<compile_context>
chip_gen: v5e
topology: v5e:2x2
jax: 0.10.0
libtpu: 0.0.40
codegen_flags: <defaults>
</compile_context>

<pallas_src>
import numpy as np
import jax
import jax.numpy as jnp
from jax.experimental import pallas as pl
from jax.experimental.pallas import tpu as pltpu

LATENT_DIM = 16
HIDDEN = 512
STYLE_DIM = 64
NUM_DOMAINS = 2

N_SHARED = 3                                    # shared 512x512 layers (after 16->512)
N_UNSHARED = 3                                  # per-domain 512x512 layers (before head)
N_BIG = N_SHARED + NUM_DOMAINS * N_UNSHARED     # 9 int8-streamed 512x512 layers
N_CHUNKS = 1 + NUM_DOMAINS                      # grid: shared chunk + one chunk per domain
OUT_W = NUM_DOMAINS * STYLE_DIM                 # 128: packed, lane-dense output width


def mapping_kernel(
    sched_ref,     # SMEM (N_CHUNKS,) int32: weight-block index for this chunk
    active_ref,    # SMEM (N_CHUNKS,) int32: 1 if this chunk must run
    z_ref,         # VMEM (B_pad, LATENT_DIM) f32
    mask_ref,      # VMEM (NUM_DOMAINS, B_pad, OUT_W) f32: onehot(row,domain) x lane-block mask
    ws0_ref,       # VMEM (LATENT_DIM, HIDDEN) bf16
    bs0_ref,       # VMEM (1, HIDDEN) f32
    scale_ref,     # SMEM (N_BIG,) f32: per-layer int8 dequant scales
    wq_ref,        # VMEM (N_UNSHARED, HIDDEN, HIDDEN) int8 -- streamed, one 3-layer chunk/step
    bb_ref,        # VMEM (N_UNSHARED, 1, HIDDEN) f32       -- streamed alongside
    wuo_ref,       # VMEM (HIDDEN, OUT_W) bf16: both style heads packed side-by-side
    buo_ref,       # VMEM (1, OUT_W) f32
    out_ref,       # VMEM (B_pad, OUT_W) f32: resident accumulator
    h_shared_ref,  # scratch VMEM (B_pad, HIDDEN) f32: shared-trunk output, carried across chunks
):
    c = pl.program_id(0)

    def big_layer(h, i, layer_idx):
        # int8 -> f32 -> bf16 is exact; per-layer scale applied to the small matmul output.
        w = wq_ref[i].astype(jnp.float32).astype(jnp.bfloat16)
        acc = jnp.dot(h.astype(jnp.bfloat16), w, preferred_element_type=jnp.float32)
        return jnp.maximum(acc * scale_ref[layer_idx] + bb_ref[i], 0.0)

    @pl.when(c == 0)
    def _shared_chunk():
        # Input layer Linear(16, 512) + ReLU, then the 3 streamed shared 512x512 layers.
        h = jnp.dot(z_ref[...].astype(jnp.bfloat16), ws0_ref[...],
                    preferred_element_type=jnp.float32) + bs0_ref[...]
        h = jnp.maximum(h, 0.0)
        for i in range(N_SHARED):                      # statically unrolled
            h = big_layer(h, i, i)
        h_shared_ref[...] = h
        out_ref[...] = jnp.zeros_like(out_ref)

    @pl.when(jnp.logical_and(c > 0, active_ref[c] == 1))
    def _domain_chunk():
        d = c - 1
        base = N_SHARED + d * N_UNSHARED               # == 3*c when this chunk is active
        h = h_shared_ref[...]
        for i in range(N_UNSHARED):                    # statically unrolled
            h = big_layer(h, i, base + i)
        # Packed heads: lanes [64d, 64d+64) of sd are head_d(h); mask keeps only those
        # lanes and only the rows whose label is d, implementing out[arange(B), y].
        sd = jnp.dot(h.astype(jnp.bfloat16), wuo_ref[...],
                     preferred_element_type=jnp.float32) + buo_ref[...]
        out_ref[...] += mask_ref[d] * sd


def _build_schedule(onehot_p):
    """Chunk-level skip schedule: absent domains repeat the previous chunk's weight-block
    index (Pallas skips the re-fetch) and are compute-gated via `active`."""
    present = (jnp.sum(onehot_p, axis=0) > 0.0).astype(jnp.int32)      # (NUM_DOMAINS,)
    active = jnp.concatenate([jnp.ones((1,), jnp.int32), present])     # (N_CHUNKS,)
    sched_list, prev = [], jnp.int32(0)
    for cix in range(N_CHUNKS):
        cur = jnp.where(active[cix] == 1, jnp.int32(cix), prev)
        sched_list.append(cur)
        prev = cur
    return jnp.stack(sched_list), active


@jax.jit
def _mapping_forward(z, y, prep):
    b = z.shape[0]
    b_pad = max(16, ((b + 15) // 16) * 16)      # bf16 sublane packing: multiple of 16

    z_p = jnp.zeros((b_pad, LATENT_DIM), jnp.float32).at[:b].set(z.astype(jnp.float32))
    onehot = jax.nn.one_hot(y, NUM_DOMAINS, dtype=jnp.float32)
    onehot_p = jnp.zeros((b_pad, NUM_DOMAINS), jnp.float32).at[:b].set(onehot)

    # mask[d, i, l] = 1 iff sample i has label d and lane l lies in domain d's 64-lane block.
    lane_block = jnp.arange(OUT_W) // STYLE_DIM                                   # (128,)
    lane_mask = (lane_block[None, :] == jnp.arange(NUM_DOMAINS)[:, None]).astype(jnp.float32)
    mask = onehot_p.T[:, :, None] * lane_mask[:, None, :]                         # (D, B_pad, 128)

    sched, active = _build_schedule(onehot_p)

    grid_spec = pltpu.PrefetchScalarGridSpec(
        num_scalar_prefetch=2,
        grid=(N_CHUNKS,),
        in_specs=[
            pl.BlockSpec((b_pad, LATENT_DIM), lambda c, sched, act: (0, 0)),
            pl.BlockSpec((NUM_DOMAINS, b_pad, OUT_W), lambda c, sched, act: (0, 0, 0)),
            pl.BlockSpec((LATENT_DIM, HIDDEN), lambda c, sched, act: (0, 0)),
            pl.BlockSpec((1, HIDDEN), lambda c, sched, act: (0, 0)),
            pl.BlockSpec(memory_space=pltpu.MemorySpace.SMEM),       # per-layer int8 scales
            # Streamed int8 weights / biases: one 3-layer (~0.8 MB) chunk per grid step,
            # double-buffered by the BlockSpec pipeline.
            pl.BlockSpec((N_UNSHARED, HIDDEN, HIDDEN), lambda c, sched, act: (sched[c], 0, 0)),
            pl.BlockSpec((N_UNSHARED, 1, HIDDEN), lambda c, sched, act: (sched[c], 0, 0)),
            pl.BlockSpec((HIDDEN, OUT_W), lambda c, sched, act: (0, 0)),
            pl.BlockSpec((1, OUT_W), lambda c, sched, act: (0, 0)),
        ],
        out_specs=pl.BlockSpec((b_pad, OUT_W), lambda c, sched, act: (0, 0)),
        scratch_shapes=[pltpu.VMEM((b_pad, HIDDEN), jnp.float32)],   # shared-trunk snapshot
    )

    out = pl.pallas_call(
        mapping_kernel,
        out_shape=jax.ShapeDtypeStruct((b_pad, OUT_W), jnp.float32),
        grid_spec=grid_spec,
        # Chunks carry state (h_shared / out accumulator) -> sequential "arbitrary" axis.
        # For large production batches on v7x, add a leading "parallel" batch-tile axis
        # so both TensorCores are used; at tiny B the kernel is DMA/overhead-bound.
        compiler_params=pltpu.CompilerParams(dimension_semantics=("arbitrary",)),
    )(sched, active, z_p, mask,
      prep["ws0"], prep["bs0"], prep["w_scale"], prep["w_q"], prep["b_big"],
      prep["wuo"], prep["buo"])

    # Each row has exactly one nonzero 64-lane block (its own domain's head output).
    return jnp.sum(out.reshape(b_pad, NUM_DOMAINS, STYLE_DIM), axis=1)[:b]


def mapping_network(z, y, prep):
    """z: (B, LATENT_DIM) f32, y: (B,) int32 in [0, NUM_DOMAINS). Returns (B, STYLE_DIM)."""
    y_host = np.asarray(jax.device_get(y))
    if ((y_host < 0) | (y_host >= NUM_DOMAINS)).any():
        raise ValueError(f"domain labels must lie in [0, {NUM_DOMAINS}), got {y_host}")
    return _mapping_forward(z, y, prep)


def init_params(key):
    """f32 params, PyTorch-equivalent layout (weights pre-transposed to (in, out))."""
    ks = jax.random.split(key, 8)
    sc = 0.05
    return {
        "ws0": sc * jax.random.normal(ks[0], (LATENT_DIM, HIDDEN), jnp.float32),
        "bs0": sc * jax.random.normal(ks[1], (1, HIDDEN), jnp.float32),
        "ws": sc * jax.random.normal(ks[2], (N_SHARED, HIDDEN, HIDDEN), jnp.float32),
        "bs": sc * jax.random.normal(ks[3], (N_SHARED, 1, HIDDEN), jnp.float32),
        "wu": sc * jax.random.normal(
            ks[4], (NUM_DOMAINS, N_UNSHARED, HIDDEN, HIDDEN), jnp.float32),
        "bu": sc * jax.random.normal(
            ks[5], (NUM_DOMAINS, N_UNSHARED, 1, HIDDEN), jnp.float32),
        "wuo": sc * jax.random.normal(ks[6], (NUM_DOMAINS, HIDDEN, STYLE_DIM), jnp.float32),
        "buo": sc * jax.random.normal(ks[7], (NUM_DOMAINS, 1, STYLE_DIM), jnp.float32),
    }


def prepare_params(p):
    """One-time packing / quantization for the kernel.

    * The nine 512x512 layers are stacked to (9, 512, 512) int8 with one symmetric f32
      scale per layer (the scale is applied to the matmul output in-kernel).
    * The input layer and packed style heads stay bf16; all biases stay f32.
    * The two (512, 64) heads are concatenated along lanes into one (512, 128) weight.
    """
    w_big = jnp.concatenate(
        [p["ws"], p["wu"].reshape(NUM_DOMAINS * N_UNSHARED, HIDDEN, HIDDEN)], axis=0)
    amax = jnp.max(jnp.abs(w_big), axis=(1, 2), keepdims=True)
    scale = jnp.maximum(amax, 1e-12) / 127.0
    w_q = jnp.clip(jnp.round(w_big / scale), -127.0, 127.0).astype(jnp.int8)

    b_big = jnp.concatenate(
        [p["bs"], p["bu"].reshape(NUM_DOMAINS * N_UNSHARED, 1, HIDDEN)], axis=0
    ).astype(jnp.float32)

    wuo = jnp.concatenate([p["wuo"][d] for d in range(NUM_DOMAINS)], axis=1)   # (512, 128)
    buo = jnp.concatenate([p["buo"][d] for d in range(NUM_DOMAINS)], axis=1)   # (1, 128)

    return {
        "ws0": p["ws0"].astype(jnp.bfloat16),
        "bs0": p["bs0"].astype(jnp.float32),
        "w_q": w_q,                                          # (9, 512, 512) int8
        "w_scale": scale.reshape(N_BIG).astype(jnp.float32), # (9,) f32
        "b_big": b_big,                                      # (9, 1, 512) f32
        "wuo": wuo.astype(jnp.bfloat16),                     # (512, 128) bf16
        "buo": buo.astype(jnp.float32),                      # (1, 128) f32
    }


def reference_f32(z, y, p):
    """Pure-JAX f32 reference mirroring the PyTorch forward exactly."""
    h = jax.nn.relu(z @ p["ws0"] + p["bs0"])
    for i in range(N_SHARED):
        h = jax.nn.relu(h @ p["ws"][i] + p["bs"][i])
    outs = []
    for d in range(NUM_DOMAINS):
        g = h
        for i in range(N_UNSHARED):
            g = jax.nn.relu(g @ p["wu"][d, i] + p["bu"][d, i])
        outs.append(g @ p["wuo"][d] + p["buo"][d])
    out = jnp.stack(outs, axis=1)          # (B, num_domains, style_dim)
    return out[jnp.arange(z.shape[0]), y]


def reference_prepared(z, y, prep):
    """Pure-JAX reference with the kernel's exact int8/bf16/f32-accumulate numerics."""
    bf = lambda a: a.astype(jnp.bfloat16)

    def big_layer(h, idx):
        w = prep["w_q"][idx].astype(jnp.float32).astype(jnp.bfloat16)
        acc = jnp.dot(bf(h), w, preferred_element_type=jnp.float32)
        return jax.nn.relu(acc * prep["w_scale"][idx] + prep["b_big"][idx])

    h = jax.nn.relu(jnp.dot(bf(z), prep["ws0"], preferred_element_type=jnp.float32)
                    + prep["bs0"])
    for i in range(N_SHARED):
        h = big_layer(h, i)
    outs = []
    for d in range(NUM_DOMAINS):
        g = h
        for i in range(N_UNSHARED):
            g = big_layer(g, N_SHARED + d * N_UNSHARED + i)
        sd = jnp.dot(bf(g), prep["wuo"], preferred_element_type=jnp.float32) + prep["buo"]
        outs.append(sd[:, d * STYLE_DIM:(d + 1) * STYLE_DIM])
    out = jnp.stack(outs, axis=1)
    return out[jnp.arange(z.shape[0]), y]


if __name__ == "__main__":
    key = jax.random.PRNGKey(0)
    kp, kz, ky = jax.random.split(key, 3)

    params = init_params(kp)
    prep = prepare_params(params)

    B = 2
    z = jax.random.normal(kz, (B, LATENT_DIM), jnp.float32)
    y = jax.random.randint(ky, (B,), 0, NUM_DOMAINS, dtype=jnp.int32)

    s = mapping_network(z, y, prep)
    s = jax.block_until_ready(s)
    assert s.shape == (B, STYLE_DIM)

    # Tight check against a reference with identical (int8-weight / bf16-activation) numerics.
    s_ref_q = reference_prepared(z, y, prep)
    assert jnp.allclose(s, s_ref_q, atol=1e-2, rtol=1e-2), "mismatch vs quantized reference"

    # Loose check against the full-f32 module semantics (documented accuracy contract).
    s_ref_f32 = reference_f32(z, y, params)
    assert jnp.allclose(s, s_ref_f32, atol=5e-2, rtol=5e-2), "mismatch vs f32 reference"

    print("KERNEL_OK")
</pallas_src>

<mosaic_0001>
module attributes {stable_mosaic.version = 11 : i64} {
  func.func @mapping_kernel(%arg0: i32, %arg1: memref<3xi32, #tpu.memory_space<smem>>, %arg2: memref<3xi32, #tpu.memory_space<smem>>, %arg3: memref<16x16xf32, #tpu.memory_space<vmem>>, %arg4: memref<2x16x128xf32, #tpu.memory_space<vmem>>, %arg5: memref<16x512xbf16, #tpu.memory_space<vmem>>, %arg6: memref<1x512xf32, #tpu.memory_space<vmem>>, %arg7: memref<9xf32, #tpu.memory_space<smem>>, %arg8: memref<3x512x512xi8, #tpu.memory_space<vmem>>, %arg9: memref<3x1x512xf32, #tpu.memory_space<vmem>>, %arg10: memref<512x128xbf16, #tpu.memory_space<vmem>>, %arg11: memref<1x128xf32, #tpu.memory_space<vmem>>, %arg12: memref<16x128xf32, #tpu.memory_space<vmem>>, %arg13: memref<16x512xf32, #tpu.memory_space<vmem>>) attributes {dimension_semantics = [#tpu.dimension_semantics<arbitrary>], iteration_bounds = array<i64: 3>, scalar_prefetch = 2 : i64, scratch_operands = 1 : i64, tpu.core_type = #tpu.core_type<tc>, window_params = [{pipeline_mode = #tpu.pipeline_mode<synchronous>, transform_indices = @transform_0, window_bounds = array<i64: 16, 16>}, {pipeline_mode = #tpu.pipeline_mode<synchronous>, transform_indices = @transform_1, window_bounds = array<i64: 2, 16, 128>}, {pipeline_mode = #tpu.pipeline_mode<synchronous>, transform_indices = @transform_2, window_bounds = array<i64: 16, 512>}, {pipeline_mode = #tpu.pipeline_mode<synchronous>, transform_indices = @transform_3, window_bounds = array<i64: 1, 512>}, {transform_indices = @transform_4, window_bounds = array<i64: 9>}, {transform_indices = @transform_5, window_bounds = array<i64: 3, 512, 512>}, {transform_indices = @transform_6, window_bounds = array<i64: 3, 1, 512>}, {pipeline_mode = #tpu.pipeline_mode<synchronous>, transform_indices = @transform_7, window_bounds = array<i64: 512, 128>}, {pipeline_mode = #tpu.pipeline_mode<synchronous>, transform_indices = @transform_8, window_bounds = array<i64: 1, 128>}, {pipeline_mode = #tpu.pipeline_mode<synchronous>, transform_indices = @transform_9, window_bounds = array<i64: 16, 128>}]} {
    %c0_i32 = arith.constant 0 : i32
    %0 = arith.cmpi eq, %arg0, %c0_i32 : i32
    %1 = arith.extui %0 : i1 to i32
    %c0_i32_0 = arith.constant 0 : i32
    %2 = arith.cmpi ne, %1, %c0_i32_0 : i32
    scf.if %2 {
      %c0 = arith.constant 0 : index
      %c0_3 = arith.constant 0 : index
      %10 = vector.load %arg3[%c0, %c0_3] : memref<16x16xf32, #tpu.memory_space<vmem>>, vector<16x16xf32>
      %11 = arith.truncf %10 : vector<16x16xf32> to vector<16x16xbf16>
      %c0_4 = arith.constant 0 : index
      %c0_5 = arith.constant 0 : index
      %12 = vector.load %arg5[%c0_4, %c0_5] : memref<16x512xbf16, #tpu.memory_space<vmem>>, vector<16x512xbf16>
      %cst = arith.constant dense<0.000000e+00> : vector<16x512xf32>
      %13 = tpu.matmul %11, %12, %cst {dimension_numbers = #tpu.dot_dimension_numbers<[1], [0], [0], [1], [0, 0, 1, 1], [], []>} : vector<16x16xbf16>, vector<16x512xbf16>, vector<16x512xf32> -> vector<16x512xf32>
      %c0_6 = arith.constant 0 : index
      %c0_7 = arith.constant 0 : index
      %14 = vector.load %arg6[%c0_6, %c0_7] : memref<1x512xf32, #tpu.memory_space<vmem>>, vector<1x512xf32>
      %15 = vector.broadcast %14 : vector<1x512xf32> to vector<16x512xf32>
      %16 = arith.addf %13, %15 : vector<16x512xf32>
      %cst_8 = arith.constant 0.000000e+00 : f32
      %17 = vector.broadcast %cst_8 : f32 to vector<16x512xf32>
      %18 = arith.maximumf %16, %17 : vector<16x512xf32>
      %c0_9 = arith.constant 0 : index
      %c0_10 = arith.constant 0 : index
      %c0_11 = arith.constant 0 : index
      %19 = vector.load %arg8[%c0_9, %c0_10, %c0_11] : memref<3x512x512xi8, #tpu.memory_space<vmem>>, vector<1x512x512xi8>
      %20 = vector.shape_cast %19 : vector<1x512x512xi8> to vector<512x512xi8>
      %21 = arith.sitofp %20 : vector<512x512xi8> to vector<512x512xf32>
      %22 = arith.truncf %21 : vector<512x512xf32> to vector<512x512xbf16>
      %23 = arith.truncf %18 : vector<16x512xf32> to vector<16x512xbf16>
      %cst_12 = arith.constant dense<0.000000e+00> : vector<16x512xf32>
      %24 = tpu.matmul %23, %22, %cst_12 {dimension_numbers = #tpu.dot_dimension_numbers<[1], [0], [0], [1], [0, 0, 1, 1], [], []>} : vector<16x512xbf16>, vector<512x512xbf16>, vector<16x512xf32> -> vector<16x512xf32>
      %c0_13 = arith.constant 0 : index
      %25 = memref.load %arg7[%c0_13] : memref<9xf32, #tpu.memory_space<smem>>
      %26 = vector.broadcast %25 : f32 to vector<16x512xf32>
      %27 = arith.mulf %24, %26 : vector<16x512xf32>
      %c0_14 = arith.constant 0 : index
      %c0_15 = arith.constant 0 : index
      %c0_16 = arith.constant 0 : index
      %28 = vector.load %arg9[%c0_14, %c0_15, %c0_16] : memref<3x1x512xf32, #tpu.memory_space<vmem>>, vector<1x1x512xf32>
      %29 = vector.shape_cast %28 : vector<1x1x512xf32> to vector<1x512xf32>
      %30 = vector.broadcast %29 : vector<1x512xf32> to vector<16x512xf32>
      %31 = arith.addf %27, %30 : vector<16x512xf32>
      %cst_17 = arith.constant 0.000000e+00 : f32
      %32 = vector.broadcast %cst_17 : f32 to vector<16x512xf32>
      %33 = arith.maximumf %31, %32 : vector<16x512xf32>
      %c1 = arith.constant 1 : index
      %c0_18 = arith.constant 0 : index
      %c0_19 = arith.constant 0 : index
      %34 = vector.load %arg8[%c1, %c0_18, %c0_19] : memref<3x512x512xi8, #tpu.memory_space<vmem>>, vector<1x512x512xi8>
      %35 = vector.shape_cast %34 : vector<1x512x512xi8> to vector<512x512xi8>
      %36 = arith.sitofp %35 : vector<512x512xi8> to vector<512x512xf32>
      %37 = arith.truncf %36 : vector<512x512xf32> to vector<512x512xbf16>
      %38 = arith.truncf %33 : vector<16x512xf32> to vector<16x512xbf16>
      %cst_20 = arith.constant dense<0.000000e+00> : vector<16x512xf32>
      %39 = tpu.matmul %38, %37, %cst_20 {dimension_numbers = #tpu.dot_dimension_numbers<[1], [0], [0], [1], [0, 0, 1, 1], [], []>} : vector<16x512xbf16>, vector<512x512xbf16>, vector<16x512xf32> -> vector<16x512xf32>
      %c1_21 = arith.constant 1 : index
      %40 = memref.load %arg7[%c1_21] : memref<9xf32, #tpu.memory_space<smem>>
      %41 = vector.broadcast %40 : f32 to vector<16x512xf32>
      %42 = arith.mulf %39, %41 : vector<16x512xf32>
      %c1_22 = arith.constant 1 : index
      %c0_23 = arith.constant 0 : index
      %c0_24 = arith.constant 0 : index
      %43 = vector.load %arg9[%c1_22, %c0_23, %c0_24] : memref<3x1x512xf32, #tpu.memory_space<vmem>>, vector<1x1x512xf32>
      %44 = vector.shape_cast %43 : vector<1x1x512xf32> to vector<1x512xf32>
      %45 = vector.broadcast %44 : vector<1x512xf32> to vector<16x512xf32>
      %46 = arith.addf %42, %45 : vector<16x512xf32>
      %cst_25 = arith.constant 0.000000e+00 : f32
      %47 = vector.broadcast %cst_25 : f32 to vector<16x512xf32>
      %48 = arith.maximumf %46, %47 : vector<16x512xf32>
      %c2 = arith.constant 2 : index
      %c0_26 = arith.constant 0 : index
      %c0_27 = arith.constant 0 : index
      %49 = vector.load %arg8[%c2, %c0_26, %c0_27] : memref<3x512x512xi8, #tpu.memory_space<vmem>>, vector<1x512x512xi8>
      %50 = vector.shape_cast %49 : vector<1x512x512xi8> to vector<512x512xi8>
      %51 = arith.sitofp %50 : vector<512x512xi8> to vector<512x512xf32>
      %52 = arith.truncf %51 : vector<512x512xf32> to vector<512x512xbf16>
      %53 = arith.truncf %48 : vector<16x512xf32> to vector<16x512xbf16>
      %cst_28 = arith.constant dense<0.000000e+00> : vector<16x512xf32>
      %54 = tpu.matmul %53, %52, %cst_28 {dimension_numbers = #tpu.dot_dimension_numbers<[1], [0], [0], [1], [0, 0, 1, 1], [], []>} : vector<16x512xbf16>, vector<512x512xbf16>, vector<16x512xf32> -> vector<16x512xf32>
      %c2_29 = arith.constant 2 : index
      %55 = memref.load %arg7[%c2_29] : memref<9xf32, #tpu.memory_space<smem>>
      %56 = vector.broadcast %55 : f32 to vector<16x512xf32>
      %57 = arith.mulf %54, %56 : vector<16x512xf32>
      %c2_30 = arith.constant 2 : index
      %c0_31 = arith.constant 0 : index
      %c0_32 = arith.constant 0 : index
      %58 = vector.load %arg9[%c2_30, %c0_31, %c0_32] : memref<3x1x512xf32, #tpu.memory_space<vmem>>, vector<1x1x512xf32>
      %59 = vector.shape_cast %58 : vector<1x1x512xf32> to vector<1x512xf32>
      %60 = vector.broadcast %59 : vector<1x512xf32> to vector<16x512xf32>
      %61 = arith.addf %57, %60 : vector<16x512xf32>
      %cst_33 = arith.constant 0.000000e+00 : f32
      %62 = vector.broadcast %cst_33 : f32 to vector<16x512xf32>
      %63 = arith.maximumf %61, %62 : vector<16x512xf32>
      %c0_34 = arith.constant 0 : index
      %c0_35 = arith.constant 0 : index
      %64 = vector.load %arg13[%c0_34, %c0_35] : memref<16x512xf32, #tpu.memory_space<vmem>>, vector<16x512xf32>
      tpu.vector_store %arg13[%c0_34, %c0_35], %63 {strides = array<i32>} : memref<16x512xf32, #tpu.memory_space<vmem>>, vector<16x512xf32>,
      %cst_36 = arith.constant 0.000000e+00 : f32
      %65 = vector.broadcast %cst_36 : f32 to vector<16x128xf32>
      %c0_37 = arith.constant 0 : index
      %c0_38 = arith.constant 0 : index
      %66 = vector.load %arg12[%c0_37, %c0_38] : memref<16x128xf32, #tpu.memory_space<vmem>>, vector<16x128xf32>
      tpu.vector_store %arg12[%c0_37, %c0_38], %65 {strides = array<i32>} : memref<16x128xf32, #tpu.memory_space<vmem>>, vector<16x128xf32>,
    } else {
    }
    %c0_i32_1 = arith.constant 0 : i32
    %3 = arith.cmpi sgt, %arg0, %c0_i32_1 : i32
    %4 = arith.index_cast %arg0 : i32 to index
    %5 = memref.load %arg2[%4] : memref<3xi32, #tpu.memory_space<smem>>
    %c1_i32 = arith.constant 1 : i32
    %6 = arith.cmpi eq, %5, %c1_i32 : i32
    %7 = arith.andi %3, %6 : i1
    %8 = arith.extui %7 : i1 to i32
    %c0_i32_2 = arith.constant 0 : i32
    %9 = arith.cmpi ne, %8, %c0_i32_2 : i32
    scf.if %9 {
      %c1_i32_3 = arith.constant 1 : i32
      %10 = arith.subi %arg0, %c1_i32_3 : i32
      %c3_i32 = arith.constant 3 : i32
      %11 = arith.muli %10, %c3_i32 : i32
      %c3_i32_4 = arith.constant 3 : i32
      %12 = arith.addi %c3_i32_4, %11 : i32
      %c0 = arith.constant 0 : index
      %c0_5 = arith.constant 0 : index
      %13 = vector.load %arg13[%c0, %c0_5] : memref<16x512xf32, #tpu.memory_space<vmem>>, vector<16x512xf32>
      %c0_i32_6 = arith.constant 0 : i32
      %14 = arith.addi %12, %c0_i32_6 : i32
      %c0_7 = arith.constant 0 : index
      %c0_8 = arith.constant 0 : index
      %c0_9 = arith.constant 0 : index
      %15 = vector.load %arg8[%c0_7, %c0_8, %c0_9] : memref<3x512x512xi8, #tpu.memory_space<vmem>>, vector<1x512x512xi8>
      %16 = vector.shape_cast %15 : vector<1x512x512xi8> to vector<512x512xi8>
      %17 = arith.sitofp %16 : vector<512x512xi8> to vector<512x512xf32>
      %18 = arith.truncf %17 : vector<512x512xf32> to vector<512x512xbf16>
      %19 = arith.truncf %13 : vector<16x512xf32> to vector<16x512xbf16>
      %cst = arith.constant dense<0.000000e+00> : vector<16x512xf32>
      %20 = tpu.matmul %19, %18, %cst {dimension_numbers = #tpu.dot_dimension_numbers<[1], [0], [0], [1], [0, 0, 1, 1], [], []>} : vector<16x512xbf16>, vector<512x512xbf16>, vector<16x512xf32> -> vector<16x512xf32>
      %21 = arith.index_cast %14 : i32 to index
      %22 = memref.load %arg7[%21] : memref<9xf32, #tpu.memory_space<smem>>
      %23 = vector.broadcast %22 : f32 to vector<16x512xf32>
      %24 = arith.mulf %20, %23 : vector<16x512xf32>
      %c0_10 = arith.constant 0 : index
      %c0_11 = arith.constant 0 : index
      %c0_12 = arith.constant 0 : index
      %25 = vector.load %arg9[%c0_10, %c0_11, %c0_12] : memref<3x1x512xf32, #tpu.memory_space<vmem>>, vector<1x1x512xf32>
      %26 = vector.shape_cast %25 : vector<1x1x512xf32> to vector<1x512xf32>
      %27 = vector.broadcast %26 : vector<1x512xf32> to vector<16x512xf32>
      %28 = arith.addf %24, %27 : vector<16x512xf32>
      %cst_13 = arith.constant 0.000000e+00 : f32
      %29 = vector.broadcast %cst_13 : f32 to vector<16x512xf32>
      %30 = arith.maximumf %28, %29 : vector<16x512xf32>
      %c1_i32_14 = arith.constant 1 : i32
      %31 = arith.addi %12, %c1_i32_14 : i32
      %c1 = arith.constant 1 : index
      %c0_15 = arith.constant 0 : index
      %c0_16 = arith.constant 0 : index
      %32 = vector.load %arg8[%c1, %c0_15, %c0_16] : memref<3x512x512xi8, #tpu.memory_space<vmem>>, vector<1x512x512xi8>
      %33 = vector.shape_cast %32 : vector<1x512x512xi8> to vector<512x512xi8>
      %34 = arith.sitofp %33 : vector<512x512xi8> to vector<512x512xf32>
      %35 = arith.truncf %34 : vector<512x512xf32> to vector<512x512xbf16>
      %36 = arith.truncf %30 : vector<16x512xf32> to vector<16x512xbf16>
      %cst_17 = arith.constant dense<0.000000e+00> : vector<16x512xf32>
      %37 = tpu.matmul %36, %35, %cst_17 {dimension_numbers = #tpu.dot_dimension_numbers<[1], [0], [0], [1], [0, 0, 1, 1], [], []>} : vector<16x512xbf16>, vector<512x512xbf16>, vector<16x512xf32> -> vector<16x512xf32>
      %38 = arith.index_cast %31 : i32 to index
      %39 = memref.load %arg7[%38] : memref<9xf32, #tpu.memory_space<smem>>
      %40 = vector.broadcast %39 : f32 to vector<16x512xf32>
      %41 = arith.mulf %37, %40 : vector<16x512xf32>
      %c1_18 = arith.constant 1 : index
      %c0_19 = arith.constant 0 : index
      %c0_20 = arith.constant 0 : index
      %42 = vector.load %arg9[%c1_18, %c0_19, %c0_20] : memref<3x1x512xf32, #tpu.memory_space<vmem>>, vector<1x1x512xf32>
      %43 = vector.shape_cast %42 : vector<1x1x512xf32> to vector<1x512xf32>
      %44 = vector.broadcast %43 : vector<1x512xf32> to vector<16x512xf32>
      %45 = arith.addf %41, %44 : vector<16x512xf32>
      %cst_21 = arith.constant 0.000000e+00 : f32
      %46 = vector.broadcast %cst_21 : f32 to vector<16x512xf32>
      %47 = arith.maximumf %45, %46 : vector<16x512xf32>
      %c2_i32 = arith.constant 2 : i32
      %48 = arith.addi %12, %c2_i32 : i32
      %c2 = arith.constant 2 : index
      %c0_22 = arith.constant 0 : index
      %c0_23 = arith.constant 0 : index
      %49 = vector.load %arg8[%c2, %c0_22, %c0_23] : memref<3x512x512xi8, #tpu.memory_space<vmem>>, vector<1x512x512xi8>
      %50 = vector.shape_cast %49 : vector<1x512x512xi8> to vector<512x512xi8>
      %51 = arith.sitofp %50 : vector<512x512xi8> to vector<512x512xf32>
      %52 = arith.truncf %51 : vector<512x512xf32> to vector<512x512xbf16>
      %53 = arith.truncf %47 : vector<16x512xf32> to vector<16x512xbf16>
      %cst_24 = arith.constant dense<0.000000e+00> : vector<16x512xf32>
      %54 = tpu.matmul %53, %52, %cst_24 {dimension_numbers = #tpu.dot_dimension_numbers<[1], [0], [0], [1], [0, 0, 1, 1], [], []>} : vector<16x512xbf16>, vector<512x512xbf16>, vector<16x512xf32> -> vector<16x512xf32>
      %55 = arith.index_cast %48 : i32 to index
      %56 = memref.load %arg7[%55] : memref<9xf32, #tpu.memory_space<smem>>
      %57 = vector.broadcast %56 : f32 to vector<16x512xf32>
      %58 = arith.mulf %54, %57 : vector<16x512xf32>
      %c2_25 = arith.constant 2 : index
      %c0_26 = arith.constant 0 : index
      %c0_27 = arith.constant 0 : index
      %59 = vector.load %arg9[%c2_25, %c0_26, %c0_27] : memref<3x1x512xf32, #tpu.memory_space<vmem>>, vector<1x1x512xf32>
      %60 = vector.shape_cast %59 : vector<1x1x512xf32> to vector<1x512xf32>
      %61 = vector.broadcast %60 : vector<1x512xf32> to vector<16x512xf32>
      %62 = arith.addf %58, %61 : vector<16x512xf32>
      %cst_28 = arith.constant 0.000000e+00 : f32
      %63 = vector.broadcast %cst_28 : f32 to vector<16x512xf32>
      %64 = arith.maximumf %62, %63 : vector<16x512xf32>
      %65 = arith.truncf %64 : vector<16x512xf32> to vector<16x512xbf16>
      %c0_29 = arith.constant 0 : index
      %c0_30 = arith.constant 0 : index
      %66 = vector.load %arg10[%c0_29, %c0_30] : memref<512x128xbf16, #tpu.memory_space<vmem>>, vector<512x128xbf16>
      %cst_31 = arith.constant dense<0.000000e+00> : vector<16x128xf32>
      %67 = tpu.matmul %65, %66, %cst_31 {dimension_numbers = #tpu.dot_dimension_numbers<[1], [0], [0], [1], [0, 0, 1, 1], [], []>} : vector<16x512xbf16>, vector<512x128xbf16>, vector<16x128xf32> -> vector<16x128xf32>
      %c0_32 = arith.constant 0 : index
      %c0_33 = arith.constant 0 : index
      %68 = vector.load %arg11[%c0_32, %c0_33] : memref<1x128xf32, #tpu.memory_space<vmem>>, vector<1x128xf32>
      %69 = vector.broadcast %68 : vector<1x128xf32> to vector<16x128xf32>
      %70 = arith.addf %67, %69 : vector<16x128xf32>
      %c0_34 = arith.constant 0 : index
      %c0_35 = arith.constant 0 : index
      %71 = vector.load %arg12[%c0_34, %c0_35] : memref<16x128xf32, #tpu.memory_space<vmem>>, vector<16x128xf32>
      %72 = arith.index_cast %10 : i32 to index
      %c0_36 = arith.constant 0 : index
      %c0_37 = arith.constant 0 : index
      %73 = vector.load %arg4[%72, %c0_36, %c0_37] : memref<2x16x128xf32, #tpu.memory_space<vmem>>, vector<1x16x128xf32>
      %74 = vector.shape_cast %73 : vector<1x16x128xf32> to vector<16x128xf32>
      %75 = arith.mulf %74, %70 : vector<16x128xf32>
      %76 = arith.addf %71, %75 : vector<16x128xf32>
      %c0_38 = arith.constant 0 : index
      %c0_39 = arith.constant 0 : index
      %77 = vector.load %arg12[%c0_38, %c0_39] : memref<16x128xf32, #tpu.memory_space<vmem>>, vector<16x128xf32>
      tpu.vector_store %arg12[%c0_38, %c0_39], %76 {strides = array<i32>} : memref<16x128xf32, #tpu.memory_space<vmem>>, vector<16x128xf32>,
    } else {
    }
    return
  }
  func.func @transform_0(%arg0: i32, %arg1: memref<3xi32, #tpu.memory_space<smem>>, %arg2: memref<3xi32, #tpu.memory_space<smem>>) -> (i32, i32) {
    %c0_i32 = arith.constant 0 : i32
    %c0_i32_0 = arith.constant 0 : i32
    %c0_i32_1 = arith.constant 0 : i32
    return %c0_i32, %c0_i32_0 : i32, i32
  }
  func.func @transform_1(%arg0: i32, %arg1: memref<3xi32, #tpu.memory_space<smem>>, %arg2: memref<3xi32, #tpu.memory_space<smem>>) -> (i32, i32, i32) {
    %c0_i32 = arith.constant 0 : i32
    %c0_i32_0 = arith.constant 0 : i32
    %c0_i32_1 = arith.constant 0 : i32
    %c0_i32_2 = arith.constant 0 : i32
    return %c0_i32, %c0_i32_0, %c0_i32_1 : i32, i32, i32
  }
  func.func @transform_2(%arg0: i32, %arg1: memref<3xi32, #tpu.memory_space<smem>>, %arg2: memref<3xi32, #tpu.memory_space<smem>>) -> (i32, i32) {
    %c0_i32 = arith.constant 0 : i32
    %c0_i32_0 = arith.constant 0 : i32
    %c0_i32_1 = arith.constant 0 : i32
    return %c0_i32, %c0_i32_0 : i32, i32
  }
  func.func @transform_3(%arg0: i32, %arg1: memref<3xi32, #tpu.memory_space<smem>>, %arg2: memref<3xi32, #tpu.memory_space<smem>>) -> (i32, i32) {
    %c0_i32 = arith.constant 0 : i32
    %c0_i32_0 = arith.constant 0 : i32
    %c0_i32_1 = arith.constant 0 : i32
    return %c0_i32, %c0_i32_0 : i32, i32
  }
  func.func @transform_4(%arg0: i32, %arg1: memref<3xi32, #tpu.memory_space<smem>>, %arg2: memref<3xi32, #tpu.memory_space<smem>>) -> i32 {
    %c0_i32 = arith.constant 0 : i32
    %c0_i32_0 = arith.constant 0 : i32
    return %c0_i32 : i32
  }
  func.func @transform_5(%arg0: i32, %arg1: memref<3xi32, #tpu.memory_space<smem>>, %arg2: memref<3xi32, #tpu.memory_space<smem>>) -> (i32, i32, i32) {
    %0 = arith.index_cast %arg0 : i32 to index
    %1 = memref.load %arg1[%0] : memref<3xi32, #tpu.memory_space<smem>>
    %c0_i32 = arith.constant 0 : i32
    %c0_i32_0 = arith.constant 0 : i32
    %c0_i32_1 = arith.constant 0 : i32
    return %1, %c0_i32, %c0_i32_0 : i32, i32, i32
  }
  func.func @transform_6(%arg0: i32, %arg1: memref<3xi32, #tpu.memory_space<smem>>, %arg2: memref<3xi32, #tpu.memory_space<smem>>) -> (i32, i32, i32) {
    %0 = arith.index_cast %arg0 : i32 to index
    %1 = memref.load %arg1[%0] : memref<3xi32, #tpu.memory_space<smem>>
    %c0_i32 = arith.constant 0 : i32
    %c0_i32_0 = arith.constant 0 : i32
    %c0_i32_1 = arith.constant 0 : i32
    return %1, %c0_i32, %c0_i32_0 : i32, i32, i32
  }
  func.func @transform_7(%arg0: i32, %arg1: memref<3xi32, #tpu.memory_space<smem>>, %arg2: memref<3xi32, #tpu.memory_space<smem>>) -> (i32, i32) {
    %c0_i32 = arith.constant 0 : i32
    %c0_i32_0 = arith.constant 0 : i32
    %c0_i32_1 = arith.constant 0 : i32
    return %c0_i32, %c0_i32_0 : i32, i32
  }
  func.func @transform_8(%arg0: i32, %arg1: memref<3xi32, #tpu.memory_space<smem>>, %arg2: memref<3xi32, #tpu.memory_space<smem>>) -> (i32, i32) {
    %c0_i32 = arith.constant 0 : i32
    %c0_i32_0 = arith.constant 0 : i32
    %c0_i32_1 = arith.constant 0 : i32
    return %c0_i32, %c0_i32_0 : i32, i32
  }
  func.func @transform_9(%arg0: i32, %arg1: memref<3xi32, #tpu.memory_space<smem>>, %arg2: memref<3xi32, #tpu.memory_space<smem>>) -> (i32, i32) {
    %c0_i32 = arith.constant 0 : i32
    %c0_i32_0 = arith.constant 0 : i32
    %c0_i32_1 = arith.constant 0 : i32
    return %c0_i32, %c0_i32_0 : i32, i32
  }
}

</mosaic_0001>

<llo_original>
// kernel: _mapping_forward.1
$region0: #{_mapping_forward.1}
  #allocation0 [shape = 'u32[]', space=smem, size = 0x4, offset = 0x4, fixed_abs, tag = 'smem constant byte address 0x4 - core index']
  #allocation1 [shape = 'u32[72,128]{1,0:T(1,128)}', space=vmem, size = 0x9000, scoped, tag = 'internal scratch']
  #allocation2 [shape = 'f32[16,512]{1,0:T(8,128)}', space=vmem, size = 0x8000, scoped, tag = 'scratch operand']
  #allocation3 [shape = 's32[1]{0}', space=sflag, size = 0x4, scoped, tag = 'scoped memory for _mapping_forward.1']
  #allocation4 [shape = 'u8[512]{0}', space=smem, size = 0x200, scoped, tag = 'prefetched SMEM operand 0']
  #allocation5 [shape = 'u8[512]{0}', space=smem, size = 0x200, scoped, tag = 'prefetched SMEM operand 1']
  %s0 = inlined_call_operand.vmem [shape: s32[3], index: 0, kind: input, shape index: {}]
  %s1 = inlined_call_operand.vmem [shape: s32[3], index: 1, kind: input, shape index: {}]
  %s2 = inlined_call_operand.vmem [shape: f32[16,16], index: 2, kind: input, shape index: {}]
  %s3 = inlined_call_operand.vmem [shape: f32[2,16,128], index: 3, kind: input, shape index: {}]
  %s4 = inlined_call_operand.hbm [shape: bf16[16,512], index: 4, kind: input, shape index: {}]
  %s5 = inlined_call_operand.hbm [shape: f32[1,512], index: 5, kind: input, shape index: {}]
  %s6 = inlined_call_operand.hbm [shape: f32[9], index: 6, kind: input, shape index: {}]
  %s7 = inlined_call_operand.hbm [shape: s8[9,512,512], index: 7, kind: input, shape index: {}]
  %s8 = inlined_call_operand.hbm [shape: f32[9,1,512], index: 8, kind: input, shape index: {}]
  %s9 = inlined_call_operand.hbm [shape: bf16[512,128], index: 9, kind: input, shape index: {}]
  %s10 = inlined_call_operand.hbm [shape: f32[1,128], index: 10, kind: input, shape index: {}]
  %s11 = inlined_call_operand.vmem [shape: f32[16,128], index: 11, kind: output, shape index: {}]
  %s12 = sld [smem:[#allocation0]]
  $region105: #{_mapping_forward.1} parent=0
    _
  %s14 = ssub.s32 1, %s12
  %s15 = scalar_select 0, %s14, %s12
  %s17 = sshll.u32 %s0, 4
  %s18 = int_to_ptr.vmem [resolvable:$true] %s17
  %20 = dma.vmem_to_smem %s18, 16, [#allocation4], [#allocation3]
  %s22 = sshll.u32 %s1, 4
  %s23 = int_to_ptr.vmem [resolvable:$true] %s22
  %25 = dma.vmem_to_smem %s23, 16, [#allocation5], [#allocation3]
  %27 = dma.done [#allocation3], 32
  %28 = sfence
  $region1: #{_mapping_forward.1} parent=0
    #allocation6 [shape = 'u8[16384]{0}', space=vmem, size = 0x4000, scoped, tag = 'input window, operand 4, single buffered']
    #allocation7 [shape = 's32[2]{0}', space=sflag, size = 0x8, scoped, tag = 'scoped memory for _mapping_forward.1']
    #allocation8 [shape = 's32[2]{0}', space=sflag, size = 0x8, scoped, tag = 'scoped memory for _mapping_forward.1']
    #allocation9 [shape = 'u8[2048]{0}', space=vmem, size = 0x800, scoped, tag = 'input window, operand 5, single buffered']
    #allocation10 [shape = 's32[1]{0}', space=sflag, size = 0x4, scoped, tag = 'scoped memory for _mapping_forward.1']
    #allocation11 [shape = 'u8[512]{0}', space=smem, size = 0x200, scoped, tag = 'input window, operand 6, single buffered']
    #allocation12 [shape = 'u8[1572864]{0}', space=vmem, size = 0x180000, scoped, tag = 'input window, operand 7']
    #allocation13 [shape = 'u8[12288]{0}', space=vmem, size = 0x3000, scoped, tag = 'input window, operand 8']
    #allocation14 [shape = 'u8[131072]{0}', space=vmem, size = 0x20000, scoped, tag = 'input window, operand 9, single buffered']
    #allocation15 [shape = 'u8[512]{0}', space=vmem, size = 0x400, scoped, tag = 'input window, operand 10, single buffered']
    #allocation16 [shape = 's32[1]{0}', space=sflag, size = 0x4, scoped, tag = 'scoped memory for _mapping_forward.1']
    %29 = vsyncpa [#allocation7], 0
    %30 = vsyncpa [#allocation10], 0
    %31 = vsyncpa [#allocation8], 0
    %32 = vsyncpa [#allocation16], 0
    loop: start=0, step=1, limit=5
    $region2: #{_mapping_forward.1} parent=1 // loop_pre_header
      _
    $region3: #{_mapping_forward.1} parent=1 // loop_header
      %s34 = sphi 0, %s38
      %p35 = scmp.ge.s32.totalorder %s34, 5
      %s42 = sphi 0, %s42
      %s44 = sphi 0, %s42
      %s45 = sphi 0, %s44
      %s59 = sphi 0, %s45
      %s63 = sphi 0, %s63
      %s65 = sphi 0, %s63
      %s66 = sphi 0, %s65
      %s80 = sphi 0, %s66
      %s84 = sphi 0, %s84
      %s86 = sphi 0, %s84
      %s87 = sphi 0, %s86
      %s101 = sphi 0, %s87
      %s105 = sphi 0, %s105
      %s107 = sphi 0, %s105
      %s108 = sphi 0, %s107
      %s122 = sphi 0, %s108
      %s126 = sphi 0, %s126
      %s128 = sphi 0, %s126
      %s129 = sphi 0, %s128
      %s143 = sphi 0, %s129
      %s151 = sphi 0, %s153
      %s154 = sphi 0, %s151
      %s155 = sphi 0, %s154
      %s171 = sphi 0, %s155
      %s179 = sphi 0, %s181
      %s182 = sphi 0, %s179
      %s183 = sphi 0, %s182
      %s199 = sphi 0, %s183
      %s203 = sphi 0, %s203
      %s205 = sphi 0, %s203
      %s206 = sphi 0, %s205
      %s220 = sphi 0, %s206
      %s224 = sphi 0, %s224
      %s226 = sphi 0, %s224
      %s227 = sphi 0, %s226
      %s241 = sphi 0, %s227
      %s245 = sphi 0, %s245
      %s247 = sphi 0, %s245
      %s248 = sphi 0, %s247
      %s262 = sphi 0, %s248
    $region4: #{_mapping_forward.1} parent=1 // loop_header_branch
      %37 = sbr.rel (%p35) target = $region8
    $region5: #{_mapping_forward.1} parent=1 // loop_body
      %s39 = ssub.s32 %s34, 1
      %s40 = ssub.s32 %s34, 2
      %s41 = sadd.s32 %s34, 1
      %s43 = sadd.s32 %s42, 1
      %p46 = scmp.eq.s32.totalorder %s34, 2
      %p47 = scmp.ne.s32.totalorder %s42, %s44
      %p48 = scmp.eq.s32.totalorder %s34, 0
      %p49 = por %p47, %p48
      %p50 = scmp.ne.s32.totalorder %s42, %s44
      %p51 = scmp.eq.s32.totalorder %s39, 2
      %p52 = por %p50, %p51
      %p53 = scmp.ne.s32.totalorder %s44, %s45
      %p54 = scmp.eq.s32.totalorder %s39, 0
      %p55 = por %p53, %p54
      %p56 = scmp.ne.s32.totalorder %s44, %s45
      %p57 = scmp.eq.s32.totalorder %s40, 2
      %p58 = por %p56, %p57
      %p60 = scmp.ne.s32.totalorder %s45, %s59
      %p61 = scmp.eq.s32.totalorder %s40, 0
      %p62 = por %p60, %p61
      %s64 = sadd.s32 %s63, 1
      %p67 = scmp.eq.s32.totalorder %s34, 2
      %p68 = scmp.ne.s32.totalorder %s63, %s65
      %p69 = scmp.eq.s32.totalorder %s34, 0
      %p70 = por %p68, %p69
      %p71 = scmp.ne.s32.totalorder %s63, %s65
      %p72 = scmp.eq.s32.totalorder %s39, 2
      %p73 = por %p71, %p72
      %p74 = scmp.ne.s32.totalorder %s65, %s66
      %p75 = scmp.eq.s32.totalorder %s39, 0
      %p76 = por %p74, %p75
      %p77 = scmp.ne.s32.totalorder %s65, %s66
      %p78 = scmp.eq.s32.totalorder %s40, 2
      %p79 = por %p77, %p78
      %p81 = scmp.ne.s32.totalorder %s66, %s80
      %p82 = scmp.eq.s32.totalorder %s40, 0
      %p83 = por %p81, %p82
      %s85 = sadd.s32 %s84, 1
      %p88 = scmp.eq.s32.totalorder %s34, 2
      %p89 = scmp.ne.s32.totalorder %s84, %s86
      %p90 = scmp.eq.s32.totalorder %s34, 0
      %p91 = por %p89, %p90
      %p92 = scmp.ne.s32.totalorder %s84, %s86
      %p93 = scmp.eq.s32.totalorder %s39, 2
      %p94 = por %p92, %p93
      %p95 = scmp.ne.s32.totalorder %s86, %s87
      %p96 = scmp.eq.s32.totalorder %s39, 0
      %p97 = por %p95, %p96
      %p98 = scmp.ne.s32.totalorder %s86, %s87
      %p99 = scmp.eq.s32.totalorder %s40, 2
      %p100 = por %p98, %p99
      %p102 = scmp.ne.s32.totalorder %s87, %s101
      %p103 = scmp.eq.s32.totalorder %s40, 0
      %p104 = por %p102, %p103
      %s106 = sadd.s32 %s105, 1
      %p109 = scmp.eq.s32.totalorder %s34, 2
      %p110 = scmp.ne.s32.totalorder %s105, %s107
      %p111 = scmp.eq.s32.totalorder %s34, 0
      %p112 = por %p110, %p111
      %p113 = scmp.ne.s32.totalorder %s105, %s107
      %p114 = scmp.eq.s32.totalorder %s39, 2
      %p115 = por %p113, %p114
      %p116 = scmp.ne.s32.totalorder %s107, %s108
      %p117 = scmp.eq.s32.totalorder %s39, 0
      %p118 = por %p116, %p117
      %p119 = scmp.ne.s32.totalorder %s107, %s108
      %p120 = scmp.eq.s32.totalorder %s40, 2
      %p121 = por %p119, %p120
      %p123 = scmp.ne.s32.totalorder %s108, %s122
      %p124 = scmp.eq.s32.totalorder %s40, 0
      %p125 = por %p123, %p124
      %s127 = sadd.s32 %s126, 1
      %p130 = scmp.eq.s32.totalorder %s34, 2
      %p131 = scmp.ne.s32.totalorder %s126, %s128
      %p132 = scmp.eq.s32.totalorder %s34, 0
      %p133 = por %p131, %p132
      %p134 = scmp.ne.s32.totalorder %s126, %s128
      %p135 = scmp.eq.s32.totalorder %s39, 2
      %p136 = por %p134, %p135
      %p137 = scmp.ne.s32.totalorder %s128, %s129
      %p138 = scmp.eq.s32.totalorder %s39, 0
      %p139 = por %p137, %p138
      %p140 = scmp.ne.s32.totalorder %s128, %s129
      %p141 = scmp.eq.s32.totalorder %s40, 2
      %p142 = por %p140, %p141
      %p144 = scmp.ne.s32.totalorder %s129, %s143
      %p145 = scmp.eq.s32.totalorder %s40, 0
      %p146 = por %p144, %p145
      %s147 = sld [smem:[#allocation4 + %s34]]
      %s148 = sld [smem:[#allocation4 + %s41]]
      %s149 = ssub.s32 %s147, %s148
      %p150 = scmp.eq.s32.totalorder %s149, 0
      %s152 = sadd.s32 %s151, 1
      %s153 = scalar_select %p150, %s151, %s152
      %p156 = pneg %p150
      %p157 = scmp.eq.s32.totalorder %s34, 2
      %p158 = por %p156, %p157
      %p159 = scmp.ne.s32.totalorder %s151, %s154
      %p160 = scmp.eq.s32.totalorder %s34, 0
      %p161 = por %p159, %p160
      %p162 = scmp.ne.s32.totalorder %s151, %s154
      %p163 = scmp.eq.s32.totalorder %s39, 2
      %p164 = por %p162, %p163
      %p165 = scmp.ne.s32.totalorder %s154, %s155
      %p166 = scmp.eq.s32.totalorder %s39, 0
      %p167 = por %p165, %p166
      %p168 = scmp.ne.s32.totalorder %s154, %s155
      %p169 = scmp.eq.s32.totalorder %s40, 2
      %p170 = por %p168, %p169
      %p172 = scmp.ne.s32.totalorder %s155, %s171
      %p173 = scmp.eq.s32.totalorder %s40, 0
      %p174 = por %p172, %p173
      %s175 = sld [smem:[#allocation4 + %s34]]
      %s176 = sld [smem:[#allocation4 + %s41]]
      %s177 = ssub.s32 %s175, %s176
      %p178 = scmp.eq.s32.totalorder %s177, 0
      %s180 = sadd.s32 %s179, 1
      %s181 = scalar_select %p178, %s179, %s180
      %p184 = pneg %p178
      %p185 = scmp.eq.s32.totalorder %s34, 2
      %p186 = por %p184, %p185
      %p187 = scmp.ne.s32.totalorder %s179, %s182
      %p188 = scmp.eq.s32.totalorder %s34, 0
      %p189 = por %p187, %p188
      %p190 = scmp.ne.s32.totalorder %s179, %s182
      %p191 = scmp.eq.s32.totalorder %s39, 2
      %p192 = por %p190, %p191
      %p193 = scmp.ne.s32.totalorder %s182, %s183
      %p194 = scmp.eq.s32.totalorder %s39, 0
      %p195 = por %p193, %p194
      %p196 = scmp.ne.s32.totalorder %s182, %s183
      %p197 = scmp.eq.s32.totalorder %s40, 2
      %p198 = por %p196, %p197
      %p200 = scmp.ne.s32.totalorder %s183, %s199
      %p201 = scmp.eq.s32.totalorder %s40, 0
      %p202 = por %p200, %p201
      %s204 = sadd.s32 %s203, 1
      %p207 = scmp.eq.s32.totalorder %s34, 2
      %p208 = scmp.ne.s32.totalorder %s203, %s205
      %p209 = scmp.eq.s32.totalorder %s34, 0
      %p210 = por %p208, %p209
      %p211 = scmp.ne.s32.totalorder %s203, %s205
      %p212 = scmp.eq.s32.totalorder %s39, 2
      %p213 = por %p211, %p212
      %p214 = scmp.ne.s32.totalorder %s205, %s206
      %p215 = scmp.eq.s32.totalorder %s39, 0
      %p216 = por %p214, %p215
      %p217 = scmp.ne.s32.totalorder %s205, %s206
      %p218 = scmp.eq.s32.totalorder %s40, 2
      %p219 = por %p217, %p218
      %p221 = scmp.ne.s32.totalorder %s206, %s220
      %p222 = scmp.eq.s32.totalorder %s40, 0
      %p223 = por %p221, %p222
      %s225 = sadd.s32 %s224, 1
      %p228 = scmp.eq.s32.totalorder %s34, 2
      %p229 = scmp.ne.s32.totalorder %s224, %s226
      %p230 = scmp.eq.s32.totalorder %s34, 0
      %p231 = por %p229, %p230
      %p232 = scmp.ne.s32.totalorder %s224, %s226
      %p233 = scmp.eq.s32.totalorder %s39, 2
      %p234 = por %p232, %p233
      %p235 = scmp.ne.s32.totalorder %s226, %s227
      %p236 = scmp.eq.s32.totalorder %s39, 0
      %p237 = por %p235, %p236
      %p238 = scmp.ne.s32.totalorder %s226, %s227
      %p239 = scmp.eq.s32.totalorder %s40, 2
      %p240 = por %p238, %p239
      %p242 = scmp.ne.s32.totalorder %s227, %s241
      %p243 = scmp.eq.s32.totalorder %s40, 0
      %p244 = por %p242, %p243
      %s246 = sadd.s32 %s245, 1
      %p249 = scmp.eq.s32.totalorder %s34, 2
      %p250 = scmp.ne.s32.totalorder %s245, %s247
      %p251 = scmp.eq.s32.totalorder %s34, 0
      %p252 = por %p250, %p251
      %p253 = scmp.ne.s32.totalorder %s245, %s247
      %p254 = scmp.eq.s32.totalorder %s39, 2
      %p255 = por %p253, %p254
      %p256 = scmp.ne.s32.totalorder %s247, %s248
      %p257 = scmp.eq.s32.totalorder %s39, 0
      %p258 = por %p256, %p257
      %p259 = scmp.ne.s32.totalorder %s247, %s248
      %p260 = scmp.eq.s32.totalorder %s40, 2
      %p261 = por %p259, %p260
      %p263 = scmp.ne.s32.totalorder %s248, %s262
      %p264 = scmp.eq.s32.totalorder %s40, 0
      %p265 = por %p263, %p264
      %p266 = scmp.le.s32.totalorder 1, %s34
      %p267 = scmp.lt.s32.totalorder %s34, 4
      %p268 = pnand %p266, %p267
      %p269 = pneg %p268
      // Predicated region
      $region9: #{_mapping_forward.1} parent=5 // pred_check
        _
      $region10: #{_mapping_forward.1} parent=5 // pred_check_branch
        %271 = sbr.rel (%p268) target = $region12
      $region11: #{_mapping_forward.1} parent=5 // pred_region
        %s272 = ssub.s32 %s34, 1
        // Predicated region
        $region13: #{_mapping_forward.1} parent=11 // pred_check
          %p273 = pneg %p55
        $region14: #{_mapping_forward.1} parent=11 // pred_check_branch
          %275 = sbr.rel (%p273) target = $region16
        $region15: #{_mapping_forward.1} parent=11 // pred_region
          _
        $region16: #{_mapping_forward.1} parent=11 // pred_fallthru
          _
        // Predicated region
        $region17: #{_mapping_forward.1} parent=11 // pred_check
          %p276 = pneg %p76
        $region18: #{_mapping_forward.1} parent=11 // pred_check_branch
          %278 = sbr.rel (%p276) target = $region20
        $region19: #{_mapping_forward.1} parent=11 // pred_region
          _
        $region20: #{_mapping_forward.1} parent=11 // pred_fallthru
          _
        // Predicated region
        $region21: #{_mapping_forward.1} parent=11 // pred_check
          %p279 = pneg %p97
        $region22: #{_mapping_forward.1} parent=11 // pred_check_branch
          %281 = sbr.rel (%p279) target = $region24
        $region23: #{_mapping_forward.1} parent=11 // pred_region
          %283 = vsyncadd [#allocation7], 0
          %s284 = sshll.u32 %s4, 4
          %s285 = int_to_ptr.hbm [resolvable:$true] %s284
          %s286 = sshll.u32 [#allocation6], 4
          %s287 = int_to_ptr.vmem [resolvable:$true] %s286
          %292 = dma.hbm_to_vmem [thread:$0]  %s285, 512, %s287, [#allocation7], 256, 256, 16
        $region24: #{_mapping_forward.1} parent=11 // pred_fallthru
          _
        // Predicated region
        $region25: #{_mapping_forward.1} parent=11 // pred_check
          %p293 = pneg %p118
        $region26: #{_mapping_forward.1} parent=11 // pred_check_branch
          %295 = sbr.rel (%p293) target = $region28
        $region27: #{_mapping_forward.1} parent=11 // pred_region
          %297 = vsyncadd [#allocation10], 0
          %s299 = sshll.u32 %s5, 4
          %s300 = int_to_ptr.hbm [resolvable:$true] %s299
          %s301 = sshll.u32 [#allocation9], 4
          %s302 = int_to_ptr.vmem [resolvable:$true] %s301
          %304 = dma.hbm_to_vmem [thread:$0]  %s300, 64, %s302, [#allocation10]
        $region28: #{_mapping_forward.1} parent=11 // pred_fallthru
          _
        // Predicated region
        $region29: #{_mapping_forward.1} parent=11 // pred_check
          %p305 = pneg %p139
        $region30: #{_mapping_forward.1} parent=11 // pred_check_branch
          %307 = sbr.rel (%p305) target = $region32
        $region31: #{_mapping_forward.1} parent=11 // pred_region
          %309 = vsyncadd [#allocation8], 0
          %s311 = sshll.u32 %s6, 4
          %s312 = int_to_ptr.hbm [resolvable:$true] %s311
          %314 = dma.hbm_to_smem %s312, 16, [#allocation11], [#allocation8]
        $region32: #{_mapping_forward.1} parent=11 // pred_fallthru
          _
        // Predicated region
        $region33: #{_mapping_forward.1} parent=11 // pred_check
          %p315 = pneg %p216
        $region34: #{_mapping_forward.1} parent=11 // pred_check_branch
          %317 = sbr.rel (%p315) target = $region36
        $region35: #{_mapping_forward.1} parent=11 // pred_region
          %319 = vsyncadd [#allocation10], 0
          %s320 = sshll.u32 %s9, 4
          %s321 = int_to_ptr.hbm [resolvable:$true] %s320
          %s322 = sshll.u32 [#allocation14], 4
          %s323 = int_to_ptr.vmem [resolvable:$true] %s322
          %328 = dma.hbm_to_vmem [thread:$0]  %s321, 4096, %s323, [#allocation10], 64, 64, 4
        $region36: #{_mapping_forward.1} parent=11 // pred_fallthru
          _
        // Predicated region
        $region37: #{_mapping_forward.1} parent=11 // pred_check
          %p329 = pneg %p237
        $region38: #{_mapping_forward.1} parent=11 // pred_check_branch
          %331 = sbr.rel (%p329) target = $region40
        $region39: #{_mapping_forward.1} parent=11 // pred_region
          %333 = vsyncadd [#allocation16], 0
          %s335 = sshll.u32 %s10, 4
          %s336 = int_to_ptr.hbm [resolvable:$true] %s335
          %s337 = sshll.u32 [#allocation15], 4
          %s338 = int_to_ptr.vmem [resolvable:$true] %s337
          %340 = dma.hbm_to_vmem [thread:$0]  %s336, 16, %s338, [#allocation16]
        $region40: #{_mapping_forward.1} parent=11 // pred_fallthru
          _
      $region12: #{_mapping_forward.1} parent=5 // pred_fallthru
        _
      %p341 = scmp.lt.s32.totalorder %s34, 3
      // Predicated region
      $region41: #{_mapping_forward.1} parent=5 // pred_check
        %p342 = pneg %p341
      $region42: #{_mapping_forward.1} parent=5 // pred_check_branch
        %344 = sbr.rel (%p342) target = $region44
      $region43: #{_mapping_forward.1} parent=5 // pred_region
        // Predicated region
        $region45: #{_mapping_forward.1} parent=43 // pred_check
          %p345 = pneg %p161
        $region46: #{_mapping_forward.1} parent=43 // pred_check_branch
          %347 = sbr.rel (%p345) target = $region48
        $region47: #{_mapping_forward.1} parent=43 // pred_region
          %s348 = sand.u32 %s34, 1
          %s349 = scalar_lea.sflag [#allocation7], %s348
          %s350 = sand.u32 %s151, 1
          %s351 = smul.addr %s350, 1536
          %s352 = scalar_lea.vmem [#allocation12], %s351
          %s353 = sld [smem:[#allocation4 + %s34]]
          %s354 = smul.u32 3, %s353
          %356 = vsyncadd %s349, 0
          %s357 = smul.addr %s354, 64
          %s358 = smul.addr %s357, 8
          %s359 = scalar_lea.hbm %s7, %s358
          %s360 = sshll.u32 %s359, 4
          %s361 = int_to_ptr.hbm [resolvable:$true] %s360
          %s362 = sshll.u32 %s352, 4
          %s363 = int_to_ptr.vmem [resolvable:$true] %s362
          %368 = dma.hbm_to_vmem [thread:$0]  %s361, 24576, %s363, %s349, 512, 512, 32
        $region48: #{_mapping_forward.1} parent=43 // pred_fallthru
          _
        // Predicated region
        $region49: #{_mapping_forward.1} parent=43 // pred_check
          %p369 = pneg %p189
        $region50: #{_mapping_forward.1} parent=43 // pred_check_branch
          %371 = sbr.rel (%p369) target = $region52
        $region51: #{_mapping_forward.1} parent=43 // pred_region
          %s372 = sand.u32 %s34, 1
          %s373 = scalar_lea.sflag [#allocation7], %s372
          %s374 = sand.u32 %s179, 1
          %s375 = smul.addr %s374, 12
          %s376 = scalar_lea.vmem [#allocation13], %s375
          %s377 = sld [smem:[#allocation4 + %s34]]
          %s378 = smul.u32 3, %s377
          %380 = vsyncadd %s373, 0
          %s381 = smul.addr %s378, 4
          %s382 = scalar_lea.hbm %s8, %s381
          %s383 = sshll.u32 %s382, 4
          %s384 = int_to_ptr.hbm [resolvable:$true] %s383
          %s385 = sshll.u32 %s376, 4
          %s386 = int_to_ptr.vmem [resolvable:$true] %s385
          %391 = dma.hbm_to_vmem [thread:$0]  %s384, 192, %s386, %s373, 64, 64, 4
        $region52: #{_mapping_forward.1} parent=43 // pred_fallthru
          _
      $region44: #{_mapping_forward.1} parent=5 // pred_fallthru
        _
      %p392 = scmp.le.s32.totalorder 1, %s34
      %p393 = scmp.lt.s32.totalorder %s34, 4
      %p394 = pnand %p392, %p393
      %p395 = pneg %p394
      // Predicated region
      $region53: #{_mapping_forward.1} parent=5 // pred_check
        _
      $region54: #{_mapping_forward.1} parent=5 // pred_check_branch
        %397 = sbr.rel (%p394) target = $region56
      $region55: #{_mapping_forward.1} parent=5 // pred_region
        %s398 = ssub.s32 %s34, 1
        // Predicated region
        $region57: #{_mapping_forward.1} parent=55 // pred_check
          %p399 = pneg %p97
        $region58: #{_mapping_forward.1} parent=55 // pred_check_branch
          %401 = sbr.rel (%p399) target = $region60
        $region59: #{_mapping_forward.1} parent=55 // pred_region
          %403 = dma.done [#allocation7], 512
        $region60: #{_mapping_forward.1} parent=55 // pred_fallthru
          _
        // Predicated region
        $region61: #{_mapping_forward.1} parent=55 // pred_check
          %p404 = pneg %p118
        $region62: #{_mapping_forward.1} parent=55 // pred_check_branch
          %406 = sbr.rel (%p404) target = $region64
        $region63: #{_mapping_forward.1} parent=55 // pred_region
          %408 = dma.done [#allocation10], 64
        $region64: #{_mapping_forward.1} parent=55 // pred_fallthru
          _
        // Predicated region
        $region65: #{_mapping_forward.1} parent=55 // pred_check
          %p409 = pneg %p139
        $region66: #{_mapping_forward.1} parent=55 // pred_check_branch
          %411 = sbr.rel (%p409) target = $region68
        $region67: #{_mapping_forward.1} parent=55 // pred_region
          %413 = dma.done [#allocation8], 16
        $region68: #{_mapping_forward.1} parent=55 // pred_fallthru
          _
        %s414 = sand.u32 %s39, 1
        %s415 = scalar_lea.sflag [#allocation7], %s414
        %s416 = sand.u32 %s154, 1
        %s417 = smul.addr %s416, 1536
        %s418 = scalar_lea.vmem [#allocation12], %s417
        // Predicated region
        $region69: #{_mapping_forward.1} parent=55 // pred_check
          %p419 = pneg %p167
        $region70: #{_mapping_forward.1} parent=55 // pred_check_branch
          %421 = sbr.rel (%p419) target = $region72
        $region71: #{_mapping_forward.1} parent=55 // pred_region
          %423 = dma.done %s415, 24576
        $region72: #{_mapping_forward.1} parent=55 // pred_fallthru
          _
        %s424 = sand.u32 %s39, 1
        %s425 = scalar_lea.sflag [#allocation7], %s424
        %s426 = sand.u32 %s182, 1
        %s427 = smul.addr %s426, 12
        %s428 = scalar_lea.vmem [#allocation13], %s427
        // Predicated region
        $region73: #{_mapping_forward.1} parent=55 // pred_check
          %p429 = pneg %p195
        $region74: #{_mapping_forward.1} parent=55 // pred_check_branch
          %431 = sbr.rel (%p429) target = $region76
        $region75: #{_mapping_forward.1} parent=55 // pred_region
          %433 = dma.done %s425, 192
        $region76: #{_mapping_forward.1} parent=55 // pred_fallthru
          _
        // Predicated region
        $region77: #{_mapping_forward.1} parent=55 // pred_check
          %p434 = pneg %p216
        $region78: #{_mapping_forward.1} parent=55 // pred_check_branch
          %436 = sbr.rel (%p434) target = $region80
        $region79: #{_mapping_forward.1} parent=55 // pred_region
          %438 = dma.done [#allocation10], 4096
        $region80: #{_mapping_forward.1} parent=55 // pred_fallthru
          _
        // Predicated region
        $region81: #{_mapping_forward.1} parent=55 // pred_check
          %p439 = pneg %p237
        $region82: #{_mapping_forward.1} parent=55 // pred_check_branch
          %441 = sbr.rel (%p439) target = $region84
        $region83: #{_mapping_forward.1} parent=55 // pred_region
          %443 = dma.done [#allocation16], 16
        $region84: #{_mapping_forward.1} parent=55 // pred_fallthru
          _
        %444 = sfence
        %p445 = pneg %p55
        %p446 = pneg %p52
        %p447 = pneg %p76
        %p448 = pneg %p73
        %p449 = pneg %p97
        %p450 = pneg %p94
        %p451 = pneg %p118
        %p452 = pneg %p115
        %p453 = pneg %p139
        %p454 = pneg %p136
        %s455 = sand.u32 %s39, 1
        %s456 = scalar_lea.sflag [#allocation7], %s455
        %s457 = sand.u32 %s154, 1
        %s458 = smul.addr %s457, 1536
        %s459 = scalar_lea.vmem [#allocation12], %s458
        %p460 = pneg %p167
        %p461 = pneg %p164
        %s462 = sand.u32 %s39, 1
        %s463 = scalar_lea.sflag [#allocation7], %s462
        %s464 = sand.u32 %s182, 1
        %s465 = smul.addr %s464, 12
        %s466 = scalar_lea.vmem [#allocation13], %s465
        %p467 = pneg %p195
        %p468 = pneg %p192
        %p469 = pneg %p216
        %p470 = pneg %p213
        %p471 = pneg %p237
        %p472 = pneg %p234
        %p473 = pneg %p258
        %p474 = pneg %p255
        %s475 = sld [smem:[#allocation4 + %s39]]
        %s476 = smul.u32 3, %s475
        %s477 = sld [smem:[#allocation4 + %s39]]
        %s478 = smul.u32 3, %s477
        %p480 = scmp.eq.s32.totalorder %s39, 0
        // Predicated region
        $region85: #{_mapping_forward.1} parent=55 // pred_check
          %p481 = pneg %p480
        $region86: #{_mapping_forward.1} parent=55 // pred_check_branch
          %483 = sbr.rel (%p481) target = $region88
        $region87: #{_mapping_forward.1} parent=55 // pred_region
          %v484 = vld [vmem:[%s2] sm:$0xff]
          %v485 = vld [vmem:[%s2 + $0x8] sm:$0xff]
          %v486 = vpack.c.bf16 %v485, %v484
          %v487 = vld [vmem:[#allocation6] sm:$0xff]
          %v488 = vld [vmem:[#allocation6 + $0x8] sm:$0xff]
          %v489 = vld [vmem:[#allocation6 + $0x10] sm:$0xff]
          %v490 = vld [vmem:[#allocation6 + $0x18] sm:$0xff]
          %v491 = vld [vmem:[#allocation9] sm:$0xf]
          %v493 = vperm.slane %v491, 0
          %v494 = vperm.slane %v491, 1
          %v495 = vperm.slane %v491, 2
          %v496 = vperm.slane %v491, 3
          %v505 = vunpack.c.l.b16 %v487
          %v506 = vunpack.c.h.b16 %v487
          %v507 = vunpack.c.l.b16 %v488
          %v508 = vunpack.c.h.b16 %v488
          %v509 = vunpack.c.l.b16 %v489
          %v510 = vunpack.c.h.b16 %v489
          %v511 = vunpack.c.l.b16 %v490
          %v512 = vunpack.c.h.b16 %v490
          %v513 = vpack.c.b16 %v509, %v505
          %v514 = vpack.c.b16 %v510, %v506
          %v515 = vpack.c.b16 %v511, %v507
          %v516 = vpack.c.b16 %v512, %v508
          %vm521 = vcmask 130048
          %v523 = vsel %vm521, %v486, 0
          %525 = vmatpush.bf16.msra.mxu0 0
          %526 = vmatpush.bf16.msra.mxu0 0
          %527 = vmatpush.bf16.msra.mxu0 0
          %528 = vmatpush.bf16.msra.mxu0 0
          %529 = vmatpush.bf16.msra.mxu0 0
          %530 = vmatpush.bf16.msra.mxu0 0
          %531 = vmatpush.bf16.msra.mxu0 0
          %532 = vmatpush.bf16.msra.mxu0 %v513
          %533 = vmatmul.bf16.gmra.mxu0 %v523
          %v534 = vpop.f32.mrf.mxu0
          %v535 = vadd.f32 %v493, %v534
          %v536 = vpop.f32.mrf.mxu0
          %v537 = vadd.f32 %v493, %v536
          %538 = vdwg.mxu0
          %539 = vmatpush.bf16.msra.mxu0 0
          %540 = vmatpush.bf16.msra.mxu0 0
          %541 = vmatpush.bf16.msra.mxu0 0
          %542 = vmatpush.bf16.msra.mxu0 0
          %543 = vmatpush.bf16.msra.mxu0 0
          %544 = vmatpush.bf16.msra.mxu0 0
          %545 = vmatpush.bf16.msra.mxu0 0
          %546 = vmatpush.bf16.msra.mxu0 %v514
          %547 = vmatmul.bf16.gmra.mxu0 %v523
          %v548 = vpop.f32.mrf.mxu0
          %v549 = vadd.f32 %v494, %v548
          %v550 = vpop.f32.mrf.mxu0
          %v551 = vadd.f32 %v494, %v550
          %552 = vdwg.mxu0
          %553 = vmatpush.bf16.msra.mxu0 0
          %554 = vmatpush.bf16.msra.mxu0 0
          %555 = vmatpush.bf16.msra.mxu0 0
          %556 = vmatpush.bf16.msra.mxu0 0
          %557 = vmatpush.bf16.msra.mxu0 0
          %558 = vmatpush.bf16.msra.mxu0 0
          %559 = vmatpush.bf16.msra.mxu0 0
          %560 = vmatpush.bf16.msra.mxu0 %v515
          %561 = vmatmul.bf16.gmra.mxu0 %v523
          %v562 = vpop.f32.mrf.mxu0
          %v563 = vadd.f32 %v495, %v562
          %v564 = vpop.f32.mrf.mxu0
          %v565 = vadd.f32 %v495, %v564
          %566 = vdwg.mxu0
          %567 = vmatpush.bf16.msra.mxu0 0
          %568 = vmatpush.bf16.msra.mxu0 0
          %569 = vmatpush.bf16.msra.mxu0 0
          %570 = vmatpush.bf16.msra.mxu0 0
          %571 = vmatpush.bf16.msra.mxu0 0
          %572 = vmatpush.bf16.msra.mxu0 0
          %573 = vmatpush.bf16.msra.mxu0 0
          %574 = vmatpush.bf16.msra.mxu0 %v516
          %575 = vmatmul.bf16.gmra.mxu0 %v523
          %v576 = vpop.f32.mrf.mxu0
          %v577 = vadd.f32 %v496, %v576
          %v578 = vpop.f32.mrf.mxu0
          %v579 = vadd.f32 %v496, %v578
          %580 = vdwg.mxu0
          %v581 = vmax.f32 %v535, 0.0
          %v582 = vmax.f32 %v549, 0.0
          %v583 = vmax.f32 %v563, 0.0
          %v584 = vmax.f32 %v577, 0.0
          %v585 = vmax.f32 %v537, 0.0
          %v586 = vmax.f32 %v551, 0.0
          %v587 = vmax.f32 %v565, 0.0
          %v588 = vmax.f32 %v579, 0.0
          %v589 = vld [vmem:[%s418] sm:$0xff]
          %v590 = vld [vmem:[%s418 + $0x8] sm:$0xff]
          %v591 = vld [vmem:[%s418 + $0x10] sm:$0xff]
          %v592 = vld [vmem:[%s418 + $0x18] sm:$0xff]
          %v593 = vld [vmem:[%s418 + $0x20] sm:$0xff]
          %v594 = vld [vmem:[%s418 + $0x28] sm:$0xff]
          %v595 = vld [vmem:[%s418 + $0x30] sm:$0xff]
          %v596 = vld [vmem:[%s418 + $0x38] sm:$0xff]
          %v597 = vld [vmem:[%s418 + $0x40] sm:$0xff]
          %v598 = vld [vmem:[%s418 + $0x48] sm:$0xff]
          %v599 = vld [vmem:[%s418 + $0x50] sm:$0xff]
          %v600 = vld [vmem:[%s418 + $0x58] sm:$0xff]
          %v601 = vld [vmem:[%s418 + $0x60] sm:$0xff]
          %v602 = vld [vmem:[%s418 + $0x68] sm:$0xff]
          %v603 = vld [vmem:[%s418 + $0x70] sm:$0xff]
          %v604 = vld [vmem:[%s418 + $0x78] sm:$0xff]
          %v605 = vld [vmem:[%s418 + $0x80] sm:$0xff]
          %v606 = vld [vmem:[%s418 + $0x88] sm:$0xff]
          %v607 = vld [vmem:[%s418 + $0x90] sm:$0xff]
          %v608 = vld [vmem:[%s418 + $0x98] sm:$0xff]
          %v609 = vld [vmem:[%s418 + $0xa0] sm:$0xff]
          %v610 = vld [vmem:[%s418 + $0xa8] sm:$0xff]
          %v611 = vld [vmem:[%s418 + $0xb0] sm:$0xff]
          %v612 = vld [vmem:[%s418 + $0xb8] sm:$0xff]
          %v613 = vld [vmem:[%s418 + $0xc0] sm:$0xff]
          %v614 = vld [vmem:[%s418 + $0xc8] sm:$0xff]
          %v615 = vld [vmem:[%s418 + $0xd0] sm:$0xff]
          %v616 = vld [vmem:[%s418 + $0xd8] sm:$0xff]
          %v617 = vld [vmem:[%s418 + $0xe0] sm:$0xff]
          %v618 = vld [vmem:[%s418 + $0xe8] sm:$0xff]
          %v619 = vld [vmem:[%s418 + $0xf0] sm:$0xff]
          %v620 = vld [vmem:[%s418 + $0xf8] sm:$0xff]
          %v621 = vld [vmem:[%s418 + $0x100] sm:$0xff]
          %v622 = vld [vmem:[%s418 + $0x108] sm:$0xff]
          %v623 = vld [vmem:[%s418 + $0x110] sm:$0xff]
          %v624 = vld [vmem:[%s418 + $0x118] sm:$0xff]
          %v625 = vld [vmem:[%s418 + $0x120] sm:$0xff]
          %v626 = vld [vmem:[%s418 + $0x128] sm:$0xff]
          %v627 = vld [vmem:[%s418 + $0x130] sm:$0xff]
          %v628 = vld [vmem:[%s418 + $0x138] sm:$0xff]
          %v629 = vld [vmem:[%s418 + $0x140] sm:$0xff]
          %v630 = vld [vmem:[%s418 + $0x148] sm:$0xff]
          %v631 = vld [vmem:[%s418 + $0x150] sm:$0xff]
          %v632 = vld [vmem:[%s418 + $0x158] sm:$0xff]
          %v633 = vld [vmem:[%s418 + $0x160] sm:$0xff]
          %v634 = vld [vmem:[%s418 + $0x168] sm:$0xff]
          %v635 = vld [vmem:[%s418 + $0x170] sm:$0xff]
          %v636 = vld [vmem:[%s418 + $0x178] sm:$0xff]
          %v637 = vld [vmem:[%s418 + $0x180] sm:$0xff]
          %v638 = vld [vmem:[%s418 + $0x188] sm:$0xff]
          %v639 = vld [vmem:[%s418 + $0x190] sm:$0xff]
          %v640 = vld [vmem:[%s418 + $0x198] sm:$0xff]
          %v641 = vld [vmem:[%s418 + $0x1a0] sm:$0xff]
          %v642 = vld [vmem:[%s418 + $0x1a8] sm:$0xff]
          %v643 = vld [vmem:[%s418 + $0x1b0] sm:$0xff]
          %v644 = vld [vmem:[%s418 + $0x1b8] sm:$0xff]
          %v645 = vld [vmem:[%s418 + $0x1c0] sm:$0xff]
          %v646 = vld [vmem:[%s418 + $0x1c8] sm:$0xff]
          %v647 = vld [vmem:[%s418 + $0x1d0] sm:$0xff]
          %v648 = vld [vmem:[%s418 + $0x1d8] sm:$0xff]
          %v649 = vld [vmem:[%s418 + $0x1e0] sm:$0xff]
          %v650 = vld [vmem:[%s418 + $0x1e8] sm:$0xff]
          %v651 = vld [vmem:[%s418 + $0x1f0] sm:$0xff]
          %v652 = vld [vmem:[%s418 + $0x1f8] sm:$0xff]
          %v653 = vunpack.c.0.s8 %v589
          %v654 = vunpack.c.0.s8 %v590
          %v655 = vunpack.c.0.s8 %v591
          %v656 = vunpack.c.0.s8 %v592
          %v657 = vunpack.c.1.s8 %v589
          %v658 = vunpack.c.1.s8 %v590
          %v659 = vunpack.c.1.s8 %v591
          %v660 = vunpack.c.1.s8 %v592
          %v661 = vunpack.c.2.s8 %v589
          %v662 = vunpack.c.2.s8 %v590
          %v663 = vunpack.c.2.s8 %v591
          %v664 = vunpack.c.2.s8 %v592
          %v665 = vunpack.c.3.s8 %v589
          %v666 = vunpack.c.3.s8 %v590
          %v667 = vunpack.c.3.s8 %v591
          %v668 = vunpack.c.3.s8 %v592
          %v669 = vunpack.c.0.s8 %v593
          %v670 = vunpack.c.0.s8 %v594
          %v671 = vunpack.c.0.s8 %v595
          %v672 = vunpack.c.0.s8 %v596
          %v673 = vunpack.c.1.s8 %v593
          %v674 = vunpack.c.1.s8 %v594
          %v675 = vunpack.c.1.s8 %v595
          %v676 = vunpack.c.1.s8 %v596
          %v677 = vunpack.c.2.s8 %v593
          %v678 = vunpack.c.2.s8 %v594
          %v679 = vunpack.c.2.s8 %v595
          %v680 = vunpack.c.2.s8 %v596
          %v681 = vunpack.c.3.s8 %v593
          %v682 = vunpack.c.3.s8 %v594
          %v683 = vunpack.c.3.s8 %v595
          %v684 = vunpack.c.3.s8 %v596
          %v685 = vunpack.c.0.s8 %v597
          %v686 = vunpack.c.0.s8 %v598
          %v687 = vunpack.c.0.s8 %v599
          %v688 = vunpack.c.0.s8 %v600
          %v689 = vunpack.c.1.s8 %v597
          %v690 = vunpack.c.1.s8 %v598
          %v691 = vunpack.c.1.s8 %v599
          %v692 = vunpack.c.1.s8 %v600
          %v693 = vunpack.c.2.s8 %v597
          %v694 = vunpack.c.2.s8 %v598
          %v695 = vunpack.c.2.s8 %v599
          %v696 = vunpack.c.2.s8 %v600
          %v697 = vunpack.c.3.s8 %v597
          %v698 = vunpack.c.3.s8 %v598
          %v699 = vunpack.c.3.s8 %v599
          %v700 = vunpack.c.3.s8 %v600
          %v701 = vunpack.c.0.s8 %v601
          %v702 = vunpack.c.0.s8 %v602
          %v703 = vunpack.c.0.s8 %v603
          %v704 = vunpack.c.0.s8 %v604
          %v705 = vunpack.c.1.s8 %v601
          %v706 = vunpack.c.1.s8 %v602
          %v707 = vunpack.c.1.s8 %v603
          %v708 = vunpack.c.1.s8 %v604
          %v709 = vunpack.c.2.s8 %v601
          %v710 = vunpack.c.2.s8 %v602
          %v711 = vunpack.c.2.s8 %v603
          %v712 = vunpack.c.2.s8 %v604
          %v713 = vunpack.c.3.s8 %v601
          %v714 = vunpack.c.3.s8 %v602
          %v715 = vunpack.c.3.s8 %v603
          %v716 = vunpack.c.3.s8 %v604
          %v717 = vunpack.c.0.s8 %v605
          %v718 = vunpack.c.0.s8 %v606
          %v719 = vunpack.c.0.s8 %v607
          %v720 = vunpack.c.0.s8 %v608
          %v721 = vunpack.c.1.s8 %v605
          %v722 = vunpack.c.1.s8 %v606
          %v723 = vunpack.c.1.s8 %v607
          %v724 = vunpack.c.1.s8 %v608
          %v725 = vunpack.c.2.s8 %v605
          %v726 = vunpack.c.2.s8 %v606
          %v727 = vunpack.c.2.s8 %v607
          %v728 = vunpack.c.2.s8 %v608
          %v729 = vunpack.c.3.s8 %v605
          %v730 = vunpack.c.3.s8 %v606
          %v731 = vunpack.c.3.s8 %v607
          %v732 = vunpack.c.3.s8 %v608
          %v733 = vunpack.c.0.s8 %v609
          %v734 = vunpack.c.0.s8 %v610
          %v735 = vunpack.c.0.s8 %v611
          %v736 = vunpack.c.0.s8 %v612
          %v737 = vunpack.c.1.s8 %v609
          %v738 = vunpack.c.1.s8 %v610
          %v739 = vunpack.c.1.s8 %v611
          %v740 = vunpack.c.1.s8 %v612
          %v741 = vunpack.c.2.s8 %v609
          %v742 = vunpack.c.2.s8 %v610
          %v743 = vunpack.c.2.s8 %v611
          %v744 = vunpack.c.2.s8 %v612
          %v745 = vunpack.c.3.s8 %v609
          %v746 = vunpack.c.3.s8 %v610
          %v747 = vunpack.c.3.s8 %v611
          %v748 = vunpack.c.3.s8 %v612
          %v749 = vunpack.c.0.s8 %v613
          %v750 = vunpack.c.0.s8 %v614
          %v751 = vunpack.c.0.s8 %v615
          %v752 = vunpack.c.0.s8 %v616
          %v753 = vunpack.c.1.s8 %v613
          %v754 = vunpack.c.1.s8 %v614
          %v755 = vunpack.c.1.s8 %v615
          %v756 = vunpack.c.1.s8 %v616
          %v757 = vunpack.c.2.s8 %v613
          %v758 = vunpack.c.2.s8 %v614
          %v759 = vunpack.c.2.s8 %v615
          %v760 = vunpack.c.2.s8 %v616
          %v761 = vunpack.c.3.s8 %v613
          %v762 = vunpack.c.3.s8 %v614
          %v763 = vunpack.c.3.s8 %v615
          %v764 = vunpack.c.3.s8 %v616
          %v765 = vunpack.c.0.s8 %v617
          %v766 = vunpack.c.0.s8 %v618
          %v767 = vunpack.c.0.s8 %v619
          %v768 = vunpack.c.0.s8 %v620
          %v769 = vunpack.c.1.s8 %v617
          %v770 = vunpack.c.1.s8 %v618
          %v771 = vunpack.c.1.s8 %v619
          %v772 = vunpack.c.1.s8 %v620
          %v773 = vunpack.c.2.s8 %v617
          %v774 = vunpack.c.2.s8 %v618
          %v775 = vunpack.c.2.s8 %v619
          %v776 = vunpack.c.2.s8 %v620
          %v777 = vunpack.c.3.s8 %v617
          %v778 = vunpack.c.3.s8 %v618
          %v779 = vunpack.c.3.s8 %v619
          %v780 = vunpack.c.3.s8 %v620
          %v781 = vunpack.c.0.s8 %v621
          %v782 = vunpack.c.0.s8 %v622
          %v783 = vunpack.c.0.s8 %v623
          %v784 = vunpack.c.0.s8 %v624
          %v785 = vunpack.c.1.s8 %v621
          %v786 = vunpack.c.1.s8 %v622
          %v787 = vunpack.c.1.s8 %v623
          %v788 = vunpack.c.1.s8 %v624
          %v789 = vunpack.c.2.s8 %v621
          %v790 = vunpack.c.2.s8 %v622
          %v791 = vunpack.c.2.s8 %v623
          %v792 = vunpack.c.2.s8 %v624
          %v793 = vunpack.c.3.s8 %v621
          %v794 = vunpack.c.3.s8 %v622
          %v795 = vunpack.c.3.s8 %v623
          %v796 = vunpack.c.3.s8 %v624
          %v797 = vunpack.c.0.s8 %v625
          %v798 = vunpack.c.0.s8 %v626
          %v799 = vunpack.c.0.s8 %v627
          %v800 = vunpack.c.0.s8 %v628
          %v801 = vunpack.c.1.s8 %v625
          %v802 = vunpack.c.1.s8 %v626
          %v803 = vunpack.c.1.s8 %v627
          %v804 = vunpack.c.1.s8 %v628
          %v805 = vunpack.c.2.s8 %v625
          %v806 = vunpack.c.2.s8 %v626
          %v807 = vunpack.c.2.s8 %v627
          %v808 = vunpack.c.2.s8 %v628
          %v809 = vunpack.c.3.s8 %v625
          %v810 = vunpack.c.3.s8 %v626
          %v811 = vunpack.c.3.s8 %v627
          %v812 = vunpack.c.3.s8 %v628
          %v813 = vunpack.c.0.s8 %v629
          %v814 = vunpack.c.0.s8 %v630
          %v815 = vunpack.c.0.s8 %v631
          %v816 = vunpack.c.0.s8 %v632
          %v817 = vunpack.c.1.s8 %v629
          %v818 = vunpack.c.1.s8 %v630
          %v819 = vunpack.c.1.s8 %v631
          %v820 = vunpack.c.1.s8 %v632
          %v821 = vunpack.c.2.s8 %v629
          %v822 = vunpack.c.2.s8 %v630
          %v823 = vunpack.c.2.s8 %v631
          %v824 = vunpack.c.2.s8 %v632
          %v825 = vunpack.c.3.s8 %v629
          %v826 = vunpack.c.3.s8 %v630
          %v827 = vunpack.c.3.s8 %v631
          %v828 = vunpack.c.3.s8 %v632
          %v829 = vunpack.c.0.s8 %v633
          %v830 = vunpack.c.0.s8 %v634
          %v831 = vunpack.c.0.s8 %v635
          %v832 = vunpack.c.0.s8 %v636
          %v833 = vunpack.c.1.s8 %v633
          %v834 = vunpack.c.1.s8 %v634
          %v835 = vunpack.c.1.s8 %v635
          %v836 = vunpack.c.1.s8 %v636
          %v837 = vunpack.c.2.s8 %v633
          %v838 = vunpack.c.2.s8 %v634
          %v839 = vunpack.c.2.s8 %v635
          %v840 = vunpack.c.2.s8 %v636
          %v841 = vunpack.c.3.s8 %v633
          %v842 = vunpack.c.3.s8 %v634
          %v843 = vunpack.c.3.s8 %v635
          %v844 = vunpack.c.3.s8 %v636
          %v845 = vunpack.c.0.s8 %v637
          %v846 = vunpack.c.0.s8 %v638
          %v847 = vunpack.c.0.s8 %v639
          %v848 = vunpack.c.0.s8 %v640
          %v849 = vunpack.c.1.s8 %v637
          %v850 = vunpack.c.1.s8 %v638
          %v851 = vunpack.c.1.s8 %v639
          %v852 = vunpack.c.1.s8 %v640
          %v853 = vunpack.c.2.s8 %v637
          %v854 = vunpack.c.2.s8 %v638
          %v855 = vunpack.c.2.s8 %v639
          %v856 = vunpack.c.2.s8 %v640
          %v857 = vunpack.c.3.s8 %v637
          %v858 = vunpack.c.3.s8 %v638
          %v859 = vunpack.c.3.s8 %v639
          %v860 = vunpack.c.3.s8 %v640
          %v861 = vunpack.c.0.s8 %v641
          %v862 = vunpack.c.0.s8 %v642
          %v863 = vunpack.c.0.s8 %v643
          %v864 = vunpack.c.0.s8 %v644
          %v865 = vunpack.c.1.s8 %v641
          %v866 = vunpack.c.1.s8 %v642
          %v867 = vunpack.c.1.s8 %v643
          %v868 = vunpack.c.1.s8 %v644
          %v869 = vunpack.c.2.s8 %v641
          %v870 = vunpack.c.2.s8 %v642
          %v871 = vunpack.c.2.s8 %v643
          %v872 = vunpack.c.2.s8 %v644
          %v873 = vunpack.c.3.s8 %v641
          %v874 = vunpack.c.3.s8 %v642
          %v875 = vunpack.c.3.s8 %v643
          %v876 = vunpack.c.3.s8 %v644
          %v877 = vunpack.c.0.s8 %v645
          %v878 = vunpack.c.0.s8 %v646
          %v879 = vunpack.c.0.s8 %v647
          %v880 = vunpack.c.0.s8 %v648
          %v881 = vunpack.c.1.s8 %v645
          %v882 = vunpack.c.1.s8 %v646
          %v883 = vunpack.c.1.s8 %v647
          %v884 = vunpack.c.1.s8 %v648
          %v885 = vunpack.c.2.s8 %v645
          %v886 = vunpack.c.2.s8 %v646
          %v887 = vunpack.c.2.s8 %v647
          %v888 = vunpack.c.2.s8 %v648
          %v889 = vunpack.c.3.s8 %v645
          %v890 = vunpack.c.3.s8 %v646
          %v891 = vunpack.c.3.s8 %v647
          %v892 = vunpack.c.3.s8 %v648
          %v893 = vunpack.c.0.s8 %v649
          %v894 = vunpack.c.0.s8 %v650
          %v895 = vunpack.c.0.s8 %v651
          %v896 = vunpack.c.0.s8 %v652
          %v897 = vunpack.c.1.s8 %v649
          %v898 = vunpack.c.1.s8 %v650
          %v899 = vunpack.c.1.s8 %v651
          %v900 = vunpack.c.1.s8 %v652
          %v901 = vunpack.c.2.s8 %v649
          %v902 = vunpack.c.2.s8 %v650
          %v903 = vunpack.c.2.s8 %v651
          %v904 = vunpack.c.2.s8 %v652
          %v905 = vunpack.c.3.s8 %v649
          %v906 = vunpack.c.3.s8 %v650
          %v907 = vunpack.c.3.s8 %v651
          %v908 = vunpack.c.3.s8 %v652
          %v909 = vcvt.s32.f32 %v653
          %v910 = vcvt.s32.f32 %v654
          %v911 = vcvt.s32.f32 %v655
          %v912 = vcvt.s32.f32 %v656
          %v913 = vcvt.s32.f32 %v657
          %v914 = vcvt.s32.f32 %v658
          %v915 = vcvt.s32.f32 %v659
          %v916 = vcvt.s32.f32 %v660
          %v917 = vcvt.s32.f32 %v661
          %v918 = vcvt.s32.f32 %v662
          %v919 = vcvt.s32.f32 %v663
          %v920 = vcvt.s32.f32 %v664
          %v921 = vcvt.s32.f32 %v665
          %v922 = vcvt.s32.f32 %v666
          %v923 = vcvt.s32.f32 %v667
          %v924 = vcvt.s32.f32 %v668
          %v925 = vcvt.s32.f32 %v669
          %v926 = vcvt.s32.f32 %v670
          %v927 = vcvt.s32.f32 %v671
          %v928 = vcvt.s32.f32 %v672
          %v929 = vcvt.s32.f32 %v673
          %v930 = vcvt.s32.f32 %v674
          %v931 = vcvt.s32.f32 %v675
          %v932 = vcvt.s32.f32 %v676
          %v933 = vcvt.s32.f32 %v677
          %v934 = vcvt.s32.f32 %v678
          %v935 = vcvt.s32.f32 %v679
          %v936 = vcvt.s32.f32 %v680
          %v937 = vcvt.s32.f32 %v681
          %v938 = vcvt.s32.f32 %v682
          %v939 = vcvt.s32.f32 %v683
          %v940 = vcvt.s32.f32 %v684
          %v941 = vcvt.s32.f32 %v685
          %v942 = vcvt.s32.f32 %v686
          %v943 = vcvt.s32.f32 %v687
          %v944 = vcvt.s32.f32 %v688
          %v945 = vcvt.s32.f32 %v689
          %v946 = vcvt.s32.f32 %v690
          %v947 = vcvt.s32.f32 %v691
          %v948 = vcvt.s32.f32 %v692
          %v949 = vcvt.s32.f32 %v693
          %v950 = vcvt.s32.f32 %v694
          %v951 = vcvt.s32.f32 %v695
          %v952 = vcvt.s32.f32 %v696
          %v953 = vcvt.s32.f32 %v697
          %v954 = vcvt.s32.f32 %v698
          %v955 = vcvt.s32.f32 %v699
          %v956 = vcvt.s32.f32 %v700
          %v957 = vcvt.s32.f32 %v701
          %v958 = vcvt.s32.f32 %v702
          %v959 = vcvt.s32.f32 %v703
          %v960 = vcvt.s32.f32 %v704
          %v961 = vcvt.s32.f32 %v705
          %v962 = vcvt.s32.f32 %v706
          %v963 = vcvt.s32.f32 %v707
          %v964 = vcvt.s32.f32 %v708
          %v965 = vcvt.s32.f32 %v709
          %v966 = vcvt.s32.f32 %v710
          %v967 = vcvt.s32.f32 %v711
          %v968 = vcvt.s32.f32 %v712
          %v969 = vcvt.s32.f32 %v713
          %v970 = vcvt.s32.f32 %v714
          %v971 = vcvt.s32.f32 %v715
          %v972 = vcvt.s32.f32 %v716
          %v973 = vcvt.s32.f32 %v717
          %v974 = vcvt.s32.f32 %v718
          %v975 = vcvt.s32.f32 %v719
          %v976 = vcvt.s32.f32 %v720
          %v977 = vcvt.s32.f32 %v721
          %v978 = vcvt.s32.f32 %v722
          %v979 = vcvt.s32.f32 %v723
          %v980 = vcvt.s32.f32 %v724
          %v981 = vcvt.s32.f32 %v725
          %v982 = vcvt.s32.f32 %v726
          %v983 = vcvt.s32.f32 %v727
          %v984 = vcvt.s32.f32 %v728
          %v985 = vcvt.s32.f32 %v729
          %v986 = vcvt.s32.f32 %v730
          %v987 = vcvt.s32.f32 %v731
          %v988 = vcvt.s32.f32 %v732
          %v989 = vcvt.s32.f32 %v733
          %v990 = vcvt.s32.f32 %v734
          %v991 = vcvt.s32.f32 %v735
          %v992 = vcvt.s32.f32 %v736
          %v993 = vcvt.s32.f32 %v737
          %v994 = vcvt.s32.f32 %v738
          %v995 = vcvt.s32.f32 %v739
          %v996 = vcvt.s32.f32 %v740
          %v997 = vcvt.s32.f32 %v741
          %v998 = vcvt.s32.f32 %v742
          %v999 = vcvt.s32.f32 %v743
          %v1000 = vcvt.s32.f32 %v744
          %v1001 = vcvt.s32.f32 %v745
          %v1002 = vcvt.s32.f32 %v746
          %v1003 = vcvt.s32.f32 %v747
          %v1004 = vcvt.s32.f32 %v748
          %v1005 = vcvt.s32.f32 %v749
          %v1006 = vcvt.s32.f32 %v750
          %v1007 = vcvt.s32.f32 %v751
          %v1008 = vcvt.s32.f32 %v752
          %v1009 = vcvt.s32.f32 %v753
          %v1010 = vcvt.s32.f32 %v754
          %v1011 = vcvt.s32.f32 %v755
          %v1012 = vcvt.s32.f32 %v756
          %v1013 = vcvt.s32.f32 %v757
          %v1014 = vcvt.s32.f32 %v758
          %v1015 = vcvt.s32.f32 %v759
          %v1016 = vcvt.s32.f32 %v760
          %v1017 = vcvt.s32.f32 %v761
          %v1018 = vcvt.s32.f32 %v762
          %v1019 = vcvt.s32.f32 %v763
          %v1020 = vcvt.s32.f32 %v764
          %v1021 = vcvt.s32.f32 %v765
          %v1022 = vcvt.s32.f32 %v766
          %v1023 = vcvt.s32.f32 %v767
          %v1024 = vcvt.s32.f32 %v768
          %v1025 = vcvt.s32.f32 %v769
          %v1026 = vcvt.s32.f32 %v770
          %v1027 = vcvt.s32.f32 %v771
          %v1028 = vcvt.s32.f32 %v772
          %v1029 = vcvt.s32.f32 %v773
          %v1030 = vcvt.s32.f32 %v774
          %v1031 = vcvt.s32.f32 %v775
          %v1032 = vcvt.s32.f32 %v776
          %v1033 = vcvt.s32.f32 %v777
          %v1034 = vcvt.s32.f32 %v778
          %v1035 = vcvt.s32.f32 %v779
          %v1036 = vcvt.s32.f32 %v780
          %v1037 = vcvt.s32.f32 %v781
          %v1038 = vcvt.s32.f32 %v782
          %v1039 = vcvt.s32.f32 %v783
          %v1040 = vcvt.s32.f32 %v784
          %v1041 = vcvt.s32.f32 %v785
          %v1042 = vcvt.s32.f32 %v786
          %v1043 = vcvt.s32.f32 %v787
          %v1044 = vcvt.s32.f32 %v788
          %v1045 = vcvt.s32.f32 %v789
          %v1046 = vcvt.s32.f32 %v790
          %v1047 = vcvt.s32.f32 %v791
          %v1048 = vcvt.s32.f32 %v792
          %v1049 = vcvt.s32.f32 %v793
          %v1050 = vcvt.s32.f32 %v794
          %v1051 = vcvt.s32.f32 %v795
          %v1052 = vcvt.s32.f32 %v796
          %v1053 = vcvt.s32.f32 %v797
          %v1054 = vcvt.s32.f32 %v798
          %v1055 = vcvt.s32.f32 %v799
          %v1056 = vcvt.s32.f32 %v800
          %v1057 = vcvt.s32.f32 %v801
          %v1058 = vcvt.s32.f32 %v802
          %v1059 = vcvt.s32.f32 %v803
          %v1060 = vcvt.s32.f32 %v804
          %v1061 = vcvt.s32.f32 %v805
          %v1062 = vcvt.s32.f32 %v806
          %v1063 = vcvt.s32.f32 %v807
          %v1064 = vcvt.s32.f32 %v808
          %v1065 = vcvt.s32.f32 %v809
          %v1066 = vcvt.s32.f32 %v810
          %v1067 = vcvt.s32.f32 %v811
          %v1068 = vcvt.s32.f32 %v812
          %v1069 = vcvt.s32.f32 %v813
          %v1070 = vcvt.s32.f32 %v814
          %v1071 = vcvt.s32.f32 %v815
          %v1072 = vcvt.s32.f32 %v816
          %v1073 = vcvt.s32.f32 %v817
          %v1074 = vcvt.s32.f32 %v818
          %v1075 = vcvt.s32.f32 %v819
          %v1076 = vcvt.s32.f32 %v820
          %v1077 = vcvt.s32.f32 %v821
          %v1078 = vcvt.s32.f32 %v822
          %v1079 = vcvt.s32.f32 %v823
          %v1080 = vcvt.s32.f32 %v824
          %v1081 = vcvt.s32.f32 %v825
          %v1082 = vcvt.s32.f32 %v826
          %v1083 = vcvt.s32.f32 %v827
          %v1084 = vcvt.s32.f32 %v828
          %v1085 = vcvt.s32.f32 %v829
          %v1086 = vcvt.s32.f32 %v830
          %v1087 = vcvt.s32.f32 %v831
          %v1088 = vcvt.s32.f32 %v832
          %v1089 = vcvt.s32.f32 %v833
          %v1090 = vcvt.s32.f32 %v834
          %v1091 = vcvt.s32.f32 %v835
          %v1092 = vcvt.s32.f32 %v836
          %v1093 = vcvt.s32.f32 %v837
          %v1094 = vcvt.s32.f32 %v838
          %v1095 = vcvt.s32.f32 %v839
          %v1096 = vcvt.s32.f32 %v840
          %v1097 = vcvt.s32.f32 %v841
          %v1098 = vcvt.s32.f32 %v842
          %v1099 = vcvt.s32.f32 %v843
          %v1100 = vcvt.s32.f32 %v844
          %v1101 = vcvt.s32.f32 %v845
          %v1102 = vcvt.s32.f32 %v846
          %v1103 = vcvt.s32.f32 %v847
          %v1104 = vcvt.s32.f32 %v848
          %v1105 = vcvt.s32.f32 %v849
          %v1106 = vcvt.s32.f32 %v850
          %v1107 = vcvt.s32.f32 %v851
          %v1108 = vcvt.s32.f32 %v852
          %v1109 = vcvt.s32.f32 %v853
          %v1110 = vcvt.s32.f32 %v854
          %v1111 = vcvt.s32.f32 %v855
          %v1112 = vcvt.s32.f32 %v856
          %v1113 = vcvt.s32.f32 %v857
          %v1114 = vcvt.s32.f32 %v858
          %v1115 = vcvt.s32.f32 %v859
          %v1116 = vcvt.s32.f32 %v860
          %v1117 = vcvt.s32.f32 %v861
          %v1118 = vcvt.s32.f32 %v862
          %v1119 = vcvt.s32.f32 %v863
          %v1120 = vcvt.s32.f32 %v864
          %v1121 = vcvt.s32.f32 %v865
          %v1122 = vcvt.s32.f32 %v866
          %v1123 = vcvt.s32.f32 %v867
          %v1124 = vcvt.s32.f32 %v868
          %v1125 = vcvt.s32.f32 %v869
          %v1126 = vcvt.s32.f32 %v870
          %v1127 = vcvt.s32.f32 %v871
          %v1128 = vcvt.s32.f32 %v872
          %v1129 = vcvt.s32.f32 %v873
          %v1130 = vcvt.s32.f32 %v874
          %v1131 = vcvt.s32.f32 %v875
          %v1132 = vcvt.s32.f32 %v876
          %v1133 = vcvt.s32.f32 %v877
          %v1134 = vcvt.s32.f32 %v878
          %v1135 = vcvt.s32.f32 %v879
          %v1136 = vcvt.s32.f32 %v880
          %v1137 = vcvt.s32.f32 %v881
          %v1138 = vcvt.s32.f32 %v882
          %v1139 = vcvt.s32.f32 %v883
          %v1140 = vcvt.s32.f32 %v884
          %v1141 = vcvt.s32.f32 %v885
          %v1142 = vcvt.s32.f32 %v886
          %v1143 = vcvt.s32.f32 %v887
          %v1144 = vcvt.s32.f32 %v888
          %v1145 = vcvt.s32.f32 %v889
          %v1146 = vcvt.s32.f32 %v890
          %v1147 = vcvt.s32.f32 %v891
          %v1148 = vcvt.s32.f32 %v892
          %v1149 = vcvt.s32.f32 %v893
          %v1150 = vcvt.s32.f32 %v894
          %v1151 = vcvt.s32.f32 %v895
          %v1152 = vcvt.s32.f32 %v896
          %v1153 = vcvt.s32.f32 %v897
          %v1154 = vcvt.s32.f32 %v898
          %v1155 = vcvt.s32.f32 %v899
          %v1156 = vcvt.s32.f32 %v900
          %v1157 = vcvt.s32.f32 %v901
          %v1158 = vcvt.s32.f32 %v902
          %v1159 = vcvt.s32.f32 %v903
          %v1160 = vcvt.s32.f32 %v904
          %v1161 = vcvt.s32.f32 %v905
          %v1162 = vcvt.s32.f32 %v906
          %v1163 = vcvt.s32.f32 %v907
          %v1164 = vcvt.s32.f32 %v908
          %v1165 = vpack.c.bf16 %v913, %v909
          %v1166 = vpack.c.bf16 %v914, %v910
          %v1167 = vpack.c.bf16 %v915, %v911
          %v1168 = vpack.c.bf16 %v916, %v912
          %v1169 = vpack.c.bf16 %v921, %v917
          %v1170 = vpack.c.bf16 %v922, %v918
          %v1171 = vpack.c.bf16 %v923, %v919
          %v1172 = vpack.c.bf16 %v924, %v920
          %v1173 = vpack.c.bf16 %v929, %v925
          %v1174 = vpack.c.bf16 %v930, %v926
          %v1175 = vpack.c.bf16 %v931, %v927
          %v1176 = vpack.c.bf16 %v932, %v928
          %v1177 = vpack.c.bf16 %v937, %v933
          %v1178 = vpack.c.bf16 %v938, %v934
          %v1179 = vpack.c.bf16 %v939, %v935
          %v1180 = vpack.c.bf16 %v940, %v936
          %v1181 = vpack.c.bf16 %v945, %v941
          %v1182 = vpack.c.bf16 %v946, %v942
          %v1183 = vpack.c.bf16 %v947, %v943
          %v1184 = vpack.c.bf16 %v948, %v944
          %v1185 = vpack.c.bf16 %v953, %v949
          %v1186 = vpack.c.bf16 %v954, %v950
          %v1187 = vpack.c.bf16 %v955, %v951
          %v1188 = vpack.c.bf16 %v956, %v952
          %v1189 = vpack.c.bf16 %v961, %v957
          %v1190 = vpack.c.bf16 %v962, %v958
          %v1191 = vpack.c.bf16 %v963, %v959
          %v1192 = vpack.c.bf16 %v964, %v960
          %v1193 = vpack.c.bf16 %v969, %v965
          %v1194 = vpack.c.bf16 %v970, %v966
          %v1195 = vpack.c.bf16 %v971, %v967
          %v1196 = vpack.c.bf16 %v972, %v968
          %v1197 = vpack.c.bf16 %v977, %v973
          %v1198 = vpack.c.bf16 %v978, %v974
          %v1199 = vpack.c.bf16 %v979, %v975
          %v1200 = vpack.c.bf16 %v980, %v976
          %v1201 = vpack.c.bf16 %v985, %v981
          %v1202 = vpack.c.bf16 %v986, %v982
          %v1203 = vpack.c.bf16 %v987, %v983
          %v1204 = vpack.c.bf16 %v988, %v984
          %v1205 = vpack.c.bf16 %v993, %v989
          %v1206 = vpack.c.bf16 %v994, %v990
          %v1207 = vpack.c.bf16 %v995, %v991
          %v1208 = vpack.c.bf16 %v996, %v992
          %v1209 = vpack.c.bf16 %v1001, %v997
          %v1210 = vpack.c.bf16 %v1002, %v998
          %v1211 = vpack.c.bf16 %v1003, %v999
          %v1212 = vpack.c.bf16 %v1004, %v1000
          %v1213 = vpack.c.bf16 %v1009, %v1005
          %v1214 = vpack.c.bf16 %v1010, %v1006
          %v1215 = vpack.c.bf16 %v1011, %v1007
          %v1216 = vpack.c.bf16 %v1012, %v1008
          %v1217 = vpack.c.bf16 %v1017, %v1013
          %v1218 = vpack.c.bf16 %v1018, %v1014
          %v1219 = vpack.c.bf16 %v1019, %v1015
          %v1220 = vpack.c.bf16 %v1020, %v1016
          %v1221 = vpack.c.bf16 %v1025, %v1021
          %v1222 = vpack.c.bf16 %v1026, %v1022
          %v1223 = vpack.c.bf16 %v1027, %v1023
          %v1224 = vpack.c.bf16 %v1028, %v1024
          %v1225 = vpack.c.bf16 %v1033, %v1029
          %v1226 = vpack.c.bf16 %v1034, %v1030
          %v1227 = vpack.c.bf16 %v1035, %v1031
          %v1228 = vpack.c.bf16 %v1036, %v1032
          %v1229 = vpack.c.bf16 %v1041, %v1037
          %v1230 = vpack.c.bf16 %v1042, %v1038
          %v1231 = vpack.c.bf16 %v1043, %v1039
          %v1232 = vpack.c.bf16 %v1044, %v1040
          %v1233 = vpack.c.bf16 %v1049, %v1045
          %v1234 = vpack.c.bf16 %v1050, %v1046
          %v1235 = vpack.c.bf16 %v1051, %v1047
          %v1236 = vpack.c.bf16 %v1052, %v1048
          %v1237 = vpack.c.bf16 %v1057, %v1053
          %v1238 = vpack.c.bf16 %v1058, %v1054
          %v1239 = vpack.c.bf16 %v1059, %v1055
          %v1240 = vpack.c.bf16 %v1060, %v1056
          %v1241 = vpack.c.bf16 %v1065, %v1061
          %v1242 = vpack.c.bf16 %v1066, %v1062
          %v1243 = vpack.c.bf16 %v1067, %v1063
          %v1244 = vpack.c.bf16 %v1068, %v1064
          %v1245 = vpack.c.bf16 %v1073, %v1069
          %v1246 = vpack.c.bf16 %v1074, %v1070
          %v1247 = vpack.c.bf16 %v1075, %v1071
          %v1248 = vpack.c.bf16 %v1076, %v1072
          %v1249 = vpack.c.bf16 %v1081, %v1077
          %v1250 = vpack.c.bf16 %v1082, %v1078
          %v1251 = vpack.c.bf16 %v1083, %v1079
          %v1252 = vpack.c.bf16 %v1084, %v1080
          %v1253 = vpack.c.bf16 %v1089, %v1085
          %v1254 = vpack.c.bf16 %v1090, %v1086
          %v1255 = vpack.c.bf16 %v1091, %v1087
          %v1256 = vpack.c.bf16 %v1092, %v1088
          %v1257 = vpack.c.bf16 %v1097, %v1093
          %v1258 = vpack.c.bf16 %v1098, %v1094
          %v1259 = vpack.c.bf16 %v1099, %v1095
          %v1260 = vpack.c.bf16 %v1100, %v1096
          %v1261 = vpack.c.bf16 %v1105, %v1101
          %v1262 = vpack.c.bf16 %v1106, %v1102
          %v1263 = vpack.c.bf16 %v1107, %v1103
          %v1264 = vpack.c.bf16 %v1108, %v1104
          %v1265 = vpack.c.bf16 %v1113, %v1109
          %v1266 = vpack.c.bf16 %v1114, %v1110
          %v1267 = vpack.c.bf16 %v1115, %v1111
          %v1268 = vpack.c.bf16 %v1116, %v1112
          %v1269 = vpack.c.bf16 %v1121, %v1117
          %v1270 = vpack.c.bf16 %v1122, %v1118
          %v1271 = vpack.c.bf16 %v1123, %v1119
          %v1272 = vpack.c.bf16 %v1124, %v1120
          %v1273 = vpack.c.bf16 %v1129, %v1125
          %v1274 = vpack.c.bf16 %v1130, %v1126
          %v1275 = vpack.c.bf16 %v1131, %v1127
          %v1276 = vpack.c.bf16 %v1132, %v1128
          %v1277 = vpack.c.bf16 %v1137, %v1133
          %v1278 = vpack.c.bf16 %v1138, %v1134
          %v1279 = vpack.c.bf16 %v1139, %v1135
          %v1280 = vpack.c.bf16 %v1140, %v1136
          %v1281 = vpack.c.bf16 %v1145, %v1141
          %v1282 = vpack.c.bf16 %v1146, %v1142
          %v1283 = vpack.c.bf16 %v1147, %v1143
          %v1284 = vpack.c.bf16 %v1148, %v1144
          %v1285 = vpack.c.bf16 %v1153, %v1149
          %v1286 = vpack.c.bf16 %v1154, %v1150
          %v1287 = vpack.c.bf16 %v1155, %v1151
          %v1288 = vpack.c.bf16 %v1156, %v1152
          %v1289 = vpack.c.bf16 %v1161, %v1157
          %v1290 = vpack.c.bf16 %v1162, %v1158
          %v1291 = vpack.c.bf16 %v1163, %v1159
          %v1292 = vpack.c.bf16 %v1164, %v1160
          %v1293 = vpack.c.bf16 %v585, %v581
          %v1294 = vpack.c.bf16 %v586, %v582
          %v1295 = vpack.c.bf16 %v587, %v583
          %v1296 = vpack.c.bf16 %v588, %v584
          %1297 = vmatpush.bf16.msra.mxu0 %v1193
          %1298 = vmatpush.bf16.msra.mxu0 %v1189
          %1299 = vmatpush.bf16.msra.mxu0 %v1185
          %1300 = vmatpush.bf16.msra.mxu0 %v1181
          %1301 = vmatpush.bf16.msra.mxu0 %v1177
          %1302 = vmatpush.bf16.msra.mxu0 %v1173
          %1303 = vmatpush.bf16.msra.mxu0 %v1169
          %1304 = vmatpush.bf16.msra.mxu0 %v1165
          %1305 = vmatmul.bf16.gmra.mxu0 %v1293
          %v1306 = vpop.f32.mrf.mxu0
          %v1307 = vadd.f32 0.0, %v1306
          %v1308 = vpop.f32.mrf.mxu0
          %v1309 = vadd.f32 0.0, %v1308
          %1310 = vdwg.mxu0
          %1311 = vmatpush.bf16.msra.mxu0 %v1225
          %1312 = vmatpush.bf16.msra.mxu0 %v1221
          %1313 = vmatpush.bf16.msra.mxu0 %v1217
          %1314 = vmatpush.bf16.msra.mxu0 %v1213
          %1315 = vmatpush.bf16.msra.mxu0 %v1209
          %1316 = vmatpush.bf16.msra.mxu0 %v1205
          %1317 = vmatpush.bf16.msra.mxu0 %v1201
          %1318 = vmatpush.bf16.msra.mxu0 %v1197
          %1319 = vmatmul.bf16.gmra.mxu0 %v1294
          %v1320 = vpop.f32.mrf.mxu0
          %v1321 = vadd.f32 %v1307, %v1320
          %v1322 = vpop.f32.mrf.mxu0
          %v1323 = vadd.f32 %v1309, %v1322
          %1324 = vdwg.mxu0
          %1325 = vmatpush.bf16.msra.mxu0 %v1257
          %1326 = vmatpush.bf16.msra.mxu0 %v1253
          %1327 = vmatpush.bf16.msra.mxu0 %v1249
          %1328 = vmatpush.bf16.msra.mxu0 %v1245
          %1329 = vmatpush.bf16.msra.mxu0 %v1241
          %1330 = vmatpush.bf16.msra.mxu0 %v1237
          %1331 = vmatpush.bf16.msra.mxu0 %v1233
          %1332 = vmatpush.bf16.msra.mxu0 %v1229
          %1333 = vmatmul.bf16.gmra.mxu0 %v1295
          %v1334 = vpop.f32.mrf.mxu0
          %v1335 = vadd.f32 %v1321, %v1334
          %v1336 = vpop.f32.mrf.mxu0
          %v1337 = vadd.f32 %v1323, %v1336
          %1338 = vdwg.mxu0
          %1339 = vmatpush.bf16.msra.mxu0 %v1289
          %1340 = vmatpush.bf16.msra.mxu0 %v1285
          %1341 = vmatpush.bf16.msra.mxu0 %v1281
          %1342 = vmatpush.bf16.msra.mxu0 %v1277
          %1343 = vmatpush.bf16.msra.mxu0 %v1273
          %1344 = vmatpush.bf16.msra.mxu0 %v1269
          %1345 = vmatpush.bf16.msra.mxu0 %v1265
          %1346 = vmatpush.bf16.msra.mxu0 %v1261
          %1347 = vmatmul.bf16.gmra.mxu0 %v1296
          %v1348 = vpop.f32.mrf.mxu0
          %v1349 = vadd.f32 %v1335, %v1348
          %v1350 = vpop.f32.mrf.mxu0
          %v1351 = vadd.f32 %v1337, %v1350
          %1352 = vdwg.mxu0
          %1353 = vmatpush.bf16.msra.mxu0 %v1194
          %1354 = vmatpush.bf16.msra.mxu0 %v1190
          %1355 = vmatpush.bf16.msra.mxu0 %v1186
          %1356 = vmatpush.bf16.msra.mxu0 %v1182
          %1357 = vmatpush.bf16.msra.mxu0 %v1178
          %1358 = vmatpush.bf16.msra.mxu0 %v1174
          %1359 = vmatpush.bf16.msra.mxu0 %v1170
          %1360 = vmatpush.bf16.msra.mxu0 %v1166
          %1361 = vmatmul.bf16.gmra.mxu0 %v1293
          %v1362 = vpop.f32.mrf.mxu0
          %v1363 = vadd.f32 0.0, %v1362
          %v1364 = vpop.f32.mrf.mxu0
          %v1365 = vadd.f32 0.0, %v1364
          %1366 = vdwg.mxu0
          %1367 = vmatpush.bf16.msra.mxu0 %v1226
          %1368 = vmatpush.bf16.msra.mxu0 %v1222
          %1369 = vmatpush.bf16.msra.mxu0 %v1218
          %1370 = vmatpush.bf16.msra.mxu0 %v1214
          %1371 = vmatpush.bf16.msra.mxu0 %v1210
          %1372 = vmatpush.bf16.msra.mxu0 %v1206
          %1373 = vmatpush.bf16.msra.mxu0 %v1202
          %1374 = vmatpush.bf16.msra.mxu0 %v1198
          %1375 = vmatmul.bf16.gmra.mxu0 %v1294
          %v1376 = vpop.f32.mrf.mxu0
          %v1377 = vadd.f32 %v1363, %v1376
          %v1378 = vpop.f32.mrf.mxu0
          %v1379 = vadd.f32 %v1365, %v1378
          %1380 = vdwg.mxu0
          %1381 = vmatpush.bf16.msra.mxu0 %v1258
          %1382 = vmatpush.bf16.msra.mxu0 %v1254
          %1383 = vmatpush.bf16.msra.mxu0 %v1250
          %1384 = vmatpush.bf16.msra.mxu0 %v1246
          %1385 = vmatpush.bf16.msra.mxu0 %v1242
          %1386 = vmatpush.bf16.msra.mxu0 %v1238
          %1387 = vmatpush.bf16.msra.mxu0 %v1234
          %1388 = vmatpush.bf16.msra.mxu0 %v1230
          %1389 = vmatmul.bf16.gmra.mxu0 %v1295
          %v1390 = vpop.f32.mrf.mxu0
          %v1391 = vadd.f32 %v1377, %v1390
          %v1392 = vpop.f32.mrf.mxu0
          %v1393 = vadd.f32 %v1379, %v1392
          %1394 = vdwg.mxu0
          %1395 = vmatpush.bf16.msra.mxu0 %v1290
          %1396 = vmatpush.bf16.msra.mxu0 %v1286
          %1397 = vmatpush.bf16.msra.mxu0 %v1282
          %1398 = vmatpush.bf16.msra.mxu0 %v1278
          %1399 = vmatpush.bf16.msra.mxu0 %v1274
          %1400 = vmatpush.bf16.msra.mxu0 %v1270
          %1401 = vmatpush.bf16.msra.mxu0 %v1266
          %1402 = vmatpush.bf16.msra.mxu0 %v1262
          %1403 = vmatmul.bf16.gmra.mxu0 %v1296
          %v1404 = vpop.f32.mrf.mxu0
          %v1405 = vadd.f32 %v1391, %v1404
          %v1406 = vpop.f32.mrf.mxu0
          %v1407 = vadd.f32 %v1393, %v1406
          %1408 = vdwg.mxu0
          %1409 = vmatpush.bf16.msra.mxu0 %v1195
          %1410 = vmatpush.bf16.msra.mxu0 %v1191
          %1411 = vmatpush.bf16.msra.mxu0 %v1187
          %1412 = vmatpush.bf16.msra.mxu0 %v1183
          %1413 = vmatpush.bf16.msra.mxu0 %v1179
          %1414 = vmatpush.bf16.msra.mxu0 %v1175
          %1415 = vmatpush.bf16.msra.mxu0 %v1171
          %1416 = vmatpush.bf16.msra.mxu0 %v1167
          %1417 = vmatmul.bf16.gmra.mxu0 %v1293
          %v1418 = vpop.f32.mrf.mxu0
          %v1419 = vadd.f32 0.0, %v1418
          %v1420 = vpop.f32.mrf.mxu0
          %v1421 = vadd.f32 0.0, %v1420
          %1422 = vdwg.mxu0
          %1423 = vmatpush.bf16.msra.mxu0 %v1227
          %1424 = vmatpush.bf16.msra.mxu0 %v1223
          %1425 = vmatpush.bf16.msra.mxu0 %v1219
          %1426 = vmatpush.bf16.msra.mxu0 %v1215
          %1427 = vmatpush.bf16.msra.mxu0 %v1211
          %1428 = vmatpush.bf16.msra.mxu0 %v1207
          %1429 = vmatpush.bf16.msra.mxu0 %v1203
          %1430 = vmatpush.bf16.msra.mxu0 %v1199
          %1431 = vmatmul.bf16.gmra.mxu0 %v1294
          %v1432 = vpop.f32.mrf.mxu0
          %v1433 = vadd.f32 %v1419, %v1432
          %v1434 = vpop.f32.mrf.mxu0
          %v1435 = vadd.f32 %v1421, %v1434
          %1436 = vdwg.mxu0
          %1437 = vmatpush.bf16.msra.mxu0 %v1259
          %1438 = vmatpush.bf16.msra.mxu0 %v1255
          %1439 = vmatpush.bf16.msra.mxu0 %v1251
          %1440 = vmatpush.bf16.msra.mxu0 %v1247
          %1441 = vmatpush.bf16.msra.mxu0 %v1243
          %1442 = vmatpush.bf16.msra.mxu0 %v1239
          %1443 = vmatpush.bf16.msra.mxu0 %v1235
          %1444 = vmatpush.bf16.msra.mxu0 %v1231
          %1445 = vmatmul.bf16.gmra.mxu0 %v1295
          %v1446 = vpop.f32.mrf.mxu0
          %v1447 = vadd.f32 %v1433, %v1446
          %v1448 = vpop.f32.mrf.mxu0
          %v1449 = vadd.f32 %v1435, %v1448
          %1450 = vdwg.mxu0
          %1451 = vmatpush.bf16.msra.mxu0 %v1291
          %1452 = vmatpush.bf16.msra.mxu0 %v1287
          %1453 = vmatpush.bf16.msra.mxu0 %v1283
          %1454 = vmatpush.bf16.msra.mxu0 %v1279
          %1455 = vmatpush.bf16.msra.mxu0 %v1275
          %1456 = vmatpush.bf16.msra.mxu0 %v1271
          %1457 = vmatpush.bf16.msra.mxu0 %v1267
          %1458 = vmatpush.bf16.msra.mxu0 %v1263
          %1459 = vmatmul.bf16.gmra.mxu0 %v1296
          %v1460 = vpop.f32.mrf.mxu0
          %v1461 = vadd.f32 %v1447, %v1460
          %v1462 = vpop.f32.mrf.mxu0
          %v1463 = vadd.f32 %v1449, %v1462
          %1464 = vdwg.mxu0
          %1465 = vmatpush.bf16.msra.mxu0 %v1196
          %1466 = vmatpush.bf16.msra.mxu0 %v1192
          %1467 = vmatpush.bf16.msra.mxu0 %v1188
          %1468 = vmatpush.bf16.msra.mxu0 %v1184
          %1469 = vmatpush.bf16.msra.mxu0 %v1180
          %1470 = vmatpush.bf16.msra.mxu0 %v1176
          %1471 = vmatpush.bf16.msra.mxu0 %v1172
          %1472 = vmatpush.bf16.msra.mxu0 %v1168
          %1473 = vmatmul.bf16.gmra.mxu0 %v1293
          %v1474 = vpop.f32.mrf.mxu0
          %v1475 = vadd.f32 0.0, %v1474
          %v1476 = vpop.f32.mrf.mxu0
          %v1477 = vadd.f32 0.0, %v1476
          %1478 = vdwg.mxu0
          %1479 = vmatpush.bf16.msra.mxu0 %v1228
          %1480 = vmatpush.bf16.msra.mxu0 %v1224
          %1481 = vmatpush.bf16.msra.mxu0 %v1220
          %1482 = vmatpush.bf16.msra.mxu0 %v1216
          %1483 = vmatpush.bf16.msra.mxu0 %v1212
          %1484 = vmatpush.bf16.msra.mxu0 %v1208
          %1485 = vmatpush.bf16.msra.mxu0 %v1204
          %1486 = vmatpush.bf16.msra.mxu0 %v1200
          %1487 = vmatmul.bf16.gmra.mxu0 %v1294
          %v1488 = vpop.f32.mrf.mxu0
          %v1489 = vadd.f32 %v1475, %v1488
          %v1490 = vpop.f32.mrf.mxu0
          %v1491 = vadd.f32 %v1477, %v1490
          %1492 = vdwg.mxu0
          %1493 = vmatpush.bf16.msra.mxu0 %v1260
          %1494 = vmatpush.bf16.msra.mxu0 %v1256
          %1495 = vmatpush.bf16.msra.mxu0 %v1252
          %1496 = vmatpush.bf16.msra.mxu0 %v1248
          %1497 = vmatpush.bf16.msra.mxu0 %v1244
          %1498 = vmatpush.bf16.msra.mxu0 %v1240
          %1499 = vmatpush.bf16.msra.mxu0 %v1236
          %1500 = vmatpush.bf16.msra.mxu0 %v1232
          %1501 = vmatmul.bf16.gmra.mxu0 %v1295
          %v1502 = vpop.f32.mrf.mxu0
          %v1503 = vadd.f32 %v1489, %v1502
          %v1504 = vpop.f32.mrf.mxu0
          %v1505 = vadd.f32 %v1491, %v1504
          %1506 = vdwg.mxu0
          %1507 = vmatpush.bf16.msra.mxu0 %v1292
          %1508 = vmatpush.bf16.msra.mxu0 %v1288
          %1509 = vmatpush.bf16.msra.mxu0 %v1284
          %1510 = vmatpush.bf16.msra.mxu0 %v1280
          %1511 = vmatpush.bf16.msra.mxu0 %v1276
          %1512 = vmatpush.bf16.msra.mxu0 %v1272
          %1513 = vmatpush.bf16.msra.mxu0 %v1268
          %1514 = vmatpush.bf16.msra.mxu0 %v1264
          %1515 = vmatmul.bf16.gmra.mxu0 %v1296
          %v1516 = vpop.f32.mrf.mxu0
          %v1517 = vadd.f32 %v1503, %v1516
          %v1518 = vpop.f32.mrf.mxu0
          %v1519 = vadd.f32 %v1505, %v1518
          %1520 = vdwg.mxu0
          %s1521 = sld [smem:[#allocation11]]
          %v1522 = vstv %s1521
          %v1523 = vmul.f32 %v1349, %v1522
          %v1524 = vmul.f32 %v1405, %v1522
          %v1525 = vmul.f32 %v1461, %v1522
          %v1526 = vmul.f32 %v1517, %v1522
          %v1527 = vmul.f32 %v1351, %v1522
          %v1528 = vmul.f32 %v1407, %v1522
          %v1529 = vmul.f32 %v1463, %v1522
          %v1530 = vmul.f32 %v1519, %v1522
          %v1531 = vld [vmem:[%s428] sm:$0xf]
          %v1533 = vperm.slane %v1531, 0
          %v1534 = vperm.slane %v1531, 1
          %v1535 = vperm.slane %v1531, 2
          %v1536 = vperm.slane %v1531, 3
          %v1541 = vadd.f32 %v1523, %v1533
          %v1542 = vadd.f32 %v1524, %v1534
          %v1543 = vadd.f32 %v1525, %v1535
          %v1544 = vadd.f32 %v1526, %v1536
          %v1545 = vadd.f32 %v1527, %v1533
          %v1546 = vadd.f32 %v1528, %v1534
          %v1547 = vadd.f32 %v1529, %v1535
          %v1548 = vadd.f32 %v1530, %v1536
          %v1549 = vmax.f32 %v1541, 0.0
          %v1550 = vmax.f32 %v1542, 0.0
          %v1551 = vmax.f32 %v1543, 0.0
          %v1552 = vmax.f32 %v1544, 0.0
          %v1553 = vmax.f32 %v1545, 0.0
          %v1554 = vmax.f32 %v1546, 0.0
          %v1555 = vmax.f32 %v1547, 0.0
          %v1556 = vmax.f32 %v1548, 0.0
          %s1557 = scalar_lea.vmem %s418, 512 [#allocation12]
          %v1558 = vld [vmem:[%s1557] sm:$0xff]
          %v1559 = vld [vmem:[%s1557 + $0x8] sm:$0xff]
          %v1560 = vld [vmem:[%s1557 + $0x10] sm:$0xff]
          %v1561 = vld [vmem:[%s1557 + $0x18] sm:$0xff]
          %v1562 = vld [vmem:[%s1557 + $0x20] sm:$0xff]
          %v1563 = vld [vmem:[%s1557 + $0x28] sm:$0xff]
          %v1564 = vld [vmem:[%s1557 + $0x30] sm:$0xff]
          %v1565 = vld [vmem:[%s1557 + $0x38] sm:$0xff]
          %v1566 = vld [vmem:[%s1557 + $0x40] sm:$0xff]
          %v1567 = vld [vmem:[%s1557 + $0x48] sm:$0xff]
          %v1568 = vld [vmem:[%s1557 + $0x50] sm:$0xff]
          %v1569 = vld [vmem:[%s1557 + $0x58] sm:$0xff]
          %v1570 = vld [vmem:[%s1557 + $0x60] sm:$0xff]
          %v1571 = vld [vmem:[%s1557 + $0x68] sm:$0xff]
          %v1572 = vld [vmem:[%s1557 + $0x70] sm:$0xff]
          %v1573 = vld [vmem:[%s1557 + $0x78] sm:$0xff]
          %v1574 = vld [vmem:[%s1557 + $0x80] sm:$0xff]
          %v1575 = vld [vmem:[%s1557 + $0x88] sm:$0xff]
          %v1576 = vld [vmem:[%s1557 + $0x90] sm:$0xff]
          %v1577 = vld [vmem:[%s1557 + $0x98] sm:$0xff]
          %v1578 = vld [vmem:[%s1557 + $0xa0] sm:$0xff]
          %v1579 = vld [vmem:[%s1557 + $0xa8] sm:$0xff]
          %v1580 = vld [vmem:[%s1557 + $0xb0] sm:$0xff]
          %v1581 = vld [vmem:[%s1557 + $0xb8] sm:$0xff]
          %v1582 = vld [vmem:[%s1557 + $0xc0] sm:$0xff]
          %v1583 = vld [vmem:[%s1557 + $0xc8] sm:$0xff]
          %v1584 = vld [vmem:[%s1557 + $0xd0] sm:$0xff]
          %v1585 = vld [vmem:[%s1557 + $0xd8] sm:$0xff]
          %v1586 = vld [vmem:[%s1557 + $0xe0] sm:$0xff]
          %v1587 = vld [vmem:[%s1557 + $0xe8] sm:$0xff]
          %v1588 = vld [vmem:[%s1557 + $0xf0] sm:$0xff]
          %v1589 = vld [vmem:[%s1557 + $0xf8] sm:$0xff]
          %v1590 = vld [vmem:[%s1557 + $0x100] sm:$0xff]
          %v1591 = vld [vmem:[%s1557 + $0x108] sm:$0xff]
          %v1592 = vld [vmem:[%s1557 + $0x110] sm:$0xff]
          %v1593 = vld [vmem:[%s1557 + $0x118] sm:$0xff]
          %v1594 = vld [vmem:[%s1557 + $0x120] sm:$0xff]
          %v1595 = vld [vmem:[%s1557 + $0x128] sm:$0xff]
          %v1596 = vld [vmem:[%s1557 + $0x130] sm:$0xff]
          %v1597 = vld [vmem:[%s1557 + $0x138] sm:$0xff]
          %v1598 = vld [vmem:[%s1557 + $0x140] sm:$0xff]
          %v1599 = vld [vmem:[%s1557 + $0x148] sm:$0xff]
          %v1600 = vld [vmem:[%s1557 + $0x150] sm:$0xff]
          %v1601 = vld [vmem:[%s1557 + $0x158] sm:$0xff]
          %v1602 = vld [vmem:[%s1557 + $0x160] sm:$0xff]
          %v1603 = vld [vmem:[%s1557 + $0x168] sm:$0xff]
          %v1604 = vld [vmem:[%s1557 + $0x170] sm:$0xff]
          %v1605 = vld [vmem:[%s1557 + $0x178] sm:$0xff]
          %v1606 = vld [vmem:[%s1557 + $0x180] sm:$0xff]
          %v1607 = vld [vmem:[%s1557 + $0x188] sm:$0xff]
          %v1608 = vld [vmem:[%s1557 + $0x190] sm:$0xff]
          %v1609 = vld [vmem:[%s1557 + $0x198] sm:$0xff]
          %v1610 = vld [vmem:[%s1557 + $0x1a0] sm:$0xff]
          %v1611 = vld [vmem:[%s1557 + $0x1a8] sm:$0xff]
          %v1612 = vld [vmem:[%s1557 + $0x1b0] sm:$0xff]
          %v1613 = vld [vmem:[%s1557 + $0x1b8] sm:$0xff]
          %v1614 = vld [vmem:[%s1557 + $0x1c0] sm:$0xff]
          %v1615 = vld [vmem:[%s1557 + $0x1c8] sm:$0xff]
          %v1616 = vld [vmem:[%s1557 + $0x1d0] sm:$0xff]
          %v1617 = vld [vmem:[%s1557 + $0x1d8] sm:$0xff]
          %v1618 = vld [vmem:[%s1557 + $0x1e0] sm:$0xff]
          %v1619 = vld [vmem:[%s1557 + $0x1e8] sm:$0xff]
          %v1620 = vld [vmem:[%s1557 + $0x1f0] sm:$0xff]
          %v1621 = vld [vmem:[%s1557 + $0x1f8] sm:$0xff]
          %v1622 = vunpack.c.0.s8 %v1558
          %v1623 = vunpack.c.0.s8 %v1559
          %v1624 = vunpack.c.0.s8 %v1560
          %v1625 = vunpack.c.0.s8 %v1561
          %v1626 = vunpack.c.1.s8 %v1558
          %v1627 = vunpack.c.1.s8 %v1559
          %v1628 = vunpack.c.1.s8 %v1560
          %v1629 = vunpack.c.1.s8 %v1561
          %v1630 = vunpack.c.2.s8 %v1558
          %v1631 = vunpack.c.2.s8 %v1559
          %v1632 = vunpack.c.2.s8 %v1560
          %v1633 = vunpack.c.2.s8 %v1561
          %v1634 = vunpack.c.3.s8 %v1558
          %v1635 = vunpack.c.3.s8 %v1559
          %v1636 = vunpack.c.3.s8 %v1560
          %v1637 = vunpack.c.3.s8 %v1561
          %v1638 = vunpack.c.0.s8 %v1562
          %v1639 = vunpack.c.0.s8 %v1563
          %v1640 = vunpack.c.0.s8 %v1564
          %v1641 = vunpack.c.0.s8 %v1565
          %v1642 = vunpack.c.1.s8 %v1562
          %v1643 = vunpack.c.1.s8 %v1563
          %v1644 = vunpack.c.1.s8 %v1564
          %v1645 = vunpack.c.1.s8 %v1565
          %v1646 = vunpack.c.2.s8 %v1562
          %v1647 = vunpack.c.2.s8 %v1563
          %v1648 = vunpack.c.2.s8 %v1564
          %v1649 = vunpack.c.2.s8 %v1565
          %v1650 = vunpack.c.3.s8 %v1562
          %v1651 = vunpack.c.3.s8 %v1563
          %v1652 = vunpack.c.3.s8 %v1564
          %v1653 = vunpack.c.3.s8 %v1565
          %v1654 = vunpack.c.0.s8 %v1566
          %v1655 = vunpack.c.0.s8 %v1567
          %v1656 = vunpack.c.0.s8 %v1568
          %v1657 = vunpack.c.0.s8 %v1569
          %v1658 = vunpack.c.1.s8 %v1566
          %v1659 = vunpack.c.1.s8 %v1567
          %v1660 = vunpack.c.1.s8 %v1568
          %v1661 = vunpack.c.1.s8 %v1569
          %v1662 = vunpack.c.2.s8 %v1566
          %v1663 = vunpack.c.2.s8 %v1567
          %v1664 = vunpack.c.2.s8 %v1568
          %v1665 = vunpack.c.2.s8 %v1569
          %v1666 = vunpack.c.3.s8 %v1566
          %v1667 = vunpack.c.3.s8 %v1567
          %v1668 = vunpack.c.3.s8 %v1568
          %v1669 = vunpack.c.3.s8 %v1569
          %v1670 = vunpack.c.0.s8 %v1570
          %v1671 = vunpack.c.0.s8 %v1571
          %v1672 = vunpack.c.0.s8 %v1572
          %v1673 = vunpack.c.0.s8 %v1573
          %v1674 = vunpack.c.1.s8 %v1570
          %v1675 = vunpack.c.1.s8 %v1571
          %v1676 = vunpack.c.1.s8 %v1572
          %v1677 = vunpack.c.1.s8 %v1573
          %v1678 = vunpack.c.2.s8 %v1570
          %v1679 = vunpack.c.2.s8 %v1571
          %v1680 = vunpack.c.2.s8 %v1572
          %v1681 = vunpack.c.2.s8 %v1573
          %v1682 = vunpack.c.3.s8 %v1570
          %v1683 = vunpack.c.3.s8 %v1571
          %v1684 = vunpack.c.3.s8 %v1572
          %v1685 = vunpack.c.3.s8 %v1573
          %v1686 = vunpack.c.0.s8 %v1574
          %v1687 = vunpack.c.0.s8 %v1575
          %v1688 = vunpack.c.0.s8 %v1576
          %v1689 = vunpack.c.0.s8 %v1577
          %v1690 = vunpack.c.1.s8 %v1574
          %v1691 = vunpack.c.1.s8 %v1575
          %v1692 = vunpack.c.1.s8 %v1576
          %v1693 = vunpack.c.1.s8 %v1577
          %v1694 = vunpack.c.2.s8 %v1574
          %v1695 = vunpack.c.2.s8 %v1575
          %v1696 = vunpack.c.2.s8 %v1576
          %v1697 = vunpack.c.2.s8 %v1577
          %v1698 = vunpack.c.3.s8 %v1574
          %v1699 = vunpack.c.3.s8 %v1575
          %v1700 = vunpack.c.3.s8 %v1576
          %v1701 = vunpack.c.3.s8 %v1577
          %v1702 = vunpack.c.0.s8 %v1578
          %v1703 = vunpack.c.0.s8 %v1579
          %v1704 = vunpack.c.0.s8 %v1580
          %v1705 = vunpack.c.0.s8 %v1581
          %v1706 = vunpack.c.1.s8 %v1578
          %v1707 = vunpack.c.1.s8 %v1579
          %v1708 = vunpack.c.1.s8 %v1580
          %v1709 = vunpack.c.1.s8 %v1581
          %v1710 = vunpack.c.2.s8 %v1578
          %v1711 = vunpack.c.2.s8 %v1579
          %v1712 = vunpack.c.2.s8 %v1580
          %v1713 = vunpack.c.2.s8 %v1581
          %v1714 = vunpack.c.3.s8 %v1578
          %v1715 = vunpack.c.3.s8 %v1579
          %v1716 = vunpack.c.3.s8 %v1580
          %v1717 = vunpack.c.3.s8 %v1581
          %v1718 = vunpack.c.0.s8 %v1582
          %v1719 = vunpack.c.0.s8 %v1583
          %v1720 = vunpack.c.0.s8 %v1584
          %v1721 = vunpack.c.0.s8 %v1585
          %v1722 = vunpack.c.1.s8 %v1582
          %v1723 = vunpack.c.1.s8 %v1583
          %v1724 = vunpack.c.1.s8 %v1584
          %v1725 = vunpack.c.1.s8 %v1585
          %v1726 = vunpack.c.2.s8 %v1582
          %v1727 = vunpack.c.2.s8 %v1583
          %v1728 = vunpack.c.2.s8 %v1584
          %v1729 = vunpack.c.2.s8 %v1585
          %v1730 = vunpack.c.3.s8 %v1582
          %v1731 = vunpack.c.3.s8 %v1583
          %v1732 = vunpack.c.3.s8 %v1584
          %v1733 = vunpack.c.3.s8 %v1585
          %v1734 = vunpack.c.0.s8 %v1586
          %v1735 = vunpack.c.0.s8 %v1587
          %v1736 = vunpack.c.0.s8 %v1588
          %v1737 = vunpack.c.0.s8 %v1589
          %v1738 = vunpack.c.1.s8 %v1586
          %v1739 = vunpack.c.1.s8 %v1587
          %v1740 = vunpack.c.1.s8 %v1588
          %v1741 = vunpack.c.1.s8 %v1589
          %v1742 = vunpack.c.2.s8 %v1586
          %v1743 = vunpack.c.2.s8 %v1587
          %v1744 = vunpack.c.2.s8 %v1588
          %v1745 = vunpack.c.2.s8 %v1589
          %v1746 = vunpack.c.3.s8 %v1586
          %v1747 = vunpack.c.3.s8 %v1587
          %v1748 = vunpack.c.3.s8 %v1588
          %v1749 = vunpack.c.3.s8 %v1589
          %v1750 = vunpack.c.0.s8 %v1590
          %v1751 = vunpack.c.0.s8 %v1591
          %v1752 = vunpack.c.0.s8 %v1592
          %v1753 = vunpack.c.0.s8 %v1593
          %v1754 = vunpack.c.1.s8 %v1590
          %v1755 = vunpack.c.1.s8 %v1591
          %v1756 = vunpack.c.1.s8 %v1592
          %v1757 = vunpack.c.1.s8 %v1593
          %v1758 = vunpack.c.2.s8 %v1590
          %v1759 = vunpack.c.2.s8 %v1591
          %v1760 = vunpack.c.2.s8 %v1592
          %v1761 = vunpack.c.2.s8 %v1593
          %v1762 = vunpack.c.3.s8 %v1590
          %v1763 = vunpack.c.3.s8 %v1591
          %v1764 = vunpack.c.3.s8 %v1592
          %v1765 = vunpack.c.3.s8 %v1593
          %v1766 = vunpack.c.0.s8 %v1594
          %v1767 = vunpack.c.0.s8 %v1595
          %v1768 = vunpack.c.0.s8 %v1596
          %v1769 = vunpack.c.0.s8 %v1597
          %v1770 = vunpack.c.1.s8 %v1594
          %v1771 = vunpack.c.1.s8 %v1595
          %v1772 = vunpack.c.1.s8 %v1596
          %v1773 = vunpack.c.1.s8 %v1597
          %v1774 = vunpack.c.2.s8 %v1594
          %v1775 = vunpack.c.2.s8 %v1595
          %v1776 = vunpack.c.2.s8 %v1596
          %v1777 = vunpack.c.2.s8 %v1597
          %v1778 = vunpack.c.3.s8 %v1594
          %v1779 = vunpack.c.3.s8 %v1595
          %v1780 = vunpack.c.3.s8 %v1596
          %v1781 = vunpack.c.3.s8 %v1597
          %v1782 = vunpack.c.0.s8 %v1598
          %v1783 = vunpack.c.0.s8 %v1599
          %v1784 = vunpack.c.0.s8 %v1600
          %v1785 = vunpack.c.0.s8 %v1601
          %v1786 = vunpack.c.1.s8 %v1598
          %v1787 = vunpack.c.1.s8 %v1599
          %v1788 = vunpack.c.1.s8 %v1600
          %v1789 = vunpack.c.1.s8 %v1601
          %v1790 = vunpack.c.2.s8 %v1598
          %v1791 = vunpack.c.2.s8 %v1599
          %v1792 = vunpack.c.2.s8 %v1600
          %v1793 = vunpack.c.2.s8 %v1601
          %v1794 = vunpack.c.3.s8 %v1598
          %v1795 = vunpack.c.3.s8 %v1599
          %v1796 = vunpack.c.3.s8 %v1600
          %v1797 = vunpack.c.3.s8 %v1601
          %v1798 = vunpack.c.0.s8 %v1602
          %v1799 = vunpack.c.0.s8 %v1603
          %v1800 = vunpack.c.0.s8 %v1604
          %v1801 = vunpack.c.0.s8 %v1605
          %v1802 = vunpack.c.1.s8 %v1602
          %v1803 = vunpack.c.1.s8 %v1603
          %v1804 = vunpack.c.1.s8 %v1604
          %v1805 = vunpack.c.1.s8 %v1605
          %v1806 = vunpack.c.2.s8 %v1602
          %v1807 = vunpack.c.2.s8 %v1603
          %v1808 = vunpack.c.2.s8 %v1604
          %v1809 = vunpack.c.2.s8 %v1605
          %v1810 = vunpack.c.3.s8 %v1602
          %v1811 = vunpack.c.3.s8 %v1603
          %v1812 = vunpack.c.3.s8 %v1604
          %v1813 = vunpack.c.3.s8 %v1605
          %v1814 = vunpack.c.0.s8 %v1606
          %v1815 = vunpack.c.0.s8 %v1607
          %v1816 = vunpack.c.0.s8 %v1608
          %v1817 = vunpack.c.0.s8 %v1609
          %v1818 = vunpack.c.1.s8 %v1606
          %v1819 = vunpack.c.1.s8 %v1607
          %v1820 = vunpack.c.1.s8 %v1608
          %v1821 = vunpack.c.1.s8 %v1609
          %v1822 = vunpack.c.2.s8 %v1606
          %v1823 = vunpack.c.2.s8 %v1607
          %v1824 = vunpack.c.2.s8 %v1608
          %v1825 = vunpack.c.2.s8 %v1609
          %v1826 = vunpack.c.3.s8 %v1606
          %v1827 = vunpack.c.3.s8 %v1607
          %v1828 = vunpack.c.3.s8 %v1608
          %v1829 = vunpack.c.3.s8 %v1609
          %v1830 = vunpack.c.0.s8 %v1610
          %v1831 = vunpack.c.0.s8 %v1611
          %v1832 = vunpack.c.0.s8 %v1612
          %v1833 = vunpack.c.0.s8 %v1613
          %v1834 = vunpack.c.1.s8 %v1610
          %v1835 = vunpack.c.1.s8 %v1611
          %v1836 = vunpack.c.1.s8 %v1612
          %v1837 = vunpack.c.1.s8 %v1613
          %v1838 = vunpack.c.2.s8 %v1610
          %v1839 = vunpack.c.2.s8 %v1611
          %v1840 = vunpack.c.2.s8 %v1612
          %v1841 = vunpack.c.2.s8 %v1613
          %v1842 = vunpack.c.3.s8 %v1610
          %v1843 = vunpack.c.3.s8 %v1611
          %v1844 = vunpack.c.3.s8 %v1612
          %v1845 = vunpack.c.3.s8 %v1613
          %v1846 = vunpack.c.0.s8 %v1614
          %v1847 = vunpack.c.0.s8 %v1615
          %v1848 = vunpack.c.0.s8 %v1616
          %v1849 = vunpack.c.0.s8 %v1617
          %v1850 = vunpack.c.1.s8 %v1614
          %v1851 = vunpack.c.1.s8 %v1615
          %v1852 = vunpack.c.1.s8 %v1616
          %v1853 = vunpack.c.1.s8 %v1617
          %v1854 = vunpack.c.2.s8 %v1614
          %v1855 = vunpack.c.2.s8 %v1615
          %v1856 = vunpack.c.2.s8 %v1616
          %v1857 = vunpack.c.2.s8 %v1617
          %v1858 = vunpack.c.3.s8 %v1614
          %v1859 = vunpack.c.3.s8 %v1615
          %v1860 = vunpack.c.3.s8 %v1616
          %v1861 = vunpack.c.3.s8 %v1617
          %v1862 = vunpack.c.0.s8 %v1618
          %v1863 = vunpack.c.0.s8 %v1619
          %v1864 = vunpack.c.0.s8 %v1620
          %v1865 = vunpack.c.0.s8 %v1621
          %v1866 = vunpack.c.1.s8 %v1618
          %v1867 = vunpack.c.1.s8 %v1619
          %v1868 = vunpack.c.1.s8 %v1620
          %v1869 = vunpack.c.1.s8 %v1621
          %v1870 = vunpack.c.2.s8 %v1618
          %v1871 = vunpack.c.2.s8 %v1619
          %v1872 = vunpack.c.2.s8 %v1620
          %v1873 = vunpack.c.2.s8 %v1621
          %v1874 = vunpack.c.3.s8 %v1618
          %v1875 = vunpack.c.3.s8 %v1619
          %v1876 = vunpack.c.3.s8 %v1620
          %v1877 = vunpack.c.3.s8 %v1621
          %v1878 = vcvt.s32.f32 %v1622
          %v1879 = vcvt.s32.f32 %v1623
          %v1880 = vcvt.s32.f32 %v1624
          %v1881 = vcvt.s32.f32 %v1625
          %v1882 = vcvt.s32.f32 %v1626
          %v1883 = vcvt.s32.f32 %v1627
          %v1884 = vcvt.s32.f32 %v1628
          %v1885 = vcvt.s32.f32 %v1629
          %v1886 = vcvt.s32.f32 %v1630
          %v1887 = vcvt.s32.f32 %v1631
          %v1888 = vcvt.s32.f32 %v1632
          %v1889 = vcvt.s32.f32 %v1633
          %v1890 = vcvt.s32.f32 %v1634
          %v1891 = vcvt.s32.f32 %v1635
          %v1892 = vcvt.s32.f32 %v1636
          %v1893 = vcvt.s32.f32 %v1637
          %v1894 = vcvt.s32.f32 %v1638
          %v1895 = vcvt.s32.f32 %v1639
          %v1896 = vcvt.s32.f32 %v1640
          %v1897 = vcvt.s32.f32 %v1641
          %v1898 = vcvt.s32.f32 %v1642
          %v1899 = vcvt.s32.f32 %v1643
          %v1900 = vcvt.s32.f32 %v1644
          %v1901 = vcvt.s32.f32 %v1645
          %v1902 = vcvt.s32.f32 %v1646
          %v1903 = vcvt.s32.f32 %v1647
          %v1904 = vcvt.s32.f32 %v1648
          %v1905 = vcvt.s32.f32 %v1649
          %v1906 = vcvt.s32.f32 %v1650
          %v1907 = vcvt.s32.f32 %v1651
          %v1908 = vcvt.s32.f32 %v1652
          %v1909 = vcvt.s32.f32 %v1653
          %v1910 = vcvt.s32.f32 %v1654
          %v1911 = vcvt.s32.f32 %v1655
          %v1912 = vcvt.s32.f32 %v1656
          %v1913 = vcvt.s32.f32 %v1657
          %v1914 = vcvt.s32.f32 %v1658
          %v1915 = vcvt.s32.f32 %v1659
          %v1916 = vcvt.s32.f32 %v1660
          %v1917 = vcvt.s32.f32 %v1661
          %v1918 = vcvt.s32.f32 %v1662
          %v1919 = vcvt.s32.f32 %v1663
          %v1920 = vcvt.s32.f32 %v1664
          %v1921 = vcvt.s32.f32 %v1665
          %v1922 = vcvt.s32.f32 %v1666
          %v1923 = vcvt.s32.f32 %v1667
          %v1924 = vcvt.s32.f32 %v1668
          %v1925 = vcvt.s32.f32 %v1669
          %v1926 = vcvt.s32.f32 %v1670
          %v1927 = vcvt.s32.f32 %v1671
          %v1928 = vcvt.s32.f32 %v1672
          %v1929 = vcvt.s32.f32 %v1673
          %v1930 = vcvt.s32.f32 %v1674
          %v1931 = vcvt.s32.f32 %v1675
          %v1932 = vcvt.s32.f32 %v1676
          %v1933 = vcvt.s32.f32 %v1677
          %v1934 = vcvt.s32.f32 %v1678
          %v1935 = vcvt.s32.f32 %v1679
          %v1936 = vcvt.s32.f32 %v1680
          %v1937 = vcvt.s32.f32 %v1681
          %v1938 = vcvt.s32.f32 %v1682
          %v1939 = vcvt.s32.f32 %v1683
          %v1940 = vcvt.s32.f32 %v1684
          %v1941 = vcvt.s32.f32 %v1685
          %v1942 = vcvt.s32.f32 %v1686
          %v1943 = vcvt.s32.f32 %v1687
          %v1944 = vcvt.s32.f32 %v1688
          %v1945 = vcvt.s32.f32 %v1689
          %v1946 = vcvt.s32.f32 %v1690
          %v1947 = vcvt.s32.f32 %v1691
          %v1948 = vcvt.s32.f32 %v1692
          %v1949 = vcvt.s32.f32 %v1693
          %v1950 = vcvt.s32.f32 %v1694
          %v1951 = vcvt.s32.f32 %v1695
          %v1952 = vcvt.s32.f32 %v1696
          %v1953 = vcvt.s32.f32 %v1697
          %v1954 = vcvt.s32.f32 %v1698
          %v1955 = vcvt.s32.f32 %v1699
          %v1956 = vcvt.s32.f32 %v1700
          %v1957 = vcvt.s32.f32 %v1701
          %v1958 = vcvt.s32.f32 %v1702
          %v1959 = vcvt.s32.f32 %v1703
          %v1960 = vcvt.s32.f32 %v1704
          %v1961 = vcvt.s32.f32 %v1705
          %v1962 = vcvt.s32.f32 %v1706
          %v1963 = vcvt.s32.f32 %v1707
          %v1964 = vcvt.s32.f32 %v1708
          %v1965 = vcvt.s32.f32 %v1709
          %v1966 = vcvt.s32.f32 %v1710
          %v1967 = vcvt.s32.f32 %v1711
          %v1968 = vcvt.s32.f32 %v1712
          %v1969 = vcvt.s32.f32 %v1713
          %v1970 = vcvt.s32.f32 %v1714
          %v1971 = vcvt.s32.f32 %v1715
          %v1972 = vcvt.s32.f32 %v1716
          %v1973 = vcvt.s32.f32 %v1717
          %v1974 = vcvt.s32.f32 %v1718
          %v1975 = vcvt.s32.f32 %v1719
          %v1976 = vcvt.s32.f32 %v1720
          %v1977 = vcvt.s32.f32 %v1721
          %v1978 = vcvt.s32.f32 %v1722
          %v1979 = vcvt.s32.f32 %v1723
          %v1980 = vcvt.s32.f32 %v1724
          %v1981 = vcvt.s32.f32 %v1725
          %v1982 = vcvt.s32.f32 %v1726
          %v1983 = vcvt.s32.f32 %v1727
          %v1984 = vcvt.s32.f32 %v1728
          %v1985 = vcvt.s32.f32 %v1729
          %v1986 = vcvt.s32.f32 %v1730
          %v1987 = vcvt.s32.f32 %v1731
          %v1988 = vcvt.s32.f32 %v1732
          %v1989 = vcvt.s32.f32 %v1733
          %v1990 = vcvt.s32.f32 %v1734
          %v1991 = vcvt.s32.f32 %v1735
          %v1992 = vcvt.s32.f32 %v1736
          %v1993 = vcvt.s32.f32 %v1737
          %v1994 = vcvt.s32.f32 %v1738
          %v1995 = vcvt.s32.f32 %v1739
          %v1996 = vcvt.s32.f32 %v1740
          %v1997 = vcvt.s32.f32 %v1741
          %v1998 = vcvt.s32.f32 %v1742
          %v1999 = vcvt.s32.f32 %v1743
          %v2000 = vcvt.s32.f32 %v1744
          %v2001 = vcvt.s32.f32 %v1745
          %v2002 = vcvt.s32.f32 %v1746
          %v2003 = vcvt.s32.f32 %v1747
          %v2004 = vcvt.s32.f32 %v1748
          %v2005 = vcvt.s32.f32 %v1749
          %v2006 = vcvt.s32.f32 %v1750
          %v2007 = vcvt.s32.f32 %v1751
          %v2008 = vcvt.s32.f32 %v1752
          %v2009 = vcvt.s32.f32 %v1753
          %v2010 = vcvt.s32.f32 %v1754
          %v2011 = vcvt.s32.f32 %v1755
          %v2012 = vcvt.s32.f32 %v1756
          %v2013 = vcvt.s32.f32 %v1757
          %v2014 = vcvt.s32.f32 %v1758
          %v2015 = vcvt.s32.f32 %v1759
          %v2016 = vcvt.s32.f32 %v1760
          %v2017 = vcvt.s32.f32 %v1761
          %v2018 = vcvt.s32.f32 %v1762
          %v2019 = vcvt.s32.f32 %v1763
          %v2020 = vcvt.s32.f32 %v1764
          %v2021 = vcvt.s32.f32 %v1765
          %v2022 = vcvt.s32.f32 %v1766
          %v2023 = vcvt.s32.f32 %v1767
          %v2024 = vcvt.s32.f32 %v1768
          %v2025 = vcvt.s32.f32 %v1769
          %v2026 = vcvt.s32.f32 %v1770
          %v2027 = vcvt.s32.f32 %v1771
          %v2028 = vcvt.s32.f32 %v1772
          %v2029 = vcvt.s32.f32 %v1773
          %v2030 = vcvt.s32.f32 %v1774
          %v2031 = vcvt.s32.f32 %v1775
          %v2032 = vcvt.s32.f32 %v1776
          %v2033 = vcvt.s32.f32 %v1777
          %v2034 = vcvt.s32.f32 %v1778
          %v2035 = vcvt.s32.f32 %v1779
          %v2036 = vcvt.s32.f32 %v1780
          %v2037 = vcvt.s32.f32 %v1781
          %v2038 = vcvt.s32.f32 %v1782
          %v2039 = vcvt.s32.f32 %v1783
          %v2040 = vcvt.s32.f32 %v1784
          %v2041 = vcvt.s32.f32 %v1785
          %v2042 = vcvt.s32.f32 %v1786
          %v2043 = vcvt.s32.f32 %v1787
          %v2044 = vcvt.s32.f32 %v1788
          %v2045 = vcvt.s32.f32 %v1789
          %v2046 = vcvt.s32.f32 %v1790
          %v2047 = vcvt.s32.f32 %v1791
          %v2048 = vcvt.s32.f32 %v1792
          %v2049 = vcvt.s32.f32 %v1793
          %v2050 = vcvt.s32.f32 %v1794
          %v2051 = vcvt.s32.f32 %v1795
          %v2052 = vcvt.s32.f32 %v1796
          %v2053 = vcvt.s32.f32 %v1797
          %v2054 = vcvt.s32.f32 %v1798
          %v2055 = vcvt.s32.f32 %v1799
          %v2056 = vcvt.s32.f32 %v1800
          %v2057 = vcvt.s32.f32 %v1801
          %v2058 = vcvt.s32.f32 %v1802
          %v2059 = vcvt.s32.f32 %v1803
          %v2060 = vcvt.s32.f32 %v1804
          %v2061 = vcvt.s32.f32 %v1805
          %v2062 = vcvt.s32.f32 %v1806
          %v2063 = vcvt.s32.f32 %v1807
          %v2064 = vcvt.s32.f32 %v1808
          %v2065 = vcvt.s32.f32 %v1809
          %v2066 = vcvt.s32.f32 %v1810
          %v2067 = vcvt.s32.f32 %v1811
          %v2068 = vcvt.s32.f32 %v1812
          %v2069 = vcvt.s32.f32 %v1813
          %v2070 = vcvt.s32.f32 %v1814
          %v2071 = vcvt.s32.f32 %v1815
          %v2072 = vcvt.s32.f32 %v1816
          %v2073 = vcvt.s32.f32 %v1817
          %v2074 = vcvt.s32.f32 %v1818
          %v2075 = vcvt.s32.f32 %v1819
          %v2076 = vcvt.s32.f32 %v1820
          %v2077 = vcvt.s32.f32 %v1821
          %v2078 = vcvt.s32.f32 %v1822
          %v2079 = vcvt.s32.f32 %v1823
          %v2080 = vcvt.s32.f32 %v1824
          %v2081 = vcvt.s32.f32 %v1825
          %v2082 = vcvt.s32.f32 %v1826
          %v2083 = vcvt.s32.f32 %v1827
          %v2084 = vcvt.s32.f32 %v1828
          %v2085 = vcvt.s32.f32 %v1829
          %v2086 = vcvt.s32.f32 %v1830
          %v2087 = vcvt.s32.f32 %v1831
          %v2088 = vcvt.s32.f32 %v1832
          %v2089 = vcvt.s32.f32 %v1833
          %v2090 = vcvt.s32.f32 %v1834
          %v2091 = vcvt.s32.f32 %v1835
          %v2092 = vcvt.s32.f32 %v1836
          %v2093 = vcvt.s32.f32 %v1837
          %v2094 = vcvt.s32.f32 %v1838
          %v2095 = vcvt.s32.f32 %v1839
          %v2096 = vcvt.s32.f32 %v1840
          %v2097 = vcvt.s32.f32 %v1841
          %v2098 = vcvt.s32.f32 %v1842
          %v2099 = vcvt.s32.f32 %v1843
          %v2100 = vcvt.s32.f32 %v1844
          %v2101 = vcvt.s32.f32 %v1845
          %v2102 = vcvt.s32.f32 %v1846
          %v2103 = vcvt.s32.f32 %v1847
          %v2104 = vcvt.s32.f32 %v1848
          %v2105 = vcvt.s32.f32 %v1849
          %v2106 = vcvt.s32.f32 %v1850
          %v2107 = vcvt.s32.f32 %v1851
          %v2108 = vcvt.s32.f32 %v1852
          %v2109 = vcvt.s32.f32 %v1853
          %v2110 = vcvt.s32.f32 %v1854
          %v2111 = vcvt.s32.f32 %v1855
          %v2112 = vcvt.s32.f32 %v1856
          %v2113 = vcvt.s32.f32 %v1857
          %v2114 = vcvt.s32.f32 %v1858
          %v2115 = vcvt.s32.f32 %v1859
          %v2116 = vcvt.s32.f32 %v1860
          %v2117 = vcvt.s32.f32 %v1861
          %v2118 = vcvt.s32.f32 %v1862
          %v2119 = vcvt.s32.f32 %v1863
          %v2120 = vcvt.s32.f32 %v1864
          %v2121 = vcvt.s32.f32 %v1865
          %v2122 = vcvt.s32.f32 %v1866
          %v2123 = vcvt.s32.f32 %v1867
          %v2124 = vcvt.s32.f32 %v1868
          %v2125 = vcvt.s32.f32 %v1869
          %v2126 = vcvt.s32.f32 %v1870
          %v2127 = vcvt.s32.f32 %v1871
          %v2128 = vcvt.s32.f32 %v1872
          %v2129 = vcvt.s32.f32 %v1873
          %v2130 = vcvt.s32.f32 %v1874
          %v2131 = vcvt.s32.f32 %v1875
          %v2132 = vcvt.s32.f32 %v1876
          %v2133 = vcvt.s32.f32 %v1877
          %v2134 = vpack.c.bf16 %v1882, %v1878
          %v2135 = vpack.c.bf16 %v1883, %v1879
          %v2136 = vpack.c.bf16 %v1884, %v1880
          %v2137 = vpack.c.bf16 %v1885, %v1881
          %v2138 = vpack.c.bf16 %v1890, %v1886
          %v2139 = vpack.c.bf16 %v1891, %v1887
          %v2140 = vpack.c.bf16 %v1892, %v1888
          %v2141 = vpack.c.bf16 %v1893, %v1889
          %v2142 = vpack.c.bf16 %v1898, %v1894
          %v2143 = vpack.c.bf16 %v1899, %v1895
          %v2144 = vpack.c.bf16 %v1900, %v1896
          %v2145 = vpack.c.bf16 %v1901, %v1897
          %v2146 = vpack.c.bf16 %v1906, %v1902
          %v2147 = vpack.c.bf16 %v1907, %v1903
          %v2148 = vpack.c.bf16 %v1908, %v1904
          %v2149 = vpack.c.bf16 %v1909, %v1905
          %v2150 = vpack.c.bf16 %v1914, %v1910
          %v2151 = vpack.c.bf16 %v1915, %v1911
          %v2152 = vpack.c.bf16 %v1916, %v1912
          %v2153 = vpack.c.bf16 %v1917, %v1913
          %v2154 = vpack.c.bf16 %v1922, %v1918
          %v2155 = vpack.c.bf16 %v1923, %v1919
          %v2156 = vpack.c.bf16 %v1924, %v1920
          %v2157 = vpack.c.bf16 %v1925, %v1921
          %v2158 = vpack.c.bf16 %v1930, %v1926
          %v2159 = vpack.c.bf16 %v1931, %v1927
          %v2160 = vpack.c.bf16 %v1932, %v1928
          %v2161 = vpack.c.bf16 %v1933, %v1929
          %v2162 = vpack.c.bf16 %v1938, %v1934
          %v2163 = vpack.c.bf16 %v1939, %v1935
          %v2164 = vpack.c.bf16 %v1940, %v1936
          %v2165 = vpack.c.bf16 %v1941, %v1937
          %v2166 = vpack.c.bf16 %v1946, %v1942
          %v2167 = vpack.c.bf16 %v1947, %v1943
          %v2168 = vpack.c.bf16 %v1948, %v1944
          %v2169 = vpack.c.bf16 %v1949, %v1945
          %v2170 = vpack.c.bf16 %v1954, %v1950
          %v2171 = vpack.c.bf16 %v1955, %v1951
          %v2172 = vpack.c.bf16 %v1956, %v1952
          %v2173 = vpack.c.bf16 %v1957, %v1953
          %v2174 = vpack.c.bf16 %v1962, %v1958
          %v2175 = vpack.c.bf16 %v1963, %v1959
          %v2176 = vpack.c.bf16 %v1964, %v1960
          %v2177 = vpack.c.bf16 %v1965, %v1961
          %v2178 = vpack.c.bf16 %v1970, %v1966
          %v2179 = vpack.c.bf16 %v1971, %v1967
          %v2180 = vpack.c.bf16 %v1972, %v1968
          %v2181 = vpack.c.bf16 %v1973, %v1969
          %v2182 = vpack.c.bf16 %v1978, %v1974
          %v2183 = vpack.c.bf16 %v1979, %v1975
          %v2184 = vpack.c.bf16 %v1980, %v1976
          %v2185 = vpack.c.bf16 %v1981, %v1977
          %v2186 = vpack.c.bf16 %v1986, %v1982
          %v2187 = vpack.c.bf16 %v1987, %v1983
          %v2188 = vpack.c.bf16 %v1988, %v1984
          %v2189 = vpack.c.bf16 %v1989, %v1985
          %v2190 = vpack.c.bf16 %v1994, %v1990
          %v2191 = vpack.c.bf16 %v1995, %v1991
          %v2192 = vpack.c.bf16 %v1996, %v1992
          %v2193 = vpack.c.bf16 %v1997, %v1993
          %v2194 = vpack.c.bf16 %v2002, %v1998
          %v2195 = vpack.c.bf16 %v2003, %v1999
          %v2196 = vpack.c.bf16 %v2004, %v2000
          %v2197 = vpack.c.bf16 %v2005, %v2001
          %v2198 = vpack.c.bf16 %v2010, %v2006
          %v2199 = vpack.c.bf16 %v2011, %v2007
          %v2200 = vpack.c.bf16 %v2012, %v2008
          %v2201 = vpack.c.bf16 %v2013, %v2009
          %v2202 = vpack.c.bf16 %v2018, %v2014
          %v2203 = vpack.c.bf16 %v2019, %v2015
          %v2204 = vpack.c.bf16 %v2020, %v2016
          %v2205 = vpack.c.bf16 %v2021, %v2017
          %v2206 = vpack.c.bf16 %v2026, %v2022
          %v2207 = vpack.c.bf16 %v2027, %v2023
          %v2208 = vpack.c.bf16 %v2028, %v2024
          %v2209 = vpack.c.bf16 %v2029, %v2025
          %v2210 = vpack.c.bf16 %v2034, %v2030
          %v2211 = vpack.c.bf16 %v2035, %v2031
          %v2212 = vpack.c.bf16 %v2036, %v2032
          %v2213 = vpack.c.bf16 %v2037, %v2033
          %v2214 = vpack.c.bf16 %v2042, %v2038
          %v2215 = vpack.c.bf16 %v2043, %v2039
          %v2216 = vpack.c.bf16 %v2044, %v2040
          %v2217 = vpack.c.bf16 %v2045, %v2041
          %v2218 = vpack.c.bf16 %v2050, %v2046
          %v2219 = vpack.c.bf16 %v2051, %v2047
          %v2220 = vpack.c.bf16 %v2052, %v2048
          %v2221 = vpack.c.bf16 %v2053, %v2049
          %v2222 = vpack.c.bf16 %v2058, %v2054
          %v2223 = vpack.c.bf16 %v2059, %v2055
          %v2224 = vpack.c.bf16 %v2060, %v2056
          %v2225 = vpack.c.bf16 %v2061, %v2057
          %v2226 = vpack.c.bf16 %v2066, %v2062
          %v2227 = vpack.c.bf16 %v2067, %v2063
          %v2228 = vpack.c.bf16 %v2068, %v2064
          %v2229 = vpack.c.bf16 %v2069, %v2065
          %v2230 = vpack.c.bf16 %v2074, %v2070
          %v2231 = vpack.c.bf16 %v2075, %v2071
          %v2232 = vpack.c.bf16 %v2076, %v2072
          %v2233 = vpack.c.bf16 %v2077, %v2073
          %v2234 = vpack.c.bf16 %v2082, %v2078
          %v2235 = vpack.c.bf16 %v2083, %v2079
          %v2236 = vpack.c.bf16 %v2084, %v2080
          %v2237 = vpack.c.bf16 %v2085, %v2081
          %v2238 = vpack.c.bf16 %v2090, %v2086
          %v2239 = vpack.c.bf16 %v2091, %v2087
          %v2240 = vpack.c.bf16 %v2092, %v2088
          %v2241 = vpack.c.bf16 %v2093, %v2089
          %v2242 = vpack.c.bf16 %v2098, %v2094
          %v2243 = vpack.c.bf16 %v2099, %v2095
          %v2244 = vpack.c.bf16 %v2100, %v2096
          %v2245 = vpack.c.bf16 %v2101, %v2097
          %v2246 = vpack.c.bf16 %v2106, %v2102
          %v2247 = vpack.c.bf16 %v2107, %v2103
          %v2248 = vpack.c.bf16 %v2108, %v2104
          %v2249 = vpack.c.bf16 %v2109, %v2105
          %v2250 = vpack.c.bf16 %v2114, %v2110
          %v2251 = vpack.c.bf16 %v2115, %v2111
          %v2252 = vpack.c.bf16 %v2116, %v2112
          %v2253 = vpack.c.bf16 %v2117, %v2113
          %v2254 = vpack.c.bf16 %v2122, %v2118
          %v2255 = vpack.c.bf16 %v2123, %v2119
          %v2256 = vpack.c.bf16 %v2124, %v2120
          %v2257 = vpack.c.bf16 %v2125, %v2121
          %v2258 = vpack.c.bf16 %v2130, %v2126
          %v2259 = vpack.c.bf16 %v2131, %v2127
          %v2260 = vpack.c.bf16 %v2132, %v2128
          %v2261 = vpack.c.bf16 %v2133, %v2129
          %v2262 = vpack.c.bf16 %v1553, %v1549
          %v2263 = vpack.c.bf16 %v1554, %v1550
          %v2264 = vpack.c.bf16 %v1555, %v1551
          %v2265 = vpack.c.bf16 %v1556, %v1552
          %2266 = vmatpush.bf16.msra.mxu0 %v2162
          %2267 = vmatpush.bf16.msra.mxu0 %v2158
          %2268 = vmatpush.bf16.msra.mxu0 %v2154
          %2269 = vmatpush.bf16.msra.mxu0 %v2150
          %2270 = vmatpush.bf16.msra.mxu0 %v2146
          %2271 = vmatpush.bf16.msra.mxu0 %v2142
          %2272 = vmatpush.bf16.msra.mxu0 %v2138
          %2273 = vmatpush.bf16.msra.mxu0 %v2134
          %2274 = vmatmul.bf16.gmra.mxu0 %v2262
          %v2275 = vpop.f32.mrf.mxu0
          %v2276 = vadd.f32 0.0, %v2275
          %v2277 = vpop.f32.mrf.mxu0
          %v2278 = vadd.f32 0.0, %v2277
          %2279 = vdwg.mxu0
          %2280 = vmatpush.bf16.msra.mxu0 %v2194
          %2281 = vmatpush.bf16.msra.mxu0 %v2190
          %2282 = vmatpush.bf16.msra.mxu0 %v2186
          %2283 = vmatpush.bf16.msra.mxu0 %v2182
          %2284 = vmatpush.bf16.msra.mxu0 %v2178
          %2285 = vmatpush.bf16.msra.mxu0 %v2174
          %2286 = vmatpush.bf16.msra.mxu0 %v2170
          %2287 = vmatpush.bf16.msra.mxu0 %v2166
          %2288 = vmatmul.bf16.gmra.mxu0 %v2263
          %v2289 = vpop.f32.mrf.mxu0
          %v2290 = vadd.f32 %v2276, %v2289
          %v2291 = vpop.f32.mrf.mxu0
          %v2292 = vadd.f32 %v2278, %v2291
          %2293 = vdwg.mxu0
          %2294 = vmatpush.bf16.msra.mxu0 %v2226
          %2295 = vmatpush.bf16.msra.mxu0 %v2222
          %2296 = vmatpush.bf16.msra.mxu0 %v2218
          %2297 = vmatpush.bf16.msra.mxu0 %v2214
          %2298 = vmatpush.bf16.msra.mxu0 %v2210
          %2299 = vmatpush.bf16.msra.mxu0 %v2206
          %2300 = vmatpush.bf16.msra.mxu0 %v2202
          %2301 = vmatpush.bf16.msra.mxu0 %v2198
          %2302 = vmatmul.bf16.gmra.mxu0 %v2264
          %v2303 = vpop.f32.mrf.mxu0
          %v2304 = vadd.f32 %v2290, %v2303
          %v2305 = vpop.f32.mrf.mxu0
          %v2306 = vadd.f32 %v2292, %v2305
          %2307 = vdwg.mxu0
          %2308 = vmatpush.bf16.msra.mxu0 %v2258
          %2309 = vmatpush.bf16.msra.mxu0 %v2254
          %2310 = vmatpush.bf16.msra.mxu0 %v2250
          %2311 = vmatpush.bf16.msra.mxu0 %v2246
          %2312 = vmatpush.bf16.msra.mxu0 %v2242
          %2313 = vmatpush.bf16.msra.mxu0 %v2238
          %2314 = vmatpush.bf16.msra.mxu0 %v2234
          %2315 = vmatpush.bf16.msra.mxu0 %v2230
          %2316 = vmatmul.bf16.gmra.mxu0 %v2265
          %v2317 = vpop.f32.mrf.mxu0
          %v2318 = vadd.f32 %v2304, %v2317
          %v2319 = vpop.f32.mrf.mxu0
          %v2320 = vadd.f32 %v2306, %v2319
          %2321 = vdwg.mxu0
          %2322 = vmatpush.bf16.msra.mxu0 %v2163
          %2323 = vmatpush.bf16.msra.mxu0 %v2159
          %2324 = vmatpush.bf16.msra.mxu0 %v2155
          %2325 = vmatpush.bf16.msra.mxu0 %v2151
          %2326 = vmatpush.bf16.msra.mxu0 %v2147
          %2327 = vmatpush.bf16.msra.mxu0 %v2143
          %2328 = vmatpush.bf16.msra.mxu0 %v2139
          %2329 = vmatpush.bf16.msra.mxu0 %v2135
          %2330 = vmatmul.bf16.gmra.mxu0 %v2262
          %v2331 = vpop.f32.mrf.mxu0
          %v2332 = vadd.f32 0.0, %v2331
          %v2333 = vpop.f32.mrf.mxu0
          %v2334 = vadd.f32 0.0, %v2333
          %2335 = vdwg.mxu0
          %2336 = vmatpush.bf16.msra.mxu0 %v2195
          %2337 = vmatpush.bf16.msra.mxu0 %v2191
          %2338 = vmatpush.bf16.msra.mxu0 %v2187
          %2339 = vmatpush.bf16.msra.mxu0 %v2183
          %2340 = vmatpush.bf16.msra.mxu0 %v2179
          %2341 = vmatpush.bf16.msra.mxu0 %v2175
          %2342 = vmatpush.bf16.msra.mxu0 %v2171
          %2343 = vmatpush.bf16.msra.mxu0 %v2167
          %2344 = vmatmul.bf16.gmra.mxu0 %v2263
          %v2345 = vpop.f32.mrf.mxu0
          %v2346 = vadd.f32 %v2332, %v2345
          %v2347 = vpop.f32.mrf.mxu0
          %v2348 = vadd.f32 %v2334, %v2347
          %2349 = vdwg.mxu0
          %2350 = vmatpush.bf16.msra.mxu0 %v2227
          %2351 = vmatpush.bf16.msra.mxu0 %v2223
          %2352 = vmatpush.bf16.msra.mxu0 %v2219
          %2353 = vmatpush.bf16.msra.mxu0 %v2215
          %2354 = vmatpush.bf16.msra.mxu0 %v2211
          %2355 = vmatpush.bf16.msra.mxu0 %v2207
          %2356 = vmatpush.bf16.msra.mxu0 %v2203
          %2357 = vmatpush.bf16.msra.mxu0 %v2199
          %2358 = vmatmul.bf16.gmra.mxu0 %v2264
          %v2359 = vpop.f32.mrf.mxu0
          %v2360 = vadd.f32 %v2346, %v2359
          %v2361 = vpop.f32.mrf.mxu0
          %v2362 = vadd.f32 %v2348, %v2361
          %2363 = vdwg.mxu0
          %2364 = vmatpush.bf16.msra.mxu0 %v2259
          %2365 = vmatpush.bf16.msra.mxu0 %v2255
          %2366 = vmatpush.bf16.msra.mxu0 %v2251
          %2367 = vmatpush.bf16.msra.mxu0 %v2247
          %2368 = vmatpush.bf16.msra.mxu0 %v2243
          %2369 = vmatpush.bf16.msra.mxu0 %v2239
          %2370 = vmatpush.bf16.msra.mxu0 %v2235
          %2371 = vmatpush.bf16.msra.mxu0 %v2231
          %2372 = vmatmul.bf16.gmra.mxu0 %v2265
          %v2373 = vpop.f32.mrf.mxu0
          %v2374 = vadd.f32 %v2360, %v2373
          %v2375 = vpop.f32.mrf.mxu0
          %v2376 = vadd.f32 %v2362, %v2375
          %2377 = vdwg.mxu0
          %2378 = vmatpush.bf16.msra.mxu0 %v2164
          %2379 = vmatpush.bf16.msra.mxu0 %v2160
          %2380 = vmatpush.bf16.msra.mxu0 %v2156
          %2381 = vmatpush.bf16.msra.mxu0 %v2152
          %2382 = vmatpush.bf16.msra.mxu0 %v2148
          %2383 = vmatpush.bf16.msra.mxu0 %v2144
          %2384 = vmatpush.bf16.msra.mxu0 %v2140
          %2385 = vmatpush.bf16.msra.mxu0 %v2136
          %2386 = vmatmul.bf16.gmra.mxu0 %v2262
          %v2387 = vpop.f32.mrf.mxu0
          %v2388 = vadd.f32 0.0, %v2387
          %v2389 = vpop.f32.mrf.mxu0
          %v2390 = vadd.f32 0.0, %v2389
          %2391 = vdwg.mxu0
          %2392 = vmatpush.bf16.msra.mxu0 %v2196
          %2393 = vmatpush.bf16.msra.mxu0 %v2192
          %2394 = vmatpush.bf16.msra.mxu0 %v2188
          %2395 = vmatpush.bf16.msra.mxu0 %v2184
          %2396 = vmatpush.bf16.msra.mxu0 %v2180
          %2397 = vmatpush.bf16.msra.mxu0 %v2176
          %2398 = vmatpush.bf16.msra.mxu0 %v2172
          %2399 = vmatpush.bf16.msra.mxu0 %v2168
          %2400 = vmatmul.bf16.gmra.mxu0 %v2263
          %v2401 = vpop.f32.mrf.mxu0
          %v2402 = vadd.f32 %v2388, %v2401
          %v2403 = vpop.f32.mrf.mxu0
          %v2404 = vadd.f32 %v2390, %v2403
          %2405 = vdwg.mxu0
          %2406 = vmatpush.bf16.msra.mxu0 %v2228
          %2407 = vmatpush.bf16.msra.mxu0 %v2224
          %2408 = vmatpush.bf16.msra.mxu0 %v2220
          %2409 = vmatpush.bf16.msra.mxu0 %v2216
          %2410 = vmatpush.bf16.msra.mxu0 %v2212
          %2411 = vmatpush.bf16.msra.mxu0 %v2208
          %2412 = vmatpush.bf16.msra.mxu0 %v2204
          %2413 = vmatpush.bf16.msra.mxu0 %v2200
          %2414 = vmatmul.bf16.gmra.mxu0 %v2264
          %v2415 = vpop.f32.mrf.mxu0
          %v2416 = vadd.f32 %v2402, %v2415
          %v2417 = vpop.f32.mrf.mxu0
          %v2418 = vadd.f32 %v2404, %v2417
          %2419 = vdwg.mxu0
          %2420 = vmatpush.bf16.msra.mxu0 %v2260
          %2421 = vmatpush.bf16.msra.mxu0 %v2256
          %2422 = vmatpush.bf16.msra.mxu0 %v2252
          %2423 = vmatpush.bf16.msra.mxu0 %v2248
          %2424 = vmatpush.bf16.msra.mxu0 %v2244
          %2425 = vmatpush.bf16.msra.mxu0 %v2240
          %2426 = vmatpush.bf16.msra.mxu0 %v2236
          %2427 = vmatpush.bf16.msra.mxu0 %v2232
          %2428 = vmatmul.bf16.gmra.mxu0 %v2265
          %v2429 = vpop.f32.mrf.mxu0
          %v2430 = vadd.f32 %v2416, %v2429
          %v2431 = vpop.f32.mrf.mxu0
          %v2432 = vadd.f32 %v2418, %v2431
          %2433 = vdwg.mxu0
          %2434 = vmatpush.bf16.msra.mxu0 %v2165
          %2435 = vmatpush.bf16.msra.mxu0 %v2161
          %2436 = vmatpush.bf16.msra.mxu0 %v2157
          %2437 = vmatpush.bf16.msra.mxu0 %v2153
          %2438 = vmatpush.bf16.msra.mxu0 %v2149
          %2439 = vmatpush.bf16.msra.mxu0 %v2145
          %2440 = vmatpush.bf16.msra.mxu0 %v2141
          %2441 = vmatpush.bf16.msra.mxu0 %v2137
          %2442 = vmatmul.bf16.gmra.mxu0 %v2262
          %v2443 = vpop.f32.mrf.mxu0
          %v2444 = vadd.f32 0.0, %v2443
          %v2445 = vpop.f32.mrf.mxu0
          %v2446 = vadd.f32 0.0, %v2445
          %2447 = vdwg.mxu0
          %2448 = vmatpush.bf16.msra.mxu0 %v2197
          %2449 = vmatpush.bf16.msra.mxu0 %v2193
          %2450 = vmatpush.bf16.msra.mxu0 %v2189
          %2451 = vmatpush.bf16.msra.mxu0 %v2185
          %2452 = vmatpush.bf16.msra.mxu0 %v2181
          %2453 = vmatpush.bf16.msra.mxu0 %v2177
          %2454 = vmatpush.bf16.msra.mxu0 %v2173
          %2455 = vmatpush.bf16.msra.mxu0 %v2169
          %2456 = vmatmul.bf16.gmra.mxu0 %v2263
          %v2457 = vpop.f32.mrf.mxu0
          %v2458 = vadd.f32 %v2444, %v2457
          %v2459 = vpop.f32.mrf.mxu0
          %v2460 = vadd.f32 %v2446, %v2459
          %2461 = vdwg.mxu0
          %2462 = vmatpush.bf16.msra.mxu0 %v2229
          %2463 = vmatpush.bf16.msra.mxu0 %v2225
          %2464 = vmatpush.bf16.msra.mxu0 %v2221
          %2465 = vmatpush.bf16.msra.mxu0 %v2217
          %2466 = vmatpush.bf16.msra.mxu0 %v2213
          %2467 = vmatpush.bf16.msra.mxu0 %v2209
          %2468 = vmatpush.bf16.msra.mxu0 %v2205
          %2469 = vmatpush.bf16.msra.mxu0 %v2201
          %2470 = vmatmul.bf16.gmra.mxu0 %v2264
          %v2471 = vpop.f32.mrf.mxu0
          %v2472 = vadd.f32 %v2458, %v2471
          %v2473 = vpop.f32.mrf.mxu0
          %v2474 = vadd.f32 %v2460, %v2473
          %2475 = vdwg.mxu0
          %2476 = vmatpush.bf16.msra.mxu0 %v2261
          %2477 = vmatpush.bf16.msra.mxu0 %v2257
          %2478 = vmatpush.bf16.msra.mxu0 %v2253
          %2479 = vmatpush.bf16.msra.mxu0 %v2249
          %2480 = vmatpush.bf16.msra.mxu0 %v2245
          %2481 = vmatpush.bf16.msra.mxu0 %v2241
          %2482 = vmatpush.bf16.msra.mxu0 %v2237
          %2483 = vmatpush.bf16.msra.mxu0 %v2233
          %2484 = vmatmul.bf16.gmra.mxu0 %v2265
          %v2485 = vpop.f32.mrf.mxu0
          %v2486 = vadd.f32 %v2472, %v2485
          %v2487 = vpop.f32.mrf.mxu0
          %v2488 = vadd.f32 %v2474, %v2487
          %2489 = vdwg.mxu0
          %s2490 = sld [smem:[#allocation11 + $0x1]]
          %v2491 = vstv %s2490
          %v2492 = vmul.f32 %v2318, %v2491
          %v2493 = vmul.f32 %v2374, %v2491
          %v2494 = vmul.f32 %v2430, %v2491
          %v2495 = vmul.f32 %v2486, %v2491
          %v2496 = vmul.f32 %v2320, %v2491
          %v2497 = vmul.f32 %v2376, %v2491
          %v2498 = vmul.f32 %v2432, %v2491
          %v2499 = vmul.f32 %v2488, %v2491
          %s2500 = scalar_lea.vmem %s428, 4 [#allocation13]
          %v2501 = vld [vmem:[%s2500] sm:$0xf]
          %v2503 = vperm.slane %v2501, 0
          %v2504 = vperm.slane %v2501, 1
          %v2505 = vperm.slane %v2501, 2
          %v2506 = vperm.slane %v2501, 3
          %v2511 = vadd.f32 %v2492, %v2503
          %v2512 = vadd.f32 %v2493, %v2504
          %v2513 = vadd.f32 %v2494, %v2505
          %v2514 = vadd.f32 %v2495, %v2506
          %v2515 = vadd.f32 %v2496, %v2503
          %v2516 = vadd.f32 %v2497, %v2504
          %v2517 = vadd.f32 %v2498, %v2505
          %v2518 = vadd.f32 %v2499, %v2506
          %v2519 = vmax.f32 %v2511, 0.0
          %v2520 = vmax.f32 %v2512, 0.0
          %v2521 = vmax.f32 %v2513, 0.0
          %v2522 = vmax.f32 %v2514, 0.0
          %v2523 = vmax.f32 %v2515, 0.0
          %v2524 = vmax.f32 %v2516, 0.0
          %v2525 = vmax.f32 %v2517, 0.0
          %v2526 = vmax.f32 %v2518, 0.0
          %s2527 = scalar_lea.vmem %s418, 1024 [#allocation12]
          %v2528 = vld [vmem:[%s2527] sm:$0xff]
          %v2529 = vld [vmem:[%s2527 + $0x8] sm:$0xff]
          %v2530 = vld [vmem:[%s2527 + $0x10] sm:$0xff]
          %v2531 = vld [vmem:[%s2527 + $0x18] sm:$0xff]
          %v2532 = vld [vmem:[%s2527 + $0x20] sm:$0xff]
          %v2533 = vld [vmem:[%s2527 + $0x28] sm:$0xff]
          %v2534 = vld [vmem:[%s2527 + $0x30] sm:$0xff]
          %v2535 = vld [vmem:[%s2527 + $0x38] sm:$0xff]
          %v2536 = vld [vmem:[%s2527 + $0x40] sm:$0xff]
          %v2537 = vld [vmem:[%s2527 + $0x48] sm:$0xff]
          %v2538 = vld [vmem:[%s2527 + $0x50] sm:$0xff]
          %v2539 = vld [vmem:[%s2527 + $0x58] sm:$0xff]
          %v2540 = vld [vmem:[%s2527 + $0x60] sm:$0xff]
          %v2541 = vld [vmem:[%s2527 + $0x68] sm:$0xff]
          %v2542 = vld [vmem:[%s2527 + $0x70] sm:$0xff]
          %v2543 = vld [vmem:[%s2527 + $0x78] sm:$0xff]
          %v2544 = vld [vmem:[%s2527 + $0x80] sm:$0xff]
          %v2545 = vld [vmem:[%s2527 + $0x88] sm:$0xff]
          %v2546 = vld [vmem:[%s2527 + $0x90] sm:$0xff]
          %v2547 = vld [vmem:[%s2527 + $0x98] sm:$0xff]
          %v2548 = vld [vmem:[%s2527 + $0xa0] sm:$0xff]
          %v2549 = vld [vmem:[%s2527 + $0xa8] sm:$0xff]
          %v2550 = vld [vmem:[%s2527 + $0xb0] sm:$0xff]
          %v2551 = vld [vmem:[%s2527 + $0xb8] sm:$0xff]
          %v2552 = vld [vmem:[%s2527 + $0xc0] sm:$0xff]
          %v2553 = vld [vmem:[%s2527 + $0xc8] sm:$0xff]
          %v2554 = vld [vmem:[%s2527 + $0xd0] sm:$0xff]
          %v2555 = vld [vmem:[%s2527 + $0xd8] sm:$0xff]
          %v2556 = vld [vmem:[%s2527 + $0xe0] sm:$0xff]
          %v2557 = vld [vmem:[%s2527 + $0xe8] sm:$0xff]
          %v2558 = vld [vmem:[%s2527 + $0xf0] sm:$0xff]
          %v2559 = vld [vmem:[%s2527 + $0xf8] sm:$0xff]
          %v2560 = vld [vmem:[%s2527 + $0x100] sm:$0xff]
          %v2561 = vld [vmem:[%s2527 + $0x108] sm:$0xff]
          %v2562 = vld [vmem:[%s2527 + $0x110] sm:$0xff]
          %v2563 = vld [vmem:[%s2527 + $0x118] sm:$0xff]
          %v2564 = vld [vmem:[%s2527 + $0x120] sm:$0xff]
          %v2565 = vld [vmem:[%s2527 + $0x128] sm:$0xff]
          %v2566 = vld [vmem:[%s2527 + $0x130] sm:$0xff]
          %v2567 = vld [vmem:[%s2527 + $0x138] sm:$0xff]
          %v2568 = vld [vmem:[%s2527 + $0x140] sm:$0xff]
          %v2569 = vld [vmem:[%s2527 + $0x148] sm:$0xff]
          %v2570 = vld [vmem:[%s2527 + $0x150] sm:$0xff]
          %v2571 = vld [vmem:[%s2527 + $0x158] sm:$0xff]
          %v2572 = vld [vmem:[%s2527 + $0x160] sm:$0xff]
          %v2573 = vld [vmem:[%s2527 + $0x168] sm:$0xff]
          %v2574 = vld [vmem:[%s2527 + $0x170] sm:$0xff]
          %v2575 = vld [vmem:[%s2527 + $0x178] sm:$0xff]
          %v2576 = vld [vmem:[%s2527 + $0x180] sm:$0xff]
          %v2577 = vld [vmem:[%s2527 + $0x188] sm:$0xff]
          %v2578 = vld [vmem:[%s2527 + $0x190] sm:$0xff]
          %v2579 = vld [vmem:[%s2527 + $0x198] sm:$0xff]
          %v2580 = vld [vmem:[%s2527 + $0x1a0] sm:$0xff]
          %v2581 = vld [vmem:[%s2527 + $0x1a8] sm:$0xff]
          %v2582 = vld [vmem:[%s2527 + $0x1b0] sm:$0xff]
          %v2583 = vld [vmem:[%s2527 + $0x1b8] sm:$0xff]
          %v2584 = vld [vmem:[%s2527 + $0x1c0] sm:$0xff]
          %v2585 = vld [vmem:[%s2527 + $0x1c8] sm:$0xff]
          %v2586 = vld [vmem:[%s2527 + $0x1d0] sm:$0xff]
          %v2587 = vld [vmem:[%s2527 + $0x1d8] sm:$0xff]
          %v2588 = vld [vmem:[%s2527 + $0x1e0] sm:$0xff]
          %v2589 = vld [vmem:[%s2527 + $0x1e8] sm:$0xff]
          %v2590 = vld [vmem:[%s2527 + $0x1f0] sm:$0xff]
          %v2591 = vld [vmem:[%s2527 + $0x1f8] sm:$0xff]
          %v2592 = vunpack.c.0.s8 %v2528
          %v2593 = vunpack.c.0.s8 %v2529
          %v2594 = vunpack.c.0.s8 %v2530
          %v2595 = vunpack.c.0.s8 %v2531
          %v2596 = vunpack.c.1.s8 %v2528
          %v2597 = vunpack.c.1.s8 %v2529
          %v2598 = vunpack.c.1.s8 %v2530
          %v2599 = vunpack.c.1.s8 %v2531
          %v2600 = vunpack.c.2.s8 %v2528
          %v2601 = vunpack.c.2.s8 %v2529
          %v2602 = vunpack.c.2.s8 %v2530
          %v2603 = vunpack.c.2.s8 %v2531
          %v2604 = vunpack.c.3.s8 %v2528
          %v2605 = vunpack.c.3.s8 %v2529
          %v2606 = vunpack.c.3.s8 %v2530
          %v2607 = vunpack.c.3.s8 %v2531
          %v2608 = vunpack.c.0.s8 %v2532
          %v2609 = vunpack.c.0.s8 %v2533
          %v2610 = vunpack.c.0.s8 %v2534
          %v2611 = vunpack.c.0.s8 %v2535
          %v2612 = vunpack.c.1.s8 %v2532
          %v2613 = vunpack.c.1.s8 %v2533
          %v2614 = vunpack.c.1.s8 %v2534
          %v2615 = vunpack.c.1.s8 %v2535
          %v2616 = vunpack.c.2.s8 %v2532
          %v2617 = vunpack.c.2.s8 %v2533
          %v2618 = vunpack.c.2.s8 %v2534
          %v2619 = vunpack.c.2.s8 %v2535
          %v2620 = vunpack.c.3.s8 %v2532
          %v2621 = vunpack.c.3.s8 %v2533
          %v2622 = vunpack.c.3.s8 %v2534
          %v2623 = vunpack.c.3.s8 %v2535
          %v2624 = vunpack.c.0.s8 %v2536
          %v2625 = vunpack.c.0.s8 %v2537
          %v2626 = vunpack.c.0.s8 %v2538
          %v2627 = vunpack.c.0.s8 %v2539
          %v2628 = vunpack.c.1.s8 %v2536
          %v2629 = vunpack.c.1.s8 %v2537
          %v2630 = vunpack.c.1.s8 %v2538
          %v2631 = vunpack.c.1.s8 %v2539
          %v2632 = vunpack.c.2.s8 %v2536
          %v2633 = vunpack.c.2.s8 %v2537
          %v2634 = vunpack.c.2.s8 %v2538
          %v2635 = vunpack.c.2.s8 %v2539
          %v2636 = vunpack.c.3.s8 %v2536
          %v2637 = vunpack.c.3.s8 %v2537
          %v2638 = vunpack.c.3.s8 %v2538
          %v2639 = vunpack.c.3.s8 %v2539
          %v2640 = vunpack.c.0.s8 %v2540
          %v2641 = vunpack.c.0.s8 %v2541
          %v2642 = vunpack.c.0.s8 %v2542
          %v2643 = vunpack.c.0.s8 %v2543
          %v2644 = vunpack.c.1.s8 %v2540
          %v2645 = vunpack.c.1.s8 %v2541
          %v2646 = vunpack.c.1.s8 %v2542
          %v2647 = vunpack.c.1.s8 %v2543
          %v2648 = vunpack.c.2.s8 %v2540
          %v2649 = vunpack.c.2.s8 %v2541
          %v2650 = vunpack.c.2.s8 %v2542
          %v2651 = vunpack.c.2.s8 %v2543
          %v2652 = vunpack.c.3.s8 %v2540
          %v2653 = vunpack.c.3.s8 %v2541
          %v2654 = vunpack.c.3.s8 %v2542
          %v2655 = vunpack.c.3.s8 %v2543
          %v2656 = vunpack.c.0.s8 %v2544
          %v2657 = vunpack.c.0.s8 %v2545
          %v2658 = vunpack.c.0.s8 %v2546
          %v2659 = vunpack.c.0.s8 %v2547
          %v2660 = vunpack.c.1.s8 %v2544
          %v2661 = vunpack.c.1.s8 %v2545
          %v2662 = vunpack.c.1.s8 %v2546
          %v2663 = vunpack.c.1.s8 %v2547
          %v2664 = vunpack.c.2.s8 %v2544
          %v2665 = vunpack.c.2.s8 %v2545
          %v2666 = vunpack.c.2.s8 %v2546
          %v2667 = vunpack.c.2.s8 %v2547
          %v2668 = vunpack.c.3.s8 %v2544
          %v2669 = vunpack.c.3.s8 %v2545
          %v2670 = vunpack.c.3.s8 %v2546
          %v2671 = vunpack.c.3.s8 %v2547
          %v2672 = vunpack.c.0.s8 %v2548
          %v2673 = vunpack.c.0.s8 %v2549
          %v2674 = vunpack.c.0.s8 %v2550
          %v2675 = vunpack.c.0.s8 %v2551
          %v2676 = vunpack.c.1.s8 %v2548
          %v2677 = vunpack.c.1.s8 %v2549
          %v2678 = vunpack.c.1.s8 %v2550
          %v2679 = vunpack.c.1.s8 %v2551
          %v2680 = vunpack.c.2.s8 %v2548
          %v2681 = vunpack.c.2.s8 %v2549
          %v2682 = vunpack.c.2.s8 %v2550
          %v2683 = vunpack.c.2.s8 %v2551
          %v2684 = vunpack.c.3.s8 %v2548
          %v2685 = vunpack.c.3.s8 %v2549
          %v2686 = vunpack.c.3.s8 %v2550
          %v2687 = vunpack.c.3.s8 %v2551
          %v2688 = vunpack.c.0.s8 %v2552
          %v2689 = vunpack.c.0.s8 %v2553
          %v2690 = vunpack.c.0.s8 %v2554
          %v2691 = vunpack.c.0.s8 %v2555
          %v2692 = vunpack.c.1.s8 %v2552
          %v2693 = vunpack.c.1.s8 %v2553
          %v2694 = vunpack.c.1.s8 %v2554
          %v2695 = vunpack.c.1.s8 %v2555
          %v2696 = vunpack.c.2.s8 %v2552
          %v2697 = vunpack.c.2.s8 %v2553
          %v2698 = vunpack.c.2.s8 %v2554
          %v2699 = vunpack.c.2.s8 %v2555
          %v2700 = vunpack.c.3.s8 %v2552
          %v2701 = vunpack.c.3.s8 %v2553
          %v2702 = vunpack.c.3.s8 %v2554
          %v2703 = vunpack.c.3.s8 %v2555
          %v2704 = vunpack.c.0.s8 %v2556
          %v2705 = vunpack.c.0.s8 %v2557
          %v2706 = vunpack.c.0.s8 %v2558
          %v2707 = vunpack.c.0.s8 %v2559
          %v2708 = vunpack.c.1.s8 %v2556
          %v2709 = vunpack.c.1.s8 %v2557
          %v2710 = vunpack.c.1.s8 %v2558
          %v2711 = vunpack.c.1.s8 %v2559
          %v2712 = vunpack.c.2.s8 %v2556
          %v2713 = vunpack.c.2.s8 %v2557
          %v2714 = vunpack.c.2.s8 %v2558
          %v2715 = vunpack.c.2.s8 %v2559
          %v2716 = vunpack.c.3.s8 %v2556
          %v2717 = vunpack.c.3.s8 %v2557
          %v2718 = vunpack.c.3.s8 %v2558
          %v2719 = vunpack.c.3.s8 %v2559
          %v2720 = vunpack.c.0.s8 %v2560
          %v2721 = vunpack.c.0.s8 %v2561
          %v2722 = vunpack.c.0.s8 %v2562
          %v2723 = vunpack.c.0.s8 %v2563
          %v2724 = vunpack.c.1.s8 %v2560
          %v2725 = vunpack.c.1.s8 %v2561
          %v2726 = vunpack.c.1.s8 %v2562
          %v2727 = vunpack.c.1.s8 %v2563
          %v2728 = vunpack.c.2.s8 %v2560
          %v2729 = vunpack.c.2.s8 %v2561
          %v2730 = vunpack.c.2.s8 %v2562
          %v2731 = vunpack.c.2.s8 %v2563
          %v2732 = vunpack.c.3.s8 %v2560
          %v2733 = vunpack.c.3.s8 %v2561
          %v2734 = vunpack.c.3.s8 %v2562
          %v2735 = vunpack.c.3.s8 %v2563
          %v2736 = vunpack.c.0.s8 %v2564
          %v2737 = vunpack.c.0.s8 %v2565
          %v2738 = vunpack.c.0.s8 %v2566
          %v2739 = vunpack.c.0.s8 %v2567
          %v2740 = vunpack.c.1.s8 %v2564
          %v2741 = vunpack.c.1.s8 %v2565
          %v2742 = vunpack.c.1.s8 %v2566
          %v2743 = vunpack.c.1.s8 %v2567
          %v2744 = vunpack.c.2.s8 %v2564
          %v2745 = vunpack.c.2.s8 %v2565
          %v2746 = vunpack.c.2.s8 %v2566
          %v2747 = vunpack.c.2.s8 %v2567
          %v2748 = vunpack.c.3.s8 %v2564
          %v2749 = vunpack.c.3.s8 %v2565
          %v2750 = vunpack.c.3.s8 %v2566
          %v2751 = vunpack.c.3.s8 %v2567
          %v2752 = vunpack.c.0.s8 %v2568
          %v2753 = vunpack.c.0.s8 %v2569
          %v2754 = vunpack.c.0.s8 %v2570
          %v2755 = vunpack.c.0.s8 %v2571
          %v2756 = vunpack.c.1.s8 %v2568
          %v2757 = vunpack.c.1.s8 %v2569
          %v2758 = vunpack.c.1.s8 %v2570
          %v2759 = vunpack.c.1.s8 %v2571
          %v2760 = vunpack.c.2.s8 %v2568
          %v2761 = vunpack.c.2.s8 %v2569
          %v2762 = vunpack.c.2.s8 %v2570
          %v2763 = vunpack.c.2.s8 %v2571
          %v2764 = vunpack.c.3.s8 %v2568
          %v2765 = vunpack.c.3.s8 %v2569
          %v2766 = vunpack.c.3.s8 %v2570
          %v2767 = vunpack.c.3.s8 %v2571
          %v2768 = vunpack.c.0.s8 %v2572
          %v2769 = vunpack.c.0.s8 %v2573
          %v2770 = vunpack.c.0.s8 %v2574
          %v2771 = vunpack.c.0.s8 %v2575
          %v2772 = vunpack.c.1.s8 %v2572
          %v2773 = vunpack.c.1.s8 %v2573
          %v2774 = vunpack.c.1.s8 %v2574
          %v2775 = vunpack.c.1.s8 %v2575
          %v2776 = vunpack.c.2.s8 %v2572
          %v2777 = vunpack.c.2.s8 %v2573
          %v2778 = vunpack.c.2.s8 %v2574
          %v2779 = vunpack.c.2.s8 %v2575
          %v2780 = vunpack.c.3.s8 %v2572
          %v2781 = vunpack.c.3.s8 %v2573
          %v2782 = vunpack.c.3.s8 %v2574
          %v2783 = vunpack.c.3.s8 %v2575
          %v2784 = vunpack.c.0.s8 %v2576
          %v2785 = vunpack.c.0.s8 %v2577
          %v2786 = vunpack.c.0.s8 %v2578
          %v2787 = vunpack.c.0.s8 %v2579
          %v2788 = vunpack.c.1.s8 %v2576
          %v2789 = vunpack.c.1.s8 %v2577
          %v2790 = vunpack.c.1.s8 %v2578
          %v2791 = vunpack.c.1.s8 %v2579
          %v2792 = vunpack.c.2.s8 %v2576
          %v2793 = vunpack.c.2.s8 %v2577
          %v2794 = vunpack.c.2.s8 %v2578
          %v2795 = vunpack.c.2.s8 %v2579
          %v2796 = vunpack.c.3.s8 %v2576
          %v2797 = vunpack.c.3.s8 %v2577
          %v2798 = vunpack.c.3.s8 %v2578
          %v2799 = vunpack.c.3.s8 %v2579
          %v2800 = vunpack.c.0.s8 %v2580
          %v2801 = vunpack.c.0.s8 %v2581
          %v2802 = vunpack.c.0.s8 %v2582
          %v2803 = vunpack.c.0.s8 %v2583
          %v2804 = vunpack.c.1.s8 %v2580
          %v2805 = vunpack.c.1.s8 %v2581
          %v2806 = vunpack.c.1.s8 %v2582
          %v2807 = vunpack.c.1.s8 %v2583
          %v2808 = vunpack.c.2.s8 %v2580
          %v2809 = vunpack.c.2.s8 %v2581
          %v2810 = vunpack.c.2.s8 %v2582
          %v2811 = vunpack.c.2.s8 %v2583
          %v2812 = vunpack.c.3.s8 %v2580
          %v2813 = vunpack.c.3.s8 %v2581
          %v2814 = vunpack.c.3.s8 %v2582
          %v2815 = vunpack.c.3.s8 %v2583
          %v2816 = vunpack.c.0.s8 %v2584
          %v2817 = vunpack.c.0.s8 %v2585
          %v2818 = vunpack.c.0.s8 %v2586
          %v2819 = vunpack.c.0.s8 %v2587
          %v2820 = vunpack.c.1.s8 %v2584
          %v2821 = vunpack.c.1.s8 %v2585
          %v2822 = vunpack.c.1.s8 %v2586
          %v2823 = vunpack.c.1.s8 %v2587
          %v2824 = vunpack.c.2.s8 %v2584
          %v2825 = vunpack.c.2.s8 %v2585
          %v2826 = vunpack.c.2.s8 %v2586
          %v2827 = vunpack.c.2.s8 %v2587
          %v2828 = vunpack.c.3.s8 %v2584
          %v2829 = vunpack.c.3.s8 %v2585
          %v2830 = vunpack.c.3.s8 %v2586
          %v2831 = vunpack.c.3.s8 %v2587
          %v2832 = vunpack.c.0.s8 %v2588
          %v2833 = vunpack.c.0.s8 %v2589
          %v2834 = vunpack.c.0.s8 %v2590
          %v2835 = vunpack.c.0.s8 %v2591
          %v2836 = vunpack.c.1.s8 %v2588
          %v2837 = vunpack.c.1.s8 %v2589
          %v2838 = vunpack.c.1.s8 %v2590
          %v2839 = vunpack.c.1.s8 %v2591
          %v2840 = vunpack.c.2.s8 %v2588
          %v2841 = vunpack.c.2.s8 %v2589
          %v2842 = vunpack.c.2.s8 %v2590
          %v2843 = vunpack.c.2.s8 %v2591
          %v2844 = vunpack.c.3.s8 %v2588
          %v2845 = vunpack.c.3.s8 %v2589
          %v2846 = vunpack.c.3.s8 %v2590
          %v2847 = vunpack.c.3.s8 %v2591
          %v2848 = vcvt.s32.f32 %v2592
          %v2849 = vcvt.s32.f32 %v2593
          %v2850 = vcvt.s32.f32 %v2594
          %v2851 = vcvt.s32.f32 %v2595
          %v2852 = vcvt.s32.f32 %v2596
          %v2853 = vcvt.s32.f32 %v2597
          %v2854 = vcvt.s32.f32 %v2598
          %v2855 = vcvt.s32.f32 %v2599
          %v2856 = vcvt.s32.f32 %v2600
          %v2857 = vcvt.s32.f32 %v2601
          %v2858 = vcvt.s32.f32 %v2602
          %v2859 = vcvt.s32.f32 %v2603
          %v2860 = vcvt.s32.f32 %v2604
          %v2861 = vcvt.s32.f32 %v2605
          %v2862 = vcvt.s32.f32 %v2606
          %v2863 = vcvt.s32.f32 %v2607
          %v2864 = vcvt.s32.f32 %v2608
          %v2865 = vcvt.s32.f32 %v2609
          %v2866 = vcvt.s32.f32 %v2610
          %v2867 = vcvt.s32.f32 %v2611
          %v2868 = vcvt.s32.f32 %v2612
          %v2869 = vcvt.s32.f32 %v2613
          %v2870 = vcvt.s32.f32 %v2614
          %v2871 = vcvt.s32.f32 %v2615
          %v2872 = vcvt.s32.f32 %v2616
          %v2873 = vcvt.s32.f32 %v2617
          %v2874 = vcvt.s32.f32 %v2618
          %v2875 = vcvt.s32.f32 %v2619
          %v2876 = vcvt.s32.f32 %v2620
          %v2877 = vcvt.s32.f32 %v2621
          %v2878 = vcvt.s32.f32 %v2622
          %v2879 = vcvt.s32.f32 %v2623
          %v2880 = vcvt.s32.f32 %v2624
          %v2881 = vcvt.s32.f32 %v2625
          %v2882 = vcvt.s32.f32 %v2626
          %v2883 = vcvt.s32.f32 %v2627
          %v2884 = vcvt.s32.f32 %v2628
          %v2885 = vcvt.s32.f32 %v2629
          %v2886 = vcvt.s32.f32 %v2630
          %v2887 = vcvt.s32.f32 %v2631
          %v2888 = vcvt.s32.f32 %v2632
          %v2889 = vcvt.s32.f32 %v2633
          %v2890 = vcvt.s32.f32 %v2634
          %v2891 = vcvt.s32.f32 %v2635
          %v2892 = vcvt.s32.f32 %v2636
          %v2893 = vcvt.s32.f32 %v2637
          %v2894 = vcvt.s32.f32 %v2638
          %v2895 = vcvt.s32.f32 %v2639
          %v2896 = vcvt.s32.f32 %v2640
          %v2897 = vcvt.s32.f32 %v2641
          %v2898 = vcvt.s32.f32 %v2642
          %v2899 = vcvt.s32.f32 %v2643
          %v2900 = vcvt.s32.f32 %v2644
          %v2901 = vcvt.s32.f32 %v2645
          %v2902 = vcvt.s32.f32 %v2646
          %v2903 = vcvt.s32.f32 %v2647
          %v2904 = vcvt.s32.f32 %v2648
          %v2905 = vcvt.s32.f32 %v2649
          %v2906 = vcvt.s32.f32 %v2650
          %v2907 = vcvt.s32.f32 %v2651
          %v2908 = vcvt.s32.f32 %v2652
          %v2909 = vcvt.s32.f32 %v2653
          %v2910 = vcvt.s32.f32 %v2654
          %v2911 = vcvt.s32.f32 %v2655
          %v2912 = vcvt.s32.f32 %v2656
          %v2913 = vcvt.s32.f32 %v2657
          %v2914 = vcvt.s32.f32 %v2658
          %v2915 = vcvt.s32.f32 %v2659
          %v2916 = vcvt.s32.f32 %v2660
          %v2917 = vcvt.s32.f32 %v2661
          %v2918 = vcvt.s32.f32 %v2662
          %v2919 = vcvt.s32.f32 %v2663
          %v2920 = vcvt.s32.f32 %v2664
          %v2921 = vcvt.s32.f32 %v2665
          %v2922 = vcvt.s32.f32 %v2666
          %v2923 = vcvt.s32.f32 %v2667
          %v2924 = vcvt.s32.f32 %v2668
          %v2925 = vcvt.s32.f32 %v2669
          %v2926 = vcvt.s32.f32 %v2670
          %v2927 = vcvt.s32.f32 %v2671
          %v2928 = vcvt.s32.f32 %v2672
          %v2929 = vcvt.s32.f32 %v2673
          %v2930 = vcvt.s32.f32 %v2674
          %v2931 = vcvt.s32.f32 %v2675
          %v2932 = vcvt.s32.f32 %v2676
          %v2933 = vcvt.s32.f32 %v2677
          %v2934 = vcvt.s32.f32 %v2678
          %v2935 = vcvt.s32.f32 %v2679
          %v2936 = vcvt.s32.f32 %v2680
          %v2937 = vcvt.s32.f32 %v2681
          %v2938 = vcvt.s32.f32 %v2682
          %v2939 = vcvt.s32.f32 %v2683
          %v2940 = vcvt.s32.f32 %v2684
          %v2941 = vcvt.s32.f32 %v2685
          %v2942 = vcvt.s32.f32 %v2686
          %v2943 = vcvt.s32.f32 %v2687
          %v2944 = vcvt.s32.f32 %v2688
          %v2945 = vcvt.s32.f32 %v2689
          %v2946 = vcvt.s32.f32 %v2690
          %v2947 = vcvt.s32.f32 %v2691
          %v2948 = vcvt.s32.f32 %v2692
          %v2949 = vcvt.s32.f32 %v2693
          %v2950 = vcvt.s32.f32 %v2694
          %v2951 = vcvt.s32.f32 %v2695
          %v2952 = vcvt.s32.f32 %v2696
          %v2953 = vcvt.s32.f32 %v2697
          %v2954 = vcvt.s32.f32 %v2698
          %v2955 = vcvt.s32.f32 %v2699
          %v2956 = vcvt.s32.f32 %v2700
          %v2957 = vcvt.s32.f32 %v2701
          %v2958 = vcvt.s32.f32 %v2702
          %v2959 = vcvt.s32.f32 %v2703
          %v2960 = vcvt.s32.f32 %v2704
          %v2961 = vcvt.s32.f32 %v2705
          %v2962 = vcvt.s32.f32 %v2706
          %v2963 = vcvt.s32.f32 %v2707
          %v2964 = vcvt.s32.f32 %v2708
          %v2965 = vcvt.s32.f32 %v2709
          %v2966 = vcvt.s32.f32 %v2710
          %v2967 = vcvt.s32.f32 %v2711
          %v2968 = vcvt.s32.f32 %v2712
          %v2969 = vcvt.s32.f32 %v2713
          %v2970 = vcvt.s32.f32 %v2714
          %v2971 = vcvt.s32.f32 %v2715
          %v2972 = vcvt.s32.f32 %v2716
          %v2973 = vcvt.s32.f32 %v2717
          %v2974 = vcvt.s32.f32 %v2718
          %v2975 = vcvt.s32.f32 %v2719
          %v2976 = vcvt.s32.f32 %v2720
          %v2977 = vcvt.s32.f32 %v2721
          %v2978 = vcvt.s32.f32 %v2722
          %v2979 = vcvt.s32.f32 %v2723
          %v2980 = vcvt.s32.f32 %v2724
          %v2981 = vcvt.s32.f32 %v2725
          %v2982 = vcvt.s32.f32 %v2726
          %v2983 = vcvt.s32.f32 %v2727
          %v2984 = vcvt.s32.f32 %v2728
          %v2985 = vcvt.s32.f32 %v2729
          %v2986 = vcvt.s32.f32 %v2730
          %v2987 = vcvt.s32.f32 %v2731
          %v2988 = vcvt.s32.f32 %v2732
          %v2989 = vcvt.s32.f32 %v2733
          %v2990 = vcvt.s32.f32 %v2734
          %v2991 = vcvt.s32.f32 %v2735
          %v2992 = vcvt.s32.f32 %v2736
          %v2993 = vcvt.s32.f32 %v2737
          %v2994 = vcvt.s32.f32 %v2738
          %v2995 = vcvt.s32.f32 %v2739
          %v2996 = vcvt.s32.f32 %v2740
          %v2997 = vcvt.s32.f32 %v2741
          %v2998 = vcvt.s32.f32 %v2742
          %v2999 = vcvt.s32.f32 %v2743
          %v3000 = vcvt.s32.f32 %v2744
          %v3001 = vcvt.s32.f32 %v2745
          %v3002 = vcvt.s32.f32 %v2746
          %v3003 = vcvt.s32.f32 %v2747
          %v3004 = vcvt.s32.f32 %v2748
          %v3005 = vcvt.s32.f32 %v2749
          %v3006 = vcvt.s32.f32 %v2750
          %v3007 = vcvt.s32.f32 %v2751
          %v3008 = vcvt.s32.f32 %v2752
          %v3009 = vcvt.s32.f32 %v2753
          %v3010 = vcvt.s32.f32 %v2754
          %v3011 = vcvt.s32.f32 %v2755
          %v3012 = vcvt.s32.f32 %v2756
          %v3013 = vcvt.s32.f32 %v2757
          %v3014 = vcvt.s32.f32 %v2758
          %v3015 = vcvt.s32.f32 %v2759
          %v3016 = vcvt.s32.f32 %v2760
          %v3017 = vcvt.s32.f32 %v2761
          %v3018 = vcvt.s32.f32 %v2762
          %v3019 = vcvt.s32.f32 %v2763
          %v3020 = vcvt.s32.f32 %v2764
          %v3021 = vcvt.s32.f32 %v2765
          %v3022 = vcvt.s32.f32 %v2766
          %v3023 = vcvt.s32.f32 %v2767
          %v3024 = vcvt.s32.f32 %v2768
          %v3025 = vcvt.s32.f32 %v2769
          %v3026 = vcvt.s32.f32 %v2770
          %v3027 = vcvt.s32.f32 %v2771
          %v3028 = vcvt.s32.f32 %v2772
          %v3029 = vcvt.s32.f32 %v2773
          %v3030 = vcvt.s32.f32 %v2774
          %v3031 = vcvt.s32.f32 %v2775
          %v3032 = vcvt.s32.f32 %v2776
          %v3033 = vcvt.s32.f32 %v2777
          %v3034 = vcvt.s32.f32 %v2778
          %v3035 = vcvt.s32.f32 %v2779
          %v3036 = vcvt.s32.f32 %v2780
          %v3037 = vcvt.s32.f32 %v2781
          %v3038 = vcvt.s32.f32 %v2782
          %v3039 = vcvt.s32.f32 %v2783
          %v3040 = vcvt.s32.f32 %v2784
          %v3041 = vcvt.s32.f32 %v2785
          %v3042 = vcvt.s32.f32 %v2786
          %v3043 = vcvt.s32.f32 %v2787
          %v3044 = vcvt.s32.f32 %v2788
          %v3045 = vcvt.s32.f32 %v2789
          %v3046 = vcvt.s32.f32 %v2790
          %v3047 = vcvt.s32.f32 %v2791
          %v3048 = vcvt.s32.f32 %v2792
          %v3049 = vcvt.s32.f32 %v2793
          %v3050 = vcvt.s32.f32 %v2794
          %v3051 = vcvt.s32.f32 %v2795
          %v3052 = vcvt.s32.f32 %v2796
          %v3053 = vcvt.s32.f32 %v2797
          %v3054 = vcvt.s32.f32 %v2798
          %v3055 = vcvt.s32.f32 %v2799
          %v3056 = vcvt.s32.f32 %v2800
          %v3057 = vcvt.s32.f32 %v2801
          %v3058 = vcvt.s32.f32 %v2802
          %v3059 = vcvt.s32.f32 %v2803
          %v3060 = vcvt.s32.f32 %v2804
          %v3061 = vcvt.s32.f32 %v2805
          %v3062 = vcvt.s32.f32 %v2806
          %v3063 = vcvt.s32.f32 %v2807
          %v3064 = vcvt.s32.f32 %v2808
          %v3065 = vcvt.s32.f32 %v2809
          %v3066 = vcvt.s32.f32 %v2810
          %v3067 = vcvt.s32.f32 %v2811
          %v3068 = vcvt.s32.f32 %v2812
          %v3069 = vcvt.s32.f32 %v2813
          %v3070 = vcvt.s32.f32 %v2814
          %v3071 = vcvt.s32.f32 %v2815
          %v3072 = vcvt.s32.f32 %v2816
          %v3073 = vcvt.s32.f32 %v2817
          %v3074 = vcvt.s32.f32 %v2818
          %v3075 = vcvt.s32.f32 %v2819
          %v3076 = vcvt.s32.f32 %v2820
          %v3077 = vcvt.s32.f32 %v2821
          %v3078 = vcvt.s32.f32 %v2822
          %v3079 = vcvt.s32.f32 %v2823
          %v3080 = vcvt.s32.f32 %v2824
          %v3081 = vcvt.s32.f32 %v2825
          %v3082 = vcvt.s32.f32 %v2826
          %v3083 = vcvt.s32.f32 %v2827
          %v3084 = vcvt.s32.f32 %v2828
          %v3085 = vcvt.s32.f32 %v2829
          %v3086 = vcvt.s32.f32 %v2830
          %v3087 = vcvt.s32.f32 %v2831
          %v3088 = vcvt.s32.f32 %v2832
          %v3089 = vcvt.s32.f32 %v2833
          %v3090 = vcvt.s32.f32 %v2834
          %v3091 = vcvt.s32.f32 %v2835
          %v3092 = vcvt.s32.f32 %v2836
          %v3093 = vcvt.s32.f32 %v2837
          %v3094 = vcvt.s32.f32 %v2838
          %v3095 = vcvt.s32.f32 %v2839
          %v3096 = vcvt.s32.f32 %v2840
          %v3097 = vcvt.s32.f32 %v2841
          %v3098 = vcvt.s32.f32 %v2842
          %v3099 = vcvt.s32.f32 %v2843
          %v3100 = vcvt.s32.f32 %v2844
          %v3101 = vcvt.s32.f32 %v2845
          %v3102 = vcvt.s32.f32 %v2846
          %v3103 = vcvt.s32.f32 %v2847
          %v3104 = vpack.c.bf16 %v2852, %v2848
          %v3105 = vpack.c.bf16 %v2853, %v2849
          %v3106 = vpack.c.bf16 %v2854, %v2850
          %v3107 = vpack.c.bf16 %v2855, %v2851
          %v3108 = vpack.c.bf16 %v2860, %v2856
          %v3109 = vpack.c.bf16 %v2861, %v2857
          %v3110 = vpack.c.bf16 %v2862, %v2858
          %v3111 = vpack.c.bf16 %v2863, %v2859
          %v3112 = vpack.c.bf16 %v2868, %v2864
          %v3113 = vpack.c.bf16 %v2869, %v2865
          %v3114 = vpack.c.bf16 %v2870, %v2866
          %v3115 = vpack.c.bf16 %v2871, %v2867
          %v3116 = vpack.c.bf16 %v2876, %v2872
          %v3117 = vpack.c.bf16 %v2877, %v2873
          %v3118 = vpack.c.bf16 %v2878, %v2874
          %v3119 = vpack.c.bf16 %v2879, %v2875
          %v3120 = vpack.c.bf16 %v2884, %v2880
          %v3121 = vpack.c.bf16 %v2885, %v2881
          %v3122 = vpack.c.bf16 %v2886, %v2882
          %v3123 = vpack.c.bf16 %v2887, %v2883
          %v3124 = vpack.c.bf16 %v2892, %v2888
          %v3125 = vpack.c.bf16 %v2893, %v2889
          %v3126 = vpack.c.bf16 %v2894, %v2890
          %v3127 = vpack.c.bf16 %v2895, %v2891
          %v3128 = vpack.c.bf16 %v2900, %v2896
          %v3129 = vpack.c.bf16 %v2901, %v2897
          %v3130 = vpack.c.bf16 %v2902, %v2898
          %v3131 = vpack.c.bf16 %v2903, %v2899
          %v3132 = vpack.c.bf16 %v2908, %v2904
          %v3133 = vpack.c.bf16 %v2909, %v2905
          %v3134 = vpack.c.bf16 %v2910, %v2906
          %v3135 = vpack.c.bf16 %v2911, %v2907
          %v3136 = vpack.c.bf16 %v2916, %v2912
          %v3137 = vpack.c.bf16 %v2917, %v2913
          %v3138 = vpack.c.bf16 %v2918, %v2914
          %v3139 = vpack.c.bf16 %v2919, %v2915
          %v3140 = vpack.c.bf16 %v2924, %v2920
          %v3141 = vpack.c.bf16 %v2925, %v2921
          %v3142 = vpack.c.bf16 %v2926, %v2922
          %v3143 = vpack.c.bf16 %v2927, %v2923
          %v3144 = vpack.c.bf16 %v2932, %v2928
          %v3145 = vpack.c.bf16 %v2933, %v2929
          %v3146 = vpack.c.bf16 %v2934, %v2930
          %v3147 = vpack.c.bf16 %v2935, %v2931
          %v3148 = vpack.c.bf16 %v2940, %v2936
          %v3149 = vpack.c.bf16 %v2941, %v2937
          %v3150 = vpack.c.bf16 %v2942, %v2938
          %v3151 = vpack.c.bf16 %v2943, %v2939
          %v3152 = vpack.c.bf16 %v2948, %v2944
          %v3153 = vpack.c.bf16 %v2949, %v2945
          %v3154 = vpack.c.bf16 %v2950, %v2946
          %v3155 = vpack.c.bf16 %v2951, %v2947
          %v3156 = vpack.c.bf16 %v2956, %v2952
          %v3157 = vpack.c.bf16 %v2957, %v2953
          %v3158 = vpack.c.bf16 %v2958, %v2954
          %v3159 = vpack.c.bf16 %v2959, %v2955
          %v3160 = vpack.c.bf16 %v2964, %v2960
          %v3161 = vpack.c.bf16 %v2965, %v2961
          %v3162 = vpack.c.bf16 %v2966, %v2962
          %v3163 = vpack.c.bf16 %v2967, %v2963
          %v3164 = vpack.c.bf16 %v2972, %v2968
          %v3165 = vpack.c.bf16 %v2973, %v2969
          %v3166 = vpack.c.bf16 %v2974, %v2970
          %v3167 = vpack.c.bf16 %v2975, %v2971
          %v3168 = vpack.c.bf16 %v2980, %v2976
          %v3169 = vpack.c.bf16 %v2981, %v2977
          %v3170 = vpack.c.bf16 %v2982, %v2978
          %v3171 = vpack.c.bf16 %v2983, %v2979
          %v3172 = vpack.c.bf16 %v2988, %v2984
          %v3173 = vpack.c.bf16 %v2989, %v2985
          %v3174 = vpack.c.bf16 %v2990, %v2986
          %v3175 = vpack.c.bf16 %v2991, %v2987
          %v3176 = vpack.c.bf16 %v2996, %v2992
          %v3177 = vpack.c.bf16 %v2997, %v2993
          %v3178 = vpack.c.bf16 %v2998, %v2994
          %v3179 = vpack.c.bf16 %v2999, %v2995
          %v3180 = vpack.c.bf16 %v3004, %v3000
          %v3181 = vpack.c.bf16 %v3005, %v3001
          %v3182 = vpack.c.bf16 %v3006, %v3002
          %v3183 = vpack.c.bf16 %v3007, %v3003
          %v3184 = vpack.c.bf16 %v3012, %v3008
          %v3185 = vpack.c.bf16 %v3013, %v3009
          %v3186 = vpack.c.bf16 %v3014, %v3010
          %v3187 = vpack.c.bf16 %v3015, %v3011
          %v3188 = vpack.c.bf16 %v3020, %v3016
          %v3189 = vpack.c.bf16 %v3021, %v3017
          %v3190 = vpack.c.bf16 %v3022, %v3018
          %v3191 = vpack.c.bf16 %v3023, %v3019
          %v3192 = vpack.c.bf16 %v3028, %v3024
          %v3193 = vpack.c.bf16 %v3029, %v3025
          %v3194 = vpack.c.bf16 %v3030, %v3026
          %v3195 = vpack.c.bf16 %v3031, %v3027
          %v3196 = vpack.c.bf16 %v3036, %v3032
          %v3197 = vpack.c.bf16 %v3037, %v3033
          %v3198 = vpack.c.bf16 %v3038, %v3034
          %v3199 = vpack.c.bf16 %v3039, %v3035
          %v3200 = vpack.c.bf16 %v3044, %v3040
          %v3201 = vpack.c.bf16 %v3045, %v3041
          %v3202 = vpack.c.bf16 %v3046, %v3042
          %v3203 = vpack.c.bf16 %v3047, %v3043
          %v3204 = vpack.c.bf16 %v3052, %v3048
          %v3205 = vpack.c.bf16 %v3053, %v3049
          %v3206 = vpack.c.bf16 %v3054, %v3050
          %v3207 = vpack.c.bf16 %v3055, %v3051
          %v3208 = vpack.c.bf16 %v3060, %v3056
          %v3209 = vpack.c.bf16 %v3061, %v3057
          %v3210 = vpack.c.bf16 %v3062, %v3058
          %v3211 = vpack.c.bf16 %v3063, %v3059
          %v3212 = vpack.c.bf16 %v3068, %v3064
          %v3213 = vpack.c.bf16 %v3069, %v3065
          %v3214 = vpack.c.bf16 %v3070, %v3066
          %v3215 = vpack.c.bf16 %v3071, %v3067
          %v3216 = vpack.c.bf16 %v3076, %v3072
          %v3217 = vpack.c.bf16 %v3077, %v3073
          %v3218 = vpack.c.bf16 %v3078, %v3074
          %v3219 = vpack.c.bf16 %v3079, %v3075
          %v3220 = vpack.c.bf16 %v3084, %v3080
          %v3221 = vpack.c.bf16 %v3085, %v3081
          %v3222 = vpack.c.bf16 %v3086, %v3082
          %v3223 = vpack.c.bf16 %v3087, %v3083
          %v3224 = vpack.c.bf16 %v3092, %v3088
          %v3225 = vpack.c.bf16 %v3093, %v3089
          %v3226 = vpack.c.bf16 %v3094, %v3090
          %v3227 = vpack.c.bf16 %v3095, %v3091
          %v3228 = vpack.c.bf16 %v3100, %v3096
          %v3229 = vpack.c.bf16 %v3101, %v3097
          %v3230 = vpack.c.bf16 %v3102, %v3098
          %v3231 = vpack.c.bf16 %v3103, %v3099
          %v3232 = vpack.c.bf16 %v2523, %v2519
          %v3233 = vpack.c.bf16 %v2524, %v2520
          %v3234 = vpack.c.bf16 %v2525, %v2521
          %v3235 = vpack.c.bf16 %v2526, %v2522
          %3236 = vmatpush.bf16.msra.mxu0 %v3132
          %3237 = vmatpush.bf16.msra.mxu0 %v3128
          %3238 = vmatpush.bf16.msra.mxu0 %v3124
          %3239 = vmatpush.bf16.msra.mxu0 %v3120
          %3240 = vmatpush.bf16.msra.mxu0 %v3116
          %3241 = vmatpush.bf16.msra.mxu0 %v3112
          %3242 = vmatpush.bf16.msra.mxu0 %v3108
          %3243 = vmatpush.bf16.msra.mxu0 %v3104
          %3244 = vmatmul.bf16.gmra.mxu0 %v3232
          %v3245 = vpop.f32.mrf.mxu0
          %v3246 = vadd.f32 0.0, %v3245
          %v3247 = vpop.f32.mrf.mxu0
          %v3248 = vadd.f32 0.0, %v3247
          %3249 = vdwg.mxu0
          %3250 = vmatpush.bf16.msra.mxu0 %v3164
          %3251 = vmatpush.bf16.msra.mxu0 %v3160
          %3252 = vmatpush.bf16.msra.mxu0 %v3156
          %3253 = vmatpush.bf16.msra.mxu0 %v3152
          %3254 = vmatpush.bf16.msra.mxu0 %v3148
          %3255 = vmatpush.bf16.msra.mxu0 %v3144
          %3256 = vmatpush.bf16.msra.mxu0 %v3140
          %3257 = vmatpush.bf16.msra.mxu0 %v3136
          %3258 = vmatmul.bf16.gmra.mxu0 %v3233
          %v3259 = vpop.f32.mrf.mxu0
          %v3260 = vadd.f32 %v3246, %v3259
          %v3261 = vpop.f32.mrf.mxu0
          %v3262 = vadd.f32 %v3248, %v3261
          %3263 = vdwg.mxu0
          %3264 = vmatpush.bf16.msra.mxu0 %v3196
          %3265 = vmatpush.bf16.msra.mxu0 %v3192
          %3266 = vmatpush.bf16.msra.mxu0 %v3188
          %3267 = vmatpush.bf16.msra.mxu0 %v3184
          %3268 = vmatpush.bf16.msra.mxu0 %v3180
          %3269 = vmatpush.bf16.msra.mxu0 %v3176
          %3270 = vmatpush.bf16.msra.mxu0 %v3172
          %3271 = vmatpush.bf16.msra.mxu0 %v3168
          %3272 = vmatmul.bf16.gmra.mxu0 %v3234
          %v3273 = vpop.f32.mrf.mxu0
          %v3274 = vadd.f32 %v3260, %v3273
          %v3275 = vpop.f32.mrf.mxu0
          %v3276 = vadd.f32 %v3262, %v3275
          %3277 = vdwg.mxu0
          %3278 = vmatpush.bf16.msra.mxu0 %v3228
          %3279 = vmatpush.bf16.msra.mxu0 %v3224
          %3280 = vmatpush.bf16.msra.mxu0 %v3220
          %3281 = vmatpush.bf16.msra.mxu0 %v3216
          %3282 = vmatpush.bf16.msra.mxu0 %v3212
          %3283 = vmatpush.bf16.msra.mxu0 %v3208
          %3284 = vmatpush.bf16.msra.mxu0 %v3204
          %3285 = vmatpush.bf16.msra.mxu0 %v3200
          %3286 = vmatmul.bf16.gmra.mxu0 %v3235
          %v3287 = vpop.f32.mrf.mxu0
          %v3288 = vadd.f32 %v3274, %v3287
          %v3289 = vpop.f32.mrf.mxu0
          %v3290 = vadd.f32 %v3276, %v3289
          %3291 = vdwg.mxu0
          %3292 = vmatpush.bf16.msra.mxu0 %v3133
          %3293 = vmatpush.bf16.msra.mxu0 %v3129
          %3294 = vmatpush.bf16.msra.mxu0 %v3125
          %3295 = vmatpush.bf16.msra.mxu0 %v3121
          %3296 = vmatpush.bf16.msra.mxu0 %v3117
          %3297 = vmatpush.bf16.msra.mxu0 %v3113
          %3298 = vmatpush.bf16.msra.mxu0 %v3109
          %3299 = vmatpush.bf16.msra.mxu0 %v3105
          %3300 = vmatmul.bf16.gmra.mxu0 %v3232
          %v3301 = vpop.f32.mrf.mxu0
          %v3302 = vadd.f32 0.0, %v3301
          %v3303 = vpop.f32.mrf.mxu0
          %v3304 = vadd.f32 0.0, %v3303
          %3305 = vdwg.mxu0
          %3306 = vmatpush.bf16.msra.mxu0 %v3165
          %3307 = vmatpush.bf16.msra.mxu0 %v3161
          %3308 = vmatpush.bf16.msra.mxu0 %v3157
          %3309 = vmatpush.bf16.msra.mxu0 %v3153
          %3310 = vmatpush.bf16.msra.mxu0 %v3149
          %3311 = vmatpush.bf16.msra.mxu0 %v3145
          %3312 = vmatpush.bf16.msra.mxu0 %v3141
          %3313 = vmatpush.bf16.msra.mxu0 %v3137
          %3314 = vmatmul.bf16.gmra.mxu0 %v3233
          %v3315 = vpop.f32.mrf.mxu0
          %v3316 = vadd.f32 %v3302, %v3315
          %v3317 = vpop.f32.mrf.mxu0
          %v3318 = vadd.f32 %v3304, %v3317
          %3319 = vdwg.mxu0
          %3320 = vmatpush.bf16.msra.mxu0 %v3197
          %3321 = vmatpush.bf16.msra.mxu0 %v3193
          %3322 = vmatpush.bf16.msra.mxu0 %v3189
          %3323 = vmatpush.bf16.msra.mxu0 %v3185
          %3324 = vmatpush.bf16.msra.mxu0 %v3181
          %3325 = vmatpush.bf16.msra.mxu0 %v3177
          %3326 = vmatpush.bf16.msra.mxu0 %v3173
          %3327 = vmatpush.bf16.msra.mxu0 %v3169
          %3328 = vmatmul.bf16.gmra.mxu0 %v3234
          %v3329 = vpop.f32.mrf.mxu0
          %v3330 = vadd.f32 %v3316, %v3329
          %v3331 = vpop.f32.mrf.mxu0
          %v3332 = vadd.f32 %v3318, %v3331
          %3333 = vdwg.mxu0
          %3334 = vmatpush.bf16.msra.mxu0 %v3229
          %3335 = vmatpush.bf16.msra.mxu0 %v3225
          %3336 = vmatpush.bf16.msra.mxu0 %v3221
          %3337 = vmatpush.bf16.msra.mxu0 %v3217
          %3338 = vmatpush.bf16.msra.mxu0 %v3213
          %3339 = vmatpush.bf16.msra.mxu0 %v3209
          %3340 = vmatpush.bf16.msra.mxu0 %v3205
          %3341 = vmatpush.bf16.msra.mxu0 %v3201
          %3342 = vmatmul.bf16.gmra.mxu0 %v3235
          %v3343 = vpop.f32.mrf.mxu0
          %v3344 = vadd.f32 %v3330, %v3343
          %v3345 = vpop.f32.mrf.mxu0
          %v3346 = vadd.f32 %v3332, %v3345
          %3347 = vdwg.mxu0
          %3348 = vmatpush.bf16.msra.mxu0 %v3134
          %3349 = vmatpush.bf16.msra.mxu0 %v3130
          %3350 = vmatpush.bf16.msra.mxu0 %v3126
          %3351 = vmatpush.bf16.msra.mxu0 %v3122
          %3352 = vmatpush.bf16.msra.mxu0 %v3118
          %3353 = vmatpush.bf16.msra.mxu0 %v3114
          %3354 = vmatpush.bf16.msra.mxu0 %v3110
          %3355 = vmatpush.bf16.msra.mxu0 %v3106
          %3356 = vmatmul.bf16.gmra.mxu0 %v3232
          %v3357 = vpop.f32.mrf.mxu0
          %v3358 = vadd.f32 0.0, %v3357
          %v3359 = vpop.f32.mrf.mxu0
          %v3360 = vadd.f32 0.0, %v3359
          %3361 = vdwg.mxu0
          %3362 = vmatpush.bf16.msra.mxu0 %v3166
          %3363 = vmatpush.bf16.msra.mxu0 %v3162
          %3364 = vmatpush.bf16.msra.mxu0 %v3158
          %3365 = vmatpush.bf16.msra.mxu0 %v3154
          %3366 = vmatpush.bf16.msra.mxu0 %v3150
          %3367 = vmatpush.bf16.msra.mxu0 %v3146
          %3368 = vmatpush.bf16.msra.mxu0 %v3142
          %3369 = vmatpush.bf16.msra.mxu0 %v3138
          %3370 = vmatmul.bf16.gmra.mxu0 %v3233
          %v3371 = vpop.f32.mrf.mxu0
          %v3372 = vadd.f32 %v3358, %v3371
          %v3373 = vpop.f32.mrf.mxu0
          %v3374 = vadd.f32 %v3360, %v3373
          %3375 = vdwg.mxu0
          %3376 = vmatpush.bf16.msra.mxu0 %v3198
          %3377 = vmatpush.bf16.msra.mxu0 %v3194
          %3378 = vmatpush.bf16.msra.mxu0 %v3190
          %3379 = vmatpush.bf16.msra.mxu0 %v3186
          %3380 = vmatpush.bf16.msra.mxu0 %v3182
          %3381 = vmatpush.bf16.msra.mxu0 %v3178
          %3382 = vmatpush.bf16.msra.mxu0 %v3174
          %3383 = vmatpush.bf16.msra.mxu0 %v3170
          %3384 = vmatmul.bf16.gmra.mxu0 %v3234
          %v3385 = vpop.f32.mrf.mxu0
          %v3386 = vadd.f32 %v3372, %v3385
          %v3387 = vpop.f32.mrf.mxu0
          %v3388 = vadd.f32 %v3374, %v3387
          %3389 = vdwg.mxu0
          %3390 = vmatpush.bf16.msra.mxu0 %v3230
          %3391 = vmatpush.bf16.msra.mxu0 %v3226
          %3392 = vmatpush.bf16.msra.mxu0 %v3222
          %3393 = vmatpush.bf16.msra.mxu0 %v3218
          %3394 = vmatpush.bf16.msra.mxu0 %v3214
          %3395 = vmatpush.bf16.msra.mxu0 %v3210
          %3396 = vmatpush.bf16.msra.mxu0 %v3206
          %3397 = vmatpush.bf16.msra.mxu0 %v3202
          %3398 = vmatmul.bf16.gmra.mxu0 %v3235
          %v3399 = vpop.f32.mrf.mxu0
          %v3400 = vadd.f32 %v3386, %v3399
          %v3401 = vpop.f32.mrf.mxu0
          %v3402 = vadd.f32 %v3388, %v3401
          %3403 = vdwg.mxu0
          %3404 = vmatpush.bf16.msra.mxu0 %v3135
          %3405 = vmatpush.bf16.msra.mxu0 %v3131
          %3406 = vmatpush.bf16.msra.mxu0 %v3127
          %3407 = vmatpush.bf16.msra.mxu0 %v3123
          %3408 = vmatpush.bf16.msra.mxu0 %v3119
          %3409 = vmatpush.bf16.msra.mxu0 %v3115
          %3410 = vmatpush.bf16.msra.mxu0 %v3111
          %3411 = vmatpush.bf16.msra.mxu0 %v3107
          %3412 = vmatmul.bf16.gmra.mxu0 %v3232
          %v3413 = vpop.f32.mrf.mxu0
          %v3414 = vadd.f32 0.0, %v3413
          %v3415 = vpop.f32.mrf.mxu0
          %v3416 = vadd.f32 0.0, %v3415
          %3417 = vdwg.mxu0
          %3418 = vmatpush.bf16.msra.mxu0 %v3167
          %3419 = vmatpush.bf16.msra.mxu0 %v3163
          %3420 = vmatpush.bf16.msra.mxu0 %v3159
          %3421 = vmatpush.bf16.msra.mxu0 %v3155
          %3422 = vmatpush.bf16.msra.mxu0 %v3151
          %3423 = vmatpush.bf16.msra.mxu0 %v3147
          %3424 = vmatpush.bf16.msra.mxu0 %v3143
          %3425 = vmatpush.bf16.msra.mxu0 %v3139
          %3426 = vmatmul.bf16.gmra.mxu0 %v3233
          %v3427 = vpop.f32.mrf.mxu0
          %v3428 = vadd.f32 %v3414, %v3427
          %v3429 = vpop.f32.mrf.mxu0
          %v3430 = vadd.f32 %v3416, %v3429
          %3431 = vdwg.mxu0
          %3432 = vmatpush.bf16.msra.mxu0 %v3199
          %3433 = vmatpush.bf16.msra.mxu0 %v3195
          %3434 = vmatpush.bf16.msra.mxu0 %v3191
          %3435 = vmatpush.bf16.msra.mxu0 %v3187
          %3436 = vmatpush.bf16.msra.mxu0 %v3183
          %3437 = vmatpush.bf16.msra.mxu0 %v3179
          %3438 = vmatpush.bf16.msra.mxu0 %v3175
          %3439 = vmatpush.bf16.msra.mxu0 %v3171
          %3440 = vmatmul.bf16.gmra.mxu0 %v3234
          %v3441 = vpop.f32.mrf.mxu0
          %v3442 = vadd.f32 %v3428, %v3441
          %v3443 = vpop.f32.mrf.mxu0
          %v3444 = vadd.f32 %v3430, %v3443
          %3445 = vdwg.mxu0
          %3446 = vmatpush.bf16.msra.mxu0 %v3231
          %3447 = vmatpush.bf16.msra.mxu0 %v3227
          %3448 = vmatpush.bf16.msra.mxu0 %v3223
          %3449 = vmatpush.bf16.msra.mxu0 %v3219
          %3450 = vmatpush.bf16.msra.mxu0 %v3215
          %3451 = vmatpush.bf16.msra.mxu0 %v3211
          %3452 = vmatpush.bf16.msra.mxu0 %v3207
          %3453 = vmatpush.bf16.msra.mxu0 %v3203
          %3454 = vmatmul.bf16.gmra.mxu0 %v3235
          %v3455 = vpop.f32.mrf.mxu0
          %v3456 = vadd.f32 %v3442, %v3455
          %v3457 = vpop.f32.mrf.mxu0
          %v3458 = vadd.f32 %v3444, %v3457
          %3459 = vdwg.mxu0
          %s3460 = sld [smem:[#allocation11 + $0x2]]
          %v3461 = vstv %s3460
          %v3462 = vmul.f32 %v3288, %v3461
          %v3463 = vmul.f32 %v3344, %v3461
          %v3464 = vmul.f32 %v3400, %v3461
          %v3465 = vmul.f32 %v3456, %v3461
          %v3466 = vmul.f32 %v3290, %v3461
          %v3467 = vmul.f32 %v3346, %v3461
          %v3468 = vmul.f32 %v3402, %v3461
          %v3469 = vmul.f32 %v3458, %v3461
          %s3470 = scalar_lea.vmem %s428, 8 [#allocation13]
          %v3471 = vld [vmem:[%s3470] sm:$0xf]
          %v3473 = vperm.slane %v3471, 0
          %v3474 = vperm.slane %v3471, 1
          %v3475 = vperm.slane %v3471, 2
          %v3476 = vperm.slane %v3471, 3
          %v3481 = vadd.f32 %v3462, %v3473
          %v3482 = vadd.f32 %v3463, %v3474
          %v3483 = vadd.f32 %v3464, %v3475
          %v3484 = vadd.f32 %v3465, %v3476
          %v3485 = vadd.f32 %v3466, %v3473
          %v3486 = vadd.f32 %v3467, %v3474
          %v3487 = vadd.f32 %v3468, %v3475
          %v3488 = vadd.f32 %v3469, %v3476
          %v3489 = vmax.f32 %v3481, 0.0
          %v3490 = vmax.f32 %v3482, 0.0
          %v3491 = vmax.f32 %v3483, 0.0
          %v3492 = vmax.f32 %v3484, 0.0
          %v3493 = vmax.f32 %v3485, 0.0
          %v3494 = vmax.f32 %v3486, 0.0
          %v3495 = vmax.f32 %v3487, 0.0
          %v3496 = vmax.f32 %v3488, 0.0
          %3497 = vst [vmem:[#allocation2] sm:$0xff] %v3489
          %3498 = vst [vmem:[#allocation2 + $0x8] sm:$0xff] %v3490
          %3499 = vst [vmem:[#allocation2 + $0x10] sm:$0xff] %v3491
          %3500 = vst [vmem:[#allocation2 + $0x18] sm:$0xff] %v3492
          %3501 = vst [vmem:[#allocation2 + $0x20] sm:$0xff] %v3493
          %3502 = vst [vmem:[#allocation2 + $0x28] sm:$0xff] %v3494
          %3503 = vst [vmem:[#allocation2 + $0x30] sm:$0xff] %v3495
          %3504 = vst [vmem:[#allocation2 + $0x38] sm:$0xff] %v3496
          %3505 = vst [vmem:[%s11] sm:$0xff] 0.0
          %3506 = vst [vmem:[%s11 + $0x8] sm:$0xff] 0.0
        $region88: #{_mapping_forward.1} parent=55 // pred_fallthru
          _
        %p3507 = scmp.gt.s32.totalorder %s39, 0
        %s3508 = sld [smem:[#allocation5 + %s39]]
        %p3509 = scmp.eq.s32.totalorder %s3508, 1
        %p3510 = pnand %p3507, %p3509
        %p3511 = pneg %p3510
        // Predicated region
        $region89: #{_mapping_forward.1} parent=55 // pred_check
          _
        $region90: #{_mapping_forward.1} parent=55 // pred_check_branch
          %3513 = sbr.rel (%p3510) target = $region92
        $region91: #{_mapping_forward.1} parent=55 // pred_region
          %s3514 = ssub.s32 %s39, 1
          %s3515 = smul.u32 %s3514, 3
          %s3516 = sadd.s32 %s3515, 3
          %v3517 = vld [vmem:[#allocation2] sm:$0xff]
          %v3518 = vld [vmem:[#allocation2 + $0x8] sm:$0xff]
          %v3519 = vld [vmem:[#allocation2 + $0x10] sm:$0xff]
          %v3520 = vld [vmem:[#allocation2 + $0x18] sm:$0xff]
          %v3521 = vld [vmem:[#allocation2 + $0x20] sm:$0xff]
          %v3522 = vld [vmem:[#allocation2 + $0x28] sm:$0xff]
          %v3523 = vld [vmem:[#allocation2 + $0x30] sm:$0xff]
          %v3524 = vld [vmem:[#allocation2 + $0x38] sm:$0xff]
          %v3525 = vld [vmem:[%s418] sm:$0xff]
          %v3526 = vld [vmem:[%s418 + $0x8] sm:$0xff]
          %v3527 = vld [vmem:[%s418 + $0x10] sm:$0xff]
          %v3528 = vld [vmem:[%s418 + $0x18] sm:$0xff]
          %v3529 = vld [vmem:[%s418 + $0x20] sm:$0xff]
          %v3530 = vld [vmem:[%s418 + $0x28] sm:$0xff]
          %v3531 = vld [vmem:[%s418 + $0x30] sm:$0xff]
          %v3532 = vld [vmem:[%s418 + $0x38] sm:$0xff]
          %v3533 = vld [vmem:[%s418 + $0x40] sm:$0xff]
          %v3534 = vld [vmem:[%s418 + $0x48] sm:$0xff]
          %v3535 = vld [vmem:[%s418 + $0x50] sm:$0xff]
          %v3536 = vld [vmem:[%s418 + $0x58] sm:$0xff]
          %v3537 = vld [vmem:[%s418 + $0x60] sm:$0xff]
          %v3538 = vld [vmem:[%s418 + $0x68] sm:$0xff]
          %v3539 = vld [vmem:[%s418 + $0x70] sm:$0xff]
          %v3540 = vld [vmem:[%s418 + $0x78] sm:$0xff]
          %v3541 = vld [vmem:[%s418 + $0x80] sm:$0xff]
          %v3542 = vld [vmem:[%s418 + $0x88] sm:$0xff]
          %v3543 = vld [vmem:[%s418 + $0x90] sm:$0xff]
          %v3544 = vld [vmem:[%s418 + $0x98] sm:$0xff]
          %v3545 = vld [vmem:[%s418 + $0xa0] sm:$0xff]
          %v3546 = vld [vmem:[%s418 + $0xa8] sm:$0xff]
          %v3547 = vld [vmem:[%s418 + $0xb0] sm:$0xff]
          %v3548 = vld [vmem:[%s418 + $0xb8] sm:$0xff]
          %v3549 = vld [vmem:[%s418 + $0xc0] sm:$0xff]
          %v3550 = vld [vmem:[%s418 + $0xc8] sm:$0xff]
          %v3551 = vld [vmem:[%s418 + $0xd0] sm:$0xff]
          %v3552 = vld [vmem:[%s418 + $0xd8] sm:$0xff]
          %v3553 = vld [vmem:[%s418 + $0xe0] sm:$0xff]
          %v3554 = vld [vmem:[%s418 + $0xe8] sm:$0xff]
          %v3555 = vld [vmem:[%s418 + $0xf0] sm:$0xff]
          %v3556 = vld [vmem:[%s418 + $0xf8] sm:$0xff]
          %v3557 = vld [vmem:[%s418 + $0x100] sm:$0xff]
          %v3558 = vld [vmem:[%s418 + $0x108] sm:$0xff]
          %v3559 = vld [vmem:[%s418 + $0x110] sm:$0xff]
          %v3560 = vld [vmem:[%s418 + $0x118] sm:$0xff]
          %v3561 = vld [vmem:[%s418 + $0x120] sm:$0xff]
          %v3562 = vld [vmem:[%s418 + $0x128] sm:$0xff]
          %v3563 = vld [vmem:[%s418 + $0x130] sm:$0xff]
          %v3564 = vld [vmem:[%s418 + $0x138] sm:$0xff]
          %v3565 = vld [vmem:[%s418 + $0x140] sm:$0xff]
          %v3566 = vld [vmem:[%s418 + $0x148] sm:$0xff]
          %v3567 = vld [vmem:[%s418 + $0x150] sm:$0xff]
          %v3568 = vld [vmem:[%s418 + $0x158] sm:$0xff]
          %v3569 = vld [vmem:[%s418 + $0x160] sm:$0xff]
          %v3570 = vld [vmem:[%s418 + $0x168] sm:$0xff]
          %v3571 = vld [vmem:[%s418 + $0x170] sm:$0xff]
          %v3572 = vld [vmem:[%s418 + $0x178] sm:$0xff]
          %v3573 = vld [vmem:[%s418 + $0x180] sm:$0xff]
          %v3574 = vld [vmem:[%s418 + $0x188] sm:$0xff]
          %v3575 = vld [vmem:[%s418 + $0x190] sm:$0xff]
          %v3576 = vld [vmem:[%s418 + $0x198] sm:$0xff]
          %v3577 = vld [vmem:[%s418 + $0x1a0] sm:$0xff]
          %v3578 = vld [vmem:[%s418 + $0x1a8] sm:$0xff]
          %v3579 = vld [vmem:[%s418 + $0x1b0] sm:$0xff]
          %v3580 = vld [vmem:[%s418 + $0x1b8] sm:$0xff]
          %v3581 = vld [vmem:[%s418 + $0x1c0] sm:$0xff]
          %v3582 = vld [vmem:[%s418 + $0x1c8] sm:$0xff]
          %v3583 = vld [vmem:[%s418 + $0x1d0] sm:$0xff]
          %v3584 = vld [vmem:[%s418 + $0x1d8] sm:$0xff]
          %v3585 = vld [vmem:[%s418 + $0x1e0] sm:$0xff]
          %v3586 = vld [vmem:[%s418 + $0x1e8] sm:$0xff]
          %v3587 = vld [vmem:[%s418 + $0x1f0] sm:$0xff]
          %v3588 = vld [vmem:[%s418 + $0x1f8] sm:$0xff]
          %v3589 = vunpack.c.0.s8 %v3525
          %v3590 = vunpack.c.0.s8 %v3526
          %v3591 = vunpack.c.0.s8 %v3527
          %v3592 = vunpack.c.0.s8 %v3528
          %v3593 = vunpack.c.1.s8 %v3525
          %v3594 = vunpack.c.1.s8 %v3526
          %v3595 = vunpack.c.1.s8 %v3527
          %v3596 = vunpack.c.1.s8 %v3528
          %v3597 = vunpack.c.2.s8 %v3525
          %v3598 = vunpack.c.2.s8 %v3526
          %v3599 = vunpack.c.2.s8 %v3527
          %v3600 = vunpack.c.2.s8 %v3528
          %v3601 = vunpack.c.3.s8 %v3525
          %v3602 = vunpack.c.3.s8 %v3526
          %v3603 = vunpack.c.3.s8 %v3527
          %v3604 = vunpack.c.3.s8 %v3528
          %v3605 = vunpack.c.0.s8 %v3529
          %v3606 = vunpack.c.0.s8 %v3530
          %v3607 = vunpack.c.0.s8 %v3531
          %v3608 = vunpack.c.0.s8 %v3532
          %v3609 = vunpack.c.1.s8 %v3529
          %v3610 = vunpack.c.1.s8 %v3530
          %v3611 = vunpack.c.1.s8 %v3531
          %v3612 = vunpack.c.1.s8 %v3532
          %v3613 = vunpack.c.2.s8 %v3529
          %v3614 = vunpack.c.2.s8 %v3530
          %v3615 = vunpack.c.2.s8 %v3531
          %v3616 = vunpack.c.2.s8 %v3532
          %v3617 = vunpack.c.3.s8 %v3529
          %v3618 = vunpack.c.3.s8 %v3530
          %v3619 = vunpack.c.3.s8 %v3531
          %v3620 = vunpack.c.3.s8 %v3532
          %v3621 = vunpack.c.0.s8 %v3533
          %v3622 = vunpack.c.0.s8 %v3534
          %v3623 = vunpack.c.0.s8 %v3535
          %v3624 = vunpack.c.0.s8 %v3536
          %v3625 = vunpack.c.1.s8 %v3533
          %v3626 = vunpack.c.1.s8 %v3534
          %v3627 = vunpack.c.1.s8 %v3535
          %v3628 = vunpack.c.1.s8 %v3536
          %v3629 = vunpack.c.2.s8 %v3533
          %v3630 = vunpack.c.2.s8 %v3534
          %v3631 = vunpack.c.2.s8 %v3535
          %v3632 = vunpack.c.2.s8 %v3536
          %v3633 = vunpack.c.3.s8 %v3533
          %v3634 = vunpack.c.3.s8 %v3534
          %v3635 = vunpack.c.3.s8 %v3535
          %v3636 = vunpack.c.3.s8 %v3536
          %v3637 = vunpack.c.0.s8 %v3537
          %v3638 = vunpack.c.0.s8 %v3538
          %v3639 = vunpack.c.0.s8 %v3539
          %v3640 = vunpack.c.0.s8 %v3540
          %v3641 = vunpack.c.1.s8 %v3537
          %v3642 = vunpack.c.1.s8 %v3538
          %v3643 = vunpack.c.1.s8 %v3539
          %v3644 = vunpack.c.1.s8 %v3540
          %v3645 = vunpack.c.2.s8 %v3537
          %v3646 = vunpack.c.2.s8 %v3538
          %v3647 = vunpack.c.2.s8 %v3539
          %v3648 = vunpack.c.2.s8 %v3540
          %v3649 = vunpack.c.3.s8 %v3537
          %v3650 = vunpack.c.3.s8 %v3538
          %v3651 = vunpack.c.3.s8 %v3539
          %v3652 = vunpack.c.3.s8 %v3540
          %v3653 = vunpack.c.0.s8 %v3541
          %v3654 = vunpack.c.0.s8 %v3542
          %v3655 = vunpack.c.0.s8 %v3543
          %v3656 = vunpack.c.0.s8 %v3544
          %v3657 = vunpack.c.1.s8 %v3541
          %v3658 = vunpack.c.1.s8 %v3542
          %v3659 = vunpack.c.1.s8 %v3543
          %v3660 = vunpack.c.1.s8 %v3544
          %v3661 = vunpack.c.2.s8 %v3541
          %v3662 = vunpack.c.2.s8 %v3542
          %v3663 = vunpack.c.2.s8 %v3543
          %v3664 = vunpack.c.2.s8 %v3544
          %v3665 = vunpack.c.3.s8 %v3541
          %v3666 = vunpack.c.3.s8 %v3542
          %v3667 = vunpack.c.3.s8 %v3543
          %v3668 = vunpack.c.3.s8 %v3544
          %v3669 = vunpack.c.0.s8 %v3545
          %v3670 = vunpack.c.0.s8 %v3546
          %v3671 = vunpack.c.0.s8 %v3547
          %v3672 = vunpack.c.0.s8 %v3548
          %v3673 = vunpack.c.1.s8 %v3545
          %v3674 = vunpack.c.1.s8 %v3546
          %v3675 = vunpack.c.1.s8 %v3547
          %v3676 = vunpack.c.1.s8 %v3548
          %v3677 = vunpack.c.2.s8 %v3545
          %v3678 = vunpack.c.2.s8 %v3546
          %v3679 = vunpack.c.2.s8 %v3547
          %v3680 = vunpack.c.2.s8 %v3548
          %v3681 = vunpack.c.3.s8 %v3545
          %v3682 = vunpack.c.3.s8 %v3546
          %v3683 = vunpack.c.3.s8 %v3547
          %v3684 = vunpack.c.3.s8 %v3548
          %v3685 = vunpack.c.0.s8 %v3549
          %v3686 = vunpack.c.0.s8 %v3550
          %v3687 = vunpack.c.0.s8 %v3551
          %v3688 = vunpack.c.0.s8 %v3552
          %v3689 = vunpack.c.1.s8 %v3549
          %v3690 = vunpack.c.1.s8 %v3550
          %v3691 = vunpack.c.1.s8 %v3551
          %v3692 = vunpack.c.1.s8 %v3552
          %v3693 = vunpack.c.2.s8 %v3549
          %v3694 = vunpack.c.2.s8 %v3550
          %v3695 = vunpack.c.2.s8 %v3551
          %v3696 = vunpack.c.2.s8 %v3552
          %v3697 = vunpack.c.3.s8 %v3549
          %v3698 = vunpack.c.3.s8 %v3550
          %v3699 = vunpack.c.3.s8 %v3551
          %v3700 = vunpack.c.3.s8 %v3552
          %v3701 = vunpack.c.0.s8 %v3553
          %v3702 = vunpack.c.0.s8 %v3554
          %v3703 = vunpack.c.0.s8 %v3555
          %v3704 = vunpack.c.0.s8 %v3556
          %v3705 = vunpack.c.1.s8 %v3553
          %v3706 = vunpack.c.1.s8 %v3554
          %v3707 = vunpack.c.1.s8 %v3555
          %v3708 = vunpack.c.1.s8 %v3556
          %v3709 = vunpack.c.2.s8 %v3553
          %v3710 = vunpack.c.2.s8 %v3554
          %v3711 = vunpack.c.2.s8 %v3555
          %v3712 = vunpack.c.2.s8 %v3556
          %v3713 = vunpack.c.3.s8 %v3553
          %v3714 = vunpack.c.3.s8 %v3554
          %v3715 = vunpack.c.3.s8 %v3555
          %v3716 = vunpack.c.3.s8 %v3556
          %v3717 = vunpack.c.0.s8 %v3557
          %v3718 = vunpack.c.0.s8 %v3558
          %v3719 = vunpack.c.0.s8 %v3559
          %v3720 = vunpack.c.0.s8 %v3560
          %v3721 = vunpack.c.1.s8 %v3557
          %v3722 = vunpack.c.1.s8 %v3558
          %v3723 = vunpack.c.1.s8 %v3559
          %v3724 = vunpack.c.1.s8 %v3560
          %v3725 = vunpack.c.2.s8 %v3557
          %v3726 = vunpack.c.2.s8 %v3558
          %v3727 = vunpack.c.2.s8 %v3559
          %v3728 = vunpack.c.2.s8 %v3560
          %v3729 = vunpack.c.3.s8 %v3557
          %v3730 = vunpack.c.3.s8 %v3558
          %v3731 = vunpack.c.3.s8 %v3559
          %v3732 = vunpack.c.3.s8 %v3560
          %v3733 = vunpack.c.0.s8 %v3561
          %v3734 = vunpack.c.0.s8 %v3562
          %v3735 = vunpack.c.0.s8 %v3563
          %v3736 = vunpack.c.0.s8 %v3564
          %v3737 = vunpack.c.1.s8 %v3561
          %v3738 = vunpack.c.1.s8 %v3562
          %v3739 = vunpack.c.1.s8 %v3563
          %v3740 = vunpack.c.1.s8 %v3564
          %v3741 = vunpack.c.2.s8 %v3561
          %v3742 = vunpack.c.2.s8 %v3562
          %v3743 = vunpack.c.2.s8 %v3563
          %v3744 = vunpack.c.2.s8 %v3564
          %v3745 = vunpack.c.3.s8 %v3561
          %v3746 = vunpack.c.3.s8 %v3562
          %v3747 = vunpack.c.3.s8 %v3563
          %v3748 = vunpack.c.3.s8 %v3564
          %v3749 = vunpack.c.0.s8 %v3565
          %v3750 = vunpack.c.0.s8 %v3566
          %v3751 = vunpack.c.0.s8 %v3567
          %v3752 = vunpack.c.0.s8 %v3568
          %v3753 = vunpack.c.1.s8 %v3565
          %v3754 = vunpack.c.1.s8 %v3566
          %v3755 = vunpack.c.1.s8 %v3567
          %v3756 = vunpack.c.1.s8 %v3568
          %v3757 = vunpack.c.2.s8 %v3565
          %v3758 = vunpack.c.2.s8 %v3566
          %v3759 = vunpack.c.2.s8 %v3567
          %v3760 = vunpack.c.2.s8 %v3568
          %v3761 = vunpack.c.3.s8 %v3565
          %v3762 = vunpack.c.3.s8 %v3566
          %v3763 = vunpack.c.3.s8 %v3567
          %v3764 = vunpack.c.3.s8 %v3568
          %v3765 = vunpack.c.0.s8 %v3569
          %v3766 = vunpack.c.0.s8 %v3570
          %v3767 = vunpack.c.0.s8 %v3571
          %v3768 = vunpack.c.0.s8 %v3572
          %v3769 = vunpack.c.1.s8 %v3569
          %v3770 = vunpack.c.1.s8 %v3570
          %v3771 = vunpack.c.1.s8 %v3571
          %v3772 = vunpack.c.1.s8 %v3572
          %v3773 = vunpack.c.2.s8 %v3569
          %v3774 = vunpack.c.2.s8 %v3570
          %v3775 = vunpack.c.2.s8 %v3571
          %v3776 = vunpack.c.2.s8 %v3572
          %v3777 = vunpack.c.3.s8 %v3569
          %v3778 = vunpack.c.3.s8 %v3570
          %v3779 = vunpack.c.3.s8 %v3571
          %v3780 = vunpack.c.3.s8 %v3572
          %v3781 = vunpack.c.0.s8 %v3573
          %v3782 = vunpack.c.0.s8 %v3574
          %v3783 = vunpack.c.0.s8 %v3575
          %v3784 = vunpack.c.0.s8 %v3576
          %v3785 = vunpack.c.1.s8 %v3573
          %v3786 = vunpack.c.1.s8 %v3574
          %v3787 = vunpack.c.1.s8 %v3575
          %v3788 = vunpack.c.1.s8 %v3576
          %v3789 = vunpack.c.2.s8 %v3573
          %v3790 = vunpack.c.2.s8 %v3574
          %v3791 = vunpack.c.2.s8 %v3575
          %v3792 = vunpack.c.2.s8 %v3576
          %v3793 = vunpack.c.3.s8 %v3573
          %v3794 = vunpack.c.3.s8 %v3574
          %v3795 = vunpack.c.3.s8 %v3575
          %v3796 = vunpack.c.3.s8 %v3576
          %v3797 = vunpack.c.0.s8 %v3577
          %v3798 = vunpack.c.0.s8 %v3578
          %v3799 = vunpack.c.0.s8 %v3579
          %v3800 = vunpack.c.0.s8 %v3580
          %v3801 = vunpack.c.1.s8 %v3577
          %v3802 = vunpack.c.1.s8 %v3578
          %v3803 = vunpack.c.1.s8 %v3579
          %v3804 = vunpack.c.1.s8 %v3580
          %v3805 = vunpack.c.2.s8 %v3577
          %v3806 = vunpack.c.2.s8 %v3578
          %v3807 = vunpack.c.2.s8 %v3579
          %v3808 = vunpack.c.2.s8 %v3580
          %v3809 = vunpack.c.3.s8 %v3577
          %v3810 = vunpack.c.3.s8 %v3578
          %v3811 = vunpack.c.3.s8 %v3579
          %v3812 = vunpack.c.3.s8 %v3580
          %v3813 = vunpack.c.0.s8 %v3581
          %v3814 = vunpack.c.0.s8 %v3582
          %v3815 = vunpack.c.0.s8 %v3583
          %v3816 = vunpack.c.0.s8 %v3584
          %v3817 = vunpack.c.1.s8 %v3581
          %v3818 = vunpack.c.1.s8 %v3582
          %v3819 = vunpack.c.1.s8 %v3583
          %v3820 = vunpack.c.1.s8 %v3584
          %v3821 = vunpack.c.2.s8 %v3581
          %v3822 = vunpack.c.2.s8 %v3582
          %v3823 = vunpack.c.2.s8 %v3583
          %v3824 = vunpack.c.2.s8 %v3584
          %v3825 = vunpack.c.3.s8 %v3581
          %v3826 = vunpack.c.3.s8 %v3582
          %v3827 = vunpack.c.3.s8 %v3583
          %v3828 = vunpack.c.3.s8 %v3584
          %v3829 = vunpack.c.0.s8 %v3585
          %v3830 = vunpack.c.0.s8 %v3586
          %v3831 = vunpack.c.0.s8 %v3587
          %v3832 = vunpack.c.0.s8 %v3588
          %v3833 = vunpack.c.1.s8 %v3585
          %v3834 = vunpack.c.1.s8 %v3586
          %v3835 = vunpack.c.1.s8 %v3587
          %v3836 = vunpack.c.1.s8 %v3588
          %v3837 = vunpack.c.2.s8 %v3585
          %v3838 = vunpack.c.2.s8 %v3586
          %v3839 = vunpack.c.2.s8 %v3587
          %v3840 = vunpack.c.2.s8 %v3588
          %v3841 = vunpack.c.3.s8 %v3585
          %v3842 = vunpack.c.3.s8 %v3586
          %v3843 = vunpack.c.3.s8 %v3587
          %v3844 = vunpack.c.3.s8 %v3588
          %v3845 = vcvt.s32.f32 %v3589
          %v3846 = vcvt.s32.f32 %v3590
          %v3847 = vcvt.s32.f32 %v3591
          %v3848 = vcvt.s32.f32 %v3592
          %v3849 = vcvt.s32.f32 %v3593
          %v3850 = vcvt.s32.f32 %v3594
          %v3851 = vcvt.s32.f32 %v3595
          %v3852 = vcvt.s32.f32 %v3596
          %v3853 = vcvt.s32.f32 %v3597
          %v3854 = vcvt.s32.f32 %v3598
          %v3855 = vcvt.s32.f32 %v3599
          %v3856 = vcvt.s32.f32 %v3600
          %v3857 = vcvt.s32.f32 %v3601
          %v3858 = vcvt.s32.f32 %v3602
          %v3859 = vcvt.s32.f32 %v3603
          %v3860 = vcvt.s32.f32 %v3604
          %v3861 = vcvt.s32.f32 %v3605
          %v3862 = vcvt.s32.f32 %v3606
          %v3863 = vcvt.s32.f32 %v3607
          %v3864 = vcvt.s32.f32 %v3608
          %v3865 = vcvt.s32.f32 %v3609
          %v3866 = vcvt.s32.f32 %v3610
          %v3867 = vcvt.s32.f32 %v3611
          %v3868 = vcvt.s32.f32 %v3612
          %v3869 = vcvt.s32.f32 %v3613
          %v3870 = vcvt.s32.f32 %v3614
          %v3871 = vcvt.s32.f32 %v3615
          %v3872 = vcvt.s32.f32 %v3616
          %v3873 = vcvt.s32.f32 %v3617
          %v3874 = vcvt.s32.f32 %v3618
          %v3875 = vcvt.s32.f32 %v3619
          %v3876 = vcvt.s32.f32 %v3620
          %v3877 = vcvt.s32.f32 %v3621
          %v3878 = vcvt.s32.f32 %v3622
          %v3879 = vcvt.s32.f32 %v3623
          %v3880 = vcvt.s32.f32 %v3624
          %v3881 = vcvt.s32.f32 %v3625
          %v3882 = vcvt.s32.f32 %v3626
          %v3883 = vcvt.s32.f32 %v3627
          %v3884 = vcvt.s32.f32 %v3628
          %v3885 = vcvt.s32.f32 %v3629
          %v3886 = vcvt.s32.f32 %v3630
          %v3887 = vcvt.s32.f32 %v3631
          %v3888 = vcvt.s32.f32 %v3632
          %v3889 = vcvt.s32.f32 %v3633
          %v3890 = vcvt.s32.f32 %v3634
          %v3891 = vcvt.s32.f32 %v3635
          %v3892 = vcvt.s32.f32 %v3636
          %v3893 = vcvt.s32.f32 %v3637
          %v3894 = vcvt.s32.f32 %v3638
          %v3895 = vcvt.s32.f32 %v3639
          %v3896 = vcvt.s32.f32 %v3640
          %v3897 = vcvt.s32.f32 %v3641
          %v3898 = vcvt.s32.f32 %v3642
          %v3899 = vcvt.s32.f32 %v3643
          %v3900 = vcvt.s32.f32 %v3644
          %v3901 = vcvt.s32.f32 %v3645
          %v3902 = vcvt.s32.f32 %v3646
          %v3903 = vcvt.s32.f32 %v3647
          %v3904 = vcvt.s32.f32 %v3648
          %v3905 = vcvt.s32.f32 %v3649
          %v3906 = vcvt.s32.f32 %v3650
          %v3907 = vcvt.s32.f32 %v3651
          %v3908 = vcvt.s32.f32 %v3652
          %v3909 = vcvt.s32.f32 %v3653
          %v3910 = vcvt.s32.f32 %v3654
          %v3911 = vcvt.s32.f32 %v3655
          %v3912 = vcvt.s32.f32 %v3656
          %v3913 = vcvt.s32.f32 %v3657
          %v3914 = vcvt.s32.f32 %v3658
          %v3915 = vcvt.s32.f32 %v3659
          %v3916 = vcvt.s32.f32 %v3660
          %v3917 = vcvt.s32.f32 %v3661
          %v3918 = vcvt.s32.f32 %v3662
          %v3919 = vcvt.s32.f32 %v3663
          %v3920 = vcvt.s32.f32 %v3664
          %v3921 = vcvt.s32.f32 %v3665
          %v3922 = vcvt.s32.f32 %v3666
          %v3923 = vcvt.s32.f32 %v3667
          %v3924 = vcvt.s32.f32 %v3668
          %v3925 = vcvt.s32.f32 %v3669
          %v3926 = vcvt.s32.f32 %v3670
          %v3927 = vcvt.s32.f32 %v3671
          %v3928 = vcvt.s32.f32 %v3672
          %v3929 = vcvt.s32.f32 %v3673
          %v3930 = vcvt.s32.f32 %v3674
          %v3931 = vcvt.s32.f32 %v3675
          %v3932 = vcvt.s32.f32 %v3676
          %v3933 = vcvt.s32.f32 %v3677
          %v3934 = vcvt.s32.f32 %v3678
          %v3935 = vcvt.s32.f32 %v3679
          %v3936 = vcvt.s32.f32 %v3680
          %v3937 = vcvt.s32.f32 %v3681
          %v3938 = vcvt.s32.f32 %v3682
          %v3939 = vcvt.s32.f32 %v3683
          %v3940 = vcvt.s32.f32 %v3684
          %v3941 = vcvt.s32.f32 %v3685
          %v3942 = vcvt.s32.f32 %v3686
          %v3943 = vcvt.s32.f32 %v3687
          %v3944 = vcvt.s32.f32 %v3688
          %v3945 = vcvt.s32.f32 %v3689
          %v3946 = vcvt.s32.f32 %v3690
          %v3947 = vcvt.s32.f32 %v3691
          %v3948 = vcvt.s32.f32 %v3692
          %v3949 = vcvt.s32.f32 %v3693
          %v3950 = vcvt.s32.f32 %v3694
          %v3951 = vcvt.s32.f32 %v3695
          %v3952 = vcvt.s32.f32 %v3696
          %v3953 = vcvt.s32.f32 %v3697
          %v3954 = vcvt.s32.f32 %v3698
          %v3955 = vcvt.s32.f32 %v3699
          %v3956 = vcvt.s32.f32 %v3700
          %v3957 = vcvt.s32.f32 %v3701
          %v3958 = vcvt.s32.f32 %v3702
          %v3959 = vcvt.s32.f32 %v3703
          %v3960 = vcvt.s32.f32 %v3704
          %v3961 = vcvt.s32.f32 %v3705
          %v3962 = vcvt.s32.f32 %v3706
          %v3963 = vcvt.s32.f32 %v3707
          %v3964 = vcvt.s32.f32 %v3708
          %v3965 = vcvt.s32.f32 %v3709
          %v3966 = vcvt.s32.f32 %v3710
          %v3967 = vcvt.s32.f32 %v3711
          %v3968 = vcvt.s32.f32 %v3712
          %v3969 = vcvt.s32.f32 %v3713
          %v3970 = vcvt.s32.f32 %v3714
          %v3971 = vcvt.s32.f32 %v3715
          %v3972 = vcvt.s32.f32 %v3716
          %v3973 = vcvt.s32.f32 %v3717
          %v3974 = vcvt.s32.f32 %v3718
          %v3975 = vcvt.s32.f32 %v3719
          %v3976 = vcvt.s32.f32 %v3720
          %v3977 = vcvt.s32.f32 %v3721
          %v3978 = vcvt.s32.f32 %v3722
          %v3979 = vcvt.s32.f32 %v3723
          %v3980 = vcvt.s32.f32 %v3724
          %v3981 = vcvt.s32.f32 %v3725
          %v3982 = vcvt.s32.f32 %v3726
          %v3983 = vcvt.s32.f32 %v3727
          %v3984 = vcvt.s32.f32 %v3728
          %v3985 = vcvt.s32.f32 %v3729
          %v3986 = vcvt.s32.f32 %v3730
          %v3987 = vcvt.s32.f32 %v3731
          %v3988 = vcvt.s32.f32 %v3732
          %v3989 = vcvt.s32.f32 %v3733
          %v3990 = vcvt.s32.f32 %v3734
          %v3991 = vcvt.s32.f32 %v3735
          %v3992 = vcvt.s32.f32 %v3736
          %v3993 = vcvt.s32.f32 %v3737
          %v3994 = vcvt.s32.f32 %v3738
          %v3995 = vcvt.s32.f32 %v3739
          %v3996 = vcvt.s32.f32 %v3740
          %v3997 = vcvt.s32.f32 %v3741
          %v3998 = vcvt.s32.f32 %v3742
          %v3999 = vcvt.s32.f32 %v3743
          %v4000 = vcvt.s32.f32 %v3744
          %v4001 = vcvt.s32.f32 %v3745
          %v4002 = vcvt.s32.f32 %v3746
          %v4003 = vcvt.s32.f32 %v3747
          %v4004 = vcvt.s32.f32 %v3748
          %v4005 = vcvt.s32.f32 %v3749
          %v4006 = vcvt.s32.f32 %v3750
          %v4007 = vcvt.s32.f32 %v3751
          %v4008 = vcvt.s32.f32 %v3752
          %v4009 = vcvt.s32.f32 %v3753
          %v4010 = vcvt.s32.f32 %v3754
          %v4011 = vcvt.s32.f32 %v3755
          %v4012 = vcvt.s32.f32 %v3756
          %v4013 = vcvt.s32.f32 %v3757
          %v4014 = vcvt.s32.f32 %v3758
          %v4015 = vcvt.s32.f32 %v3759
          %v4016 = vcvt.s32.f32 %v3760
          %v4017 = vcvt.s32.f32 %v3761
          %v4018 = vcvt.s32.f32 %v3762
          %v4019 = vcvt.s32.f32 %v3763
          %v4020 = vcvt.s32.f32 %v3764
          %v4021 = vcvt.s32.f32 %v3765
          %v4022 = vcvt.s32.f32 %v3766
          %v4023 = vcvt.s32.f32 %v3767
          %v4024 = vcvt.s32.f32 %v3768
          %v4025 = vcvt.s32.f32 %v3769
          %v4026 = vcvt.s32.f32 %v3770
          %v4027 = vcvt.s32.f32 %v3771
          %v4028 = vcvt.s32.f32 %v3772
          %v4029 = vcvt.s32.f32 %v3773
          %v4030 = vcvt.s32.f32 %v3774
          %v4031 = vcvt.s32.f32 %v3775
          %v4032 = vcvt.s32.f32 %v3776
          %v4033 = vcvt.s32.f32 %v3777
          %v4034 = vcvt.s32.f32 %v3778
          %v4035 = vcvt.s32.f32 %v3779
          %v4036 = vcvt.s32.f32 %v3780
          %v4037 = vcvt.s32.f32 %v3781
          %v4038 = vcvt.s32.f32 %v3782
          %v4039 = vcvt.s32.f32 %v3783
          %v4040 = vcvt.s32.f32 %v3784
          %v4041 = vcvt.s32.f32 %v3785
          %v4042 = vcvt.s32.f32 %v3786
          %v4043 = vcvt.s32.f32 %v3787
          %v4044 = vcvt.s32.f32 %v3788
          %v4045 = vcvt.s32.f32 %v3789
          %v4046 = vcvt.s32.f32 %v3790
          %v4047 = vcvt.s32.f32 %v3791
          %v4048 = vcvt.s32.f32 %v3792
          %v4049 = vcvt.s32.f32 %v3793
          %v4050 = vcvt.s32.f32 %v3794
          %v4051 = vcvt.s32.f32 %v3795
          %v4052 = vcvt.s32.f32 %v3796
          %v4053 = vcvt.s32.f32 %v3797
          %v4054 = vcvt.s32.f32 %v3798
          %v4055 = vcvt.s32.f32 %v3799
          %v4056 = vcvt.s32.f32 %v3800
          %v4057 = vcvt.s32.f32 %v3801
          %v4058 = vcvt.s32.f32 %v3802
          %v4059 = vcvt.s32.f32 %v3803
          %v4060 = vcvt.s32.f32 %v3804
          %v4061 = vcvt.s32.f32 %v3805
          %v4062 = vcvt.s32.f32 %v3806
          %v4063 = vcvt.s32.f32 %v3807
          %v4064 = vcvt.s32.f32 %v3808
          %v4065 = vcvt.s32.f32 %v3809
          %v4066 = vcvt.s32.f32 %v3810
          %v4067 = vcvt.s32.f32 %v3811
          %v4068 = vcvt.s32.f32 %v3812
          %v4069 = vcvt.s32.f32 %v3813
          %v4070 = vcvt.s32.f32 %v3814
          %v4071 = vcvt.s32.f32 %v3815
          %v4072 = vcvt.s32.f32 %v3816
          %v4073 = vcvt.s32.f32 %v3817
          %v4074 = vcvt.s32.f32 %v3818
          %v4075 = vcvt.s32.f32 %v3819
          %v4076 = vcvt.s32.f32 %v3820
          %v4077 = vcvt.s32.f32 %v3821
          %v4078 = vcvt.s32.f32 %v3822
          %v4079 = vcvt.s32.f32 %v3823
          %v4080 = vcvt.s32.f32 %v3824
          %v4081 = vcvt.s32.f32 %v3825
          %v4082 = vcvt.s32.f32 %v3826
          %v4083 = vcvt.s32.f32 %v3827
          %v4084 = vcvt.s32.f32 %v3828
          %v4085 = vcvt.s32.f32 %v3829
          %v4086 = vcvt.s32.f32 %v3830
          %v4087 = vcvt.s32.f32 %v3831
          %v4088 = vcvt.s32.f32 %v3832
          %v4089 = vcvt.s32.f32 %v3833
          %v4090 = vcvt.s32.f32 %v3834
          %v4091 = vcvt.s32.f32 %v3835
          %v4092 = vcvt.s32.f32 %v3836
          %v4093 = vcvt.s32.f32 %v3837
          %v4094 = vcvt.s32.f32 %v3838
          %v4095 = vcvt.s32.f32 %v3839
          %v4096 = vcvt.s32.f32 %v3840
          %v4097 = vcvt.s32.f32 %v3841
          %v4098 = vcvt.s32.f32 %v3842
          %v4099 = vcvt.s32.f32 %v3843
          %v4100 = vcvt.s32.f32 %v3844
          %v4101 = vpack.c.bf16 %v3849, %v3845
          %v4102 = vpack.c.bf16 %v3850, %v3846
          %v4103 = vpack.c.bf16 %v3851, %v3847
          %v4104 = vpack.c.bf16 %v3852, %v3848
          %v4105 = vpack.c.bf16 %v3857, %v3853
          %v4106 = vpack.c.bf16 %v3858, %v3854
          %v4107 = vpack.c.bf16 %v3859, %v3855
          %v4108 = vpack.c.bf16 %v3860, %v3856
          %v4109 = vpack.c.bf16 %v3865, %v3861
          %v4110 = vpack.c.bf16 %v3866, %v3862
          %v4111 = vpack.c.bf16 %v3867, %v3863
          %v4112 = vpack.c.bf16 %v3868, %v3864
          %v4113 = vpack.c.bf16 %v3873, %v3869
          %v4114 = vpack.c.bf16 %v3874, %v3870
          %v4115 = vpack.c.bf16 %v3875, %v3871
          %v4116 = vpack.c.bf16 %v3876, %v3872
          %v4117 = vpack.c.bf16 %v3881, %v3877
          %v4118 = vpack.c.bf16 %v3882, %v3878
          %v4119 = vpack.c.bf16 %v3883, %v3879
          %v4120 = vpack.c.bf16 %v3884, %v3880
          %v4121 = vpack.c.bf16 %v3889, %v3885
          %v4122 = vpack.c.bf16 %v3890, %v3886
          %v4123 = vpack.c.bf16 %v3891, %v3887
          %v4124 = vpack.c.bf16 %v3892, %v3888
          %v4125 = vpack.c.bf16 %v3897, %v3893
          %v4126 = vpack.c.bf16 %v3898, %v3894
          %v4127 = vpack.c.bf16 %v3899, %v3895
          %v4128 = vpack.c.bf16 %v3900, %v3896
          %v4129 = vpack.c.bf16 %v3905, %v3901
          %v4130 = vpack.c.bf16 %v3906, %v3902
          %v4131 = vpack.c.bf16 %v3907, %v3903
          %v4132 = vpack.c.bf16 %v3908, %v3904
          %v4133 = vpack.c.bf16 %v3913, %v3909
          %v4134 = vpack.c.bf16 %v3914, %v3910
          %v4135 = vpack.c.bf16 %v3915, %v3911
          %v4136 = vpack.c.bf16 %v3916, %v3912
          %v4137 = vpack.c.bf16 %v3921, %v3917
          %v4138 = vpack.c.bf16 %v3922, %v3918
          %v4139 = vpack.c.bf16 %v3923, %v3919
          %v4140 = vpack.c.bf16 %v3924, %v3920
          %v4141 = vpack.c.bf16 %v3929, %v3925
          %v4142 = vpack.c.bf16 %v3930, %v3926
          %v4143 = vpack.c.bf16 %v3931, %v3927
          %v4144 = vpack.c.bf16 %v3932, %v3928
          %v4145 = vpack.c.bf16 %v3937, %v3933
          %v4146 = vpack.c.bf16 %v3938, %v3934
          %v4147 = vpack.c.bf16 %v3939, %v3935
          %v4148 = vpack.c.bf16 %v3940, %v3936
          %v4149 = vpack.c.bf16 %v3945, %v3941
          %v4150 = vpack.c.bf16 %v3946, %v3942
          %v4151 = vpack.c.bf16 %v3947, %v3943
          %v4152 = vpack.c.bf16 %v3948, %v3944
          %v4153 = vpack.c.bf16 %v3953, %v3949
          %v4154 = vpack.c.bf16 %v3954, %v3950
          %v4155 = vpack.c.bf16 %v3955, %v3951
          %v4156 = vpack.c.bf16 %v3956, %v3952
          %v4157 = vpack.c.bf16 %v3961, %v3957
          %v4158 = vpack.c.bf16 %v3962, %v3958
          %v4159 = vpack.c.bf16 %v3963, %v3959
          %v4160 = vpack.c.bf16 %v3964, %v3960
          %v4161 = vpack.c.bf16 %v3969, %v3965
          %v4162 = vpack.c.bf16 %v3970, %v3966
          %v4163 = vpack.c.bf16 %v3971, %v3967
          %v4164 = vpack.c.bf16 %v3972, %v3968
          %v4165 = vpack.c.bf16 %v3977, %v3973
          %v4166 = vpack.c.bf16 %v3978, %v3974
          %v4167 = vpack.c.bf16 %v3979, %v3975
          %v4168 = vpack.c.bf16 %v3980, %v3976
          %v4169 = vpack.c.bf16 %v3985, %v3981
          %v4170 = vpack.c.bf16 %v3986, %v3982
          %v4171 = vpack.c.bf16 %v3987, %v3983
          %v4172 = vpack.c.bf16 %v3988, %v3984
          %v4173 = vpack.c.bf16 %v3993, %v3989
          %v4174 = vpack.c.bf16 %v3994, %v3990
          %v4175 = vpack.c.bf16 %v3995, %v3991
          %v4176 = vpack.c.bf16 %v3996, %v3992
          %v4177 = vpack.c.bf16 %v4001, %v3997
          %v4178 = vpack.c.bf16 %v4002, %v3998
          %v4179 = vpack.c.bf16 %v4003, %v3999
          %v4180 = vpack.c.bf16 %v4004, %v4000
          %v4181 = vpack.c.bf16 %v4009, %v4005
          %v4182 = vpack.c.bf16 %v4010, %v4006
          %v4183 = vpack.c.bf16 %v4011, %v4007
          %v4184 = vpack.c.bf16 %v4012, %v4008
          %v4185 = vpack.c.bf16 %v4017, %v4013
          %v4186 = vpack.c.bf16 %v4018, %v4014
          %v4187 = vpack.c.bf16 %v4019, %v4015
          %v4188 = vpack.c.bf16 %v4020, %v4016
          %v4189 = vpack.c.bf16 %v4025, %v4021
          %v4190 = vpack.c.bf16 %v4026, %v4022
          %v4191 = vpack.c.bf16 %v4027, %v4023
          %v4192 = vpack.c.bf16 %v4028, %v4024
          %v4193 = vpack.c.bf16 %v4033, %v4029
          %v4194 = vpack.c.bf16 %v4034, %v4030
          %v4195 = vpack.c.bf16 %v4035, %v4031
          %v4196 = vpack.c.bf16 %v4036, %v4032
          %v4197 = vpack.c.bf16 %v4041, %v4037
          %v4198 = vpack.c.bf16 %v4042, %v4038
          %v4199 = vpack.c.bf16 %v4043, %v4039
          %v4200 = vpack.c.bf16 %v4044, %v4040
          %v4201 = vpack.c.bf16 %v4049, %v4045
          %v4202 = vpack.c.bf16 %v4050, %v4046
          %v4203 = vpack.c.bf16 %v4051, %v4047
          %v4204 = vpack.c.bf16 %v4052, %v4048
          %v4205 = vpack.c.bf16 %v4057, %v4053
          %v4206 = vpack.c.bf16 %v4058, %v4054
          %v4207 = vpack.c.bf16 %v4059, %v4055
          %v4208 = vpack.c.bf16 %v4060, %v4056
          %v4209 = vpack.c.bf16 %v4065, %v4061
          %v4210 = vpack.c.bf16 %v4066, %v4062
          %v4211 = vpack.c.bf16 %v4067, %v4063
          %v4212 = vpack.c.bf16 %v4068, %v4064
          %v4213 = vpack.c.bf16 %v4073, %v4069
          %v4214 = vpack.c.bf16 %v4074, %v4070
          %v4215 = vpack.c.bf16 %v4075, %v4071
          %v4216 = vpack.c.bf16 %v4076, %v4072
          %v4217 = vpack.c.bf16 %v4081, %v4077
          %v4218 = vpack.c.bf16 %v4082, %v4078
          %v4219 = vpack.c.bf16 %v4083, %v4079
          %v4220 = vpack.c.bf16 %v4084, %v4080
          %v4221 = vpack.c.bf16 %v4089, %v4085
          %v4222 = vpack.c.bf16 %v4090, %v4086
          %v4223 = vpack.c.bf16 %v4091, %v4087
          %v4224 = vpack.c.bf16 %v4092, %v4088
          %v4225 = vpack.c.bf16 %v4097, %v4093
          %v4226 = vpack.c.bf16 %v4098, %v4094
          %v4227 = vpack.c.bf16 %v4099, %v4095
          %v4228 = vpack.c.bf16 %v4100, %v4096
          %v4229 = vpack.c.bf16 %v3521, %v3517
          %v4230 = vpack.c.bf16 %v3522, %v3518
          %v4231 = vpack.c.bf16 %v3523, %v3519
          %v4232 = vpack.c.bf16 %v3524, %v3520
          %4233 = vmatpush.bf16.msra.mxu0 %v4129
          %4234 = vmatpush.bf16.msra.mxu0 %v4125
          %4235 = vmatpush.bf16.msra.mxu0 %v4121
          %4236 = vmatpush.bf16.msra.mxu0 %v4117
          %4237 = vmatpush.bf16.msra.mxu0 %v4113
          %4238 = vmatpush.bf16.msra.mxu0 %v4109
          %4239 = vmatpush.bf16.msra.mxu0 %v4105
          %4240 = vmatpush.bf16.msra.mxu0 %v4101
          %4241 = vmatmul.bf16.gmra.mxu0 %v4229
          %v4242 = vpop.f32.mrf.mxu0
          %v4243 = vadd.f32 0.0, %v4242
          %v4244 = vpop.f32.mrf.mxu0
          %v4245 = vadd.f32 0.0, %v4244
          %4246 = vdwg.mxu0
          %4247 = vmatpush.bf16.msra.mxu0 %v4161
          %4248 = vmatpush.bf16.msra.mxu0 %v4157
          %4249 = vmatpush.bf16.msra.mxu0 %v4153
          %4250 = vmatpush.bf16.msra.mxu0 %v4149
          %4251 = vmatpush.bf16.msra.mxu0 %v4145
          %4252 = vmatpush.bf16.msra.mxu0 %v4141
          %4253 = vmatpush.bf16.msra.mxu0 %v4137
          %4254 = vmatpush.bf16.msra.mxu0 %v4133
          %4255 = vmatmul.bf16.gmra.mxu0 %v4230
          %v4256 = vpop.f32.mrf.mxu0
          %v4257 = vadd.f32 %v4243, %v4256
          %v4258 = vpop.f32.mrf.mxu0
          %v4259 = vadd.f32 %v4245, %v4258
          %4260 = vdwg.mxu0
          %4261 = vmatpush.bf16.msra.mxu0 %v4193
          %4262 = vmatpush.bf16.msra.mxu0 %v4189
          %4263 = vmatpush.bf16.msra.mxu0 %v4185
          %4264 = vmatpush.bf16.msra.mxu0 %v4181
          %4265 = vmatpush.bf16.msra.mxu0 %v4177
          %4266 = vmatpush.bf16.msra.mxu0 %v4173
          %4267 = vmatpush.bf16.msra.mxu0 %v4169
          %4268 = vmatpush.bf16.msra.mxu0 %v4165
          %4269 = vmatmul.bf16.gmra.mxu0 %v4231
          %v4270 = vpop.f32.mrf.mxu0
          %v4271 = vadd.f32 %v4257, %v4270
          %v4272 = vpop.f32.mrf.mxu0
          %v4273 = vadd.f32 %v4259, %v4272
          %4274 = vdwg.mxu0
          %4275 = vmatpush.bf16.msra.mxu0 %v4225
          %4276 = vmatpush.bf16.msra.mxu0 %v4221
          %4277 = vmatpush.bf16.msra.mxu0 %v4217
          %4278 = vmatpush.bf16.msra.mxu0 %v4213
          %4279 = vmatpush.bf16.msra.mxu0 %v4209
          %4280 = vmatpush.bf16.msra.mxu0 %v4205
          %4281 = vmatpush.bf16.msra.mxu0 %v4201
          %4282 = vmatpush.bf16.msra.mxu0 %v4197
          %4283 = vmatmul.bf16.gmra.mxu0 %v4232
          %v4284 = vpop.f32.mrf.mxu0
          %v4285 = vadd.f32 %v4271, %v4284
          %v4286 = vpop.f32.mrf.mxu0
          %v4287 = vadd.f32 %v4273, %v4286
          %4288 = vdwg.mxu0
          %4289 = vmatpush.bf16.msra.mxu0 %v4130
          %4290 = vmatpush.bf16.msra.mxu0 %v4126
          %4291 = vmatpush.bf16.msra.mxu0 %v4122
          %4292 = vmatpush.bf16.msra.mxu0 %v4118
          %4293 = vmatpush.bf16.msra.mxu0 %v4114
          %4294 = vmatpush.bf16.msra.mxu0 %v4110
          %4295 = vmatpush.bf16.msra.mxu0 %v4106
          %4296 = vmatpush.bf16.msra.mxu0 %v4102
          %4297 = vmatmul.bf16.gmra.mxu0 %v4229
          %v4298 = vpop.f32.mrf.mxu0
          %v4299 = vadd.f32 0.0, %v4298
          %v4300 = vpop.f32.mrf.mxu0
          %v4301 = vadd.f32 0.0, %v4300
          %4302 = vdwg.mxu0
          %4303 = vmatpush.bf16.msra.mxu0 %v4162
          %4304 = vmatpush.bf16.msra.mxu0 %v4158
          %4305 = vmatpush.bf16.msra.mxu0 %v4154
          %4306 = vmatpush.bf16.msra.mxu0 %v4150
          %4307 = vmatpush.bf16.msra.mxu0 %v4146
          %4308 = vmatpush.bf16.msra.mxu0 %v4142
          %4309 = vmatpush.bf16.msra.mxu0 %v4138
          %4310 = vmatpush.bf16.msra.mxu0 %v4134
          %4311 = vmatmul.bf16.gmra.mxu0 %v4230
          %v4312 = vpop.f32.mrf.mxu0
          %v4313 = vadd.f32 %v4299, %v4312
          %v4314 = vpop.f32.mrf.mxu0
          %v4315 = vadd.f32 %v4301, %v4314
          %4316 = vdwg.mxu0
          %4317 = vmatpush.bf16.msra.mxu0 %v4194
          %4318 = vmatpush.bf16.msra.mxu0 %v4190
          %4319 = vmatpush.bf16.msra.mxu0 %v4186
          %4320 = vmatpush.bf16.msra.mxu0 %v4182
          %4321 = vmatpush.bf16.msra.mxu0 %v4178
          %4322 = vmatpush.bf16.msra.mxu0 %v4174
          %4323 = vmatpush.bf16.msra.mxu0 %v4170
          %4324 = vmatpush.bf16.msra.mxu0 %v4166
          %4325 = vmatmul.bf16.gmra.mxu0 %v4231
          %v4326 = vpop.f32.mrf.mxu0
          %v4327 = vadd.f32 %v4313, %v4326
          %v4328 = vpop.f32.mrf.mxu0
          %v4329 = vadd.f32 %v4315, %v4328
          %4330 = vdwg.mxu0
          %4331 = vmatpush.bf16.msra.mxu0 %v4226
          %4332 = vmatpush.bf16.msra.mxu0 %v4222
          %4333 = vmatpush.bf16.msra.mxu0 %v4218
          %4334 = vmatpush.bf16.msra.mxu0 %v4214
          %4335 = vmatpush.bf16.msra.mxu0 %v4210
          %4336 = vmatpush.bf16.msra.mxu0 %v4206
          %4337 = vmatpush.bf16.msra.mxu0 %v4202
          %4338 = vmatpush.bf16.msra.mxu0 %v4198
          %4339 = vmatmul.bf16.gmra.mxu0 %v4232
          %v4340 = vpop.f32.mrf.mxu0
          %v4341 = vadd.f32 %v4327, %v4340
          %v4342 = vpop.f32.mrf.mxu0
          %v4343 = vadd.f32 %v4329, %v4342
          %4344 = vdwg.mxu0
          %4345 = vmatpush.bf16.msra.mxu0 %v4131
          %4346 = vmatpush.bf16.msra.mxu0 %v4127
          %4347 = vmatpush.bf16.msra.mxu0 %v4123
          %4348 = vmatpush.bf16.msra.mxu0 %v4119
          %4349 = vmatpush.bf16.msra.mxu0 %v4115
          %4350 = vmatpush.bf16.msra.mxu0 %v4111
          %4351 = vmatpush.bf16.msra.mxu0 %v4107
          %4352 = vmatpush.bf16.msra.mxu0 %v4103
          %4353 = vmatmul.bf16.gmra.mxu0 %v4229
          %v4354 = vpop.f32.mrf.mxu0
          %v4355 = vadd.f32 0.0, %v4354
          %v4356 = vpop.f32.mrf.mxu0
          %v4357 = vadd.f32 0.0, %v4356
          %4358 = vdwg.mxu0
          %4359 = vmatpush.bf16.msra.mxu0 %v4163
          %4360 = vmatpush.bf16.msra.mxu0 %v4159
          %4361 = vmatpush.bf16.msra.mxu0 %v4155
          %4362 = vmatpush.bf16.msra.mxu0 %v4151
          %4363 = vmatpush.bf16.msra.mxu0 %v4147
          %4364 = vmatpush.bf16.msra.mxu0 %v4143
          %4365 = vmatpush.bf16.msra.mxu0 %v4139
          %4366 = vmatpush.bf16.msra.mxu0 %v4135
          %4367 = vmatmul.bf16.gmra.mxu0 %v4230
          %v4368 = vpop.f32.mrf.mxu0
          %v4369 = vadd.f32 %v4355, %v4368
          %v4370 = vpop.f32.mrf.mxu0
          %v4371 = vadd.f32 %v4357, %v4370
          %4372 = vdwg.mxu0
          %4373 = vmatpush.bf16.msra.mxu0 %v4195
          %4374 = vmatpush.bf16.msra.mxu0 %v4191
          %4375 = vmatpush.bf16.msra.mxu0 %v4187
          %4376 = vmatpush.bf16.msra.mxu0 %v4183
          %4377 = vmatpush.bf16.msra.mxu0 %v4179
          %4378 = vmatpush.bf16.msra.mxu0 %v4175
          %4379 = vmatpush.bf16.msra.mxu0 %v4171
          %4380 = vmatpush.bf16.msra.mxu0 %v4167
          %4381 = vmatmul.bf16.gmra.mxu0 %v4231
          %v4382 = vpop.f32.mrf.mxu0
          %v4383 = vadd.f32 %v4369, %v4382
          %v4384 = vpop.f32.mrf.mxu0
          %v4385 = vadd.f32 %v4371, %v4384
          %4386 = vdwg.mxu0
          %4387 = vmatpush.bf16.msra.mxu0 %v4227
          %4388 = vmatpush.bf16.msra.mxu0 %v4223
          %4389 = vmatpush.bf16.msra.mxu0 %v4219
          %4390 = vmatpush.bf16.msra.mxu0 %v4215
          %4391 = vmatpush.bf16.msra.mxu0 %v4211
          %4392 = vmatpush.bf16.msra.mxu0 %v4207
          %4393 = vmatpush.bf16.msra.mxu0 %v4203
          %4394 = vmatpush.bf16.msra.mxu0 %v4199
          %4395 = vmatmul.bf16.gmra.mxu0 %v4232
          %v4396 = vpop.f32.mrf.mxu0
          %v4397 = vadd.f32 %v4383, %v4396
          %v4398 = vpop.f32.mrf.mxu0
          %v4399 = vadd.f32 %v4385, %v4398
          %4400 = vdwg.mxu0
          %4401 = vmatpush.bf16.msra.mxu0 %v4132
          %4402 = vmatpush.bf16.msra.mxu0 %v4128
          %4403 = vmatpush.bf16.msra.mxu0 %v4124
          %4404 = vmatpush.bf16.msra.mxu0 %v4120
          %4405 = vmatpush.bf16.msra.mxu0 %v4116
          %4406 = vmatpush.bf16.msra.mxu0 %v4112
          %4407 = vmatpush.bf16.msra.mxu0 %v4108
          %4408 = vmatpush.bf16.msra.mxu0 %v4104
          %4409 = vmatmul.bf16.gmra.mxu0 %v4229
          %v4410 = vpop.f32.mrf.mxu0
          %v4411 = vadd.f32 0.0, %v4410
          %v4412 = vpop.f32.mrf.mxu0
          %v4413 = vadd.f32 0.0, %v4412
          %4414 = vdwg.mxu0
          %4415 = vmatpush.bf16.msra.mxu0 %v4164
          %4416 = vmatpush.bf16.msra.mxu0 %v4160
          %4417 = vmatpush.bf16.msra.mxu0 %v4156
          %4418 = vmatpush.bf16.msra.mxu0 %v4152
          %4419 = vmatpush.bf16.msra.mxu0 %v4148
          %4420 = vmatpush.bf16.msra.mxu0 %v4144
          %4421 = vmatpush.bf16.msra.mxu0 %v4140
          %4422 = vmatpush.bf16.msra.mxu0 %v4136
          %4423 = vmatmul.bf16.gmra.mxu0 %v4230
          %v4424 = vpop.f32.mrf.mxu0
          %v4425 = vadd.f32 %v4411, %v4424
          %v4426 = vpop.f32.mrf.mxu0
          %v4427 = vadd.f32 %v4413, %v4426
          %4428 = vdwg.mxu0
          %4429 = vmatpush.bf16.msra.mxu0 %v4196
          %4430 = vmatpush.bf16.msra.mxu0 %v4192
          %4431 = vmatpush.bf16.msra.mxu0 %v4188
          %4432 = vmatpush.bf16.msra.mxu0 %v4184
          %4433 = vmatpush.bf16.msra.mxu0 %v4180
          %4434 = vmatpush.bf16.msra.mxu0 %v4176
          %4435 = vmatpush.bf16.msra.mxu0 %v4172
          %4436 = vmatpush.bf16.msra.mxu0 %v4168
          %4437 = vmatmul.bf16.gmra.mxu0 %v4231
          %v4438 = vpop.f32.mrf.mxu0
          %v4439 = vadd.f32 %v4425, %v4438
          %v4440 = vpop.f32.mrf.mxu0
          %v4441 = vadd.f32 %v4427, %v4440
          %4442 = vdwg.mxu0
          %4443 = vmatpush.bf16.msra.mxu0 %v4228
          %4444 = vmatpush.bf16.msra.mxu0 %v4224
          %4445 = vmatpush.bf16.msra.mxu0 %v4220
          %4446 = vmatpush.bf16.msra.mxu0 %v4216
          %4447 = vmatpush.bf16.msra.mxu0 %v4212
          %4448 = vmatpush.bf16.msra.mxu0 %v4208
          %4449 = vmatpush.bf16.msra.mxu0 %v4204
          %4450 = vmatpush.bf16.msra.mxu0 %v4200
          %4451 = vmatmul.bf16.gmra.mxu0 %v4232
          %v4452 = vpop.f32.mrf.mxu0
          %v4453 = vadd.f32 %v4439, %v4452
          %v4454 = vpop.f32.mrf.mxu0
          %v4455 = vadd.f32 %v4441, %v4454
          %4456 = vdwg.mxu0
          %s4457 = sld [smem:[#allocation11 + %s3516]]
          %v4458 = vstv %s4457
          %v4459 = vmul.f32 %v4285, %v4458
          %v4460 = vmul.f32 %v4341, %v4458
          %v4461 = vmul.f32 %v4397, %v4458
          %v4462 = vmul.f32 %v4453, %v4458
          %v4463 = vmul.f32 %v4287, %v4458
          %v4464 = vmul.f32 %v4343, %v4458
          %v4465 = vmul.f32 %v4399, %v4458
          %v4466 = vmul.f32 %v4455, %v4458
          %v4467 = vld [vmem:[%s428] sm:$0xf]
          %v4469 = vperm.slane %v4467, 0
          %v4470 = vperm.slane %v4467, 1
          %v4471 = vperm.slane %v4467, 2
          %v4472 = vperm.slane %v4467, 3
          %v4477 = vadd.f32 %v4459, %v4469
          %v4478 = vadd.f32 %v4460, %v4470
          %v4479 = vadd.f32 %v4461, %v4471
          %v4480 = vadd.f32 %v4462, %v4472
          %v4481 = vadd.f32 %v4463, %v4469
          %v4482 = vadd.f32 %v4464, %v4470
          %v4483 = vadd.f32 %v4465, %v4471
          %v4484 = vadd.f32 %v4466, %v4472
          %v4485 = vmax.f32 %v4477, 0.0
          %v4486 = vmax.f32 %v4478, 0.0
          %v4487 = vmax.f32 %v4479, 0.0
          %v4488 = vmax.f32 %v4480, 0.0
          %v4489 = vmax.f32 %v4481, 0.0
          %v4490 = vmax.f32 %v4482, 0.0
          %v4491 = vmax.f32 %v4483, 0.0
          %v4492 = vmax.f32 %v4484, 0.0
          %s4493 = sadd.s32 %s3515, 4
          %s4494 = scalar_lea.vmem %s418, 512 [#allocation12]
          %v4495 = vld [vmem:[%s4494] sm:$0xff]
          %v4496 = vld [vmem:[%s4494 + $0x8] sm:$0xff]
          %v4497 = vld [vmem:[%s4494 + $0x10] sm:$0xff]
          %v4498 = vld [vmem:[%s4494 + $0x18] sm:$0xff]
          %v4499 = vld [vmem:[%s4494 + $0x20] sm:$0xff]
          %v4500 = vld [vmem:[%s4494 + $0x28] sm:$0xff]
          %v4501 = vld [vmem:[%s4494 + $0x30] sm:$0xff]
          %v4502 = vld [vmem:[%s4494 + $0x38] sm:$0xff]
          %v4503 = vld [vmem:[%s4494 + $0x40] sm:$0xff]
          %v4504 = vld [vmem:[%s4494 + $0x48] sm:$0xff]
          %v4505 = vld [vmem:[%s4494 + $0x50] sm:$0xff]
          %v4506 = vld [vmem:[%s4494 + $0x58] sm:$0xff]
          %v4507 = vld [vmem:[%s4494 + $0x60] sm:$0xff]
          %v4508 = vld [vmem:[%s4494 + $0x68] sm:$0xff]
          %v4509 = vld [vmem:[%s4494 + $0x70] sm:$0xff]
          %v4510 = vld [vmem:[%s4494 + $0x78] sm:$0xff]
          %v4511 = vld [vmem:[%s4494 + $0x80] sm:$0xff]
          %v4512 = vld [vmem:[%s4494 + $0x88] sm:$0xff]
          %v4513 = vld [vmem:[%s4494 + $0x90] sm:$0xff]
          %v4514 = vld [vmem:[%s4494 + $0x98] sm:$0xff]
          %v4515 = vld [vmem:[%s4494 + $0xa0] sm:$0xff]
          %v4516 = vld [vmem:[%s4494 + $0xa8] sm:$0xff]
          %v4517 = vld [vmem:[%s4494 + $0xb0] sm:$0xff]
          %v4518 = vld [vmem:[%s4494 + $0xb8] sm:$0xff]
          %v4519 = vld [vmem:[%s4494 + $0xc0] sm:$0xff]
          %v4520 = vld [vmem:[%s4494 + $0xc8] sm:$0xff]
          %v4521 = vld [vmem:[%s4494 + $0xd0] sm:$0xff]
          %v4522 = vld [vmem:[%s4494 + $0xd8] sm:$0xff]
          %v4523 = vld [vmem:[%s4494 + $0xe0] sm:$0xff]
          %v4524 = vld [vmem:[%s4494 + $0xe8] sm:$0xff]
          %v4525 = vld [vmem:[%s4494 + $0xf0] sm:$0xff]
          %v4526 = vld [vmem:[%s4494 + $0xf8] sm:$0xff]
          %v4527 = vld [vmem:[%s4494 + $0x100] sm:$0xff]
          %v4528 = vld [vmem:[%s4494 + $0x108] sm:$0xff]
          %v4529 = vld [vmem:[%s4494 + $0x110] sm:$0xff]
          %v4530 = vld [vmem:[%s4494 + $0x118] sm:$0xff]
          %v4531 = vld [vmem:[%s4494 + $0x120] sm:$0xff]
          %v4532 = vld [vmem:[%s4494 + $0x128] sm:$0xff]
          %v4533 = vld [vmem:[%s4494 + $0x130] sm:$0xff]
          %v4534 = vld [vmem:[%s4494 + $0x138] sm:$0xff]
          %v4535 = vld [vmem:[%s4494 + $0x140] sm:$0xff]
          %v4536 = vld [vmem:[%s4494 + $0x148] sm:$0xff]
          %v4537 = vld [vmem:[%s4494 + $0x150] sm:$0xff]
          %v4538 = vld [vmem:[%s4494 + $0x158] sm:$0xff]
          %v4539 = vld [vmem:[%s4494 + $0x160] sm:$0xff]
          %v4540 = vld [vmem:[%s4494 + $0x168] sm:$0xff]
          %v4541 = vld [vmem:[%s4494 + $0x170] sm:$0xff]
          %v4542 = vld [vmem:[%s4494 + $0x178] sm:$0xff]
          %v4543 = vld [vmem:[%s4494 + $0x180] sm:$0xff]
          %v4544 = vld [vmem:[%s4494 + $0x188] sm:$0xff]
          %v4545 = vld [vmem:[%s4494 + $0x190] sm:$0xff]
          %v4546 = vld [vmem:[%s4494 + $0x198] sm:$0xff]
          %v4547 = vld [vmem:[%s4494 + $0x1a0] sm:$0xff]
          %v4548 = vld [vmem:[%s4494 + $0x1a8] sm:$0xff]
          %v4549 = vld [vmem:[%s4494 + $0x1b0] sm:$0xff]
          %v4550 = vld [vmem:[%s4494 + $0x1b8] sm:$0xff]
          %v4551 = vld [vmem:[%s4494 + $0x1c0] sm:$0xff]
          %v4552 = vld [vmem:[%s4494 + $0x1c8] sm:$0xff]
          %v4553 = vld [vmem:[%s4494 + $0x1d0] sm:$0xff]
          %v4554 = vld [vmem:[%s4494 + $0x1d8] sm:$0xff]
          %v4555 = vld [vmem:[%s4494 + $0x1e0] sm:$0xff]
          %v4556 = vld [vmem:[%s4494 + $0x1e8] sm:$0xff]
          %v4557 = vld [vmem:[%s4494 + $0x1f0] sm:$0xff]
          %v4558 = vld [vmem:[%s4494 + $0x1f8] sm:$0xff]
          %v4559 = vunpack.c.0.s8 %v4495
          %v4560 = vunpack.c.0.s8 %v4496
          %v4561 = vunpack.c.0.s8 %v4497
          %v4562 = vunpack.c.0.s8 %v4498
          %v4563 = vunpack.c.1.s8 %v4495
          %v4564 = vunpack.c.1.s8 %v4496
          %v4565 = vunpack.c.1.s8 %v4497
          %v4566 = vunpack.c.1.s8 %v4498
          %v4567 = vunpack.c.2.s8 %v4495
          %v4568 = vunpack.c.2.s8 %v4496
          %v4569 = vunpack.c.2.s8 %v4497
          %v4570 = vunpack.c.2.s8 %v4498
          %v4571 = vunpack.c.3.s8 %v4495
          %v4572 = vunpack.c.3.s8 %v4496
          %v4573 = vunpack.c.3.s8 %v4497
          %v4574 = vunpack.c.3.s8 %v4498
          %v4575 = vunpack.c.0.s8 %v4499
          %v4576 = vunpack.c.0.s8 %v4500
          %v4577 = vunpack.c.0.s8 %v4501
          %v4578 = vunpack.c.0.s8 %v4502
          %v4579 = vunpack.c.1.s8 %v4499
          %v4580 = vunpack.c.1.s8 %v4500
          %v4581 = vunpack.c.1.s8 %v4501
          %v4582 = vunpack.c.1.s8 %v4502
          %v4583 = vunpack.c.2.s8 %v4499
          %v4584 = vunpack.c.2.s8 %v4500
          %v4585 = vunpack.c.2.s8 %v4501
          %v4586 = vunpack.c.2.s8 %v4502
          %v4587 = vunpack.c.3.s8 %v4499
          %v4588 = vunpack.c.3.s8 %v4500
          %v4589 = vunpack.c.3.s8 %v4501
          %v4590 = vunpack.c.3.s8 %v4502
          %v4591 = vunpack.c.0.s8 %v4503
          %v4592 = vunpack.c.0.s8 %v4504
          %v4593 = vunpack.c.0.s8 %v4505
          %v4594 = vunpack.c.0.s8 %v4506
          %v4595 = vunpack.c.1.s8 %v4503
          %v4596 = vunpack.c.1.s8 %v4504
          %v4597 = vunpack.c.1.s8 %v4505
          %v4598 = vunpack.c.1.s8 %v4506
          %v4599 = vunpack.c.2.s8 %v4503
          %v4600 = vunpack.c.2.s8 %v4504
          %v4601 = vunpack.c.2.s8 %v4505
          %v4602 = vunpack.c.2.s8 %v4506
          %v4603 = vunpack.c.3.s8 %v4503
          %v4604 = vunpack.c.3.s8 %v4504
          %v4605 = vunpack.c.3.s8 %v4505
          %v4606 = vunpack.c.3.s8 %v4506
          %v4607 = vunpack.c.0.s8 %v4507
          %v4608 = vunpack.c.0.s8 %v4508
          %v4609 = vunpack.c.0.s8 %v4509
          %v4610 = vunpack.c.0.s8 %v4510
          %v4611 = vunpack.c.1.s8 %v4507
          %v4612 = vunpack.c.1.s8 %v4508
          %v4613 = vunpack.c.1.s8 %v4509
          %v4614 = vunpack.c.1.s8 %v4510
          %v4615 = vunpack.c.2.s8 %v4507
          %v4616 = vunpack.c.2.s8 %v4508
          %v4617 = vunpack.c.2.s8 %v4509
          %v4618 = vunpack.c.2.s8 %v4510
          %v4619 = vunpack.c.3.s8 %v4507
          %v4620 = vunpack.c.3.s8 %v4508
          %v4621 = vunpack.c.3.s8 %v4509
          %v4622 = vunpack.c.3.s8 %v4510
          %v4623 = vunpack.c.0.s8 %v4511
          %v4624 = vunpack.c.0.s8 %v4512
          %v4625 = vunpack.c.0.s8 %v4513
          %v4626 = vunpack.c.0.s8 %v4514
          %v4627 = vunpack.c.1.s8 %v4511
          %v4628 = vunpack.c.1.s8 %v4512
          %v4629 = vunpack.c.1.s8 %v4513
          %v4630 = vunpack.c.1.s8 %v4514
          %v4631 = vunpack.c.2.s8 %v4511
          %v4632 = vunpack.c.2.s8 %v4512
          %v4633 = vunpack.c.2.s8 %v4513
          %v4634 = vunpack.c.2.s8 %v4514
          %v4635 = vunpack.c.3.s8 %v4511
          %v4636 = vunpack.c.3.s8 %v4512
          %v4637 = vunpack.c.3.s8 %v4513
          %v4638 = vunpack.c.3.s8 %v4514
          %v4639 = vunpack.c.0.s8 %v4515
          %v4640 = vunpack.c.0.s8 %v4516
          %v4641 = vunpack.c.0.s8 %v4517
          %v4642 = vunpack.c.0.s8 %v4518
          %v4643 = vunpack.c.1.s8 %v4515
          %v4644 = vunpack.c.1.s8 %v4516
          %v4645 = vunpack.c.1.s8 %v4517
          %v4646 = vunpack.c.1.s8 %v4518
          %v4647 = vunpack.c.2.s8 %v4515
          %v4648 = vunpack.c.2.s8 %v4516
          %v4649 = vunpack.c.2.s8 %v4517
          %v4650 = vunpack.c.2.s8 %v4518
          %v4651 = vunpack.c.3.s8 %v4515
          %v4652 = vunpack.c.3.s8 %v4516
          %v4653 = vunpack.c.3.s8 %v4517
          %v4654 = vunpack.c.3.s8 %v4518
          %v4655 = vunpack.c.0.s8 %v4519
          %v4656 = vunpack.c.0.s8 %v4520
          %v4657 = vunpack.c.0.s8 %v4521
          %v4658 = vunpack.c.0.s8 %v4522
          %v4659 = vunpack.c.1.s8 %v4519
          %v4660 = vunpack.c.1.s8 %v4520
          %v4661 = vunpack.c.1.s8 %v4521
          %v4662 = vunpack.c.1.s8 %v4522
          %v4663 = vunpack.c.2.s8 %v4519
          %v4664 = vunpack.c.2.s8 %v4520
          %v4665 = vunpack.c.2.s8 %v4521
          %v4666 = vunpack.c.2.s8 %v4522
          %v4667 = vunpack.c.3.s8 %v4519
          %v4668 = vunpack.c.3.s8 %v4520
          %v4669 = vunpack.c.3.s8 %v4521
          %v4670 = vunpack.c.3.s8 %v4522
          %v4671 = vunpack.c.0.s8 %v4523
          %v4672 = vunpack.c.0.s8 %v4524
          %v4673 = vunpack.c.0.s8 %v4525
          %v4674 = vunpack.c.0.s8 %v4526
          %v4675 = vunpack.c.1.s8 %v4523
          %v4676 = vunpack.c.1.s8 %v4524
          %v4677 = vunpack.c.1.s8 %v4525
          %v4678 = vunpack.c.1.s8 %v4526
          %v4679 = vunpack.c.2.s8 %v4523
          %v4680 = vunpack.c.2.s8 %v4524
          %v4681 = vunpack.c.2.s8 %v4525
          %v4682 = vunpack.c.2.s8 %v4526
          %v4683 = vunpack.c.3.s8 %v4523
          %v4684 = vunpack.c.3.s8 %v4524
          %v4685 = vunpack.c.3.s8 %v4525
          %v4686 = vunpack.c.3.s8 %v4526
          %v4687 = vunpack.c.0.s8 %v4527
          %v4688 = vunpack.c.0.s8 %v4528
          %v4689 = vunpack.c.0.s8 %v4529
          %v4690 = vunpack.c.0.s8 %v4530
          %v4691 = vunpack.c.1.s8 %v4527
          %v4692 = vunpack.c.1.s8 %v4528
          %v4693 = vunpack.c.1.s8 %v4529
          %v4694 = vunpack.c.1.s8 %v4530
          %v4695 = vunpack.c.2.s8 %v4527
          %v4696 = vunpack.c.2.s8 %v4528
          %v4697 = vunpack.c.2.s8 %v4529
          %v4698 = vunpack.c.2.s8 %v4530
          %v4699 = vunpack.c.3.s8 %v4527
          %v4700 = vunpack.c.3.s8 %v4528
          %v4701 = vunpack.c.3.s8 %v4529
          %v4702 = vunpack.c.3.s8 %v4530
          %v4703 = vunpack.c.0.s8 %v4531
          %v4704 = vunpack.c.0.s8 %v4532
          %v4705 = vunpack.c.0.s8 %v4533
          %v4706 = vunpack.c.0.s8 %v4534
          %v4707 = vunpack.c.1.s8 %v4531
          %v4708 = vunpack.c.1.s8 %v4532
          %v4709 = vunpack.c.1.s8 %v4533
          %v4710 = vunpack.c.1.s8 %v4534
          %v4711 = vunpack.c.2.s8 %v4531
          %v4712 = vunpack.c.2.s8 %v4532
          %v4713 = vunpack.c.2.s8 %v4533
          %v4714 = vunpack.c.2.s8 %v4534
          %v4715 = vunpack.c.3.s8 %v4531
          %v4716 = vunpack.c.3.s8 %v4532
          %v4717 = vunpack.c.3.s8 %v4533
          %v4718 = vunpack.c.3.s8 %v4534
          %v4719 = vunpack.c.0.s8 %v4535
          %v4720 = vunpack.c.0.s8 %v4536
          %v4721 = vunpack.c.0.s8 %v4537
          %v4722 = vunpack.c.0.s8 %v4538
          %v4723 = vunpack.c.1.s8 %v4535
          %v4724 = vunpack.c.1.s8 %v4536
          %v4725 = vunpack.c.1.s8 %v4537
          %v4726 = vunpack.c.1.s8 %v4538
          %v4727 = vunpack.c.2.s8 %v4535
          %v4728 = vunpack.c.2.s8 %v4536
          %v4729 = vunpack.c.2.s8 %v4537
          %v4730 = vunpack.c.2.s8 %v4538
          %v4731 = vunpack.c.3.s8 %v4535
          %v4732 = vunpack.c.3.s8 %v4536
          %v4733 = vunpack.c.3.s8 %v4537
          %v4734 = vunpack.c.3.s8 %v4538
          %v4735 = vunpack.c.0.s8 %v4539
          %v4736 = vunpack.c.0.s8 %v4540
          %v4737 = vunpack.c.0.s8 %v4541
          %v4738 = vunpack.c.0.s8 %v4542
          %v4739 = vunpack.c.1.s8 %v4539
          %v4740 = vunpack.c.1.s8 %v4540
          %v4741 = vunpack.c.1.s8 %v4541
          %v4742 = vunpack.c.1.s8 %v4542
          %v4743 = vunpack.c.2.s8 %v4539
          %v4744 = vunpack.c.2.s8 %v4540
          %v4745 = vunpack.c.2.s8 %v4541
          %v4746 = vunpack.c.2.s8 %v4542
          %v4747 = vunpack.c.3.s8 %v4539
          %v4748 = vunpack.c.3.s8 %v4540
          %v4749 = vunpack.c.3.s8 %v4541
          %v4750 = vunpack.c.3.s8 %v4542
          %v4751 = vunpack.c.0.s8 %v4543
          %v4752 = vunpack.c.0.s8 %v4544
          %v4753 = vunpack.c.0.s8 %v4545
          %v4754 = vunpack.c.0.s8 %v4546
          %v4755 = vunpack.c.1.s8 %v4543
          %v4756 = vunpack.c.1.s8 %v4544
          %v4757 = vunpack.c.1.s8 %v4545
          %v4758 = vunpack.c.1.s8 %v4546
          %v4759 = vunpack.c.2.s8 %v4543
          %v4760 = vunpack.c.2.s8 %v4544
          %v4761 = vunpack.c.2.s8 %v4545
          %v4762 = vunpack.c.2.s8 %v4546
          %v4763 = vunpack.c.3.s8 %v4543
          %v4764 = vunpack.c.3.s8 %v4544
          %v4765 = vunpack.c.3.s8 %v4545
          %v4766 = vunpack.c.3.s8 %v4546
          %v4767 = vunpack.c.0.s8 %v4547
          %v4768 = vunpack.c.0.s8 %v4548
          %v4769 = vunpack.c.0.s8 %v4549
          %v4770 = vunpack.c.0.s8 %v4550
          %v4771 = vunpack.c.1.s8 %v4547
          %v4772 = vunpack.c.1.s8 %v4548
          %v4773 = vunpack.c.1.s8 %v4549
          %v4774 = vunpack.c.1.s8 %v4550
          %v4775 = vunpack.c.2.s8 %v4547
          %v4776 = vunpack.c.2.s8 %v4548
          %v4777 = vunpack.c.2.s8 %v4549
          %v4778 = vunpack.c.2.s8 %v4550
          %v4779 = vunpack.c.3.s8 %v4547
          %v4780 = vunpack.c.3.s8 %v4548
          %v4781 = vunpack.c.3.s8 %v4549
          %v4782 = vunpack.c.3.s8 %v4550
          %v4783 = vunpack.c.0.s8 %v4551
          %v4784 = vunpack.c.0.s8 %v4552
          %v4785 = vunpack.c.0.s8 %v4553
          %v4786 = vunpack.c.0.s8 %v4554
          %v4787 = vunpack.c.1.s8 %v4551
          %v4788 = vunpack.c.1.s8 %v4552
          %v4789 = vunpack.c.1.s8 %v4553
          %v4790 = vunpack.c.1.s8 %v4554
          %v4791 = vunpack.c.2.s8 %v4551
          %v4792 = vunpack.c.2.s8 %v4552
          %v4793 = vunpack.c.2.s8 %v4553
          %v4794 = vunpack.c.2.s8 %v4554
          %v4795 = vunpack.c.3.s8 %v4551
          %v4796 = vunpack.c.3.s8 %v4552
          %v4797 = vunpack.c.3.s8 %v4553
          %v4798 = vunpack.c.3.s8 %v4554
          %v4799 = vunpack.c.0.s8 %v4555
          %v4800 = vunpack.c.0.s8 %v4556
          %v4801 = vunpack.c.0.s8 %v4557
          %v4802 = vunpack.c.0.s8 %v4558
          %v4803 = vunpack.c.1.s8 %v4555
          %v4804 = vunpack.c.1.s8 %v4556
          %v4805 = vunpack.c.1.s8 %v4557
          %v4806 = vunpack.c.1.s8 %v4558
          %v4807 = vunpack.c.2.s8 %v4555
          %v4808 = vunpack.c.2.s8 %v4556
          %v4809 = vunpack.c.2.s8 %v4557
          %v4810 = vunpack.c.2.s8 %v4558
          %v4811 = vunpack.c.3.s8 %v4555
          %v4812 = vunpack.c.3.s8 %v4556
          %v4813 = vunpack.c.3.s8 %v4557
          %v4814 = vunpack.c.3.s8 %v4558
          %v4815 = vcvt.s32.f32 %v4559
          %v4816 = vcvt.s32.f32 %v4560
          %v4817 = vcvt.s32.f32 %v4561
          %v4818 = vcvt.s32.f32 %v4562
          %v4819 = vcvt.s32.f32 %v4563
          %v4820 = vcvt.s32.f32 %v4564
          %v4821 = vcvt.s32.f32 %v4565
          %v4822 = vcvt.s32.f32 %v4566
          %v4823 = vcvt.s32.f32 %v4567
          %v4824 = vcvt.s32.f32 %v4568
          %v4825 = vcvt.s32.f32 %v4569
          %v4826 = vcvt.s32.f32 %v4570
          %v4827 = vcvt.s32.f32 %v4571
          %v4828 = vcvt.s32.f32 %v4572
          %v4829 = vcvt.s32.f32 %v4573
          %v4830 = vcvt.s32.f32 %v4574
          %v4831 = vcvt.s32.f32 %v4575
          %v4832 = vcvt.s32.f32 %v4576
          %v4833 = vcvt.s32.f32 %v4577
          %v4834 = vcvt.s32.f32 %v4578
          %v4835 = vcvt.s32.f32 %v4579
          %v4836 = vcvt.s32.f32 %v4580
          %v4837 = vcvt.s32.f32 %v4581
          %v4838 = vcvt.s32.f32 %v4582
          %v4839 = vcvt.s32.f32 %v4583
          %v4840 = vcvt.s32.f32 %v4584
          %v4841 = vcvt.s32.f32 %v4585
          %v4842 = vcvt.s32.f32 %v4586
          %v4843 = vcvt.s32.f32 %v4587
          %v4844 = vcvt.s32.f32 %v4588
          %v4845 = vcvt.s32.f32 %v4589
          %v4846 = vcvt.s32.f32 %v4590
          %v4847 = vcvt.s32.f32 %v4591
          %v4848 = vcvt.s32.f32 %v4592
          %v4849 = vcvt.s32.f32 %v4593
          %v4850 = vcvt.s32.f32 %v4594
          %v4851 = vcvt.s32.f32 %v4595
          %v4852 = vcvt.s32.f32 %v4596
          %v4853 = vcvt.s32.f32 %v4597
          %v4854 = vcvt.s32.f32 %v4598
          %v4855 = vcvt.s32.f32 %v4599
          %v4856 = vcvt.s32.f32 %v4600
          %v4857 = vcvt.s32.f32 %v4601
          %v4858 = vcvt.s32.f32 %v4602
          %v4859 = vcvt.s32.f32 %v4603
          %v4860 = vcvt.s32.f32 %v4604
          %v4861 = vcvt.s32.f32 %v4605
          %v4862 = vcvt.s32.f32 %v4606
          %v4863 = vcvt.s32.f32 %v4607
          %v4864 = vcvt.s32.f32 %v4608
          %v4865 = vcvt.s32.f32 %v4609
          %v4866 = vcvt.s32.f32 %v4610
          %v4867 = vcvt.s32.f32 %v4611
          %v4868 = vcvt.s32.f32 %v4612
          %v4869 = vcvt.s32.f32 %v4613
          %v4870 = vcvt.s32.f32 %v4614
          %v4871 = vcvt.s32.f32 %v4615
          %v4872 = vcvt.s32.f32 %v4616
          %v4873 = vcvt.s32.f32 %v4617
          %v4874 = vcvt.s32.f32 %v4618
          %v4875 = vcvt.s32.f32 %v4619
          %v4876 = vcvt.s32.f32 %v4620
          %v4877 = vcvt.s32.f32 %v4621
          %v4878 = vcvt.s32.f32 %v4622
          %v4879 = vcvt.s32.f32 %v4623
          %v4880 = vcvt.s32.f32 %v4624
          %v4881 = vcvt.s32.f32 %v4625
          %v4882 = vcvt.s32.f32 %v4626
          %v4883 = vcvt.s32.f32 %v4627
          %v4884 = vcvt.s32.f32 %v4628
          %v4885 = vcvt.s32.f32 %v4629
          %v4886 = vcvt.s32.f32 %v4630
          %v4887 = vcvt.s32.f32 %v4631
          %v4888 = vcvt.s32.f32 %v4632
          %v4889 = vcvt.s32.f32 %v4633
          %v4890 = vcvt.s32.f32 %v4634
          %v4891 = vcvt.s32.f32 %v4635
          %v4892 = vcvt.s32.f32 %v4636
          %v4893 = vcvt.s32.f32 %v4637
          %v4894 = vcvt.s32.f32 %v4638
          %v4895 = vcvt.s32.f32 %v4639
          %v4896 = vcvt.s32.f32 %v4640
          %v4897 = vcvt.s32.f32 %v4641
          %v4898 = vcvt.s32.f32 %v4642
          %v4899 = vcvt.s32.f32 %v4643
          %v4900 = vcvt.s32.f32 %v4644
          %v4901 = vcvt.s32.f32 %v4645
          %v4902 = vcvt.s32.f32 %v4646
          %v4903 = vcvt.s32.f32 %v4647
          %v4904 = vcvt.s32.f32 %v4648
          %v4905 = vcvt.s32.f32 %v4649
          %v4906 = vcvt.s32.f32 %v4650
          %v4907 = vcvt.s32.f32 %v4651
          %v4908 = vcvt.s32.f32 %v4652
          %v4909 = vcvt.s32.f32 %v4653
          %v4910 = vcvt.s32.f32 %v4654
          %v4911 = vcvt.s32.f32 %v4655
          %v4912 = vcvt.s32.f32 %v4656
          %v4913 = vcvt.s32.f32 %v4657
          %v4914 = vcvt.s32.f32 %v4658
          %v4915 = vcvt.s32.f32 %v4659
          %v4916 = vcvt.s32.f32 %v4660
          %v4917 = vcvt.s32.f32 %v4661
          %v4918 = vcvt.s32.f32 %v4662
          %v4919 = vcvt.s32.f32 %v4663
          %v4920 = vcvt.s32.f32 %v4664
          %v4921 = vcvt.s32.f32 %v4665
          %v4922 = vcvt.s32.f32 %v4666
          %v4923 = vcvt.s32.f32 %v4667
          %v4924 = vcvt.s32.f32 %v4668
          %v4925 = vcvt.s32.f32 %v4669
          %v4926 = vcvt.s32.f32 %v4670
          %v4927 = vcvt.s32.f32 %v4671
          %v4928 = vcvt.s32.f32 %v4672
          %v4929 = vcvt.s32.f32 %v4673
          %v4930 = vcvt.s32.f32 %v4674
          %v4931 = vcvt.s32.f32 %v4675
          %v4932 = vcvt.s32.f32 %v4676
          %v4933 = vcvt.s32.f32 %v4677
          %v4934 = vcvt.s32.f32 %v4678
          %v4935 = vcvt.s32.f32 %v4679
          %v4936 = vcvt.s32.f32 %v4680
          %v4937 = vcvt.s32.f32 %v4681
          %v4938 = vcvt.s32.f32 %v4682
          %v4939 = vcvt.s32.f32 %v4683
          %v4940 = vcvt.s32.f32 %v4684
          %v4941 = vcvt.s32.f32 %v4685
          %v4942 = vcvt.s32.f32 %v4686
          %v4943 = vcvt.s32.f32 %v4687
          %v4944 = vcvt.s32.f32 %v4688
          %v4945 = vcvt.s32.f32 %v4689
          %v4946 = vcvt.s32.f32 %v4690
          %v4947 = vcvt.s32.f32 %v4691
          %v4948 = vcvt.s32.f32 %v4692
          %v4949 = vcvt.s32.f32 %v4693
          %v4950 = vcvt.s32.f32 %v4694
          %v4951 = vcvt.s32.f32 %v4695
          %v4952 = vcvt.s32.f32 %v4696
          %v4953 = vcvt.s32.f32 %v4697
          %v4954 = vcvt.s32.f32 %v4698
          %v4955 = vcvt.s32.f32 %v4699
          %v4956 = vcvt.s32.f32 %v4700
          %v4957 = vcvt.s32.f32 %v4701
          %v4958 = vcvt.s32.f32 %v4702
          %v4959 = vcvt.s32.f32 %v4703
          %v4960 = vcvt.s32.f32 %v4704
          %v4961 = vcvt.s32.f32 %v4705
          %v4962 = vcvt.s32.f32 %v4706
          %v4963 = vcvt.s32.f32 %v4707
          %v4964 = vcvt.s32.f32 %v4708
          %v4965 = vcvt.s32.f32 %v4709
          %v4966 = vcvt.s32.f32 %v4710
          %v4967 = vcvt.s32.f32 %v4711
          %v4968 = vcvt.s32.f32 %v4712
          %v4969 = vcvt.s32.f32 %v4713
          %v4970 = vcvt.s32.f32 %v4714
          %v4971 = vcvt.s32.f32 %v4715
          %v4972 = vcvt.s32.f32 %v4716
          %v4973 = vcvt.s32.f32 %v4717
          %v4974 = vcvt.s32.f32 %v4718
          %v4975 = vcvt.s32.f32 %v4719
          %v4976 = vcvt.s32.f32 %v4720
          %v4977 = vcvt.s32.f32 %v4721
          %v4978 = vcvt.s32.f32 %v4722
          %v4979 = vcvt.s32.f32 %v4723
          %v4980 = vcvt.s32.f32 %v4724
          %v4981 = vcvt.s32.f32 %v4725
          %v4982 = vcvt.s32.f32 %v4726
          %v4983 = vcvt.s32.f32 %v4727
          %v4984 = vcvt.s32.f32 %v4728
          %v4985 = vcvt.s32.f32 %v4729
          %v4986 = vcvt.s32.f32 %v4730
          %v4987 = vcvt.s32.f32 %v4731
          %v4988 = vcvt.s32.f32 %v4732
          %v4989 = vcvt.s32.f32 %v4733
          %v4990 = vcvt.s32.f32 %v4734
          %v4991 = vcvt.s32.f32 %v4735
          %v4992 = vcvt.s32.f32 %v4736
          %v4993 = vcvt.s32.f32 %v4737
          %v4994 = vcvt.s32.f32 %v4738
          %v4995 = vcvt.s32.f32 %v4739
          %v4996 = vcvt.s32.f32 %v4740
          %v4997 = vcvt.s32.f32 %v4741
          %v4998 = vcvt.s32.f32 %v4742
          %v4999 = vcvt.s32.f32 %v4743
          %v5000 = vcvt.s32.f32 %v4744
          %v5001 = vcvt.s32.f32 %v4745
          %v5002 = vcvt.s32.f32 %v4746
          %v5003 = vcvt.s32.f32 %v4747
          %v5004 = vcvt.s32.f32 %v4748
          %v5005 = vcvt.s32.f32 %v4749
          %v5006 = vcvt.s32.f32 %v4750
          %v5007 = vcvt.s32.f32 %v4751
          %v5008 = vcvt.s32.f32 %v4752
          %v5009 = vcvt.s32.f32 %v4753
          %v5010 = vcvt.s32.f32 %v4754
          %v5011 = vcvt.s32.f32 %v4755
          %v5012 = vcvt.s32.f32 %v4756
          %v5013 = vcvt.s32.f32 %v4757
          %v5014 = vcvt.s32.f32 %v4758
          %v5015 = vcvt.s32.f32 %v4759
          %v5016 = vcvt.s32.f32 %v4760
          %v5017 = vcvt.s32.f32 %v4761
          %v5018 = vcvt.s32.f32 %v4762
          %v5019 = vcvt.s32.f32 %v4763
          %v5020 = vcvt.s32.f32 %v4764
          %v5021 = vcvt.s32.f32 %v4765
          %v5022 = vcvt.s32.f32 %v4766
          %v5023 = vcvt.s32.f32 %v4767
          %v5024 = vcvt.s32.f32 %v4768
          %v5025 = vcvt.s32.f32 %v4769
          %v5026 = vcvt.s32.f32 %v4770
          %v5027 = vcvt.s32.f32 %v4771
          %v5028 = vcvt.s32.f32 %v4772
          %v5029 = vcvt.s32.f32 %v4773
          %v5030 = vcvt.s32.f32 %v4774
          %v5031 = vcvt.s32.f32 %v4775
          %v5032 = vcvt.s32.f32 %v4776
          %v5033 = vcvt.s32.f32 %v4777
          %v5034 = vcvt.s32.f32 %v4778
          %v5035 = vcvt.s32.f32 %v4779
          %v5036 = vcvt.s32.f32 %v4780
          %v5037 = vcvt.s32.f32 %v4781
          %v5038 = vcvt.s32.f32 %v4782
          %v5039 = vcvt.s32.f32 %v4783
          %v5040 = vcvt.s32.f32 %v4784
          %v5041 = vcvt.s32.f32 %v4785
          %v5042 = vcvt.s32.f32 %v4786
          %v5043 = vcvt.s32.f32 %v4787
          %v5044 = vcvt.s32.f32 %v4788
          %v5045 = vcvt.s32.f32 %v4789
          %v5046 = vcvt.s32.f32 %v4790
          %v5047 = vcvt.s32.f32 %v4791
          %v5048 = vcvt.s32.f32 %v4792
          %v5049 = vcvt.s32.f32 %v4793
          %v5050 = vcvt.s32.f32 %v4794
          %v5051 = vcvt.s32.f32 %v4795
          %v5052 = vcvt.s32.f32 %v4796
          %v5053 = vcvt.s32.f32 %v4797
          %v5054 = vcvt.s32.f32 %v4798
          %v5055 = vcvt.s32.f32 %v4799
          %v5056 = vcvt.s32.f32 %v4800
          %v5057 = vcvt.s32.f32 %v4801
          %v5058 = vcvt.s32.f32 %v4802
          %v5059 = vcvt.s32.f32 %v4803
          %v5060 = vcvt.s32.f32 %v4804
          %v5061 = vcvt.s32.f32 %v4805
          %v5062 = vcvt.s32.f32 %v4806
          %v5063 = vcvt.s32.f32 %v4807
          %v5064 = vcvt.s32.f32 %v4808
          %v5065 = vcvt.s32.f32 %v4809
          %v5066 = vcvt.s32.f32 %v4810
          %v5067 = vcvt.s32.f32 %v4811
          %v5068 = vcvt.s32.f32 %v4812
          %v5069 = vcvt.s32.f32 %v4813
          %v5070 = vcvt.s32.f32 %v4814
          %v5071 = vpack.c.bf16 %v4819, %v4815
          %v5072 = vpack.c.bf16 %v4820, %v4816
          %v5073 = vpack.c.bf16 %v4821, %v4817
          %v5074 = vpack.c.bf16 %v4822, %v4818
          %v5075 = vpack.c.bf16 %v4827, %v4823
          %v5076 = vpack.c.bf16 %v4828, %v4824
          %v5077 = vpack.c.bf16 %v4829, %v4825
          %v5078 = vpack.c.bf16 %v4830, %v4826
          %v5079 = vpack.c.bf16 %v4835, %v4831
          %v5080 = vpack.c.bf16 %v4836, %v4832
          %v5081 = vpack.c.bf16 %v4837, %v4833
          %v5082 = vpack.c.bf16 %v4838, %v4834
          %v5083 = vpack.c.bf16 %v4843, %v4839
          %v5084 = vpack.c.bf16 %v4844, %v4840
          %v5085 = vpack.c.bf16 %v4845, %v4841
          %v5086 = vpack.c.bf16 %v4846, %v4842
          %v5087 = vpack.c.bf16 %v4851, %v4847
          %v5088 = vpack.c.bf16 %v4852, %v4848
          %v5089 = vpack.c.bf16 %v4853, %v4849
          %v5090 = vpack.c.bf16 %v4854, %v4850
          %v5091 = vpack.c.bf16 %v4859, %v4855
          %v5092 = vpack.c.bf16 %v4860, %v4856
          %v5093 = vpack.c.bf16 %v4861, %v4857
          %v5094 = vpack.c.bf16 %v4862, %v4858
          %v5095 = vpack.c.bf16 %v4867, %v4863
          %v5096 = vpack.c.bf16 %v4868, %v4864
          %v5097 = vpack.c.bf16 %v4869, %v4865
          %v5098 = vpack.c.bf16 %v4870, %v4866
          %v5099 = vpack.c.bf16 %v4875, %v4871
          %v5100 = vpack.c.bf16 %v4876, %v4872
          %v5101 = vpack.c.bf16 %v4877, %v4873
          %v5102 = vpack.c.bf16 %v4878, %v4874
          %v5103 = vpack.c.bf16 %v4883, %v4879
          %v5104 = vpack.c.bf16 %v4884, %v4880
          %v5105 = vpack.c.bf16 %v4885, %v4881
          %v5106 = vpack.c.bf16 %v4886, %v4882
          %v5107 = vpack.c.bf16 %v4891, %v4887
          %v5108 = vpack.c.bf16 %v4892, %v4888
          %v5109 = vpack.c.bf16 %v4893, %v4889
          %v5110 = vpack.c.bf16 %v4894, %v4890
          %v5111 = vpack.c.bf16 %v4899, %v4895
          %v5112 = vpack.c.bf16 %v4900, %v4896
          %v5113 = vpack.c.bf16 %v4901, %v4897
          %v5114 = vpack.c.bf16 %v4902, %v4898
          %v5115 = vpack.c.bf16 %v4907, %v4903
          %v5116 = vpack.c.bf16 %v4908, %v4904
          %v5117 = vpack.c.bf16 %v4909, %v4905
          %v5118 = vpack.c.bf16 %v4910, %v4906
          %v5119 = vpack.c.bf16 %v4915, %v4911
          %v5120 = vpack.c.bf16 %v4916, %v4912
          %v5121 = vpack.c.bf16 %v4917, %v4913
          %v5122 = vpack.c.bf16 %v4918, %v4914
          %v5123 = vpack.c.bf16 %v4923, %v4919
          %v5124 = vpack.c.bf16 %v4924, %v4920
          %v5125 = vpack.c.bf16 %v4925, %v4921
          %v5126 = vpack.c.bf16 %v4926, %v4922
          %v5127 = vpack.c.bf16 %v4931, %v4927
          %v5128 = vpack.c.bf16 %v4932, %v4928
          %v5129 = vpack.c.bf16 %v4933, %v4929
          %v5130 = vpack.c.bf16 %v4934, %v4930
          %v5131 = vpack.c.bf16 %v4939, %v4935
          %v5132 = vpack.c.bf16 %v4940, %v4936
          %v5133 = vpack.c.bf16 %v4941, %v4937
          %v5134 = vpack.c.bf16 %v4942, %v4938
          %v5135 = vpack.c.bf16 %v4947, %v4943
          %v5136 = vpack.c.bf16 %v4948, %v4944
          %v5137 = vpack.c.bf16 %v4949, %v4945
          %v5138 = vpack.c.bf16 %v4950, %v4946
          %v5139 = vpack.c.bf16 %v4955, %v4951
          %v5140 = vpack.c.bf16 %v4956, %v4952
          %v5141 = vpack.c.bf16 %v4957, %v4953
          %v5142 = vpack.c.bf16 %v4958, %v4954
          %v5143 = vpack.c.bf16 %v4963, %v4959
          %v5144 = vpack.c.bf16 %v4964, %v4960
          %v5145 = vpack.c.bf16 %v4965, %v4961
          %v5146 = vpack.c.bf16 %v4966, %v4962
          %v5147 = vpack.c.bf16 %v4971, %v4967
          %v5148 = vpack.c.bf16 %v4972, %v4968
          %v5149 = vpack.c.bf16 %v4973, %v4969
          %v5150 = vpack.c.bf16 %v4974, %v4970
          %v5151 = vpack.c.bf16 %v4979, %v4975
          %v5152 = vpack.c.bf16 %v4980, %v4976
          %v5153 = vpack.c.bf16 %v4981, %v4977
          %v5154 = vpack.c.bf16 %v4982, %v4978
          %v5155 = vpack.c.bf16 %v4987, %v4983
          %v5156 = vpack.c.bf16 %v4988, %v4984
          %v5157 = vpack.c.bf16 %v4989, %v4985
          %v5158 = vpack.c.bf16 %v4990, %v4986
          %v5159 = vpack.c.bf16 %v4995, %v4991
          %v5160 = vpack.c.bf16 %v4996, %v4992
          %v5161 = vpack.c.bf16 %v4997, %v4993
          %v5162 = vpack.c.bf16 %v4998, %v4994
          %v5163 = vpack.c.bf16 %v5003, %v4999
          %v5164 = vpack.c.bf16 %v5004, %v5000
          %v5165 = vpack.c.bf16 %v5005, %v5001
          %v5166 = vpack.c.bf16 %v5006, %v5002
          %v5167 = vpack.c.bf16 %v5011, %v5007
          %v5168 = vpack.c.bf16 %v5012, %v5008
          %v5169 = vpack.c.bf16 %v5013, %v5009
          %v5170 = vpack.c.bf16 %v5014, %v5010
          %v5171 = vpack.c.bf16 %v5019, %v5015
          %v5172 = vpack.c.bf16 %v5020, %v5016
          %v5173 = vpack.c.bf16 %v5021, %v5017
          %v5174 = vpack.c.bf16 %v5022, %v5018
          %v5175 = vpack.c.bf16 %v5027, %v5023
          %v5176 = vpack.c.bf16 %v5028, %v5024
          %v5177 = vpack.c.bf16 %v5029, %v5025
          %v5178 = vpack.c.bf16 %v5030, %v5026
          %v5179 = vpack.c.bf16 %v5035, %v5031
          %v5180 = vpack.c.bf16 %v5036, %v5032
          %v5181 = vpack.c.bf16 %v5037, %v5033
          %v5182 = vpack.c.bf16 %v5038, %v5034
          %v5183 = vpack.c.bf16 %v5043, %v5039
          %v5184 = vpack.c.bf16 %v5044, %v5040
          %v5185 = vpack.c.bf16 %v5045, %v5041
          %v5186 = vpack.c.bf16 %v5046, %v5042
          %v5187 = vpack.c.bf16 %v5051, %v5047
          %v5188 = vpack.c.bf16 %v5052, %v5048
          %v5189 = vpack.c.bf16 %v5053, %v5049
          %v5190 = vpack.c.bf16 %v5054, %v5050
          %v5191 = vpack.c.bf16 %v5059, %v5055
          %v5192 = vpack.c.bf16 %v5060, %v5056
          %v5193 = vpack.c.bf16 %v5061, %v5057
          %v5194 = vpack.c.bf16 %v5062, %v5058
          %v5195 = vpack.c.bf16 %v5067, %v5063
          %v5196 = vpack.c.bf16 %v5068, %v5064
          %v5197 = vpack.c.bf16 %v5069, %v5065
          %v5198 = vpack.c.bf16 %v5070, %v5066
          %v5199 = vpack.c.bf16 %v4489, %v4485
          %v5200 = vpack.c.bf16 %v4490, %v4486
          %v5201 = vpack.c.bf16 %v4491, %v4487
          %v5202 = vpack.c.bf16 %v4492, %v4488
          %5203 = vmatpush.bf16.msra.mxu0 %v5099
          %5204 = vmatpush.bf16.msra.mxu0 %v5095
          %5205 = vmatpush.bf16.msra.mxu0 %v5091
          %5206 = vmatpush.bf16.msra.mxu0 %v5087
          %5207 = vmatpush.bf16.msra.mxu0 %v5083
          %5208 = vmatpush.bf16.msra.mxu0 %v5079
          %5209 = vmatpush.bf16.msra.mxu0 %v5075
          %5210 = vmatpush.bf16.msra.mxu0 %v5071
          %5211 = vmatmul.bf16.gmra.mxu0 %v5199
          %v5212 = vpop.f32.mrf.mxu0
          %v5213 = vadd.f32 0.0, %v5212
          %v5214 = vpop.f32.mrf.mxu0
          %v5215 = vadd.f32 0.0, %v5214
          %5216 = vdwg.mxu0
          %5217 = vmatpush.bf16.msra.mxu0 %v5131
          %5218 = vmatpush.bf16.msra.mxu0 %v5127
          %5219 = vmatpush.bf16.msra.mxu0 %v5123
          %5220 = vmatpush.bf16.msra.mxu0 %v5119
          %5221 = vmatpush.bf16.msra.mxu0 %v5115
          %5222 = vmatpush.bf16.msra.mxu0 %v5111
          %5223 = vmatpush.bf16.msra.mxu0 %v5107
          %5224 = vmatpush.bf16.msra.mxu0 %v5103
          %5225 = vmatmul.bf16.gmra.mxu0 %v5200
          %v5226 = vpop.f32.mrf.mxu0
          %v5227 = vadd.f32 %v5213, %v5226
          %v5228 = vpop.f32.mrf.mxu0
          %v5229 = vadd.f32 %v5215, %v5228
          %5230 = vdwg.mxu0
          %5231 = vmatpush.bf16.msra.mxu0 %v5163
          %5232 = vmatpush.bf16.msra.mxu0 %v5159
          %5233 = vmatpush.bf16.msra.mxu0 %v5155
          %5234 = vmatpush.bf16.msra.mxu0 %v5151
          %5235 = vmatpush.bf16.msra.mxu0 %v5147
          %5236 = vmatpush.bf16.msra.mxu0 %v5143
          %5237 = vmatpush.bf16.msra.mxu0 %v5139
          %5238 = vmatpush.bf16.msra.mxu0 %v5135
          %5239 = vmatmul.bf16.gmra.mxu0 %v5201
          %v5240 = vpop.f32.mrf.mxu0
          %v5241 = vadd.f32 %v5227, %v5240
          %v5242 = vpop.f32.mrf.mxu0
          %v5243 = vadd.f32 %v5229, %v5242
          %5244 = vdwg.mxu0
          %5245 = vmatpush.bf16.msra.mxu0 %v5195
          %5246 = vmatpush.bf16.msra.mxu0 %v5191
          %5247 = vmatpush.bf16.msra.mxu0 %v5187
          %5248 = vmatpush.bf16.msra.mxu0 %v5183
          %5249 = vmatpush.bf16.msra.mxu0 %v5179
          %5250 = vmatpush.bf16.msra.mxu0 %v5175
          %5251 = vmatpush.bf16.msra.mxu0 %v5171
          %5252 = vmatpush.bf16.msra.mxu0 %v5167
          %5253 = vmatmul.bf16.gmra.mxu0 %v5202
          %v5254 = vpop.f32.mrf.mxu0
          %v5255 = vadd.f32 %v5241, %v5254
          %v5256 = vpop.f32.mrf.mxu0
          %v5257 = vadd.f32 %v5243, %v5256
          %5258 = vdwg.mxu0
          %5259 = vmatpush.bf16.msra.mxu0 %v5100
          %5260 = vmatpush.bf16.msra.mxu0 %v5096
          %5261 = vmatpush.bf16.msra.mxu0 %v5092
          %5262 = vmatpush.bf16.msra.mxu0 %v5088
          %5263 = vmatpush.bf16.msra.mxu0 %v5084
          %5264 = vmatpush.bf16.msra.mxu0 %v5080
          %5265 = vmatpush.bf16.msra.mxu0 %v5076
          %5266 = vmatpush.bf16.msra.mxu0 %v5072
          %5267 = vmatmul.bf16.gmra.mxu0 %v5199
          %v5268 = vpop.f32.mrf.mxu0
          %v5269 = vadd.f32 0.0, %v5268
          %v5270 = vpop.f32.mrf.mxu0
          %v5271 = vadd.f32 0.0, %v5270
          %5272 = vdwg.mxu0
          %5273 = vmatpush.bf16.msra.mxu0 %v5132
          %5274 = vmatpush.bf16.msra.mxu0 %v5128
          %5275 = vmatpush.bf16.msra.mxu0 %v5124
          %5276 = vmatpush.bf16.msra.mxu0 %v5120
          %5277 = vmatpush.bf16.msra.mxu0 %v5116
          %5278 = vmatpush.bf16.msra.mxu0 %v5112
          %5279 = vmatpush.bf16.msra.mxu0 %v5108
          %5280 = vmatpush.bf16.msra.mxu0 %v5104
          %5281 = vmatmul.bf16.gmra.mxu0 %v5200
          %v5282 = vpop.f32.mrf.mxu0
          %v5283 = vadd.f32 %v5269, %v5282
          %v5284 = vpop.f32.mrf.mxu0
          %v5285 = vadd.f32 %v5271, %v5284
          %5286 = vdwg.mxu0
          %5287 = vmatpush.bf16.msra.mxu0 %v5164
          %5288 = vmatpush.bf16.msra.mxu0 %v5160
          %5289 = vmatpush.bf16.msra.mxu0 %v5156
          %5290 = vmatpush.bf16.msra.mxu0 %v5152
          %5291 = vmatpush.bf16.msra.mxu0 %v5148
          %5292 = vmatpush.bf16.msra.mxu0 %v5144
          %5293 = vmatpush.bf16.msra.mxu0 %v5140
          %5294 = vmatpush.bf16.msra.mxu0 %v5136
          %5295 = vmatmul.bf16.gmra.mxu0 %v5201
          %v5296 = vpop.f32.mrf.mxu0
          %v5297 = vadd.f32 %v5283, %v5296
          %v5298 = vpop.f32.mrf.mxu0
          %v5299 = vadd.f32 %v5285, %v5298
          %5300 = vdwg.mxu0
          %5301 = vmatpush.bf16.msra.mxu0 %v5196
          %5302 = vmatpush.bf16.msra.mxu0 %v5192
          %5303 = vmatpush.bf16.msra.mxu0 %v5188
          %5304 = vmatpush.bf16.msra.mxu0 %v5184
          %5305 = vmatpush.bf16.msra.mxu0 %v5180
          %5306 = vmatpush.bf16.msra.mxu0 %v5176
          %5307 = vmatpush.bf16.msra.mxu0 %v5172
          %5308 = vmatpush.bf16.msra.mxu0 %v5168
          %5309 = vmatmul.bf16.gmra.mxu0 %v5202
          %v5310 = vpop.f32.mrf.mxu0
          %v5311 = vadd.f32 %v5297, %v5310
          %v5312 = vpop.f32.mrf.mxu0
          %v5313 = vadd.f32 %v5299, %v5312
          %5314 = vdwg.mxu0
          %5315 = vmatpush.bf16.msra.mxu0 %v5101
          %5316 = vmatpush.bf16.msra.mxu0 %v5097
          %5317 = vmatpush.bf16.msra.mxu0 %v5093
          %5318 = vmatpush.bf16.msra.mxu0 %v5089
          %5319 = vmatpush.bf16.msra.mxu0 %v5085
          %5320 = vmatpush.bf16.msra.mxu0 %v5081
          %5321 = vmatpush.bf16.msra.mxu0 %v5077
          %5322 = vmatpush.bf16.msra.mxu0 %v5073
          %5323 = vmatmul.bf16.gmra.mxu0 %v5199
          %v5324 = vpop.f32.mrf.mxu0
          %v5325 = vadd.f32 0.0, %v5324
          %v5326 = vpop.f32.mrf.mxu0
          %v5327 = vadd.f32 0.0, %v5326
          %5328 = vdwg.mxu0
          %5329 = vmatpush.bf16.msra.mxu0 %v5133
          %5330 = vmatpush.bf16.msra.mxu0 %v5129
          %5331 = vmatpush.bf16.msra.mxu0 %v5125
          %5332 = vmatpush.bf16.msra.mxu0 %v5121
          %5333 = vmatpush.bf16.msra.mxu0 %v5117
          %5334 = vmatpush.bf16.msra.mxu0 %v5113
          %5335 = vmatpush.bf16.msra.mxu0 %v5109
          %5336 = vmatpush.bf16.msra.mxu0 %v5105
          %5337 = vmatmul.bf16.gmra.mxu0 %v5200
          %v5338 = vpop.f32.mrf.mxu0
          %v5339 = vadd.f32 %v5325, %v5338
          %v5340 = vpop.f32.mrf.mxu0
          %v5341 = vadd.f32 %v5327, %v5340
          %5342 = vdwg.mxu0
          %5343 = vmatpush.bf16.msra.mxu0 %v5165
          %5344 = vmatpush.bf16.msra.mxu0 %v5161
          %5345 = vmatpush.bf16.msra.mxu0 %v5157
          %5346 = vmatpush.bf16.msra.mxu0 %v5153
          %5347 = vmatpush.bf16.msra.mxu0 %v5149
          %5348 = vmatpush.bf16.msra.mxu0 %v5145
          %5349 = vmatpush.bf16.msra.mxu0 %v5141
          %5350 = vmatpush.bf16.msra.mxu0 %v5137
          %5351 = vmatmul.bf16.gmra.mxu0 %v5201
          %v5352 = vpop.f32.mrf.mxu0
          %v5353 = vadd.f32 %v5339, %v5352
          %v5354 = vpop.f32.mrf.mxu0
          %v5355 = vadd.f32 %v5341, %v5354
          %5356 = vdwg.mxu0
          %5357 = vmatpush.bf16.msra.mxu0 %v5197
          %5358 = vmatpush.bf16.msra.mxu0 %v5193
          %5359 = vmatpush.bf16.msra.mxu0 %v5189
          %5360 = vmatpush.bf16.msra.mxu0 %v5185
          %5361 = vmatpush.bf16.msra.mxu0 %v5181
          %5362 = vmatpush.bf16.msra.mxu0 %v5177
          %5363 = vmatpush.bf16.msra.mxu0 %v5173
          %5364 = vmatpush.bf16.msra.mxu0 %v5169
          %5365 = vmatmul.bf16.gmra.mxu0 %v5202
          %v5366 = vpop.f32.mrf.mxu0
          %v5367 = vadd.f32 %v5353, %v5366
          %v5368 = vpop.f32.mrf.mxu0
          %v5369 = vadd.f32 %v5355, %v5368
          %5370 = vdwg.mxu0
          %5371 = vmatpush.bf16.msra.mxu0 %v5102
          %5372 = vmatpush.bf16.msra.mxu0 %v5098
          %5373 = vmatpush.bf16.msra.mxu0 %v5094
          %5374 = vmatpush.bf16.msra.mxu0 %v5090
          %5375 = vmatpush.bf16.msra.mxu0 %v5086
          %5376 = vmatpush.bf16.msra.mxu0 %v5082
          %5377 = vmatpush.bf16.msra.mxu0 %v5078
          %5378 = vmatpush.bf16.msra.mxu0 %v5074
          %5379 = vmatmul.bf16.gmra.mxu0 %v5199
          %v5380 = vpop.f32.mrf.mxu0
          %v5381 = vadd.f32 0.0, %v5380
          %v5382 = vpop.f32.mrf.mxu0
          %v5383 = vadd.f32 0.0, %v5382
          %5384 = vdwg.mxu0
          %5385 = vmatpush.bf16.msra.mxu0 %v5134
          %5386 = vmatpush.bf16.msra.mxu0 %v5130
          %5387 = vmatpush.bf16.msra.mxu0 %v5126
          %5388 = vmatpush.bf16.msra.mxu0 %v5122
          %5389 = vmatpush.bf16.msra.mxu0 %v5118
          %5390 = vmatpush.bf16.msra.mxu0 %v5114
          %5391 = vmatpush.bf16.msra.mxu0 %v5110
          %5392 = vmatpush.bf16.msra.mxu0 %v5106
          %5393 = vmatmul.bf16.gmra.mxu0 %v5200
          %v5394 = vpop.f32.mrf.mxu0
          %v5395 = vadd.f32 %v5381, %v5394
          %v5396 = vpop.f32.mrf.mxu0
          %v5397 = vadd.f32 %v5383, %v5396
          %5398 = vdwg.mxu0
          %5399 = vmatpush.bf16.msra.mxu0 %v5166
          %5400 = vmatpush.bf16.msra.mxu0 %v5162
          %5401 = vmatpush.bf16.msra.mxu0 %v5158
          %5402 = vmatpush.bf16.msra.mxu0 %v5154
          %5403 = vmatpush.bf16.msra.mxu0 %v5150
          %5404 = vmatpush.bf16.msra.mxu0 %v5146
          %5405 = vmatpush.bf16.msra.mxu0 %v5142
          %5406 = vmatpush.bf16.msra.mxu0 %v5138
          %5407 = vmatmul.bf16.gmra.mxu0 %v5201
          %v5408 = vpop.f32.mrf.mxu0
          %v5409 = vadd.f32 %v5395, %v5408
          %v5410 = vpop.f32.mrf.mxu0
          %v5411 = vadd.f32 %v5397, %v5410
          %5412 = vdwg.mxu0
          %5413 = vmatpush.bf16.msra.mxu0 %v5198
          %5414 = vmatpush.bf16.msra.mxu0 %v5194
          %5415 = vmatpush.bf16.msra.mxu0 %v5190
          %5416 = vmatpush.bf16.msra.mxu0 %v5186
          %5417 = vmatpush.bf16.msra.mxu0 %v5182
          %5418 = vmatpush.bf16.msra.mxu0 %v5178
          %5419 = vmatpush.bf16.msra.mxu0 %v5174
          %5420 = vmatpush.bf16.msra.mxu0 %v5170
          %5421 = vmatmul.bf16.gmra.mxu0 %v5202
          %v5422 = vpop.f32.mrf.mxu0
          %v5423 = vadd.f32 %v5409, %v5422
          %v5424 = vpop.f32.mrf.mxu0
          %v5425 = vadd.f32 %v5411, %v5424
          %5426 = vdwg.mxu0
          %s5427 = sld [smem:[#allocation11 + %s4493]]
          %v5428 = vstv %s5427
          %v5429 = vmul.f32 %v5255, %v5428
          %v5430 = vmul.f32 %v5311, %v5428
          %v5431 = vmul.f32 %v5367, %v5428
          %v5432 = vmul.f32 %v5423, %v5428
          %v5433 = vmul.f32 %v5257, %v5428
          %v5434 = vmul.f32 %v5313, %v5428
          %v5435 = vmul.f32 %v5369, %v5428
          %v5436 = vmul.f32 %v5425, %v5428
          %s5437 = scalar_lea.vmem %s428, 4 [#allocation13]
          %v5438 = vld [vmem:[%s5437] sm:$0xf]
          %v5440 = vperm.slane %v5438, 0
          %v5441 = vperm.slane %v5438, 1
          %v5442 = vperm.slane %v5438, 2
          %v5443 = vperm.slane %v5438, 3
          %v5448 = vadd.f32 %v5429, %v5440
          %v5449 = vadd.f32 %v5430, %v5441
          %v5450 = vadd.f32 %v5431, %v5442
          %v5451 = vadd.f32 %v5432, %v5443
          %v5452 = vadd.f32 %v5433, %v5440
          %v5453 = vadd.f32 %v5434, %v5441
          %v5454 = vadd.f32 %v5435, %v5442
          %v5455 = vadd.f32 %v5436, %v5443
          %v5456 = vmax.f32 %v5448, 0.0
          %v5457 = vmax.f32 %v5449, 0.0
          %v5458 = vmax.f32 %v5450, 0.0
          %v5459 = vmax.f32 %v5451, 0.0
          %v5460 = vmax.f32 %v5452, 0.0
          %v5461 = vmax.f32 %v5453, 0.0
          %v5462 = vmax.f32 %v5454, 0.0
          %v5463 = vmax.f32 %v5455, 0.0
          %s5464 = sadd.s32 %s3515, 5
          %s5465 = scalar_lea.vmem %s418, 1024 [#allocation12]
          %v5466 = vld [vmem:[%s5465] sm:$0xff]
          %v5467 = vld [vmem:[%s5465 + $0x8] sm:$0xff]
          %v5468 = vld [vmem:[%s5465 + $0x10] sm:$0xff]
          %v5469 = vld [vmem:[%s5465 + $0x18] sm:$0xff]
          %v5470 = vld [vmem:[%s5465 + $0x20] sm:$0xff]
          %v5471 = vld [vmem:[%s5465 + $0x28] sm:$0xff]
          %v5472 = vld [vmem:[%s5465 + $0x30] sm:$0xff]
          %v5473 = vld [vmem:[%s5465 + $0x38] sm:$0xff]
          %v5474 = vld [vmem:[%s5465 + $0x40] sm:$0xff]
          %v5475 = vld [vmem:[%s5465 + $0x48] sm:$0xff]
          %v5476 = vld [vmem:[%s5465 + $0x50] sm:$0xff]
          %v5477 = vld [vmem:[%s5465 + $0x58] sm:$0xff]
          %v5478 = vld [vmem:[%s5465 + $0x60] sm:$0xff]
          %v5479 = vld [vmem:[%s5465 + $0x68] sm:$0xff]
          %v5480 = vld [vmem:[%s5465 + $0x70] sm:$0xff]
          %v5481 = vld [vmem:[%s5465 + $0x78] sm:$0xff]
          %v5482 = vld [vmem:[%s5465 + $0x80] sm:$0xff]
          %v5483 = vld [vmem:[%s5465 + $0x88] sm:$0xff]
          %v5484 = vld [vmem:[%s5465 + $0x90] sm:$0xff]
          %v5485 = vld [vmem:[%s5465 + $0x98] sm:$0xff]
          %v5486 = vld [vmem:[%s5465 + $0xa0] sm:$0xff]
          %v5487 = vld [vmem:[%s5465 + $0xa8] sm:$0xff]
          %v5488 = vld [vmem:[%s5465 + $0xb0] sm:$0xff]
          %v5489 = vld [vmem:[%s5465 + $0xb8] sm:$0xff]
          %v5490 = vld [vmem:[%s5465 + $0xc0] sm:$0xff]
          %v5491 = vld [vmem:[%s5465 + $0xc8] sm:$0xff]
          %v5492 = vld [vmem:[%s5465 + $0xd0] sm:$0xff]
          %v5493 = vld [vmem:[%s5465 + $0xd8] sm:$0xff]
          %v5494 = vld [vmem:[%s5465 + $0xe0] sm:$0xff]
          %v5495 = vld [vmem:[%s5465 + $0xe8] sm:$0xff]
          %v5496 = vld [vmem:[%s5465 + $0xf0] sm:$0xff]
          %v5497 = vld [vmem:[%s5465 + $0xf8] sm:$0xff]
          %v5498 = vld [vmem:[%s5465 + $0x100] sm:$0xff]
          %v5499 = vld [vmem:[%s5465 + $0x108] sm:$0xff]
          %v5500 = vld [vmem:[%s5465 + $0x110] sm:$0xff]
          %v5501 = vld [vmem:[%s5465 + $0x118] sm:$0xff]
          %v5502 = vld [vmem:[%s5465 + $0x120] sm:$0xff]
          %v5503 = vld [vmem:[%s5465 + $0x128] sm:$0xff]
          %v5504 = vld [vmem:[%s5465 + $0x130] sm:$0xff]
          %v5505 = vld [vmem:[%s5465 + $0x138] sm:$0xff]
          %v5506 = vld [vmem:[%s5465 + $0x140] sm:$0xff]
          %v5507 = vld [vmem:[%s5465 + $0x148] sm:$0xff]
          %v5508 = vld [vmem:[%s5465 + $0x150] sm:$0xff]
          %v5509 = vld [vmem:[%s5465 + $0x158] sm:$0xff]
          %v5510 = vld [vmem:[%s5465 + $0x160] sm:$0xff]
          %v5511 = vld [vmem:[%s5465 + $0x168] sm:$0xff]
          %v5512 = vld [vmem:[%s5465 + $0x170] sm:$0xff]
          %v5513 = vld [vmem:[%s5465 + $0x178] sm:$0xff]
          %v5514 = vld [vmem:[%s5465 + $0x180] sm:$0xff]
          %v5515 = vld [vmem:[%s5465 + $0x188] sm:$0xff]
          %v5516 = vld [vmem:[%s5465 + $0x190] sm:$0xff]
          %v5517 = vld [vmem:[%s5465 + $0x198] sm:$0xff]
          %v5518 = vld [vmem:[%s5465 + $0x1a0] sm:$0xff]
          %v5519 = vld [vmem:[%s5465 + $0x1a8] sm:$0xff]
          %v5520 = vld [vmem:[%s5465 + $0x1b0] sm:$0xff]
          %v5521 = vld [vmem:[%s5465 + $0x1b8] sm:$0xff]
          %v5522 = vld [vmem:[%s5465 + $0x1c0] sm:$0xff]
          %v5523 = vld [vmem:[%s5465 + $0x1c8] sm:$0xff]
          %v5524 = vld [vmem:[%s5465 + $0x1d0] sm:$0xff]
          %v5525 = vld [vmem:[%s5465 + $0x1d8] sm:$0xff]
          %v5526 = vld [vmem:[%s5465 + $0x1e0] sm:$0xff]
          %v5527 = vld [vmem:[%s5465 + $0x1e8] sm:$0xff]
          %v5528 = vld [vmem:[%s5465 + $0x1f0] sm:$0xff]
          %v5529 = vld [vmem:[%s5465 + $0x1f8] sm:$0xff]
          %v5530 = vunpack.c.0.s8 %v5466
          %v5531 = vunpack.c.0.s8 %v5467
          %v5532 = vunpack.c.0.s8 %v5468
          %v5533 = vunpack.c.0.s8 %v5469
          %v5534 = vunpack.c.1.s8 %v5466
          %v5535 = vunpack.c.1.s8 %v5467
          %v5536 = vunpack.c.1.s8 %v5468
          %v5537 = vunpack.c.1.s8 %v5469
          %v5538 = vunpack.c.2.s8 %v5466
          %v5539 = vunpack.c.2.s8 %v5467
          %v5540 = vunpack.c.2.s8 %v5468
          %v5541 = vunpack.c.2.s8 %v5469
          %v5542 = vunpack.c.3.s8 %v5466
          %v5543 = vunpack.c.3.s8 %v5467
          %v5544 = vunpack.c.3.s8 %v5468
          %v5545 = vunpack.c.3.s8 %v5469
          %v5546 = vunpack.c.0.s8 %v5470
          %v5547 = vunpack.c.0.s8 %v5471
          %v5548 = vunpack.c.0.s8 %v5472
          %v5549 = vunpack.c.0.s8 %v5473
          %v5550 = vunpack.c.1.s8 %v5470
          %v5551 = vunpack.c.1.s8 %v5471
          %v5552 = vunpack.c.1.s8 %v5472
          %v5553 = vunpack.c.1.s8 %v5473
          %v5554 = vunpack.c.2.s8 %v5470
          %v5555 = vunpack.c.2.s8 %v5471
          %v5556 = vunpack.c.2.s8 %v5472
          %v5557 = vunpack.c.2.s8 %v5473
          %v5558 = vunpack.c.3.s8 %v5470
          %v5559 = vunpack.c.3.s8 %v5471
          %v5560 = vunpack.c.3.s8 %v5472
          %v5561 = vunpack.c.3.s8 %v5473
          %v5562 = vunpack.c.0.s8 %v5474
          %v5563 = vunpack.c.0.s8 %v5475
          %v5564 = vunpack.c.0.s8 %v5476
          %v5565 = vunpack.c.0.s8 %v5477
          %v5566 = vunpack.c.1.s8 %v5474
          %v5567 = vunpack.c.1.s8 %v5475
          %v5568 = vunpack.c.1.s8 %v5476
          %v5569 = vunpack.c.1.s8 %v5477
          %v5570 = vunpack.c.2.s8 %v5474
          %v5571 = vunpack.c.2.s8 %v5475
          %v5572 = vunpack.c.2.s8 %v5476
          %v5573 = vunpack.c.2.s8 %v5477
          %v5574 = vunpack.c.3.s8 %v5474
          %v5575 = vunpack.c.3.s8 %v5475
          %v5576 = vunpack.c.3.s8 %v5476
          %v5577 = vunpack.c.3.s8 %v5477
          %v5578 = vunpack.c.0.s8 %v5478
          %v5579 = vunpack.c.0.s8 %v5479
          %v5580 = vunpack.c.0.s8 %v5480
          %v5581 = vunpack.c.0.s8 %v5481
          %v5582 = vunpack.c.1.s8 %v5478
          %v5583 = vunpack.c.1.s8 %v5479
          %v5584 = vunpack.c.1.s8 %v5480
          %v5585 = vunpack.c.1.s8 %v5481
          %v5586 = vunpack.c.2.s8 %v5478
          %v5587 = vunpack.c.2.s8 %v5479
          %v5588 = vunpack.c.2.s8 %v5480
          %v5589 = vunpack.c.2.s8 %v5481
          %v5590 = vunpack.c.3.s8 %v5478
          %v5591 = vunpack.c.3.s8 %v5479
          %v5592 = vunpack.c.3.s8 %v5480
          %v5593 = vunpack.c.3.s8 %v5481
          %v5594 = vunpack.c.0.s8 %v5482
          %v5595 = vunpack.c.0.s8 %v5483
          %v5596 = vunpack.c.0.s8 %v5484
          %v5597 = vunpack.c.0.s8 %v5485
          %v5598 = vunpack.c.1.s8 %v5482
          %v5599 = vunpack.c.1.s8 %v5483
          %v5600 = vunpack.c.1.s8 %v5484
          %v5601 = vunpack.c.1.s8 %v5485
          %v5602 = vunpack.c.2.s8 %v5482
          %v5603 = vunpack.c.2.s8 %v5483
          %v5604 = vunpack.c.2.s8 %v5484
          %v5605 = vunpack.c.2.s8 %v5485
          %v5606 = vunpack.c.3.s8 %v5482
          %v5607 = vunpack.c.3.s8 %v5483
          %v5608 = vunpack.c.3.s8 %v5484
          %v5609 = vunpack.c.3.s8 %v5485
          %v5610 = vunpack.c.0.s8 %v5486
          %v5611 = vunpack.c.0.s8 %v5487
          %v5612 = vunpack.c.0.s8 %v5488
          %v5613 = vunpack.c.0.s8 %v5489
          %v5614 = vunpack.c.1.s8 %v5486
          %v5615 = vunpack.c.1.s8 %v5487
          %v5616 = vunpack.c.1.s8 %v5488
          %v5617 = vunpack.c.1.s8 %v5489
          %v5618 = vunpack.c.2.s8 %v5486
          %v5619 = vunpack.c.2.s8 %v5487
          %v5620 = vunpack.c.2.s8 %v5488
          %v5621 = vunpack.c.2.s8 %v5489
          %v5622 = vunpack.c.3.s8 %v5486
          %v5623 = vunpack.c.3.s8 %v5487
          %v5624 = vunpack.c.3.s8 %v5488
          %v5625 = vunpack.c.3.s8 %v5489
          %v5626 = vunpack.c.0.s8 %v5490
          %v5627 = vunpack.c.0.s8 %v5491
          %v5628 = vunpack.c.0.s8 %v5492
          %v5629 = vunpack.c.0.s8 %v5493
          %v5630 = vunpack.c.1.s8 %v5490
          %v5631 = vunpack.c.1.s8 %v5491
          %v5632 = vunpack.c.1.s8 %v5492
          %v5633 = vunpack.c.1.s8 %v5493
          %v5634 = vunpack.c.2.s8 %v5490
          %v5635 = vunpack.c.2.s8 %v5491
          %v5636 = vunpack.c.2.s8 %v5492
          %v5637 = vunpack.c.2.s8 %v5493
          %v5638 = vunpack.c.3.s8 %v5490
          %v5639 = vunpack.c.3.s8 %v5491
          %v5640 = vunpack.c.3.s8 %v5492
          %v5641 = vunpack.c.3.s8 %v5493
          %v5642 = vunpack.c.0.s8 %v5494
          %v5643 = vunpack.c.0.s8 %v5495
          %v5644 = vunpack.c.0.s8 %v5496
          %v5645 = vunpack.c.0.s8 %v5497
          %v5646 = vunpack.c.1.s8 %v5494
          %v5647 = vunpack.c.1.s8 %v5495
          %v5648 = vunpack.c.1.s8 %v5496
          %v5649 = vunpack.c.1.s8 %v5497
          %v5650 = vunpack.c.2.s8 %v5494
          %v5651 = vunpack.c.2.s8 %v5495
          %v5652 = vunpack.c.2.s8 %v5496
          %v5653 = vunpack.c.2.s8 %v5497
          %v5654 = vunpack.c.3.s8 %v5494
          %v5655 = vunpack.c.3.s8 %v5495
          %v5656 = vunpack.c.3.s8 %v5496
          %v5657 = vunpack.c.3.s8 %v5497
          %v5658 = vunpack.c.0.s8 %v5498
          %v5659 = vunpack.c.0.s8 %v5499
          %v5660 = vunpack.c.0.s8 %v5500
          %v5661 = vunpack.c.0.s8 %v5501
          %v5662 = vunpack.c.1.s8 %v5498
          %v5663 = vunpack.c.1.s8 %v5499
          %v5664 = vunpack.c.1.s8 %v5500
          %v5665 = vunpack.c.1.s8 %v5501
          %v5666 = vunpack.c.2.s8 %v5498
          %v5667 = vunpack.c.2.s8 %v5499
          %v5668 = vunpack.c.2.s8 %v5500
          %v5669 = vunpack.c.2.s8 %v5501
          %v5670 = vunpack.c.3.s8 %v5498
          %v5671 = vunpack.c.3.s8 %v5499
          %v5672 = vunpack.c.3.s8 %v5500
          %v5673 = vunpack.c.3.s8 %v5501
          %v5674 = vunpack.c.0.s8 %v5502
          %v5675 = vunpack.c.0.s8 %v5503
          %v5676 = vunpack.c.0.s8 %v5504
          %v5677 = vunpack.c.0.s8 %v5505
          %v5678 = vunpack.c.1.s8 %v5502
          %v5679 = vunpack.c.1.s8 %v5503
          %v5680 = vunpack.c.1.s8 %v5504
          %v5681 = vunpack.c.1.s8 %v5505
          %v5682 = vunpack.c.2.s8 %v5502
          %v5683 = vunpack.c.2.s8 %v5503
          %v5684 = vunpack.c.2.s8 %v5504
          %v5685 = vunpack.c.2.s8 %v5505
          %v5686 = vunpack.c.3.s8 %v5502
          %v5687 = vunpack.c.3.s8 %v5503
          %v5688 = vunpack.c.3.s8 %v5504
          %v5689 = vunpack.c.3.s8 %v5505
          %v5690 = vunpack.c.0.s8 %v5506
          %v5691 = vunpack.c.0.s8 %v5507
          %v5692 = vunpack.c.0.s8 %v5508
          %v5693 = vunpack.c.0.s8 %v5509
          %v5694 = vunpack.c.1.s8 %v5506
          %v5695 = vunpack.c.1.s8 %v5507
          %v5696 = vunpack.c.1.s8 %v5508
          %v5697 = vunpack.c.1.s8 %v5509
          %v5698 = vunpack.c.2.s8 %v5506
          %v5699 = vunpack.c.2.s8 %v5507
          %v5700 = vunpack.c.2.s8 %v5508
          %v5701 = vunpack.c.2.s8 %v5509
          %v5702 = vunpack.c.3.s8 %v5506
          %v5703 = vunpack.c.3.s8 %v5507
          %v5704 = vunpack.c.3.s8 %v5508
          %v5705 = vunpack.c.3.s8 %v5509
          %v5706 = vunpack.c.0.s8 %v5510
          %v5707 = vunpack.c.0.s8 %v5511
          %v5708 = vunpack.c.0.s8 %v5512
          %v5709 = vunpack.c.0.s8 %v5513
          %v5710 = vunpack.c.1.s8 %v5510
          %v5711 = vunpack.c.1.s8 %v5511
          %v5712 = vunpack.c.1.s8 %v5512
          %v5713 = vunpack.c.1.s8 %v5513
          %v5714 = vunpack.c.2.s8 %v5510
          %v5715 = vunpack.c.2.s8 %v5511
          %v5716 = vunpack.c.2.s8 %v5512
          %v5717 = vunpack.c.2.s8 %v5513
          %v5718 = vunpack.c.3.s8 %v5510
          %v5719 = vunpack.c.3.s8 %v5511
          %v5720 = vunpack.c.3.s8 %v5512
          %v5721 = vunpack.c.3.s8 %v5513
          %v5722 = vunpack.c.0.s8 %v5514
          %v5723 = vunpack.c.0.s8 %v5515
          %v5724 = vunpack.c.0.s8 %v5516
          %v5725 = vunpack.c.0.s8 %v5517
          %v5726 = vunpack.c.1.s8 %v5514
          %v5727 = vunpack.c.1.s8 %v5515
          %v5728 = vunpack.c.1.s8 %v5516
          %v5729 = vunpack.c.1.s8 %v5517
          %v5730 = vunpack.c.2.s8 %v5514
          %v5731 = vunpack.c.2.s8 %v5515
          %v5732 = vunpack.c.2.s8 %v5516
          %v5733 = vunpack.c.2.s8 %v5517
          %v5734 = vunpack.c.3.s8 %v5514
          %v5735 = vunpack.c.3.s8 %v5515
          %v5736 = vunpack.c.3.s8 %v5516
          %v5737 = vunpack.c.3.s8 %v5517
          %v5738 = vunpack.c.0.s8 %v5518
          %v5739 = vunpack.c.0.s8 %v5519
          %v5740 = vunpack.c.0.s8 %v5520
          %v5741 = vunpack.c.0.s8 %v5521
          %v5742 = vunpack.c.1.s8 %v5518
          %v5743 = vunpack.c.1.s8 %v5519
          %v5744 = vunpack.c.1.s8 %v5520
          %v5745 = vunpack.c.1.s8 %v5521
          %v5746 = vunpack.c.2.s8 %v5518
          %v5747 = vunpack.c.2.s8 %v5519
          %v5748 = vunpack.c.2.s8 %v5520
          %v5749 = vunpack.c.2.s8 %v5521
          %v5750 = vunpack.c.3.s8 %v5518
          %v5751 = vunpack.c.3.s8 %v5519
          %v5752 = vunpack.c.3.s8 %v5520
          %v5753 = vunpack.c.3.s8 %v5521
          %v5754 = vunpack.c.0.s8 %v5522
          %v5755 = vunpack.c.0.s8 %v5523
          %v5756 = vunpack.c.0.s8 %v5524
          %v5757 = vunpack.c.0.s8 %v5525
          %v5758 = vunpack.c.1.s8 %v5522
          %v5759 = vunpack.c.1.s8 %v5523
          %v5760 = vunpack.c.1.s8 %v5524
          %v5761 = vunpack.c.1.s8 %v5525
          %v5762 = vunpack.c.2.s8 %v5522
          %v5763 = vunpack.c.2.s8 %v5523
          %v5764 = vunpack.c.2.s8 %v5524
          %v5765 = vunpack.c.2.s8 %v5525
          %v5766 = vunpack.c.3.s8 %v5522
          %v5767 = vunpack.c.3.s8 %v5523
          %v5768 = vunpack.c.3.s8 %v5524
          %v5769 = vunpack.c.3.s8 %v5525
          %v5770 = vunpack.c.0.s8 %v5526
          %v5771 = vunpack.c.0.s8 %v5527
          %v5772 = vunpack.c.0.s8 %v5528
          %v5773 = vunpack.c.0.s8 %v5529
          %v5774 = vunpack.c.1.s8 %v5526
          %v5775 = vunpack.c.1.s8 %v5527
          %v5776 = vunpack.c.1.s8 %v5528
          %v5777 = vunpack.c.1.s8 %v5529
          %v5778 = vunpack.c.2.s8 %v5526
          %v5779 = vunpack.c.2.s8 %v5527
          %v5780 = vunpack.c.2.s8 %v5528
          %v5781 = vunpack.c.2.s8 %v5529
          %v5782 = vunpack.c.3.s8 %v5526
          %v5783 = vunpack.c.3.s8 %v5527
          %v5784 = vunpack.c.3.s8 %v5528
          %v5785 = vunpack.c.3.s8 %v5529
          %v5786 = vcvt.s32.f32 %v5530
          %v5787 = vcvt.s32.f32 %v5531
          %v5788 = vcvt.s32.f32 %v5532
          %v5789 = vcvt.s32.f32 %v5533
          %v5790 = vcvt.s32.f32 %v5534
          %v5791 = vcvt.s32.f32 %v5535
          %v5792 = vcvt.s32.f32 %v5536
          %v5793 = vcvt.s32.f32 %v5537
          %v5794 = vcvt.s32.f32 %v5538
          %v5795 = vcvt.s32.f32 %v5539
          %v5796 = vcvt.s32.f32 %v5540
          %v5797 = vcvt.s32.f32 %v5541
          %v5798 = vcvt.s32.f32 %v5542
          %v5799 = vcvt.s32.f32 %v5543
          %v5800 = vcvt.s32.f32 %v5544
          %v5801 = vcvt.s32.f32 %v5545
          %v5802 = vcvt.s32.f32 %v5546
          %v5803 = vcvt.s32.f32 %v5547
          %v5804 = vcvt.s32.f32 %v5548
          %v5805 = vcvt.s32.f32 %v5549
          %v5806 = vcvt.s32.f32 %v5550
          %v5807 = vcvt.s32.f32 %v5551
          %v5808 = vcvt.s32.f32 %v5552
          %v5809 = vcvt.s32.f32 %v5553
          %v5810 = vcvt.s32.f32 %v5554
          %v5811 = vcvt.s32.f32 %v5555
          %v5812 = vcvt.s32.f32 %v5556
          %v5813 = vcvt.s32.f32 %v5557
          %v5814 = vcvt.s32.f32 %v5558
          %v5815 = vcvt.s32.f32 %v5559
          %v5816 = vcvt.s32.f32 %v5560
          %v5817 = vcvt.s32.f32 %v5561
          %v5818 = vcvt.s32.f32 %v5562
          %v5819 = vcvt.s32.f32 %v5563
          %v5820 = vcvt.s32.f32 %v5564
          %v5821 = vcvt.s32.f32 %v5565
          %v5822 = vcvt.s32.f32 %v5566
          %v5823 = vcvt.s32.f32 %v5567
          %v5824 = vcvt.s32.f32 %v5568
          %v5825 = vcvt.s32.f32 %v5569
          %v5826 = vcvt.s32.f32 %v5570
          %v5827 = vcvt.s32.f32 %v5571
          %v5828 = vcvt.s32.f32 %v5572
          %v5829 = vcvt.s32.f32 %v5573
          %v5830 = vcvt.s32.f32 %v5574
          %v5831 = vcvt.s32.f32 %v5575
          %v5832 = vcvt.s32.f32 %v5576
          %v5833 = vcvt.s32.f32 %v5577
          %v5834 = vcvt.s32.f32 %v5578
          %v5835 = vcvt.s32.f32 %v5579
          %v5836 = vcvt.s32.f32 %v5580
          %v5837 = vcvt.s32.f32 %v5581
          %v5838 = vcvt.s32.f32 %v5582
          %v5839 = vcvt.s32.f32 %v5583
          %v5840 = vcvt.s32.f32 %v5584
          %v5841 = vcvt.s32.f32 %v5585
          %v5842 = vcvt.s32.f32 %v5586
          %v5843 = vcvt.s32.f32 %v5587
          %v5844 = vcvt.s32.f32 %v5588
          %v5845 = vcvt.s32.f32 %v5589
          %v5846 = vcvt.s32.f32 %v5590
          %v5847 = vcvt.s32.f32 %v5591
          %v5848 = vcvt.s32.f32 %v5592
          %v5849 = vcvt.s32.f32 %v5593
          %v5850 = vcvt.s32.f32 %v5594
          %v5851 = vcvt.s32.f32 %v5595
          %v5852 = vcvt.s32.f32 %v5596
          %v5853 = vcvt.s32.f32 %v5597
          %v5854 = vcvt.s32.f32 %v5598
          %v5855 = vcvt.s32.f32 %v5599
          %v5856 = vcvt.s32.f32 %v5600
          %v5857 = vcvt.s32.f32 %v5601
          %v5858 = vcvt.s32.f32 %v5602
          %v5859 = vcvt.s32.f32 %v5603
          %v5860 = vcvt.s32.f32 %v5604
          %v5861 = vcvt.s32.f32 %v5605
          %v5862 = vcvt.s32.f32 %v5606
          %v5863 = vcvt.s32.f32 %v5607
          %v5864 = vcvt.s32.f32 %v5608
          %v5865 = vcvt.s32.f32 %v5609
          %v5866 = vcvt.s32.f32 %v5610
          %v5867 = vcvt.s32.f32 %v5611
          %v5868 = vcvt.s32.f32 %v5612
          %v5869 = vcvt.s32.f32 %v5613
          %v5870 = vcvt.s32.f32 %v5614
          %v5871 = vcvt.s32.f32 %v5615
          %v5872 = vcvt.s32.f32 %v5616
          %v5873 = vcvt.s32.f32 %v5617
          %v5874 = vcvt.s32.f32 %v5618
          %v5875 = vcvt.s32.f32 %v5619
          %v5876 = vcvt.s32.f32 %v5620
          %v5877 = vcvt.s32.f32 %v5621
          %v5878 = vcvt.s32.f32 %v5622
          %v5879 = vcvt.s32.f32 %v5623
          %v5880 = vcvt.s32.f32 %v5624
          %v5881 = vcvt.s32.f32 %v5625
          %v5882 = vcvt.s32.f32 %v5626
          %v5883 = vcvt.s32.f32 %v5627
          %v5884 = vcvt.s32.f32 %v5628
          %v5885 = vcvt.s32.f32 %v5629
          %v5886 = vcvt.s32.f32 %v5630
          %v5887 = vcvt.s32.f32 %v5631
          %v5888 = vcvt.s32.f32 %v5632
          %v5889 = vcvt.s32.f32 %v5633
          %v5890 = vcvt.s32.f32 %v5634
          %v5891 = vcvt.s32.f32 %v5635
          %v5892 = vcvt.s32.f32 %v5636
          %v5893 = vcvt.s32.f32 %v5637
          %v5894 = vcvt.s32.f32 %v5638
          %v5895 = vcvt.s32.f32 %v5639
          %v5896 = vcvt.s32.f32 %v5640
          %v5897 = vcvt.s32.f32 %v5641
          %v5898 = vcvt.s32.f32 %v5642
          %v5899 = vcvt.s32.f32 %v5643
          %v5900 = vcvt.s32.f32 %v5644
          %v5901 = vcvt.s32.f32 %v5645
          %v5902 = vcvt.s32.f32 %v5646
          %v5903 = vcvt.s32.f32 %v5647
          %v5904 = vcvt.s32.f32 %v5648
          %v5905 = vcvt.s32.f32 %v5649
          %v5906 = vcvt.s32.f32 %v5650
          %v5907 = vcvt.s32.f32 %v5651
          %v5908 = vcvt.s32.f32 %v5652
          %v5909 = vcvt.s32.f32 %v5653
          %v5910 = vcvt.s32.f32 %v5654
          %v5911 = vcvt.s32.f32 %v5655
          %v5912 = vcvt.s32.f32 %v5656
          %v5913 = vcvt.s32.f32 %v5657
          %v5914 = vcvt.s32.f32 %v5658
          %v5915 = vcvt.s32.f32 %v5659
          %v5916 = vcvt.s32.f32 %v5660
          %v5917 = vcvt.s32.f32 %v5661
          %v5918 = vcvt.s32.f32 %v5662
          %v5919 = vcvt.s32.f32 %v5663
          %v5920 = vcvt.s32.f32 %v5664
          %v5921 = vcvt.s32.f32 %v5665
          %v5922 = vcvt.s32.f32 %v5666
          %v5923 = vcvt.s32.f32 %v5667
          %v5924 = vcvt.s32.f32 %v5668
          %v5925 = vcvt.s32.f32 %v5669
          %v5926 = vcvt.s32.f32 %v5670
          %v5927 = vcvt.s32.f32 %v5671
          %v5928 = vcvt.s32.f32 %v5672
          %v5929 = vcvt.s32.f32 %v5673
          %v5930 = vcvt.s32.f32 %v5674
          %v5931 = vcvt.s32.f32 %v5675
          %v5932 = vcvt.s32.f32 %v5676
          %v5933 = vcvt.s32.f32 %v5677
          %v5934 = vcvt.s32.f32 %v5678
          %v5935 = vcvt.s32.f32 %v5679
          %v5936 = vcvt.s32.f32 %v5680
          %v5937 = vcvt.s32.f32 %v5681
          %v5938 = vcvt.s32.f32 %v5682
          %v5939 = vcvt.s32.f32 %v5683
          %v5940 = vcvt.s32.f32 %v5684
          %v5941 = vcvt.s32.f32 %v5685
          %v5942 = vcvt.s32.f32 %v5686
          %v5943 = vcvt.s32.f32 %v5687
          %v5944 = vcvt.s32.f32 %v5688
          %v5945 = vcvt.s32.f32 %v5689
          %v5946 = vcvt.s32.f32 %v5690
          %v5947 = vcvt.s32.f32 %v5691
          %v5948 = vcvt.s32.f32 %v5692
          %v5949 = vcvt.s32.f32 %v5693
          %v5950 = vcvt.s32.f32 %v5694
          %v5951 = vcvt.s32.f32 %v5695
          %v5952 = vcvt.s32.f32 %v5696
          %v5953 = vcvt.s32.f32 %v5697
          %v5954 = vcvt.s32.f32 %v5698
          %v5955 = vcvt.s32.f32 %v5699
          %v5956 = vcvt.s32.f32 %v5700
          %v5957 = vcvt.s32.f32 %v5701
          %v5958 = vcvt.s32.f32 %v5702
          %v5959 = vcvt.s32.f32 %v5703
          %v5960 = vcvt.s32.f32 %v5704
          %v5961 = vcvt.s32.f32 %v5705
          %v5962 = vcvt.s32.f32 %v5706
          %v5963 = vcvt.s32.f32 %v5707
          %v5964 = vcvt.s32.f32 %v5708
          %v5965 = vcvt.s32.f32 %v5709
          %v5966 = vcvt.s32.f32 %v5710
          %v5967 = vcvt.s32.f32 %v5711
          %v5968 = vcvt.s32.f32 %v5712
          %v5969 = vcvt.s32.f32 %v5713
          %v5970 = vcvt.s32.f32 %v5714
          %v5971 = vcvt.s32.f32 %v5715
          %v5972 = vcvt.s32.f32 %v5716
          %v5973 = vcvt.s32.f32 %v5717
          %v5974 = vcvt.s32.f32 %v5718
          %v5975 = vcvt.s32.f32 %v5719
          %v5976 = vcvt.s32.f32 %v5720
          %v5977 = vcvt.s32.f32 %v5721
          %v5978 = vcvt.s32.f32 %v5722
          %v5979 = vcvt.s32.f32 %v5723
          %v5980 = vcvt.s32.f32 %v5724
          %v5981 = vcvt.s32.f32 %v5725
          %v5982 = vcvt.s32.f32 %v5726
          %v5983 = vcvt.s32.f32 %v5727
          %v5984 = vcvt.s32.f32 %v5728
          %v5985 = vcvt.s32.f32 %v5729
          %v5986 = vcvt.s32.f32 %v5730
          %v5987 = vcvt.s32.f32 %v5731
          %v5988 = vcvt.s32.f32 %v5732
          %v5989 = vcvt.s32.f32 %v5733
          %v5990 = vcvt.s32.f32 %v5734
          %v5991 = vcvt.s32.f32 %v5735
          %v5992 = vcvt.s32.f32 %v5736
          %v5993 = vcvt.s32.f32 %v5737
          %v5994 = vcvt.s32.f32 %v5738
          %v5995 = vcvt.s32.f32 %v5739
          %v5996 = vcvt.s32.f32 %v5740
          %v5997 = vcvt.s32.f32 %v5741
          %v5998 = vcvt.s32.f32 %v5742
          %v5999 = vcvt.s32.f32 %v5743
          %v6000 = vcvt.s32.f32 %v5744
          %v6001 = vcvt.s32.f32 %v5745
          %v6002 = vcvt.s32.f32 %v5746
          %v6003 = vcvt.s32.f32 %v5747
          %v6004 = vcvt.s32.f32 %v5748
          %v6005 = vcvt.s32.f32 %v5749
          %v6006 = vcvt.s32.f32 %v5750
          %v6007 = vcvt.s32.f32 %v5751
          %v6008 = vcvt.s32.f32 %v5752
          %v6009 = vcvt.s32.f32 %v5753
          %v6010 = vcvt.s32.f32 %v5754
          %v6011 = vcvt.s32.f32 %v5755
          %v6012 = vcvt.s32.f32 %v5756
          %v6013 = vcvt.s32.f32 %v5757
          %v6014 = vcvt.s32.f32 %v5758
          %v6015 = vcvt.s32.f32 %v5759
          %v6016 = vcvt.s32.f32 %v5760
          %v6017 = vcvt.s32.f32 %v5761
          %v6018 = vcvt.s32.f32 %v5762
          %v6019 = vcvt.s32.f32 %v5763
          %v6020 = vcvt.s32.f32 %v5764
          %v6021 = vcvt.s32.f32 %v5765
          %v6022 = vcvt.s32.f32 %v5766
          %v6023 = vcvt.s32.f32 %v5767
          %v6024 = vcvt.s32.f32 %v5768
          %v6025 = vcvt.s32.f32 %v5769
          %v6026 = vcvt.s32.f32 %v5770
          %v6027 = vcvt.s32.f32 %v5771
          %v6028 = vcvt.s32.f32 %v5772
          %v6029 = vcvt.s32.f32 %v5773
          %v6030 = vcvt.s32.f32 %v5774
          %v6031 = vcvt.s32.f32 %v5775
          %v6032 = vcvt.s32.f32 %v5776
          %v6033 = vcvt.s32.f32 %v5777
          %v6034 = vcvt.s32.f32 %v5778
          %v6035 = vcvt.s32.f32 %v5779
          %v6036 = vcvt.s32.f32 %v5780
          %v6037 = vcvt.s32.f32 %v5781
          %v6038 = vcvt.s32.f32 %v5782
          %v6039 = vcvt.s32.f32 %v5783
          %v6040 = vcvt.s32.f32 %v5784
          %v6041 = vcvt.s32.f32 %v5785
          %v6042 = vpack.c.bf16 %v5790, %v5786
          %v6043 = vpack.c.bf16 %v5791, %v5787
          %v6044 = vpack.c.bf16 %v5792, %v5788
          %v6045 = vpack.c.bf16 %v5793, %v5789
          %v6046 = vpack.c.bf16 %v5798, %v5794
          %v6047 = vpack.c.bf16 %v5799, %v5795
          %v6048 = vpack.c.bf16 %v5800, %v5796
          %v6049 = vpack.c.bf16 %v5801, %v5797
          %v6050 = vpack.c.bf16 %v5806, %v5802
          %v6051 = vpack.c.bf16 %v5807, %v5803
          %v6052 = vpack.c.bf16 %v5808, %v5804
          %v6053 = vpack.c.bf16 %v5809, %v5805
          %v6054 = vpack.c.bf16 %v5814, %v5810
          %v6055 = vpack.c.bf16 %v5815, %v5811
          %v6056 = vpack.c.bf16 %v5816, %v5812
          %v6057 = vpack.c.bf16 %v5817, %v5813
          %v6058 = vpack.c.bf16 %v5822, %v5818
          %v6059 = vpack.c.bf16 %v5823, %v5819
          %v6060 = vpack.c.bf16 %v5824, %v5820
          %v6061 = vpack.c.bf16 %v5825, %v5821
          %v6062 = vpack.c.bf16 %v5830, %v5826
          %v6063 = vpack.c.bf16 %v5831, %v5827
          %v6064 = vpack.c.bf16 %v5832, %v5828
          %v6065 = vpack.c.bf16 %v5833, %v5829
          %v6066 = vpack.c.bf16 %v5838, %v5834
          %v6067 = vpack.c.bf16 %v5839, %v5835
          %v6068 = vpack.c.bf16 %v5840, %v5836
          %v6069 = vpack.c.bf16 %v5841, %v5837
          %v6070 = vpack.c.bf16 %v5846, %v5842
          %v6071 = vpack.c.bf16 %v5847, %v5843
          %v6072 = vpack.c.bf16 %v5848, %v5844
          %v6073 = vpack.c.bf16 %v5849, %v5845
          %v6074 = vpack.c.bf16 %v5854, %v5850
          %v6075 = vpack.c.bf16 %v5855, %v5851
          %v6076 = vpack.c.bf16 %v5856, %v5852
          %v6077 = vpack.c.bf16 %v5857, %v5853
          %v6078 = vpack.c.bf16 %v5862, %v5858
          %v6079 = vpack.c.bf16 %v5863, %v5859
          %v6080 = vpack.c.bf16 %v5864, %v5860
          %v6081 = vpack.c.bf16 %v5865, %v5861
          %v6082 = vpack.c.bf16 %v5870, %v5866
          %v6083 = vpack.c.bf16 %v5871, %v5867
          %v6084 = vpack.c.bf16 %v5872, %v5868
          %v6085 = vpack.c.bf16 %v5873, %v5869
          %v6086 = vpack.c.bf16 %v5878, %v5874
          %v6087 = vpack.c.bf16 %v5879, %v5875
          %v6088 = vpack.c.bf16 %v5880, %v5876
          %v6089 = vpack.c.bf16 %v5881, %v5877
          %v6090 = vpack.c.bf16 %v5886, %v5882
          %v6091 = vpack.c.bf16 %v5887, %v5883
          %v6092 = vpack.c.bf16 %v5888, %v5884
          %v6093 = vpack.c.bf16 %v5889, %v5885
          %v6094 = vpack.c.bf16 %v5894, %v5890
          %v6095 = vpack.c.bf16 %v5895, %v5891
          %v6096 = vpack.c.bf16 %v5896, %v5892
          %v6097 = vpack.c.bf16 %v5897, %v5893
          %v6098 = vpack.c.bf16 %v5902, %v5898
          %v6099 = vpack.c.bf16 %v5903, %v5899
          %v6100 = vpack.c.bf16 %v5904, %v5900
          %v6101 = vpack.c.bf16 %v5905, %v5901
          %v6102 = vpack.c.bf16 %v5910, %v5906
          %v6103 = vpack.c.bf16 %v5911, %v5907
          %v6104 = vpack.c.bf16 %v5912, %v5908
          %v6105 = vpack.c.bf16 %v5913, %v5909
          %v6106 = vpack.c.bf16 %v5918, %v5914
          %v6107 = vpack.c.bf16 %v5919, %v5915
          %v6108 = vpack.c.bf16 %v5920, %v5916
          %v6109 = vpack.c.bf16 %v5921, %v5917
          %v6110 = vpack.c.bf16 %v5926, %v5922
          %v6111 = vpack.c.bf16 %v5927, %v5923
          %v6112 = vpack.c.bf16 %v5928, %v5924
          %v6113 = vpack.c.bf16 %v5929, %v5925
          %v6114 = vpack.c.bf16 %v5934, %v5930
          %v6115 = vpack.c.bf16 %v5935, %v5931
          %v6116 = vpack.c.bf16 %v5936, %v5932
          %v6117 = vpack.c.bf16 %v5937, %v5933
          %v6118 = vpack.c.bf16 %v5942, %v5938
          %v6119 = vpack.c.bf16 %v5943, %v5939
          %v6120 = vpack.c.bf16 %v5944, %v5940
          %v6121 = vpack.c.bf16 %v5945, %v5941
          %v6122 = vpack.c.bf16 %v5950, %v5946
          %v6123 = vpack.c.bf16 %v5951, %v5947
          %v6124 = vpack.c.bf16 %v5952, %v5948
          %v6125 = vpack.c.bf16 %v5953, %v5949
          %v6126 = vpack.c.bf16 %v5958, %v5954
          %v6127 = vpack.c.bf16 %v5959, %v5955
          %v6128 = vpack.c.bf16 %v5960, %v5956
          %v6129 = vpack.c.bf16 %v5961, %v5957
          %v6130 = vpack.c.bf16 %v5966, %v5962
          %v6131 = vpack.c.bf16 %v5967, %v5963
          %v6132 = vpack.c.bf16 %v5968, %v5964
          %v6133 = vpack.c.bf16 %v5969, %v5965
          %v6134 = vpack.c.bf16 %v5974, %v5970
          %v6135 = vpack.c.bf16 %v5975, %v5971
          %v6136 = vpack.c.bf16 %v5976, %v5972
          %v6137 = vpack.c.bf16 %v5977, %v5973
          %v6138 = vpack.c.bf16 %v5982, %v5978
          %v6139 = vpack.c.bf16 %v5983, %v5979
          %v6140 = vpack.c.bf16 %v5984, %v5980
          %v6141 = vpack.c.bf16 %v5985, %v5981
          %v6142 = vpack.c.bf16 %v5990, %v5986
          %v6143 = vpack.c.bf16 %v5991, %v5987
          %v6144 = vpack.c.bf16 %v5992, %v5988
          %v6145 = vpack.c.bf16 %v5993, %v5989
          %v6146 = vpack.c.bf16 %v5998, %v5994
          %v6147 = vpack.c.bf16 %v5999, %v5995
          %v6148 = vpack.c.bf16 %v6000, %v5996
          %v6149 = vpack.c.bf16 %v6001, %v5997
          %v6150 = vpack.c.bf16 %v6006, %v6002
          %v6151 = vpack.c.bf16 %v6007, %v6003
          %v6152 = vpack.c.bf16 %v6008, %v6004
          %v6153 = vpack.c.bf16 %v6009, %v6005
          %v6154 = vpack.c.bf16 %v6014, %v6010
          %v6155 = vpack.c.bf16 %v6015, %v6011
          %v6156 = vpack.c.bf16 %v6016, %v6012
          %v6157 = vpack.c.bf16 %v6017, %v6013
          %v6158 = vpack.c.bf16 %v6022, %v6018
          %v6159 = vpack.c.bf16 %v6023, %v6019
          %v6160 = vpack.c.bf16 %v6024, %v6020
          %v6161 = vpack.c.bf16 %v6025, %v6021
          %v6162 = vpack.c.bf16 %v6030, %v6026
          %v6163 = vpack.c.bf16 %v6031, %v6027
          %v6164 = vpack.c.bf16 %v6032, %v6028
          %v6165 = vpack.c.bf16 %v6033, %v6029
          %v6166 = vpack.c.bf16 %v6038, %v6034
          %v6167 = vpack.c.bf16 %v6039, %v6035
          %v6168 = vpack.c.bf16 %v6040, %v6036
          %v6169 = vpack.c.bf16 %v6041, %v6037
          %v6170 = vpack.c.bf16 %v5460, %v5456
          %v6171 = vpack.c.bf16 %v5461, %v5457
          %v6172 = vpack.c.bf16 %v5462, %v5458
          %v6173 = vpack.c.bf16 %v5463, %v5459
          %6174 = vmatpush.bf16.msra.mxu0 %v6070
          %6175 = vmatpush.bf16.msra.mxu0 %v6066
          %6176 = vmatpush.bf16.msra.mxu0 %v6062
          %6177 = vmatpush.bf16.msra.mxu0 %v6058
          %6178 = vmatpush.bf16.msra.mxu0 %v6054
          %6179 = vmatpush.bf16.msra.mxu0 %v6050
          %6180 = vmatpush.bf16.msra.mxu0 %v6046
          %6181 = vmatpush.bf16.msra.mxu0 %v6042
          %6182 = vmatmul.bf16.gmra.mxu0 %v6170
          %v6183 = vpop.f32.mrf.mxu0
          %v6184 = vadd.f32 0.0, %v6183
          %v6185 = vpop.f32.mrf.mxu0
          %v6186 = vadd.f32 0.0, %v6185
          %6187 = vdwg.mxu0
          %6188 = vmatpush.bf16.msra.mxu0 %v6102
          %6189 = vmatpush.bf16.msra.mxu0 %v6098
          %6190 = vmatpush.bf16.msra.mxu0 %v6094
          %6191 = vmatpush.bf16.msra.mxu0 %v6090
          %6192 = vmatpush.bf16.msra.mxu0 %v6086
          %6193 = vmatpush.bf16.msra.mxu0 %v6082
          %6194 = vmatpush.bf16.msra.mxu0 %v6078
          %6195 = vmatpush.bf16.msra.mxu0 %v6074
          %6196 = vmatmul.bf16.gmra.mxu0 %v6171
          %v6197 = vpop.f32.mrf.mxu0
          %v6198 = vadd.f32 %v6184, %v6197
          %v6199 = vpop.f32.mrf.mxu0
          %v6200 = vadd.f32 %v6186, %v6199
          %6201 = vdwg.mxu0
          %6202 = vmatpush.bf16.msra.mxu0 %v6134
          %6203 = vmatpush.bf16.msra.mxu0 %v6130
          %6204 = vmatpush.bf16.msra.mxu0 %v6126
          %6205 = vmatpush.bf16.msra.mxu0 %v6122
          %6206 = vmatpush.bf16.msra.mxu0 %v6118
          %6207 = vmatpush.bf16.msra.mxu0 %v6114
          %6208 = vmatpush.bf16.msra.mxu0 %v6110
          %6209 = vmatpush.bf16.msra.mxu0 %v6106
          %6210 = vmatmul.bf16.gmra.mxu0 %v6172
          %v6211 = vpop.f32.mrf.mxu0
          %v6212 = vadd.f32 %v6198, %v6211
          %v6213 = vpop.f32.mrf.mxu0
          %v6214 = vadd.f32 %v6200, %v6213
          %6215 = vdwg.mxu0
          %6216 = vmatpush.bf16.msra.mxu0 %v6166
          %6217 = vmatpush.bf16.msra.mxu0 %v6162
          %6218 = vmatpush.bf16.msra.mxu0 %v6158
          %6219 = vmatpush.bf16.msra.mxu0 %v6154
          %6220 = vmatpush.bf16.msra.mxu0 %v6150
          %6221 = vmatpush.bf16.msra.mxu0 %v6146
          %6222 = vmatpush.bf16.msra.mxu0 %v6142
          %6223 = vmatpush.bf16.msra.mxu0 %v6138
          %6224 = vmatmul.bf16.gmra.mxu0 %v6173
          %v6225 = vpop.f32.mrf.mxu0
          %v6226 = vadd.f32 %v6212, %v6225
          %v6227 = vpop.f32.mrf.mxu0
          %v6228 = vadd.f32 %v6214, %v6227
          %6229 = vdwg.mxu0
          %6230 = vmatpush.bf16.msra.mxu0 %v6071
          %6231 = vmatpush.bf16.msra.mxu0 %v6067
          %6232 = vmatpush.bf16.msra.mxu0 %v6063
          %6233 = vmatpush.bf16.msra.mxu0 %v6059
          %6234 = vmatpush.bf16.msra.mxu0 %v6055
          %6235 = vmatpush.bf16.msra.mxu0 %v6051
          %6236 = vmatpush.bf16.msra.mxu0 %v6047
          %6237 = vmatpush.bf16.msra.mxu0 %v6043
          %6238 = vmatmul.bf16.gmra.mxu0 %v6170
          %v6239 = vpop.f32.mrf.mxu0
          %v6240 = vadd.f32 0.0, %v6239
          %v6241 = vpop.f32.mrf.mxu0
          %v6242 = vadd.f32 0.0, %v6241
          %6243 = vdwg.mxu0
          %6244 = vmatpush.bf16.msra.mxu0 %v6103
          %6245 = vmatpush.bf16.msra.mxu0 %v6099
          %6246 = vmatpush.bf16.msra.mxu0 %v6095
          %6247 = vmatpush.bf16.msra.mxu0 %v6091
          %6248 = vmatpush.bf16.msra.mxu0 %v6087
          %6249 = vmatpush.bf16.msra.mxu0 %v6083
          %6250 = vmatpush.bf16.msra.mxu0 %v6079
          %6251 = vmatpush.bf16.msra.mxu0 %v6075
          %6252 = vmatmul.bf16.gmra.mxu0 %v6171
          %v6253 = vpop.f32.mrf.mxu0
          %v6254 = vadd.f32 %v6240, %v6253
          %v6255 = vpop.f32.mrf.mxu0
          %v6256 = vadd.f32 %v6242, %v6255
          %6257 = vdwg.mxu0
          %6258 = vmatpush.bf16.msra.mxu0 %v6135
          %6259 = vmatpush.bf16.msra.mxu0 %v6131
          %6260 = vmatpush.bf16.msra.mxu0 %v6127
          %6261 = vmatpush.bf16.msra.mxu0 %v6123
          %6262 = vmatpush.bf16.msra.mxu0 %v6119
          %6263 = vmatpush.bf16.msra.mxu0 %v6115
          %6264 = vmatpush.bf16.msra.mxu0 %v6111
          %6265 = vmatpush.bf16.msra.mxu0 %v6107
          %6266 = vmatmul.bf16.gmra.mxu0 %v6172
          %v6267 = vpop.f32.mrf.mxu0
          %v6268 = vadd.f32 %v6254, %v6267
          %v6269 = vpop.f32.mrf.mxu0
          %v6270 = vadd.f32 %v6256, %v6269
          %6271 = vdwg.mxu0
          %6272 = vmatpush.bf16.msra.mxu0 %v6167
          %6273 = vmatpush.bf16.msra.mxu0 %v6163
          %6274 = vmatpush.bf16.msra.mxu0 %v6159
          %6275 = vmatpush.bf16.msra.mxu0 %v6155
          %6276 = vmatpush.bf16.msra.mxu0 %v6151
          %6277 = vmatpush.bf16.msra.mxu0 %v6147
          %6278 = vmatpush.bf16.msra.mxu0 %v6143
          %6279 = vmatpush.bf16.msra.mxu0 %v6139
          %6280 = vmatmul.bf16.gmra.mxu0 %v6173
          %v6281 = vpop.f32.mrf.mxu0
          %v6282 = vadd.f32 %v6268, %v6281
          %v6283 = vpop.f32.mrf.mxu0
          %v6284 = vadd.f32 %v6270, %v6283
          %6285 = vdwg.mxu0
          %6286 = vmatpush.bf16.msra.mxu0 %v6072
          %6287 = vmatpush.bf16.msra.mxu0 %v6068
          %6288 = vmatpush.bf16.msra.mxu0 %v6064
          %6289 = vmatpush.bf16.msra.mxu0 %v6060
          %6290 = vmatpush.bf16.msra.mxu0 %v6056
          %6291 = vmatpush.bf16.msra.mxu0 %v6052
          %6292 = vmatpush.bf16.msra.mxu0 %v6048
          %6293 = vmatpush.bf16.msra.mxu0 %v6044
          %6294 = vmatmul.bf16.gmra.mxu0 %v6170
          %v6295 = vpop.f32.mrf.mxu0
          %v6296 = vadd.f32 0.0, %v6295
          %v6297 = vpop.f32.mrf.mxu0
          %v6298 = vadd.f32 0.0, %v6297
          %6299 = vdwg.mxu0
          %6300 = vmatpush.bf16.msra.mxu0 %v6104
          %6301 = vmatpush.bf16.msra.mxu0 %v6100
          %6302 = vmatpush.bf16.msra.mxu0 %v6096
          %6303 = vmatpush.bf16.msra.mxu0 %v6092
          %6304 = vmatpush.bf16.msra.mxu0 %v6088
          %6305 = vmatpush.bf16.msra.mxu0 %v6084
          %6306 = vmatpush.bf16.msra.mxu0 %v6080
          %6307 = vmatpush.bf16.msra.mxu0 %v6076
          %6308 = vmatmul.bf16.gmra.mxu0 %v6171
          %v6309 = vpop.f32.mrf.mxu0
          %v6310 = vadd.f32 %v6296, %v6309
          %v6311 = vpop.f32.mrf.mxu0
          %v6312 = vadd.f32 %v6298, %v6311
          %6313 = vdwg.mxu0
          %6314 = vmatpush.bf16.msra.mxu0 %v6136
          %6315 = vmatpush.bf16.msra.mxu0 %v6132
          %6316 = vmatpush.bf16.msra.mxu0 %v6128
          %6317 = vmatpush.bf16.msra.mxu0 %v6124
          %6318 = vmatpush.bf16.msra.mxu0 %v6120
          %6319 = vmatpush.bf16.msra.mxu0 %v6116
          %6320 = vmatpush.bf16.msra.mxu0 %v6112
          %6321 = vmatpush.bf16.msra.mxu0 %v6108
          %6322 = vmatmul.bf16.gmra.mxu0 %v6172
          %v6323 = vpop.f32.mrf.mxu0
          %v6324 = vadd.f32 %v6310, %v6323
          %v6325 = vpop.f32.mrf.mxu0
          %v6326 = vadd.f32 %v6312, %v6325
          %6327 = vdwg.mxu0
          %6328 = vmatpush.bf16.msra.mxu0 %v6168
          %6329 = vmatpush.bf16.msra.mxu0 %v6164
          %6330 = vmatpush.bf16.msra.mxu0 %v6160
          %6331 = vmatpush.bf16.msra.mxu0 %v6156
          %6332 = vmatpush.bf16.msra.mxu0 %v6152
          %6333 = vmatpush.bf16.msra.mxu0 %v6148
          %6334 = vmatpush.bf16.msra.mxu0 %v6144
          %6335 = vmatpush.bf16.msra.mxu0 %v6140
          %6336 = vmatmul.bf16.gmra.mxu0 %v6173
          %v6337 = vpop.f32.mrf.mxu0
          %v6338 = vadd.f32 %v6324, %v6337
          %v6339 = vpop.f32.mrf.mxu0
          %v6340 = vadd.f32 %v6326, %v6339
          %6341 = vdwg.mxu0
          %6342 = vmatpush.bf16.msra.mxu0 %v6073
          %6343 = vmatpush.bf16.msra.mxu0 %v6069
          %6344 = vmatpush.bf16.msra.mxu0 %v6065
          %6345 = vmatpush.bf16.msra.mxu0 %v6061
          %6346 = vmatpush.bf16.msra.mxu0 %v6057
          %6347 = vmatpush.bf16.msra.mxu0 %v6053
          %6348 = vmatpush.bf16.msra.mxu0 %v6049
          %6349 = vmatpush.bf16.msra.mxu0 %v6045
          %6350 = vmatmul.bf16.gmra.mxu0 %v6170
          %v6351 = vpop.f32.mrf.mxu0
          %v6352 = vadd.f32 0.0, %v6351
          %v6353 = vpop.f32.mrf.mxu0
          %v6354 = vadd.f32 0.0, %v6353
          %6355 = vdwg.mxu0
          %6356 = vmatpush.bf16.msra.mxu0 %v6105
          %6357 = vmatpush.bf16.msra.mxu0 %v6101
          %6358 = vmatpush.bf16.msra.mxu0 %v6097
          %6359 = vmatpush.bf16.msra.mxu0 %v6093
          %6360 = vmatpush.bf16.msra.mxu0 %v6089
          %6361 = vmatpush.bf16.msra.mxu0 %v6085
          %6362 = vmatpush.bf16.msra.mxu0 %v6081
          %6363 = vmatpush.bf16.msra.mxu0 %v6077
          %6364 = vmatmul.bf16.gmra.mxu0 %v6171
          %v6365 = vpop.f32.mrf.mxu0
          %v6366 = vadd.f32 %v6352, %v6365
          %v6367 = vpop.f32.mrf.mxu0
          %v6368 = vadd.f32 %v6354, %v6367
          %6369 = vdwg.mxu0
          %6370 = vmatpush.bf16.msra.mxu0 %v6137
          %6371 = vmatpush.bf16.msra.mxu0 %v6133
          %6372 = vmatpush.bf16.msra.mxu0 %v6129
          %6373 = vmatpush.bf16.msra.mxu0 %v6125
          %6374 = vmatpush.bf16.msra.mxu0 %v6121
          %6375 = vmatpush.bf16.msra.mxu0 %v6117
          %6376 = vmatpush.bf16.msra.mxu0 %v6113
          %6377 = vmatpush.bf16.msra.mxu0 %v6109
          %6378 = vmatmul.bf16.gmra.mxu0 %v6172
          %v6379 = vpop.f32.mrf.mxu0
          %v6380 = vadd.f32 %v6366, %v6379
          %v6381 = vpop.f32.mrf.mxu0
          %v6382 = vadd.f32 %v6368, %v6381
          %6383 = vdwg.mxu0
          %6384 = vmatpush.bf16.msra.mxu0 %v6169
          %6385 = vmatpush.bf16.msra.mxu0 %v6165
          %6386 = vmatpush.bf16.msra.mxu0 %v6161
          %6387 = vmatpush.bf16.msra.mxu0 %v6157
          %6388 = vmatpush.bf16.msra.mxu0 %v6153
          %6389 = vmatpush.bf16.msra.mxu0 %v6149
          %6390 = vmatpush.bf16.msra.mxu0 %v6145
          %6391 = vmatpush.bf16.msra.mxu0 %v6141
          %6392 = vmatmul.bf16.gmra.mxu0 %v6173
          %v6393 = vpop.f32.mrf.mxu0
          %v6394 = vadd.f32 %v6380, %v6393
          %v6395 = vpop.f32.mrf.mxu0
          %v6396 = vadd.f32 %v6382, %v6395
          %6397 = vdwg.mxu0
          %s6398 = sld [smem:[#allocation11 + %s5464]]
          %v6399 = vstv %s6398
          %v6400 = vmul.f32 %v6226, %v6399
          %v6401 = vmul.f32 %v6282, %v6399
          %v6402 = vmul.f32 %v6338, %v6399
          %v6403 = vmul.f32 %v6394, %v6399
          %v6404 = vmul.f32 %v6228, %v6399
          %v6405 = vmul.f32 %v6284, %v6399
          %v6406 = vmul.f32 %v6340, %v6399
          %v6407 = vmul.f32 %v6396, %v6399
          %s6408 = scalar_lea.vmem %s428, 8 [#allocation13]
          %v6409 = vld [vmem:[%s6408] sm:$0xf]
          %v6411 = vperm.slane %v6409, 0
          %v6412 = vperm.slane %v6409, 1
          %v6413 = vperm.slane %v6409, 2
          %v6414 = vperm.slane %v6409, 3
          %v6419 = vadd.f32 %v6400, %v6411
          %v6420 = vadd.f32 %v6401, %v6412
          %v6421 = vadd.f32 %v6402, %v6413
          %v6422 = vadd.f32 %v6403, %v6414
          %v6423 = vadd.f32 %v6404, %v6411
          %v6424 = vadd.f32 %v6405, %v6412
          %v6425 = vadd.f32 %v6406, %v6413
          %v6426 = vadd.f32 %v6407, %v6414
          %v6427 = vmax.f32 %v6419, 0.0
          %v6428 = vmax.f32 %v6420, 0.0
          %v6429 = vmax.f32 %v6421, 0.0
          %v6430 = vmax.f32 %v6422, 0.0
          %v6431 = vmax.f32 %v6423, 0.0
          %v6432 = vmax.f32 %v6424, 0.0
          %v6433 = vmax.f32 %v6425, 0.0
          %v6434 = vmax.f32 %v6426, 0.0
          %v6435 = vpack.c.bf16 %v6431, %v6427
          %v6436 = vpack.c.bf16 %v6432, %v6428
          %v6437 = vpack.c.bf16 %v6433, %v6429
          %v6438 = vpack.c.bf16 %v6434, %v6430
          %v6439 = vld [vmem:[#allocation14] sm:$0xf]
          %v6440 = vld [vmem:[#allocation14 + $0x4] sm:$0xf]
          %v6441 = vld [vmem:[#allocation14 + $0x8] sm:$0xf]
          %v6442 = vld [vmem:[#allocation14 + $0xc] sm:$0xf]
          %v6443 = vld [vmem:[#allocation14 + $0x10] sm:$0xf]
          %v6444 = vld [vmem:[#allocation14 + $0x14] sm:$0xf]
          %v6445 = vld [vmem:[#allocation14 + $0x18] sm:$0xf]
          %v6446 = vld [vmem:[#allocation14 + $0x1c] sm:$0xf]
          %v6447 = vld [vmem:[#allocation14 + $0x20] sm:$0xf]
          %v6448 = vld [vmem:[#allocation14 + $0x24] sm:$0xf]
          %v6449 = vld [vmem:[#allocation14 + $0x28] sm:$0xf]
          %v6450 = vld [vmem:[#allocation14 + $0x2c] sm:$0xf]
          %v6451 = vld [vmem:[#allocation14 + $0x30] sm:$0xf]
          %v6452 = vld [vmem:[#allocation14 + $0x34] sm:$0xf]
          %v6453 = vld [vmem:[#allocation14 + $0x38] sm:$0xf]
          %v6454 = vld [vmem:[#allocation14 + $0x3c] sm:$0xf]
          %v6455 = vld [vmem:[#allocation14 + $0x40] sm:$0xf]
          %v6456 = vld [vmem:[#allocation14 + $0x44] sm:$0xf]
          %v6457 = vld [vmem:[#allocation14 + $0x48] sm:$0xf]
          %v6458 = vld [vmem:[#allocation14 + $0x4c] sm:$0xf]
          %v6459 = vld [vmem:[#allocation14 + $0x50] sm:$0xf]
          %v6460 = vld [vmem:[#allocation14 + $0x54] sm:$0xf]
          %v6461 = vld [vmem:[#allocation14 + $0x58] sm:$0xf]
          %v6462 = vld [vmem:[#allocation14 + $0x5c] sm:$0xf]
          %v6463 = vld [vmem:[#allocation14 + $0x60] sm:$0xf]
          %v6464 = vld [vmem:[#allocation14 + $0x64] sm:$0xf]
          %v6465 = vld [vmem:[#allocation14 + $0x68] sm:$0xf]
          %v6466 = vld [vmem:[#allocation14 + $0x6c] sm:$0xf]
          %v6467 = vld [vmem:[#allocation14 + $0x70] sm:$0xf]
          %v6468 = vld [vmem:[#allocation14 + $0x74] sm:$0xf]
          %v6469 = vld [vmem:[#allocation14 + $0x78] sm:$0xf]
          %v6470 = vld [vmem:[#allocation14 + $0x7c] sm:$0xf]
          %v6471 = vld [vmem:[#allocation14 + $0x80] sm:$0xf]
          %v6472 = vld [vmem:[#allocation14 + $0x84] sm:$0xf]
          %v6473 = vld [vmem:[#allocation14 + $0x88] sm:$0xf]
          %v6474 = vld [vmem:[#allocation14 + $0x8c] sm:$0xf]
          %v6475 = vld [vmem:[#allocation14 + $0x90] sm:$0xf]
          %v6476 = vld [vmem:[#allocation14 + $0x94] sm:$0xf]
          %v6477 = vld [vmem:[#allocation14 + $0x98] sm:$0xf]
          %v6478 = vld [vmem:[#allocation14 + $0x9c] sm:$0xf]
          %v6479 = vld [vmem:[#allocation14 + $0xa0] sm:$0xf]
          %v6480 = vld [vmem:[#allocation14 + $0xa4] sm:$0xf]
          %v6481 = vld [vmem:[#allocation14 + $0xa8] sm:$0xf]
          %v6482 = vld [vmem:[#allocation14 + $0xac] sm:$0xf]
          %v6483 = vld [vmem:[#allocation14 + $0xb0] sm:$0xf]
          %v6484 = vld [vmem:[#allocation14 + $0xb4] sm:$0xf]
          %v6485 = vld [vmem:[#allocation14 + $0xb8] sm:$0xf]
          %v6486 = vld [vmem:[#allocation14 + $0xbc] sm:$0xf]
          %v6487 = vld [vmem:[#allocation14 + $0xc0] sm:$0xf]
          %v6488 = vld [vmem:[#allocation14 + $0xc4] sm:$0xf]
          %v6489 = vld [vmem:[#allocation14 + $0xc8] sm:$0xf]
          %v6490 = vld [vmem:[#allocation14 + $0xcc] sm:$0xf]
          %v6491 = vld [vmem:[#allocation14 + $0xd0] sm:$0xf]
          %v6492 = vld [vmem:[#allocation14 + $0xd4] sm:$0xf]
          %v6493 = vld [vmem:[#allocation14 + $0xd8] sm:$0xf]
          %v6494 = vld [vmem:[#allocation14 + $0xdc] sm:$0xf]
          %v6495 = vld [vmem:[#allocation14 + $0xe0] sm:$0xf]
          %v6496 = vld [vmem:[#allocation14 + $0xe4] sm:$0xf]
          %v6497 = vld [vmem:[#allocation14 + $0xe8] sm:$0xf]
          %v6498 = vld [vmem:[#allocation14 + $0xec] sm:$0xf]
          %v6499 = vld [vmem:[#allocation14 + $0xf0] sm:$0xf]
          %v6500 = vld [vmem:[#allocation14 + $0xf4] sm:$0xf]
          %v6501 = vld [vmem:[#allocation14 + $0xf8] sm:$0xf]
          %v6502 = vld [vmem:[#allocation14 + $0xfc] sm:$0xf]
          %v6503 = vld [vmem:[#allocation15] sm:$0x1]
          %v6505 = vperm.slane %v6503, 0
          %v6571 = vunpack.c.l.b16 %v6439
          %v6572 = vunpack.c.l.b16 %v6440
          %v6573 = vunpack.c.l.b16 %v6441
          %v6574 = vunpack.c.l.b16 %v6442
          %v6575 = vunpack.c.l.b16 %v6443
          %v6576 = vunpack.c.l.b16 %v6444
          %v6577 = vunpack.c.l.b16 %v6445
          %v6578 = vunpack.c.l.b16 %v6446
          %v6579 = vunpack.c.l.b16 %v6447
          %v6580 = vunpack.c.l.b16 %v6448
          %v6581 = vunpack.c.l.b16 %v6449
          %v6582 = vunpack.c.l.b16 %v6450
          %v6583 = vunpack.c.l.b16 %v6451
          %v6584 = vunpack.c.l.b16 %v6452
          %v6585 = vunpack.c.l.b16 %v6453
          %v6586 = vunpack.c.l.b16 %v6454
          %v6587 = vunpack.c.l.b16 %v6455
          %v6588 = vunpack.c.l.b16 %v6456
          %v6589 = vunpack.c.l.b16 %v6457
          %v6590 = vunpack.c.l.b16 %v6458
          %v6591 = vunpack.c.l.b16 %v6459
          %v6592 = vunpack.c.l.b16 %v6460
          %v6593 = vunpack.c.l.b16 %v6461
          %v6594 = vunpack.c.l.b16 %v6462
          %v6595 = vunpack.c.l.b16 %v6463
          %v6596 = vunpack.c.l.b16 %v6464
          %v6597 = vunpack.c.l.b16 %v6465
          %v6598 = vunpack.c.l.b16 %v6466
          %v6599 = vunpack.c.l.b16 %v6467
          %v6600 = vunpack.c.l.b16 %v6468
          %v6601 = vunpack.c.l.b16 %v6469
          %v6602 = vunpack.c.l.b16 %v6470
          %v6603 = vunpack.c.l.b16 %v6471
          %v6604 = vunpack.c.l.b16 %v6472
          %v6605 = vunpack.c.l.b16 %v6473
          %v6606 = vunpack.c.l.b16 %v6474
          %v6607 = vunpack.c.l.b16 %v6475
          %v6608 = vunpack.c.l.b16 %v6476
          %v6609 = vunpack.c.l.b16 %v6477
          %v6610 = vunpack.c.l.b16 %v6478
          %v6611 = vunpack.c.l.b16 %v6479
          %v6612 = vunpack.c.l.b16 %v6480
          %v6613 = vunpack.c.l.b16 %v6481
          %v6614 = vunpack.c.l.b16 %v6482
          %v6615 = vunpack.c.l.b16 %v6483
          %v6616 = vunpack.c.l.b16 %v6484
          %v6617 = vunpack.c.l.b16 %v6485
          %v6618 = vunpack.c.l.b16 %v6486
          %v6619 = vunpack.c.l.b16 %v6487
          %v6620 = vunpack.c.l.b16 %v6488
          %v6621 = vunpack.c.l.b16 %v6489
          %v6622 = vunpack.c.l.b16 %v6490
          %v6623 = vunpack.c.l.b16 %v6491
          %v6624 = vunpack.c.l.b16 %v6492
          %v6625 = vunpack.c.l.b16 %v6493
          %v6626 = vunpack.c.l.b16 %v6494
          %v6627 = vunpack.c.l.b16 %v6495
          %v6628 = vunpack.c.l.b16 %v6496
          %v6629 = vunpack.c.l.b16 %v6497
          %v6630 = vunpack.c.l.b16 %v6498
          %v6631 = vunpack.c.l.b16 %v6499
          %v6632 = vunpack.c.l.b16 %v6500
          %v6633 = vunpack.c.l.b16 %v6501
          %v6634 = vunpack.c.l.b16 %v6502
          %v6635 = vpack.c.b16 %v6572, %v6571
          %v6636 = vpack.c.b16 %v6574, %v6573
          %v6637 = vpack.c.b16 %v6576, %v6575
          %v6638 = vpack.c.b16 %v6578, %v6577
          %v6639 = vpack.c.b16 %v6580, %v6579
          %v6640 = vpack.c.b16 %v6582, %v6581
          %v6641 = vpack.c.b16 %v6584, %v6583
          %v6642 = vpack.c.b16 %v6586, %v6585
          %v6643 = vpack.c.b16 %v6588, %v6587
          %v6644 = vpack.c.b16 %v6590, %v6589
          %v6645 = vpack.c.b16 %v6592, %v6591
          %v6646 = vpack.c.b16 %v6594, %v6593
          %v6647 = vpack.c.b16 %v6596, %v6595
          %v6648 = vpack.c.b16 %v6598, %v6597
          %v6649 = vpack.c.b16 %v6600, %v6599
          %v6650 = vpack.c.b16 %v6602, %v6601
          %v6651 = vpack.c.b16 %v6604, %v6603
          %v6652 = vpack.c.b16 %v6606, %v6605
          %v6653 = vpack.c.b16 %v6608, %v6607
          %v6654 = vpack.c.b16 %v6610, %v6609
          %v6655 = vpack.c.b16 %v6612, %v6611
          %v6656 = vpack.c.b16 %v6614, %v6613
          %v6657 = vpack.c.b16 %v6616, %v6615
          %v6658 = vpack.c.b16 %v6618, %v6617
          %v6659 = vpack.c.b16 %v6620, %v6619
          %v6660 = vpack.c.b16 %v6622, %v6621
          %v6661 = vpack.c.b16 %v6624, %v6623
          %v6662 = vpack.c.b16 %v6626, %v6625
          %v6663 = vpack.c.b16 %v6628, %v6627
          %v6664 = vpack.c.b16 %v6630, %v6629
          %v6665 = vpack.c.b16 %v6632, %v6631
          %v6666 = vpack.c.b16 %v6634, %v6633
          %6699 = vmatpush.bf16.msra.mxu0 %v6642
          %6700 = vmatpush.bf16.msra.mxu0 %v6641
          %6701 = vmatpush.bf16.msra.mxu0 %v6640
          %6702 = vmatpush.bf16.msra.mxu0 %v6639
          %6703 = vmatpush.bf16.msra.mxu0 %v6638
          %6704 = vmatpush.bf16.msra.mxu0 %v6637
          %6705 = vmatpush.bf16.msra.mxu0 %v6636
          %6706 = vmatpush.bf16.msra.mxu0 %v6635
          %6707 = vmatmul.bf16.gmra.mxu0 %v6435
          %v6708 = vpop.f32.mrf.mxu0
          %v6709 = vadd.f32 %v6505, %v6708
          %v6710 = vpop.f32.mrf.mxu0
          %v6711 = vadd.f32 %v6505, %v6710
          %6712 = vdwg.mxu0
          %6713 = vmatpush.bf16.msra.mxu0 %v6650
          %6714 = vmatpush.bf16.msra.mxu0 %v6649
          %6715 = vmatpush.bf16.msra.mxu0 %v6648
          %6716 = vmatpush.bf16.msra.mxu0 %v6647
          %6717 = vmatpush.bf16.msra.mxu0 %v6646
          %6718 = vmatpush.bf16.msra.mxu0 %v6645
          %6719 = vmatpush.bf16.msra.mxu0 %v6644
          %6720 = vmatpush.bf16.msra.mxu0 %v6643
          %6721 = vmatmul.bf16.gmra.mxu0 %v6436
          %v6722 = vpop.f32.mrf.mxu0
          %v6723 = vadd.f32 %v6709, %v6722
          %v6724 = vpop.f32.mrf.mxu0
          %v6725 = vadd.f32 %v6711, %v6724
          %6726 = vdwg.mxu0
          %6727 = vmatpush.bf16.msra.mxu0 %v6658
          %6728 = vmatpush.bf16.msra.mxu0 %v6657
          %6729 = vmatpush.bf16.msra.mxu0 %v6656
          %6730 = vmatpush.bf16.msra.mxu0 %v6655
          %6731 = vmatpush.bf16.msra.mxu0 %v6654
          %6732 = vmatpush.bf16.msra.mxu0 %v6653
          %6733 = vmatpush.bf16.msra.mxu0 %v6652
          %6734 = vmatpush.bf16.msra.mxu0 %v6651
          %6735 = vmatmul.bf16.gmra.mxu0 %v6437
          %v6736 = vpop.f32.mrf.mxu0
          %v6737 = vadd.f32 %v6723, %v6736
          %v6738 = vpop.f32.mrf.mxu0
          %v6739 = vadd.f32 %v6725, %v6738
          %6740 = vdwg.mxu0
          %6741 = vmatpush.bf16.msra.mxu0 %v6666
          %6742 = vmatpush.bf16.msra.mxu0 %v6665
          %6743 = vmatpush.bf16.msra.mxu0 %v6664
          %6744 = vmatpush.bf16.msra.mxu0 %v6663
          %6745 = vmatpush.bf16.msra.mxu0 %v6662
          %6746 = vmatpush.bf16.msra.mxu0 %v6661
          %6747 = vmatpush.bf16.msra.mxu0 %v6660
          %6748 = vmatpush.bf16.msra.mxu0 %v6659
          %6749 = vmatmul.bf16.gmra.mxu0 %v6438
          %v6750 = vpop.f32.mrf.mxu0
          %v6751 = vadd.f32 %v6737, %v6750
          %v6752 = vpop.f32.mrf.mxu0
          %v6753 = vadd.f32 %v6739, %v6752
          %6754 = vdwg.mxu0
          %v6755 = vld [vmem:[%s11] sm:$0xff]
          %v6756 = vld [vmem:[%s11 + $0x8] sm:$0xff]
          %s6757 = smul.u32 %s3514, 16
          %s6758 = scalar_lea.vmem %s3, %s6757
          %v6759 = vld [vmem:[%s6758] sm:$0xff]
          %v6760 = vld [vmem:[%s6758 + $0x8] sm:$0xff]
          %v6761 = vmul.f32 %v6759, %v6751
          %v6762 = vmul.f32 %v6760, %v6753
          %v6763 = vadd.f32 %v6755, %v6761
          %v6764 = vadd.f32 %v6756, %v6762
          %6765 = vst [vmem:[%s11] sm:$0xff] %v6763
          %6766 = vst [vmem:[%s11 + $0x8] sm:$0xff] %v6764
        $region92: #{_mapping_forward.1} parent=55 // pred_fallthru
          _
        // Predicated region
        $region93: #{_mapping_forward.1} parent=55 // pred_check
          %p6767 = pneg %p255
        $region94: #{_mapping_forward.1} parent=55 // pred_check_branch
          %6769 = sbr.rel (%p6767) target = $region96
        $region95: #{_mapping_forward.1} parent=55 // pred_region
          _
        $region96: #{_mapping_forward.1} parent=55 // pred_fallthru
          _
        // Predicated region
        $region97: #{_mapping_forward.1} parent=55 // pred_check
          %p6770 = pneg %p255
        $region98: #{_mapping_forward.1} parent=55 // pred_check_branch
          %6772 = sbr.rel (%p6770) target = $region100
        $region99: #{_mapping_forward.1} parent=55 // pred_region
          _
        $region100: #{_mapping_forward.1} parent=55 // pred_fallthru
          _
      $region56: #{_mapping_forward.1} parent=5 // pred_fallthru
        _
      %p6773 = scmp.le.s32.totalorder 2, %s34
      // Predicated region
      $region101: #{_mapping_forward.1} parent=5 // pred_check
        %p6774 = pneg %p6773
      $region102: #{_mapping_forward.1} parent=5 // pred_check_branch
        %6776 = sbr.rel (%p6774) target = $region104
      $region103: #{_mapping_forward.1} parent=5 // pred_region
        %s6777 = ssub.s32 %s34, 2
      $region104: #{_mapping_forward.1} parent=5 // pred_fallthru
        _
    $region6: #{_mapping_forward.1} parent=1 // loop_footer
      %s38 = sadd.s32 1, %s34
    $region7: #{_mapping_forward.1} parent=1 // loop_footer_branch
      %33 = sbr.rel target = $region3
    $region8: #{_mapping_forward.1} parent=1 // loop_exit
      _
    %6778 = vsyncpa [#allocation7], 1
    %s6779 = scalar_lea.sflag [#allocation7], 1
    %6780 = vsyncpa %s6779, 1
    %6781 = vsyncpa [#allocation10], 1
    %6782 = vsyncpa [#allocation16], 1
    %6783 = vsyncpa [#allocation8], 1
    %s6784 = scalar_lea.sflag [#allocation8], 1
    %6785 = vsyncpa %s6784, 1

</llo_original>
